<compile_context>
chip_gen: v5e
topology: v5e:2x2
jax: 0.10.0
libtpu: 0.0.40
codegen_flags: <defaults>
</compile_context>

<pallas_src>
import functools

import jax
import jax.numpy as jnp
from jax import lax
from jax.experimental import pallas as pl
from jax.experimental.pallas import tpu as pltpu

PADC = 128                      # lane-dense output width (zero-padded Cout)
MAX_TM = 256                    # M-tile (rows); multiple of 8, VMEM-bounded
VMEM_LIMIT = 32 * 1024 * 1024   # explicit scoped-VMEM request (safe on v5e/v6e/v7x)
NUM_CLASSES = 3
NUM_ANCHORS = 4


# ----------------------------- Pallas kernels -----------------------------

def _matmul_bias_kernel(a_ref, w_ref, b_ref, o_ref, *, relu):
    """(tm,K)bf16 @ (K,128)bf16 -> f32, + bias, optional fused ReLU."""
    acc = jnp.dot(a_ref[...], w_ref[...], preferred_element_type=jnp.float32)
    acc = acc + b_ref[...]                       # (1,128) broadcasts over rows
    if relu:
        acc = jnp.maximum(acc, 0.0)
    o_ref[...] = acc


def _conv_relu_l2norm_kernel(a_ref, w_ref, b_ref, nw_ref, x_ref, s_ref):
    """conv1 epilogue: ReLU, write x; also write L2-normalized*scale source.

    Padded output columns are exactly zero (zero-padded weights/bias + ReLU),
    so the full-width sum of squares equals the sum over the valid channels.
    """
    acc = jnp.dot(a_ref[...], w_ref[...], preferred_element_type=jnp.float32)
    acc = jnp.maximum(acc + b_ref[...], 0.0)
    x_ref[...] = acc
    norm = jnp.sqrt(jnp.sum(acc * acc, axis=-1, keepdims=True)) + 1e-10
    s_ref[...] = (acc / norm) * nw_ref[...]      # nw padded with zeros


def _head_kernel(a_ref, w_ref, b_ref, o_ref, *, n_loc, n_anchor, n_cls,
                 do_softmax):
    """Fused loc+conf head conv; columns [0:n_loc]=loc, [n_loc:n_loc+A*C]=conf.

    In eval the per-anchor softmax over the class triples is fused as an
    epilogue using full-width masked ops (no minor-dim concat / sub-stores).
    """
    acc = jnp.dot(a_ref[...], w_ref[...], preferred_element_type=jnp.float32)
    acc = acc + b_ref[...]
    if do_softmax:
        n_conf = n_anchor * n_cls
        col = lax.broadcasted_iota(jnp.int32, (1, acc.shape[-1]), 1)
        conf_mask = jnp.logical_and(col >= n_loc, col < n_loc + n_conf)
        mx = jnp.zeros_like(acc)
        den = jnp.ones_like(acc)
        for a in range(n_anchor):                # static unroll, 4 groups of 3
            lo = n_loc + a * n_cls
            grp = acc[:, lo:lo + n_cls]                        # (tm, n_cls)
            m_a = jnp.max(grp, axis=-1, keepdims=True)         # (tm, 1)
            d_a = jnp.sum(jnp.exp(grp - m_a), axis=-1, keepdims=True)
            sel = jnp.logical_and(col >= lo, col < lo + n_cls)  # (1, 128)
            mx = jnp.where(sel, m_a, mx)
            den = jnp.where(sel, d_a, den)
        soft = jnp.exp(acc - mx) * pl.reciprocal(den, approx=True)
        acc = jnp.where(conf_mask, soft, acc)
    o_ref[...] = acc


# ----------------------------- launch helper -----------------------------

def _launch(kernel, cols_bf16, w, b, extra_ins=(), n_out=1):
    M, K = cols_bf16.shape
    tm = M if M <= MAX_TM else MAX_TM
    grid = (pl.cdiv(M, tm),)

    a_spec = pl.BlockSpec((tm, K), lambda i: (i, 0))
    w_spec = pl.BlockSpec((K, PADC), lambda i: (0, 0))
    b_spec = pl.BlockSpec((1, PADC), lambda i: (0, 0))
    in_specs = [a_spec, w_spec, b_spec] + [
        pl.BlockSpec((1, PADC), lambda i: (0, 0)) for _ in extra_ins]

    if n_out == 1:
        out_shape = jax.ShapeDtypeStruct((M, PADC), jnp.float32)
        out_specs = pl.BlockSpec((tm, PADC), lambda i: (i, 0))
    else:
        out_shape = tuple(jax.ShapeDtypeStruct((M, PADC), jnp.float32)
                          for _ in range(n_out))
        out_specs = tuple(pl.BlockSpec((tm, PADC), lambda i: (i, 0))
                          for _ in range(n_out))

    return pl.pallas_call(
        kernel,
        grid_spec=pltpu.PrefetchScalarGridSpec(
            num_scalar_prefetch=0, grid=grid,
            in_specs=in_specs, out_specs=out_specs),
        out_shape=out_shape,
        compiler_params=pltpu.CompilerParams(
            dimension_semantics=("parallel",),
            vmem_limit_bytes=VMEM_LIMIT),
    )(cols_bf16, w, b, *extra_ins)


# ----------------------------- conv wrappers (im2col + Pallas matmul) ------

def _im2col(x_nhwc, kh, kw, stride, pad):
    N, H, W, C = x_nhwc.shape
    xp = jnp.pad(x_nhwc, ((0, 0), (pad, pad), (pad, pad), (0, 0)))
    Ho = (H + 2 * pad - kh) // stride + 1
    Wo = (W + 2 * pad - kw) // stride + 1
    patches = []
    for i in range(kh):
        for j in range(kw):
            patches.append(xp[:, i:i + stride * Ho:stride,
                               j:j + stride * Wo:stride, :])
    cols = jnp.concatenate(patches, axis=-1)          # (N, Ho, Wo, kh*kw*C)
    return cols.reshape(N * Ho * Wo, kh * kw * C), Ho, Wo


def conv2d_relu(x_nhwc, w, b, cout, stride, pad):
    cols, Ho, Wo = _im2col(x_nhwc, 3, 3, stride, pad)
    out = _launch(functools.partial(_matmul_bias_kernel, relu=True),
                  cols.astype(jnp.bfloat16), w, b)
    N = x_nhwc.shape[0]
    return out[:, :cout].reshape(N, Ho, Wo, cout)     # slice valid columns


def conv2d_relu_l2norm(x_nhwc, w, b, nw, cout, stride, pad):
    cols, Ho, Wo = _im2col(x_nhwc, 3, 3, stride, pad)
    out_x, out_s = _launch(_conv_relu_l2norm_kernel,
                           cols.astype(jnp.bfloat16), w, b,
                           extra_ins=(nw,), n_out=2)
    N = x_nhwc.shape[0]
    return (out_x[:, :cout].reshape(N, Ho, Wo, cout),
            out_s[:, :cout].reshape(N, Ho, Wo, cout))


def head_conv(x_nhwc, w, b, do_softmax):
    """One fused loc+conf 3x3/s1/p1 conv; returns flattened (loc, conf)."""
    cols, Ho, Wo = _im2col(x_nhwc, 3, 3, 1, 1)
    n_loc = NUM_ANCHORS * 4
    n_conf = NUM_ANCHORS * NUM_CLASSES
    out = _launch(functools.partial(_head_kernel, n_loc=n_loc,
                                    n_anchor=NUM_ANCHORS, n_cls=NUM_CLASSES,
                                    do_softmax=do_softmax),
                  cols.astype(jnp.bfloat16), w, b)
    N = x_nhwc.shape[0]
    # rows are (b, ho, wo)-major; slicing before reshape keeps prior ordering
    loc = out[:, :n_loc].reshape(N, Ho * Wo * n_loc)
    conf = out[:, n_loc:n_loc + n_conf].reshape(N, Ho * Wo * n_conf)
    return loc, conf


# ----------------------------- AttSSDLite (synthetic config) ---------------

def init_params(key):
    """Deterministic synthetic parameters mirroring AttSSDLite.__init__ shapes.

    base   : Conv(3->8,3x3,s1,p1)+ReLU, Conv(8->16,3x3,s2,p1)+ReLU  (ReLU fused)
    extras : Conv(16->32,3x3,s2,p1)  (F.relu fused)
    heads  : 4 anchors/location, num_classes=3 ; loc+conf weights fused (Cout=28)
    feature_layer taps -> L2Norm(8, 20) on the first (post-ReLU) source.
    Weights are reshaped for im2col (i,j,c ordering), zero-padded to 128 output
    columns and cast to bf16; biases stay f32.
    """
    def conv_w(k, kh, kw, cin, cout):
        k1, k2 = jax.random.split(k)
        w = 0.1 * jax.random.normal(k1, (kh, kw, cin, cout), jnp.float32)
        b = 0.01 * jax.random.normal(k2, (cout,), jnp.float32)
        return w, b

    def pack(w, b):
        kh, kw, cin, cout = w.shape
        w2 = w.reshape(kh * kw * cin, cout)
        w2 = jnp.pad(w2, ((0, 0), (0, PADC - cout))).astype(jnp.bfloat16)
        b2 = jnp.pad(b, (0, PADC - cout)).reshape(1, PADC).astype(jnp.float32)
        return w2, b2

    keys = jax.random.split(key, 9)
    c1w, c1b = conv_w(keys[0], 3, 3, 3, 8)
    c2w, c2b = conv_w(keys[1], 3, 3, 8, 16)
    exw, exb = conv_w(keys[2], 3, 3, 16, 32)

    heads_w, heads_b = [], []
    for i, cin in enumerate((8, 16, 32)):
        lw, lb = conv_w(keys[3 + i], 3, 3, cin, NUM_ANCHORS * 4)
        cw, cb = conv_w(keys[6 + i], 3, 3, cin, NUM_ANCHORS * NUM_CLASSES)
        fw = jnp.concatenate([lw, cw], axis=-1)       # fuse loc+conf along Cout
        fb = jnp.concatenate([lb, cb], axis=0)
        pw, pb = pack(fw, fb)
        heads_w.append(pw)
        heads_b.append(pb)

    params = {}
    params["conv1_w"], params["conv1_b"] = pack(c1w, c1b)
    params["conv2_w"], params["conv2_b"] = pack(c2w, c2b)
    params["extra_w"], params["extra_b"] = pack(exw, exb)
    params["l2norm_w"] = jnp.pad(jnp.full((8,), 20.0, jnp.float32),
                                 (0, PADC - 8)).reshape(1, PADC)
    params["head_w"] = heads_w
    params["head_b"] = heads_b
    return params


def attssd_lite_forward(x_nchw, params, phase="eval"):
    # layout: input is NCHW (PyTorch); all kernels run NHWC.
    x = jnp.transpose(x_nchw, (0, 2, 3, 1)).astype(jnp.float32)

    # base (ReLU fused into the convs; the original taps feature sources at the
    # ReLU layer indices, which is exactly the fused conv+ReLU output)
    x, s0 = conv2d_relu_l2norm(x, params["conv1_w"], params["conv1_b"],
                               params["l2norm_w"], cout=8, stride=1, pad=1)
    sources = [s0]
    x = conv2d_relu(x, params["conv2_w"], params["conv2_b"],
                    cout=16, stride=2, pad=1)
    sources.append(x)

    # extras (F.relu fused)
    x = conv2d_relu(x, params["extra_w"], params["extra_b"],
                    cout=32, stride=2, pad=1)
    sources.append(x)

    if phase == "feature":
        return sources   # NHWC feature maps (layout note: torch returns NCHW)

    do_softmax = (phase == "eval")
    locs, confs = [], []
    for s, hw, hb in zip(sources, params["head_w"], params["head_b"]):
        lo, co = head_conv(s, hw, hb, do_softmax)
        locs.append(lo)
        confs.append(co)

    loc = jnp.concatenate(locs, axis=1)
    conf = jnp.concatenate(confs, axis=1)
    B = loc.shape[0]
    if phase == "eval":
        # conf was already softmaxed per (prior, anchor) class-triple in-kernel,
        # which is identical to softmax(conf.view(-1, num_classes)).
        return loc.reshape(B, -1, 4), conf.reshape(-1, NUM_CLASSES)
    return loc.reshape(B, -1, 4), conf.reshape(B, -1, NUM_CLASSES)


if __name__ == "__main__":
    key = jax.random.PRNGKey(0)
    kx, kp = jax.random.split(key)
    x = jax.random.normal(kx, (2, 3, 16, 16), jnp.float32)   # NCHW like PyTorch
    params = init_params(kp)

    fwd = jax.jit(attssd_lite_forward, static_argnames=("phase",))
    loc_out, conf_out = fwd(x, params, phase="eval")
    loc_out = jax.block_until_ready(loc_out)
    conf_out = jax.block_until_ready(conf_out)

    # sanity: 4 anchors at 16x16, 8x8, 4x4 -> 1344 priors; num_classes = 3
    assert loc_out.shape == (2, 1344, 4), loc_out.shape
    assert conf_out.shape == (2 * 1344, 3), conf_out.shape
    # softmax uses the EUP approx reciprocal -> rows sum to 1 within ~2^-12
    assert bool(jnp.allclose(jnp.sum(conf_out, axis=-1), 1.0, atol=5e-3))

    print("KERNEL_OK")
</pallas_src>

<mosaic_0001>
module attributes {stable_mosaic.version = 11 : i64} {
  func.func @_conv_relu_l2norm_kernel(%arg0: i32, %arg1: memref<256x27xbf16, #tpu.memory_space<vmem>>, %arg2: memref<27x128xbf16, #tpu.memory_space<vmem>>, %arg3: memref<1x128xf32, #tpu.memory_space<vmem>>, %arg4: memref<1x128xf32, #tpu.memory_space<vmem>>, %arg5: memref<256x128xf32, #tpu.memory_space<vmem>>, %arg6: memref<256x128xf32, #tpu.memory_space<vmem>>) attributes {dimension_semantics = [#tpu.dimension_semantics<parallel>], iteration_bounds = array<i64: 2>, scalar_prefetch = 0 : i64, scratch_operands = 0 : i64, tpu.core_type = #tpu.core_type<tc>, window_params = [{transform_indices = @transform_0, window_bounds = array<i64: 256, 27>}, {pipeline_mode = #tpu.pipeline_mode<synchronous>, transform_indices = @transform_1, window_bounds = array<i64: 27, 128>}, {pipeline_mode = #tpu.pipeline_mode<synchronous>, transform_indices = @transform_2, window_bounds = array<i64: 1, 128>}, {pipeline_mode = #tpu.pipeline_mode<synchronous>, transform_indices = @transform_3, window_bounds = array<i64: 1, 128>}, {transform_indices = @transform_4, window_bounds = array<i64: 256, 128>}, {transform_indices = @transform_5, window_bounds = array<i64: 256, 128>}]} {
    %c0 = arith.constant 0 : index
    %c0_0 = arith.constant 0 : index
    %0 = vector.load %arg1[%c0, %c0_0] : memref<256x27xbf16, #tpu.memory_space<vmem>>, vector<256x27xbf16>
    %c0_1 = arith.constant 0 : index
    %c0_2 = arith.constant 0 : index
    %1 = vector.load %arg2[%c0_1, %c0_2] : memref<27x128xbf16, #tpu.memory_space<vmem>>, vector<27x128xbf16>
    %cst = arith.constant dense<0.000000e+00> : vector<256x128xf32>
    %2 = tpu.matmul %0, %1, %cst {dimension_numbers = #tpu.dot_dimension_numbers<[1], [0], [0], [1], [0, 0, 1, 1], [], []>} : vector<256x27xbf16>, vector<27x128xbf16>, vector<256x128xf32> -> vector<256x128xf32>
    %c0_3 = arith.constant 0 : index
    %c0_4 = arith.constant 0 : index
    %3 = vector.load %arg3[%c0_3, %c0_4] : memref<1x128xf32, #tpu.memory_space<vmem>>, vector<1x128xf32>
    %4 = vector.broadcast %3 : vector<1x128xf32> to vector<256x128xf32>
    %5 = arith.addf %2, %4 : vector<256x128xf32>
    %cst_5 = arith.constant 0.000000e+00 : f32
    %6 = vector.broadcast %cst_5 : f32 to vector<256x128xf32>
    %7 = arith.maximumf %5, %6 : vector<256x128xf32>
    %c0_6 = arith.constant 0 : index
    %c0_7 = arith.constant 0 : index
    %8 = vector.load %arg5[%c0_6, %c0_7] : memref<256x128xf32, #tpu.memory_space<vmem>>, vector<256x128xf32>
    tpu.vector_store %arg5[%c0_6, %c0_7], %7 {strides = array<i32>} : memref<256x128xf32, #tpu.memory_space<vmem>>, vector<256x128xf32>,
    %9 = arith.mulf %7, %7 : vector<256x128xf32>
    %cst_8 = arith.constant dense<0.000000e+00> : vector<256xf32>
    %10 = vector.multi_reduction <add>, %9, %cst_8 [1] : vector<256x128xf32> to vector<256xf32>
    %11 = vector.shape_cast %10 : vector<256xf32> to vector<256x1xf32>
    %12 = math.sqrt %11 : vector<256x1xf32>
    %cst_9 = arith.constant 1.000000e-10 : f32
    %13 = vector.broadcast %cst_9 : f32 to vector<256x1xf32>
    %14 = arith.addf %12, %13 : vector<256x1xf32>
    %15 = vector.broadcast %14 : vector<256x1xf32> to vector<256x128xf32>
    %16 = arith.divf %7, %15 : vector<256x128xf32>
    %c0_10 = arith.constant 0 : index
    %c0_11 = arith.constant 0 : index
    %17 = vector.load %arg4[%c0_10, %c0_11] : memref<1x128xf32, #tpu.memory_space<vmem>>, vector<1x128xf32>
    %18 = vector.broadcast %17 : vector<1x128xf32> to vector<256x128xf32>
    %19 = arith.mulf %16, %18 : vector<256x128xf32>
    %c0_12 = arith.constant 0 : index
    %c0_13 = arith.constant 0 : index
    %20 = vector.load %arg6[%c0_12, %c0_13] : memref<256x128xf32, #tpu.memory_space<vmem>>, vector<256x128xf32>
    tpu.vector_store %arg6[%c0_12, %c0_13], %19 {strides = array<i32>} : memref<256x128xf32, #tpu.memory_space<vmem>>, vector<256x128xf32>,
    return
  }
  func.func @transform_0(%arg0: i32) -> (i32, i32) {
    %c0_i32 = arith.constant 0 : i32
    %c0_i32_0 = arith.constant 0 : i32
    return %arg0, %c0_i32 : i32, i32
  }
  func.func @transform_1(%arg0: i32) -> (i32, i32) {
    %c0_i32 = arith.constant 0 : i32
    %c0_i32_0 = arith.constant 0 : i32
    %c0_i32_1 = arith.constant 0 : i32
    return %c0_i32, %c0_i32_0 : i32, i32
  }
  func.func @transform_2(%arg0: i32) -> (i32, i32) {
    %c0_i32 = arith.constant 0 : i32
    %c0_i32_0 = arith.constant 0 : i32
    %c0_i32_1 = arith.constant 0 : i32
    return %c0_i32, %c0_i32_0 : i32, i32
  }
  func.func @transform_3(%arg0: i32) -> (i32, i32) {
    %c0_i32 = arith.constant 0 : i32
    %c0_i32_0 = arith.constant 0 : i32
    %c0_i32_1 = arith.constant 0 : i32
    return %c0_i32, %c0_i32_0 : i32, i32
  }
  func.func @transform_4(%arg0: i32) -> (i32, i32) {
    %c0_i32 = arith.constant 0 : i32
    %c0_i32_0 = arith.constant 0 : i32
    return %arg0, %c0_i32 : i32, i32
  }
  func.func @transform_5(%arg0: i32) -> (i32, i32) {
    %c0_i32 = arith.constant 0 : i32
    %c0_i32_0 = arith.constant 0 : i32
    return %arg0, %c0_i32 : i32, i32
  }
}

module attributes {stable_mosaic.version = 11 : i64} {
  func.func @_matmul_bias_kernel(%arg0: i32, %arg1: memref<128x72xbf16, #tpu.memory_space<vmem>>, %arg2: memref<72x128xbf16, #tpu.memory_space<vmem>>, %arg3: memref<1x128xf32, #tpu.memory_space<vmem>>, %arg4: memref<128x128xf32, #tpu.memory_space<vmem>>) attributes {dimension_semantics = [#tpu.dimension_semantics<parallel>], iteration_bounds = array<i64: 1>, scalar_prefetch = 0 : i64, scratch_operands = 0 : i64, tpu.core_type = #tpu.core_type<tc>, window_params = [{transform_indices = @transform_0, window_bounds = array<i64: 128, 72>}, {pipeline_mode = #tpu.pipeline_mode<synchronous>, transform_indices = @transform_1, window_bounds = array<i64: 72, 128>}, {pipeline_mode = #tpu.pipeline_mode<synchronous>, transform_indices = @transform_2, window_bounds = array<i64: 1, 128>}, {transform_indices = @transform_3, window_bounds = array<i64: 128, 128>}]} {
    %c0 = arith.constant 0 : index
    %c0_0 = arith.constant 0 : index
    %0 = vector.load %arg1[%c0, %c0_0] : memref<128x72xbf16, #tpu.memory_space<vmem>>, vector<128x72xbf16>
    %c0_1 = arith.constant 0 : index
    %c0_2 = arith.constant 0 : index
    %1 = vector.load %arg2[%c0_1, %c0_2] : memref<72x128xbf16, #tpu.memory_space<vmem>>, vector<72x128xbf16>
    %cst = arith.constant dense<0.000000e+00> : vector<128x128xf32>
    %2 = tpu.matmul %0, %1, %cst {dimension_numbers = #tpu.dot_dimension_numbers<[1], [0], [0], [1], [0, 0, 1, 1], [], []>} : vector<128x72xbf16>, vector<72x128xbf16>, vector<128x128xf32> -> vector<128x128xf32>
    %c0_3 = arith.constant 0 : index
    %c0_4 = arith.constant 0 : index
    %3 = vector.load %arg3[%c0_3, %c0_4] : memref<1x128xf32, #tpu.memory_space<vmem>>, vector<1x128xf32>
    %4 = vector.broadcast %3 : vector<1x128xf32> to vector<128x128xf32>
    %5 = arith.addf %2, %4 : vector<128x128xf32>
    %cst_5 = arith.constant 0.000000e+00 : f32
    %6 = vector.broadcast %cst_5 : f32 to vector<128x128xf32>
    %7 = arith.maximumf %5, %6 : vector<128x128xf32>
    %c0_6 = arith.constant 0 : index
    %c0_7 = arith.constant 0 : index
    %8 = vector.load %arg4[%c0_6, %c0_7] : memref<128x128xf32, #tpu.memory_space<vmem>>, vector<128x128xf32>
    tpu.vector_store %arg4[%c0_6, %c0_7], %7 {strides = array<i32>} : memref<128x128xf32, #tpu.memory_space<vmem>>, vector<128x128xf32>,
    return
  }
  func.func @transform_0(%arg0: i32) -> (i32, i32) {
    %c0_i32 = arith.constant 0 : i32
    %c0_i32_0 = arith.constant 0 : i32
    return %arg0, %c0_i32 : i32, i32
  }
  func.func @transform_1(%arg0: i32) -> (i32, i32) {
    %c0_i32 = arith.constant 0 : i32
    %c0_i32_0 = arith.constant 0 : i32
    %c0_i32_1 = arith.constant 0 : i32
    return %c0_i32, %c0_i32_0 : i32, i32
  }
  func.func @transform_2(%arg0: i32) -> (i32, i32) {
    %c0_i32 = arith.constant 0 : i32
    %c0_i32_0 = arith.constant 0 : i32
    %c0_i32_1 = arith.constant 0 : i32
    return %c0_i32, %c0_i32_0 : i32, i32
  }
  func.func @transform_3(%arg0: i32) -> (i32, i32) {
    %c0_i32 = arith.constant 0 : i32
    %c0_i32_0 = arith.constant 0 : i32
    return %arg0, %c0_i32 : i32, i32
  }
}

module attributes {stable_mosaic.version = 11 : i64} {
  func.func @_matmul_bias_kernel(%arg0: i32, %arg1: memref<32x144xbf16, #tpu.memory_space<vmem>>, %arg2: memref<144x128xbf16, #tpu.memory_space<vmem>>, %arg3: memref<1x128xf32, #tpu.memory_space<vmem>>, %arg4: memref<32x128xf32, #tpu.memory_space<vmem>>) attributes {dimension_semantics = [#tpu.dimension_semantics<parallel>], iteration_bounds = array<i64: 1>, scalar_prefetch = 0 : i64, scratch_operands = 0 : i64, tpu.core_type = #tpu.core_type<tc>, window_params = [{transform_indices = @transform_0, window_bounds = array<i64: 32, 144>}, {pipeline_mode = #tpu.pipeline_mode<synchronous>, transform_indices = @transform_1, window_bounds = array<i64: 144, 128>}, {pipeline_mode = #tpu.pipeline_mode<synchronous>, transform_indices = @transform_2, window_bounds = array<i64: 1, 128>}, {transform_indices = @transform_3, window_bounds = array<i64: 32, 128>}]} {
    %c0 = arith.constant 0 : index
    %c0_0 = arith.constant 0 : index
    %0 = vector.load %arg1[%c0, %c0_0] : memref<32x144xbf16, #tpu.memory_space<vmem>>, vector<32x144xbf16>
    %c0_1 = arith.constant 0 : index
    %c0_2 = arith.constant 0 : index
    %1 = vector.load %arg2[%c0_1, %c0_2] : memref<144x128xbf16, #tpu.memory_space<vmem>>, vector<144x128xbf16>
    %cst = arith.constant dense<0.000000e+00> : vector<32x128xf32>
    %2 = tpu.matmul %0, %1, %cst {dimension_numbers = #tpu.dot_dimension_numbers<[1], [0], [0], [1], [0, 0, 1, 1], [], []>} : vector<32x144xbf16>, vector<144x128xbf16>, vector<32x128xf32> -> vector<32x128xf32>
    %c0_3 = arith.constant 0 : index
    %c0_4 = arith.constant 0 : index
    %3 = vector.load %arg3[%c0_3, %c0_4] : memref<1x128xf32, #tpu.memory_space<vmem>>, vector<1x128xf32>
    %4 = vector.broadcast %3 : vector<1x128xf32> to vector<32x128xf32>
    %5 = arith.addf %2, %4 : vector<32x128xf32>
    %cst_5 = arith.constant 0.000000e+00 : f32
    %6 = vector.broadcast %cst_5 : f32 to vector<32x128xf32>
    %7 = arith.maximumf %5, %6 : vector<32x128xf32>
    %c0_6 = arith.constant 0 : index
    %c0_7 = arith.constant 0 : index
    %8 = vector.load %arg4[%c0_6, %c0_7] : memref<32x128xf32, #tpu.memory_space<vmem>>, vector<32x128xf32>
    tpu.vector_store %arg4[%c0_6, %c0_7], %7 {strides = array<i32>} : memref<32x128xf32, #tpu.memory_space<vmem>>, vector<32x128xf32>,
    return
  }
  func.func @transform_0(%arg0: i32) -> (i32, i32) {
    %c0_i32 = arith.constant 0 : i32
    %c0_i32_0 = arith.constant 0 : i32
    return %arg0, %c0_i32 : i32, i32
  }
  func.func @transform_1(%arg0: i32) -> (i32, i32) {
    %c0_i32 = arith.constant 0 : i32
    %c0_i32_0 = arith.constant 0 : i32
    %c0_i32_1 = arith.constant 0 : i32
    return %c0_i32, %c0_i32_0 : i32, i32
  }
  func.func @transform_2(%arg0: i32) -> (i32, i32) {
    %c0_i32 = arith.constant 0 : i32
    %c0_i32_0 = arith.constant 0 : i32
    %c0_i32_1 = arith.constant 0 : i32
    return %c0_i32, %c0_i32_0 : i32, i32
  }
  func.func @transform_3(%arg0: i32) -> (i32, i32) {
    %c0_i32 = arith.constant 0 : i32
    %c0_i32_0 = arith.constant 0 : i32
    return %arg0, %c0_i32 : i32, i32
  }
}

module attributes {stable_mosaic.version = 11 : i64} {
  func.func @_head_kernel(%arg0: i32, %arg1: memref<32x288xbf16, #tpu.memory_space<vmem>>, %arg2: memref<288x128xbf16, #tpu.memory_space<vmem>>, %arg3: memref<1x128xf32, #tpu.memory_space<vmem>>, %arg4: memref<32x128xf32, #tpu.memory_space<vmem>>) attributes {dimension_semantics = [#tpu.dimension_semantics<parallel>], iteration_bounds = array<i64: 1>, scalar_prefetch = 0 : i64, scratch_operands = 0 : i64, tpu.core_type = #tpu.core_type<tc>, window_params = [{transform_indices = @transform_0, window_bounds = array<i64: 32, 288>}, {pipeline_mode = #tpu.pipeline_mode<synchronous>, transform_indices = @transform_1, window_bounds = array<i64: 288, 128>}, {pipeline_mode = #tpu.pipeline_mode<synchronous>, transform_indices = @transform_2, window_bounds = array<i64: 1, 128>}, {transform_indices = @transform_3, window_bounds = array<i64: 32, 128>}]} {
    %c0 = arith.constant 0 : index
    %c0_0 = arith.constant 0 : index
    %0 = vector.load %arg1[%c0, %c0_0] : memref<32x288xbf16, #tpu.memory_space<vmem>>, vector<32x288xbf16>
    %c0_1 = arith.constant 0 : index
    %c0_2 = arith.constant 0 : index
    %1 = vector.load %arg2[%c0_1, %c0_2] : memref<288x128xbf16, #tpu.memory_space<vmem>>, vector<288x128xbf16>
    %cst = arith.constant dense<0.000000e+00> : vector<32x128xf32>
    %2 = tpu.matmul %0, %1, %cst {dimension_numbers = #tpu.dot_dimension_numbers<[1], [0], [0], [1], [0, 0, 1, 1], [], []>} : vector<32x288xbf16>, vector<288x128xbf16>, vector<32x128xf32> -> vector<32x128xf32>
    %c0_3 = arith.constant 0 : index
    %c0_4 = arith.constant 0 : index
    %3 = vector.load %arg3[%c0_3, %c0_4] : memref<1x128xf32, #tpu.memory_space<vmem>>, vector<1x128xf32>
    %4 = vector.broadcast %3 : vector<1x128xf32> to vector<32x128xf32>
    %5 = arith.addf %2, %4 : vector<32x128xf32>
    %6 = tpu.iota {dimensions = array<i32: 1>} : vector<1x128xi32>
    %c16_i32 = arith.constant 16 : i32
    %7 = vector.broadcast %c16_i32 : i32 to vector<1x128xi32>
    %8 = arith.cmpi sge, %6, %7 : vector<1x128xi32>
    %c28_i32 = arith.constant 28 : i32
    %9 = vector.broadcast %c28_i32 : i32 to vector<1x128xi32>
    %10 = arith.cmpi slt, %6, %9 : vector<1x128xi32>
    %11 = arith.andi %8, %10 : vector<1x128xi1>
    %cst_5 = arith.constant 0.000000e+00 : f32
    %12 = vector.broadcast %cst_5 : f32 to vector<32x128xf32>
    %cst_6 = arith.constant 1.000000e+00 : f32
    %13 = vector.broadcast %cst_6 : f32 to vector<32x128xf32>
    %14 = vector.extract_strided_slice %5 {offsets = [0, 16], sizes = [32, 3], strides = [1, 1]} : vector<32x128xf32> to vector<32x3xf32>
    %cst_7 = arith.constant dense<0xFF800000> : vector<32xf32>
    %15 = vector.multi_reduction <maximumf>, %14, %cst_7 [1] : vector<32x3xf32> to vector<32xf32>
    %16 = vector.shape_cast %15 : vector<32xf32> to vector<32x1xf32>
    %17 = vector.broadcast %16 : vector<32x1xf32> to vector<32x3xf32>
    %18 = arith.subf %14, %17 : vector<32x3xf32>
    %19 = math.exp %18 : vector<32x3xf32>
    %cst_8 = arith.constant dense<0.000000e+00> : vector<32xf32>
    %20 = vector.multi_reduction <add>, %19, %cst_8 [1] : vector<32x3xf32> to vector<32xf32>
    %21 = vector.shape_cast %20 : vector<32xf32> to vector<32x1xf32>
    %c16_i32_9 = arith.constant 16 : i32
    %22 = vector.broadcast %c16_i32_9 : i32 to vector<1x128xi32>
    %23 = arith.cmpi sge, %6, %22 : vector<1x128xi32>
    %c19_i32 = arith.constant 19 : i32
    %24 = vector.broadcast %c19_i32 : i32 to vector<1x128xi32>
    %25 = arith.cmpi slt, %6, %24 : vector<1x128xi32>
    %26 = arith.andi %23, %25 : vector<1x128xi1>
    %27 = vector.shape_cast %26 : vector<1x128xi1> to vector<1x128xi1>
    %28 = vector.broadcast %27 : vector<1x128xi1> to vector<32x128xi1>
    %29 = vector.shape_cast %16 : vector<32x1xf32> to vector<32x1xf32>
    %30 = vector.broadcast %29 : vector<32x1xf32> to vector<32x128xf32>
    %31 = arith.select %28, %30, %12 : vector<32x128xi1>, vector<32x128xf32>
    %32 = vector.shape_cast %26 : vector<1x128xi1> to vector<1x128xi1>
    %33 = vector.broadcast %32 : vector<1x128xi1> to vector<32x128xi1>
    %34 = vector.shape_cast %21 : vector<32x1xf32> to vector<32x1xf32>
    %35 = vector.broadcast %34 : vector<32x1xf32> to vector<32x128xf32>
    %36 = arith.select %33, %35, %13 : vector<32x128xi1>, vector<32x128xf32>
    %37 = vector.extract_strided_slice %5 {offsets = [0, 19], sizes = [32, 3], strides = [1, 1]} : vector<32x128xf32> to vector<32x3xf32>
    %cst_10 = arith.constant dense<0xFF800000> : vector<32xf32>
    %38 = vector.multi_reduction <maximumf>, %37, %cst_10 [1] : vector<32x3xf32> to vector<32xf32>
    %39 = vector.shape_cast %38 : vector<32xf32> to vector<32x1xf32>
    %40 = vector.broadcast %39 : vector<32x1xf32> to vector<32x3xf32>
    %41 = arith.subf %37, %40 : vector<32x3xf32>
    %42 = math.exp %41 : vector<32x3xf32>
    %cst_11 = arith.constant dense<0.000000e+00> : vector<32xf32>
    %43 = vector.multi_reduction <add>, %42, %cst_11 [1] : vector<32x3xf32> to vector<32xf32>
    %44 = vector.shape_cast %43 : vector<32xf32> to vector<32x1xf32>
    %c19_i32_12 = arith.constant 19 : i32
    %45 = vector.broadcast %c19_i32_12 : i32 to vector<1x128xi32>
    %46 = arith.cmpi sge, %6, %45 : vector<1x128xi32>
    %c22_i32 = arith.constant 22 : i32
    %47 = vector.broadcast %c22_i32 : i32 to vector<1x128xi32>
    %48 = arith.cmpi slt, %6, %47 : vector<1x128xi32>
    %49 = arith.andi %46, %48 : vector<1x128xi1>
    %50 = vector.shape_cast %49 : vector<1x128xi1> to vector<1x128xi1>
    %51 = vector.broadcast %50 : vector<1x128xi1> to vector<32x128xi1>
    %52 = vector.shape_cast %39 : vector<32x1xf32> to vector<32x1xf32>
    %53 = vector.broadcast %52 : vector<32x1xf32> to vector<32x128xf32>
    %54 = arith.select %51, %53, %31 : vector<32x128xi1>, vector<32x128xf32>
    %55 = vector.shape_cast %49 : vector<1x128xi1> to vector<1x128xi1>
    %56 = vector.broadcast %55 : vector<1x128xi1> to vector<32x128xi1>
    %57 = vector.shape_cast %44 : vector<32x1xf32> to vector<32x1xf32>
    %58 = vector.broadcast %57 : vector<32x1xf32> to vector<32x128xf32>
    %59 = arith.select %56, %58, %36 : vector<32x128xi1>, vector<32x128xf32>
    %60 = vector.extract_strided_slice %5 {offsets = [0, 22], sizes = [32, 3], strides = [1, 1]} : vector<32x128xf32> to vector<32x3xf32>
    %cst_13 = arith.constant dense<0xFF800000> : vector<32xf32>
    %61 = vector.multi_reduction <maximumf>, %60, %cst_13 [1] : vector<32x3xf32> to vector<32xf32>
    %62 = vector.shape_cast %61 : vector<32xf32> to vector<32x1xf32>
    %63 = vector.broadcast %62 : vector<32x1xf32> to vector<32x3xf32>
    %64 = arith.subf %60, %63 : vector<32x3xf32>
    %65 = math.exp %64 : vector<32x3xf32>
    %cst_14 = arith.constant dense<0.000000e+00> : vector<32xf32>
    %66 = vector.multi_reduction <add>, %65, %cst_14 [1] : vector<32x3xf32> to vector<32xf32>
    %67 = vector.shape_cast %66 : vector<32xf32> to vector<32x1xf32>
    %c22_i32_15 = arith.constant 22 : i32
    %68 = vector.broadcast %c22_i32_15 : i32 to vector<1x128xi32>
    %69 = arith.cmpi sge, %6, %68 : vector<1x128xi32>
    %c25_i32 = arith.constant 25 : i32
    %70 = vector.broadcast %c25_i32 : i32 to vector<1x128xi32>
    %71 = arith.cmpi slt, %6, %70 : vector<1x128xi32>
    %72 = arith.andi %69, %71 : vector<1x128xi1>
    %73 = vector.shape_cast %72 : vector<1x128xi1> to vector<1x128xi1>
    %74 = vector.broadcast %73 : vector<1x128xi1> to vector<32x128xi1>
    %75 = vector.shape_cast %62 : vector<32x1xf32> to vector<32x1xf32>
    %76 = vector.broadcast %75 : vector<32x1xf32> to vector<32x128xf32>
    %77 = arith.select %74, %76, %54 : vector<32x128xi1>, vector<32x128xf32>
    %78 = vector.shape_cast %72 : vector<1x128xi1> to vector<1x128xi1>
    %79 = vector.broadcast %78 : vector<1x128xi1> to vector<32x128xi1>
    %80 = vector.shape_cast %67 : vector<32x1xf32> to vector<32x1xf32>
    %81 = vector.broadcast %80 : vector<32x1xf32> to vector<32x128xf32>
    %82 = arith.select %79, %81, %59 : vector<32x128xi1>, vector<32x128xf32>
    %83 = vector.extract_strided_slice %5 {offsets = [0, 25], sizes = [32, 3], strides = [1, 1]} : vector<32x128xf32> to vector<32x3xf32>
    %cst_16 = arith.constant dense<0xFF800000> : vector<32xf32>
    %84 = vector.multi_reduction <maximumf>, %83, %cst_16 [1] : vector<32x3xf32> to vector<32xf32>
    %85 = vector.shape_cast %84 : vector<32xf32> to vector<32x1xf32>
    %86 = vector.broadcast %85 : vector<32x1xf32> to vector<32x3xf32>
    %87 = arith.subf %83, %86 : vector<32x3xf32>
    %88 = math.exp %87 : vector<32x3xf32>
    %cst_17 = arith.constant dense<0.000000e+00> : vector<32xf32>
    %89 = vector.multi_reduction <add>, %88, %cst_17 [1] : vector<32x3xf32> to vector<32xf32>
    %90 = vector.shape_cast %89 : vector<32xf32> to vector<32x1xf32>
    %c25_i32_18 = arith.constant 25 : i32
    %91 = vector.broadcast %c25_i32_18 : i32 to vector<1x128xi32>
    %92 = arith.cmpi sge, %6, %91 : vector<1x128xi32>
    %c28_i32_19 = arith.constant 28 : i32
    %93 = vector.broadcast %c28_i32_19 : i32 to vector<1x128xi32>
    %94 = arith.cmpi slt, %6, %93 : vector<1x128xi32>
    %95 = arith.andi %92, %94 : vector<1x128xi1>
    %96 = vector.shape_cast %95 : vector<1x128xi1> to vector<1x128xi1>
    %97 = vector.broadcast %96 : vector<1x128xi1> to vector<32x128xi1>
    %98 = vector.shape_cast %85 : vector<32x1xf32> to vector<32x1xf32>
    %99 = vector.broadcast %98 : vector<32x1xf32> to vector<32x128xf32>
    %100 = arith.select %97, %99, %77 : vector<32x128xi1>, vector<32x128xf32>
    %101 = vector.shape_cast %95 : vector<1x128xi1> to vector<1x128xi1>
    %102 = vector.broadcast %101 : vector<1x128xi1> to vector<32x128xi1>
    %103 = vector.shape_cast %90 : vector<32x1xf32> to vector<32x1xf32>
    %104 = vector.broadcast %103 : vector<32x1xf32> to vector<32x128xf32>
    %105 = arith.select %102, %104, %82 : vector<32x128xi1>, vector<32x128xf32>
    %106 = arith.subf %5, %100 : vector<32x128xf32>
    %107 = math.exp %106 : vector<32x128xf32>
    %108 = tpu.reciprocal %105 {approx = true} : vector<32x128xf32> -> vector<32x128xf32>
    %109 = arith.mulf %107, %108 : vector<32x128xf32>
    %110 = vector.shape_cast %11 : vector<1x128xi1> to vector<1x128xi1>
    %111 = vector.broadcast %110 : vector<1x128xi1> to vector<32x128xi1>
    %112 = arith.select %111, %109, %5 : vector<32x128xi1>, vector<32x128xf32>
    %c0_20 = arith.constant 0 : index
    %c0_21 = arith.constant 0 : index
    %113 = vector.load %arg4[%c0_20, %c0_21] : memref<32x128xf32, #tpu.memory_space<vmem>>, vector<32x128xf32>
    tpu.vector_store %arg4[%c0_20, %c0_21], %112 {strides = array<i32>} : memref<32x128xf32, #tpu.memory_space<vmem>>, vector<32x128xf32>,
    return
  }
  func.func @transform_0(%arg0: i32) -> (i32, i32) {
    %c0_i32 = arith.constant 0 : i32
    %c0_i32_0 = arith.constant 0 : i32
    return %arg0, %c0_i32 : i32, i32
  }
  func.func @transform_1(%arg0: i32) -> (i32, i32) {
    %c0_i32 = arith.constant 0 : i32
    %c0_i32_0 = arith.constant 0 : i32
    %c0_i32_1 = arith.constant 0 : i32
    return %c0_i32, %c0_i32_0 : i32, i32
  }
  func.func @transform_2(%arg0: i32) -> (i32, i32) {
    %c0_i32 = arith.constant 0 : i32
    %c0_i32_0 = arith.constant 0 : i32
    %c0_i32_1 = arith.constant 0 : i32
    return %c0_i32, %c0_i32_0 : i32, i32
  }
  func.func @transform_3(%arg0: i32) -> (i32, i32) {
    %c0_i32 = arith.constant 0 : i32
    %c0_i32_0 = arith.constant 0 : i32
    return %arg0, %c0_i32 : i32, i32
  }
}

module attributes {stable_mosaic.version = 11 : i64} {
  func.func @_head_kernel(%arg0: i32, %arg1: memref<128x144xbf16, #tpu.memory_space<vmem>>, %arg2: memref<144x128xbf16, #tpu.memory_space<vmem>>, %arg3: memref<1x128xf32, #tpu.memory_space<vmem>>, %arg4: memref<128x128xf32, #tpu.memory_space<vmem>>) attributes {dimension_semantics = [#tpu.dimension_semantics<parallel>], iteration_bounds = array<i64: 1>, scalar_prefetch = 0 : i64, scratch_operands = 0 : i64, tpu.core_type = #tpu.core_type<tc>, window_params = [{transform_indices = @transform_0, window_bounds = array<i64: 128, 144>}, {pipeline_mode = #tpu.pipeline_mode<synchronous>, transform_indices = @transform_1, window_bounds = array<i64: 144, 128>}, {pipeline_mode = #tpu.pipeline_mode<synchronous>, transform_indices = @transform_2, window_bounds = array<i64: 1, 128>}, {transform_indices = @transform_3, window_bounds = array<i64: 128, 128>}]} {
    %c0 = arith.constant 0 : index
    %c0_0 = arith.constant 0 : index
    %0 = vector.load %arg1[%c0, %c0_0] : memref<128x144xbf16, #tpu.memory_space<vmem>>, vector<128x144xbf16>
    %c0_1 = arith.constant 0 : index
    %c0_2 = arith.constant 0 : index
    %1 = vector.load %arg2[%c0_1, %c0_2] : memref<144x128xbf16, #tpu.memory_space<vmem>>, vector<144x128xbf16>
    %cst = arith.constant dense<0.000000e+00> : vector<128x128xf32>
    %2 = tpu.matmul %0, %1, %cst {dimension_numbers = #tpu.dot_dimension_numbers<[1], [0], [0], [1], [0, 0, 1, 1], [], []>} : vector<128x144xbf16>, vector<144x128xbf16>, vector<128x128xf32> -> vector<128x128xf32>
    %c0_3 = arith.constant 0 : index
    %c0_4 = arith.constant 0 : index
    %3 = vector.load %arg3[%c0_3, %c0_4] : memref<1x128xf32, #tpu.memory_space<vmem>>, vector<1x128xf32>
    %4 = vector.broadcast %3 : vector<1x128xf32> to vector<128x128xf32>
    %5 = arith.addf %2, %4 : vector<128x128xf32>
    %6 = tpu.iota {dimensions = array<i32: 1>} : vector<1x128xi32>
    %c16_i32 = arith.constant 16 : i32
    %7 = vector.broadcast %c16_i32 : i32 to vector<1x128xi32>
    %8 = arith.cmpi sge, %6, %7 : vector<1x128xi32>
    %c28_i32 = arith.constant 28 : i32
    %9 = vector.broadcast %c28_i32 : i32 to vector<1x128xi32>
    %10 = arith.cmpi slt, %6, %9 : vector<1x128xi32>
    %11 = arith.andi %8, %10 : vector<1x128xi1>
    %cst_5 = arith.constant 0.000000e+00 : f32
    %12 = vector.broadcast %cst_5 : f32 to vector<128x128xf32>
    %cst_6 = arith.constant 1.000000e+00 : f32
    %13 = vector.broadcast %cst_6 : f32 to vector<128x128xf32>
    %14 = vector.extract_strided_slice %5 {offsets = [0, 16], sizes = [128, 3], strides = [1, 1]} : vector<128x128xf32> to vector<128x3xf32>
    %cst_7 = arith.constant dense<0xFF800000> : vector<128xf32>
    %15 = vector.multi_reduction <maximumf>, %14, %cst_7 [1] : vector<128x3xf32> to vector<128xf32>
    %16 = vector.shape_cast %15 : vector<128xf32> to vector<128x1xf32>
    %17 = vector.broadcast %16 : vector<128x1xf32> to vector<128x3xf32>
    %18 = arith.subf %14, %17 : vector<128x3xf32>
    %19 = math.exp %18 : vector<128x3xf32>
    %cst_8 = arith.constant dense<0.000000e+00> : vector<128xf32>
    %20 = vector.multi_reduction <add>, %19, %cst_8 [1] : vector<128x3xf32> to vector<128xf32>
    %21 = vector.shape_cast %20 : vector<128xf32> to vector<128x1xf32>
    %c16_i32_9 = arith.constant 16 : i32
    %22 = vector.broadcast %c16_i32_9 : i32 to vector<1x128xi32>
    %23 = arith.cmpi sge, %6, %22 : vector<1x128xi32>
    %c19_i32 = arith.constant 19 : i32
    %24 = vector.broadcast %c19_i32 : i32 to vector<1x128xi32>
    %25 = arith.cmpi slt, %6, %24 : vector<1x128xi32>
    %26 = arith.andi %23, %25 : vector<1x128xi1>
    %27 = vector.shape_cast %26 : vector<1x128xi1> to vector<1x128xi1>
    %28 = vector.broadcast %27 : vector<1x128xi1> to vector<128x128xi1>
    %29 = vector.shape_cast %16 : vector<128x1xf32> to vector<128x1xf32>
    %30 = vector.broadcast %29 : vector<128x1xf32> to vector<128x128xf32>
    %31 = arith.select %28, %30, %12 : vector<128x128xi1>, vector<128x128xf32>
    %32 = vector.shape_cast %26 : vector<1x128xi1> to vector<1x128xi1>
    %33 = vector.broadcast %32 : vector<1x128xi1> to vector<128x128xi1>
    %34 = vector.shape_cast %21 : vector<128x1xf32> to vector<128x1xf32>
    %35 = vector.broadcast %34 : vector<128x1xf32> to vector<128x128xf32>
    %36 = arith.select %33, %35, %13 : vector<128x128xi1>, vector<128x128xf32>
    %37 = vector.extract_strided_slice %5 {offsets = [0, 19], sizes = [128, 3], strides = [1, 1]} : vector<128x128xf32> to vector<128x3xf32>
    %cst_10 = arith.constant dense<0xFF800000> : vector<128xf32>
    %38 = vector.multi_reduction <maximumf>, %37, %cst_10 [1] : vector<128x3xf32> to vector<128xf32>
    %39 = vector.shape_cast %38 : vector<128xf32> to vector<128x1xf32>
    %40 = vector.broadcast %39 : vector<128x1xf32> to vector<128x3xf32>
    %41 = arith.subf %37, %40 : vector<128x3xf32>
    %42 = math.exp %41 : vector<128x3xf32>
    %cst_11 = arith.constant dense<0.000000e+00> : vector<128xf32>
    %43 = vector.multi_reduction <add>, %42, %cst_11 [1] : vector<128x3xf32> to vector<128xf32>
    %44 = vector.shape_cast %43 : vector<128xf32> to vector<128x1xf32>
    %c19_i32_12 = arith.constant 19 : i32
    %45 = vector.broadcast %c19_i32_12 : i32 to vector<1x128xi32>
    %46 = arith.cmpi sge, %6, %45 : vector<1x128xi32>
    %c22_i32 = arith.constant 22 : i32
    %47 = vector.broadcast %c22_i32 : i32 to vector<1x128xi32>
    %48 = arith.cmpi slt, %6, %47 : vector<1x128xi32>
    %49 = arith.andi %46, %48 : vector<1x128xi1>
    %50 = vector.shape_cast %49 : vector<1x128xi1> to vector<1x128xi1>
    %51 = vector.broadcast %50 : vector<1x128xi1> to vector<128x128xi1>
    %52 = vector.shape_cast %39 : vector<128x1xf32> to vector<128x1xf32>
    %53 = vector.broadcast %52 : vector<128x1xf32> to vector<128x128xf32>
    %54 = arith.select %51, %53, %31 : vector<128x128xi1>, vector<128x128xf32>
    %55 = vector.shape_cast %49 : vector<1x128xi1> to vector<1x128xi1>
    %56 = vector.broadcast %55 : vector<1x128xi1> to vector<128x128xi1>
    %57 = vector.shape_cast %44 : vector<128x1xf32> to vector<128x1xf32>
    %58 = vector.broadcast %57 : vector<128x1xf32> to vector<128x128xf32>
    %59 = arith.select %56, %58, %36 : vector<128x128xi1>, vector<128x128xf32>
    %60 = vector.extract_strided_slice %5 {offsets = [0, 22], sizes = [128, 3], strides = [1, 1]} : vector<128x128xf32> to vector<128x3xf32>
    %cst_13 = arith.constant dense<0xFF800000> : vector<128xf32>
    %61 = vector.multi_reduction <maximumf>, %60, %cst_13 [1] : vector<128x3xf32> to vector<128xf32>
    %62 = vector.shape_cast %61 : vector<128xf32> to vector<128x1xf32>
    %63 = vector.broadcast %62 : vector<128x1xf32> to vector<128x3xf32>
    %64 = arith.subf %60, %63 : vector<128x3xf32>
    %65 = math.exp %64 : vector<128x3xf32>
    %cst_14 = arith.constant dense<0.000000e+00> : vector<128xf32>
    %66 = vector.multi_reduction <add>, %65, %cst_14 [1] : vector<128x3xf32> to vector<128xf32>
    %67 = vector.shape_cast %66 : vector<128xf32> to vector<128x1xf32>
    %c22_i32_15 = arith.constant 22 : i32
    %68 = vector.broadcast %c22_i32_15 : i32 to vector<1x128xi32>
    %69 = arith.cmpi sge, %6, %68 : vector<1x128xi32>
    %c25_i32 = arith.constant 25 : i32
    %70 = vector.broadcast %c25_i32 : i32 to vector<1x128xi32>
    %71 = arith.cmpi slt, %6, %70 : vector<1x128xi32>
    %72 = arith.andi %69, %71 : vector<1x128xi1>
    %73 = vector.shape_cast %72 : vector<1x128xi1> to vector<1x128xi1>
    %74 = vector.broadcast %73 : vector<1x128xi1> to vector<128x128xi1>
    %75 = vector.shape_cast %62 : vector<128x1xf32> to vector<128x1xf32>
    %76 = vector.broadcast %75 : vector<128x1xf32> to vector<128x128xf32>
    %77 = arith.select %74, %76, %54 : vector<128x128xi1>, vector<128x128xf32>
    %78 = vector.shape_cast %72 : vector<1x128xi1> to vector<1x128xi1>
    %79 = vector.broadcast %78 : vector<1x128xi1> to vector<128x128xi1>
    %80 = vector.shape_cast %67 : vector<128x1xf32> to vector<128x1xf32>
    %81 = vector.broadcast %80 : vector<128x1xf32> to vector<128x128xf32>
    %82 = arith.select %79, %81, %59 : vector<128x128xi1>, vector<128x128xf32>
    %83 = vector.extract_strided_slice %5 {offsets = [0, 25], sizes = [128, 3], strides = [1, 1]} : vector<128x128xf32> to vector<128x3xf32>
    %cst_16 = arith.constant dense<0xFF800000> : vector<128xf32>
    %84 = vector.multi_reduction <maximumf>, %83, %cst_16 [1] : vector<128x3xf32> to vector<128xf32>
    %85 = vector.shape_cast %84 : vector<128xf32> to vector<128x1xf32>
    %86 = vector.broadcast %85 : vector<128x1xf32> to vector<128x3xf32>
    %87 = arith.subf %83, %86 : vector<128x3xf32>
    %88 = math.exp %87 : vector<128x3xf32>
    %cst_17 = arith.constant dense<0.000000e+00> : vector<128xf32>
    %89 = vector.multi_reduction <add>, %88, %cst_17 [1] : vector<128x3xf32> to vector<128xf32>
    %90 = vector.shape_cast %89 : vector<128xf32> to vector<128x1xf32>
    %c25_i32_18 = arith.constant 25 : i32
    %91 = vector.broadcast %c25_i32_18 : i32 to vector<1x128xi32>
    %92 = arith.cmpi sge, %6, %91 : vector<1x128xi32>
    %c28_i32_19 = arith.constant 28 : i32
    %93 = vector.broadcast %c28_i32_19 : i32 to vector<1x128xi32>
    %94 = arith.cmpi slt, %6, %93 : vector<1x128xi32>
    %95 = arith.andi %92, %94 : vector<1x128xi1>
    %96 = vector.shape_cast %95 : vector<1x128xi1> to vector<1x128xi1>
    %97 = vector.broadcast %96 : vector<1x128xi1> to vector<128x128xi1>
    %98 = vector.shape_cast %85 : vector<128x1xf32> to vector<128x1xf32>
    %99 = vector.broadcast %98 : vector<128x1xf32> to vector<128x128xf32>
    %100 = arith.select %97, %99, %77 : vector<128x128xi1>, vector<128x128xf32>
    %101 = vector.shape_cast %95 : vector<1x128xi1> to vector<1x128xi1>
    %102 = vector.broadcast %101 : vector<1x128xi1> to vector<128x128xi1>
    %103 = vector.shape_cast %90 : vector<128x1xf32> to vector<128x1xf32>
    %104 = vector.broadcast %103 : vector<128x1xf32> to vector<128x128xf32>
    %105 = arith.select %102, %104, %82 : vector<128x128xi1>, vector<128x128xf32>
    %106 = arith.subf %5, %100 : vector<128x128xf32>
    %107 = math.exp %106 : vector<128x128xf32>
    %108 = tpu.reciprocal %105 {approx = true} : vector<128x128xf32> -> vector<128x128xf32>
    %109 = arith.mulf %107, %108 : vector<128x128xf32>
    %110 = vector.shape_cast %11 : vector<1x128xi1> to vector<1x128xi1>
    %111 = vector.broadcast %110 : vector<1x128xi1> to vector<128x128xi1>
    %112 = arith.select %111, %109, %5 : vector<128x128xi1>, vector<128x128xf32>
    %c0_20 = arith.constant 0 : index
    %c0_21 = arith.constant 0 : index
    %113 = vector.load %arg4[%c0_20, %c0_21] : memref<128x128xf32, #tpu.memory_space<vmem>>, vector<128x128xf32>
    tpu.vector_store %arg4[%c0_20, %c0_21], %112 {strides = array<i32>} : memref<128x128xf32, #tpu.memory_space<vmem>>, vector<128x128xf32>,
    return
  }
  func.func @transform_0(%arg0: i32) -> (i32, i32) {
    %c0_i32 = arith.constant 0 : i32
    %c0_i32_0 = arith.constant 0 : i32
    return %arg0, %c0_i32 : i32, i32
  }
  func.func @transform_1(%arg0: i32) -> (i32, i32) {
    %c0_i32 = arith.constant 0 : i32
    %c0_i32_0 = arith.constant 0 : i32
    %c0_i32_1 = arith.constant 0 : i32
    return %c0_i32, %c0_i32_0 : i32, i32
  }
  func.func @transform_2(%arg0: i32) -> (i32, i32) {
    %c0_i32 = arith.constant 0 : i32
    %c0_i32_0 = arith.constant 0 : i32
    %c0_i32_1 = arith.constant 0 : i32
    return %c0_i32, %c0_i32_0 : i32, i32
  }
  func.func @transform_3(%arg0: i32) -> (i32, i32) {
    %c0_i32 = arith.constant 0 : i32
    %c0_i32_0 = arith.constant 0 : i32
    return %arg0, %c0_i32 : i32, i32
  }
}

module attributes {stable_mosaic.version = 11 : i64} {
  func.func @_head_kernel(%arg0: i32, %arg1: memref<256x72xbf16, #tpu.memory_space<vmem>>, %arg2: memref<72x128xbf16, #tpu.memory_space<vmem>>, %arg3: memref<1x128xf32, #tpu.memory_space<vmem>>, %arg4: memref<256x128xf32, #tpu.memory_space<vmem>>) attributes {dimension_semantics = [#tpu.dimension_semantics<parallel>], iteration_bounds = array<i64: 2>, scalar_prefetch = 0 : i64, scratch_operands = 0 : i64, tpu.core_type = #tpu.core_type<tc>, window_params = [{transform_indices = @transform_0, window_bounds = array<i64: 256, 72>}, {pipeline_mode = #tpu.pipeline_mode<synchronous>, transform_indices = @transform_1, window_bounds = array<i64: 72, 128>}, {pipeline_mode = #tpu.pipeline_mode<synchronous>, transform_indices = @transform_2, window_bounds = array<i64: 1, 128>}, {transform_indices = @transform_3, window_bounds = array<i64: 256, 128>}]} {
    %c0 = arith.constant 0 : index
    %c0_0 = arith.constant 0 : index
    %0 = vector.load %arg1[%c0, %c0_0] : memref<256x72xbf16, #tpu.memory_space<vmem>>, vector<256x72xbf16>
    %c0_1 = arith.constant 0 : index
    %c0_2 = arith.constant 0 : index
    %1 = vector.load %arg2[%c0_1, %c0_2] : memref<72x128xbf16, #tpu.memory_space<vmem>>, vector<72x128xbf16>
    %cst = arith.constant dense<0.000000e+00> : vector<256x128xf32>
    %2 = tpu.matmul %0, %1, %cst {dimension_numbers = #tpu.dot_dimension_numbers<[1], [0], [0], [1], [0, 0, 1, 1], [], []>} : vector<256x72xbf16>, vector<72x128xbf16>, vector<256x128xf32> -> vector<256x128xf32>
    %c0_3 = arith.constant 0 : index
    %c0_4 = arith.constant 0 : index
    %3 = vector.load %arg3[%c0_3, %c0_4] : memref<1x128xf32, #tpu.memory_space<vmem>>, vector<1x128xf32>
    %4 = vector.broadcast %3 : vector<1x128xf32> to vector<256x128xf32>
    %5 = arith.addf %2, %4 : vector<256x128xf32>
    %6 = tpu.iota {dimensions = array<i32: 1>} : vector<1x128xi32>
    %c16_i32 = arith.constant 16 : i32
    %7 = vector.broadcast %c16_i32 : i32 to vector<1x128xi32>
    %8 = arith.cmpi sge, %6, %7 : vector<1x128xi32>
    %c28_i32 = arith.constant 28 : i32
    %9 = vector.broadcast %c28_i32 : i32 to vector<1x128xi32>
    %10 = arith.cmpi slt, %6, %9 : vector<1x128xi32>
    %11 = arith.andi %8, %10 : vector<1x128xi1>
    %cst_5 = arith.constant 0.000000e+00 : f32
    %12 = vector.broadcast %cst_5 : f32 to vector<256x128xf32>
    %cst_6 = arith.constant 1.000000e+00 : f32
    %13 = vector.broadcast %cst_6 : f32 to vector<256x128xf32>
    %14 = vector.extract_strided_slice %5 {offsets = [0, 16], sizes = [256, 3], strides = [1, 1]} : vector<256x128xf32> to vector<256x3xf32>
    %cst_7 = arith.constant dense<0xFF800000> : vector<256xf32>
    %15 = vector.multi_reduction <maximumf>, %14, %cst_7 [1] : vector<256x3xf32> to vector<256xf32>
    %16 = vector.shape_cast %15 : vector<256xf32> to vector<256x1xf32>
    %17 = vector.broadcast %16 : vector<256x1xf32> to vector<256x3xf32>
    %18 = arith.subf %14, %17 : vector<256x3xf32>
    %19 = math.exp %18 : vector<256x3xf32>
    %cst_8 = arith.constant dense<0.000000e+00> : vector<256xf32>
    %20 = vector.multi_reduction <add>, %19, %cst_8 [1] : vector<256x3xf32> to vector<256xf32>
    %21 = vector.shape_cast %20 : vector<256xf32> to vector<256x1xf32>
    %c16_i32_9 = arith.constant 16 : i32
    %22 = vector.broadcast %c16_i32_9 : i32 to vector<1x128xi32>
    %23 = arith.cmpi sge, %6, %22 : vector<1x128xi32>
    %c19_i32 = arith.constant 19 : i32
    %24 = vector.broadcast %c19_i32 : i32 to vector<1x128xi32>
    %25 = arith.cmpi slt, %6, %24 : vector<1x128xi32>
    %26 = arith.andi %23, %25 : vector<1x128xi1>
    %27 = vector.shape_cast %26 : vector<1x128xi1> to vector<1x128xi1>
    %28 = vector.broadcast %27 : vector<1x128xi1> to vector<256x128xi1>
    %29 = vector.shape_cast %16 : vector<256x1xf32> to vector<256x1xf32>
    %30 = vector.broadcast %29 : vector<256x1xf32> to vector<256x128xf32>
    %31 = arith.select %28, %30, %12 : vector<256x128xi1>, vector<256x128xf32>
    %32 = vector.shape_cast %26 : vector<1x128xi1> to vector<1x128xi1>
    %33 = vector.broadcast %32 : vector<1x128xi1> to vector<256x128xi1>
    %34 = vector.shape_cast %21 : vector<256x1xf32> to vector<256x1xf32>
    %35 = vector.broadcast %34 : vector<256x1xf32> to vector<256x128xf32>
    %36 = arith.select %33, %35, %13 : vector<256x128xi1>, vector<256x128xf32>
    %37 = vector.extract_strided_slice %5 {offsets = [0, 19], sizes = [256, 3], strides = [1, 1]} : vector<256x128xf32> to vector<256x3xf32>
    %cst_10 = arith.constant dense<0xFF800000> : vector<256xf32>
    %38 = vector.multi_reduction <maximumf>, %37, %cst_10 [1] : vector<256x3xf32> to vector<256xf32>
    %39 = vector.shape_cast %38 : vector<256xf32> to vector<256x1xf32>
    %40 = vector.broadcast %39 : vector<256x1xf32> to vector<256x3xf32>
    %41 = arith.subf %37, %40 : vector<256x3xf32>
    %42 = math.exp %41 : vector<256x3xf32>
    %cst_11 = arith.constant dense<0.000000e+00> : vector<256xf32>
    %43 = vector.multi_reduction <add>, %42, %cst_11 [1] : vector<256x3xf32> to vector<256xf32>
    %44 = vector.shape_cast %43 : vector<256xf32> to vector<256x1xf32>
    %c19_i32_12 = arith.constant 19 : i32
    %45 = vector.broadcast %c19_i32_12 : i32 to vector<1x128xi32>
    %46 = arith.cmpi sge, %6, %45 : vector<1x128xi32>
    %c22_i32 = arith.constant 22 : i32
    %47 = vector.broadcast %c22_i32 : i32 to vector<1x128xi32>
    %48 = arith.cmpi slt, %6, %47 : vector<1x128xi32>
    %49 = arith.andi %46, %48 : vector<1x128xi1>
    %50 = vector.shape_cast %49 : vector<1x128xi1> to vector<1x128xi1>
    %51 = vector.broadcast %50 : vector<1x128xi1> to vector<256x128xi1>
    %52 = vector.shape_cast %39 : vector<256x1xf32> to vector<256x1xf32>
    %53 = vector.broadcast %52 : vector<256x1xf32> to vector<256x128xf32>
    %54 = arith.select %51, %53, %31 : vector<256x128xi1>, vector<256x128xf32>
    %55 = vector.shape_cast %49 : vector<1x128xi1> to vector<1x128xi1>
    %56 = vector.broadcast %55 : vector<1x128xi1> to vector<256x128xi1>
    %57 = vector.shape_cast %44 : vector<256x1xf32> to vector<256x1xf32>
    %58 = vector.broadcast %57 : vector<256x1xf32> to vector<256x128xf32>
    %59 = arith.select %56, %58, %36 : vector<256x128xi1>, vector<256x128xf32>
    %60 = vector.extract_strided_slice %5 {offsets = [0, 22], sizes = [256, 3], strides = [1, 1]} : vector<256x128xf32> to vector<256x3xf32>
    %cst_13 = arith.constant dense<0xFF800000> : vector<256xf32>
    %61 = vector.multi_reduction <maximumf>, %60, %cst_13 [1] : vector<256x3xf32> to vector<256xf32>
    %62 = vector.shape_cast %61 : vector<256xf32> to vector<256x1xf32>
    %63 = vector.broadcast %62 : vector<256x1xf32> to vector<256x3xf32>
    %64 = arith.subf %60, %63 : vector<256x3xf32>
    %65 = math.exp %64 : vector<256x3xf32>
    %cst_14 = arith.constant dense<0.000000e+00> : vector<256xf32>
    %66 = vector.multi_reduction <add>, %65, %cst_14 [1] : vector<256x3xf32> to vector<256xf32>
    %67 = vector.shape_cast %66 : vector<256xf32> to vector<256x1xf32>
    %c22_i32_15 = arith.constant 22 : i32
    %68 = vector.broadcast %c22_i32_15 : i32 to vector<1x128xi32>
    %69 = arith.cmpi sge, %6, %68 : vector<1x128xi32>
    %c25_i32 = arith.constant 25 : i32
    %70 = vector.broadcast %c25_i32 : i32 to vector<1x128xi32>
    %71 = arith.cmpi slt, %6, %70 : vector<1x128xi32>
    %72 = arith.andi %69, %71 : vector<1x128xi1>
    %73 = vector.shape_cast %72 : vector<1x128xi1> to vector<1x128xi1>
    %74 = vector.broadcast %73 : vector<1x128xi1> to vector<256x128xi1>
    %75 = vector.shape_cast %62 : vector<256x1xf32> to vector<256x1xf32>
    %76 = vector.broadcast %75 : vector<256x1xf32> to vector<256x128xf32>
    %77 = arith.select %74, %76, %54 : vector<256x128xi1>, vector<256x128xf32>
    %78 = vector.shape_cast %72 : vector<1x128xi1> to vector<1x128xi1>
    %79 = vector.broadcast %78 : vector<1x128xi1> to vector<256x128xi1>
    %80 = vector.shape_cast %67 : vector<256x1xf32> to vector<256x1xf32>
    %81 = vector.broadcast %80 : vector<256x1xf32> to vector<256x128xf32>
    %82 = arith.select %79, %81, %59 : vector<256x128xi1>, vector<256x128xf32>
    %83 = vector.extract_strided_slice %5 {offsets = [0, 25], sizes = [256, 3], strides = [1, 1]} : vector<256x128xf32> to vector<256x3xf32>
    %cst_16 = arith.constant dense<0xFF800000> : vector<256xf32>
    %84 = vector.multi_reduction <maximumf>, %83, %cst_16 [1] : vector<256x3xf32> to vector<256xf32>
    %85 = vector.shape_cast %84 : vector<256xf32> to vector<256x1xf32>
    %86 = vector.broadcast %85 : vector<256x1xf32> to vector<256x3xf32>
    %87 = arith.subf %83, %86 : vector<256x3xf32>
    %88 = math.exp %87 : vector<256x3xf32>
    %cst_17 = arith.constant dense<0.000000e+00> : vector<256xf32>
    %89 = vector.multi_reduction <add>, %88, %cst_17 [1] : vector<256x3xf32> to vector<256xf32>
    %90 = vector.shape_cast %89 : vector<256xf32> to vector<256x1xf32>
    %c25_i32_18 = arith.constant 25 : i32
    %91 = vector.broadcast %c25_i32_18 : i32 to vector<1x128xi32>
    %92 = arith.cmpi sge, %6, %91 : vector<1x128xi32>
    %c28_i32_19 = arith.constant 28 : i32
    %93 = vector.broadcast %c28_i32_19 : i32 to vector<1x128xi32>
    %94 = arith.cmpi slt, %6, %93 : vector<1x128xi32>
    %95 = arith.andi %92, %94 : vector<1x128xi1>
    %96 = vector.shape_cast %95 : vector<1x128xi1> to vector<1x128xi1>
    %97 = vector.broadcast %96 : vector<1x128xi1> to vector<256x128xi1>
    %98 = vector.shape_cast %85 : vector<256x1xf32> to vector<256x1xf32>
    %99 = vector.broadcast %98 : vector<256x1xf32> to vector<256x128xf32>
    %100 = arith.select %97, %99, %77 : vector<256x128xi1>, vector<256x128xf32>
    %101 = vector.shape_cast %95 : vector<1x128xi1> to vector<1x128xi1>
    %102 = vector.broadcast %101 : vector<1x128xi1> to vector<256x128xi1>
    %103 = vector.shape_cast %90 : vector<256x1xf32> to vector<256x1xf32>
    %104 = vector.broadcast %103 : vector<256x1xf32> to vector<256x128xf32>
    %105 = arith.select %102, %104, %82 : vector<256x128xi1>, vector<256x128xf32>
    %106 = arith.subf %5, %100 : vector<256x128xf32>
    %107 = math.exp %106 : vector<256x128xf32>
    %108 = tpu.reciprocal %105 {approx = true} : vector<256x128xf32> -> vector<256x128xf32>
    %109 = arith.mulf %107, %108 : vector<256x128xf32>
    %110 = vector.shape_cast %11 : vector<1x128xi1> to vector<1x128xi1>
    %111 = vector.broadcast %110 : vector<1x128xi1> to vector<256x128xi1>
    %112 = arith.select %111, %109, %5 : vector<256x128xi1>, vector<256x128xf32>
    %c0_20 = arith.constant 0 : index
    %c0_21 = arith.constant 0 : index
    %113 = vector.load %arg4[%c0_20, %c0_21] : memref<256x128xf32, #tpu.memory_space<vmem>>, vector<256x128xf32>
    tpu.vector_store %arg4[%c0_20, %c0_21], %112 {strides = array<i32>} : memref<256x128xf32, #tpu.memory_space<vmem>>, vector<256x128xf32>,
    return
  }
  func.func @transform_0(%arg0: i32) -> (i32, i32) {
    %c0_i32 = arith.constant 0 : i32
    %c0_i32_0 = arith.constant 0 : i32
    return %arg0, %c0_i32 : i32, i32
  }
  func.func @transform_1(%arg0: i32) -> (i32, i32) {
    %c0_i32 = arith.constant 0 : i32
    %c0_i32_0 = arith.constant 0 : i32
    %c0_i32_1 = arith.constant 0 : i32
    return %c0_i32, %c0_i32_0 : i32, i32
  }
  func.func @transform_2(%arg0: i32) -> (i32, i32) {
    %c0_i32 = arith.constant 0 : i32
    %c0_i32_0 = arith.constant 0 : i32
    %c0_i32_1 = arith.constant 0 : i32
    return %c0_i32, %c0_i32_0 : i32, i32
  }
  func.func @transform_3(%arg0: i32) -> (i32, i32) {
    %c0_i32 = arith.constant 0 : i32
    %c0_i32_0 = arith.constant 0 : i32
    return %arg0, %c0_i32 : i32, i32
  }
}

</mosaic_0001>

<llo_original>
// kernel: attssd_lite_forward.6
$region0: #{attssd_lite_forward.6}
  #allocation0 [shape = 'u32[]', space=smem, size = 0x4, offset = 0x4, fixed_abs, tag = 'smem constant byte address 0x4 - core index']
  #allocation1 [shape = 'u32[72,128]{1,0:T(1,128)}', space=vmem, size = 0x9000, scoped, tag = 'internal scratch']
  %s0 = inlined_call_operand.vmem [shape: bf16[512,27], index: 0, kind: input, shape index: {}]
  %s1 = inlined_call_operand.hbm [shape: bf16[27,128], index: 1, kind: input, shape index: {}]
  %s2 = inlined_call_operand.hbm [shape: f32[1,128], index: 2, kind: input, shape index: {}]
  %s3 = inlined_call_operand.hbm [shape: f32[1,128], index: 3, kind: input, shape index: {}]
  %s4 = inlined_call_operand.vmem [shape: f32[512,128], index: 4, kind: output, shape index: {0}]
  %s5 = inlined_call_operand.vmem [shape: f32[512,128], index: 5, kind: output, shape index: {1}]
  %6 = xla_tuple %s4, %s5
  %s7 = sld [smem:[#allocation0]]
  $region69: #{attssd_lite_forward.6} parent=0
    _
  %s9 = ssub.s32 1, %s7
  %s10 = scalar_select 0, %s9, %s7
  $region1: #{attssd_lite_forward.6} parent=0
    #allocation2 [shape = 'u8[8192]{0}', space=vmem, size = 0x2000, scoped, tag = 'input window, operand 1, single buffered']
    #allocation3 [shape = 's32[2]{0}', space=sflag, size = 0x8, scoped, tag = 'scoped memory for attssd_lite_forward.6']
    #allocation4 [shape = 'u8[512]{0}', space=vmem, size = 0x400, scoped, tag = 'input window, operand 2, single buffered']
    #allocation5 [shape = 's32[1]{0}', space=sflag, size = 0x4, scoped, tag = 'scoped memory for attssd_lite_forward.6']
    #allocation6 [shape = 'u8[512]{0}', space=vmem, size = 0x400, scoped, tag = 'input window, operand 3, single buffered']
    %11 = vsyncpa [#allocation3], 0
    %12 = vsyncpa [#allocation5], 0
    loop: start=0, step=1, limit=4
    $region2: #{attssd_lite_forward.6} parent=1 // loop_pre_header
      _
    $region3: #{attssd_lite_forward.6} parent=1 // loop_header
      %s14 = sphi 0, %s18
      %p15 = scmp.ge.s32.totalorder %s14, 4
      %s24 = sphi 0, %s26
      %s27 = sphi 0, %s24
      %s28 = sphi 0, %s27
      %s44 = sphi 0, %s28
      %s48 = sphi 0, %s48
      %s50 = sphi 0, %s48
      %s51 = sphi 0, %s50
      %s65 = sphi 0, %s51
      %s69 = sphi 0, %s69
      %s71 = sphi 0, %s69
      %s72 = sphi 0, %s71
      %s86 = sphi 0, %s72
      %s90 = sphi 0, %s90
      %s92 = sphi 0, %s90
      %s93 = sphi 0, %s92
      %s107 = sphi 0, %s93
      %s113 = sphi 0, %s115
      %s116 = sphi 0, %s113
      %s117 = sphi 0, %s116
      %s133 = sphi 0, %s117
      %s139 = sphi 0, %s141
      %s142 = sphi 0, %s139
      %s143 = sphi 0, %s142
      %s159 = sphi 0, %s143
    $region4: #{attssd_lite_forward.6} parent=1 // loop_header_branch
      %17 = sbr.rel (%p15) target = $region8
    $region5: #{attssd_lite_forward.6} parent=1 // loop_body
      %s19 = ssub.s32 %s14, 1
      %s20 = ssub.s32 %s14, 2
      %s21 = sadd.s32 %s14, 1
      %s22 = ssub.s32 %s14, %s21
      %p23 = scmp.eq.s32.totalorder %s22, 0
      %s25 = sadd.s32 %s24, 1
      %s26 = scalar_select %p23, %s24, %s25
      %p29 = pneg %p23
      %p30 = scmp.eq.s32.totalorder %s14, 1
      %p31 = por %p29, %p30
      %p32 = scmp.ne.s32.totalorder %s24, %s27
      %p33 = scmp.eq.s32.totalorder %s14, 0
      %p34 = por %p32, %p33
      %p35 = scmp.ne.s32.totalorder %s24, %s27
      %p36 = scmp.eq.s32.totalorder %s19, 1
      %p37 = por %p35, %p36
      %p38 = scmp.ne.s32.totalorder %s27, %s28
      %p39 = scmp.eq.s32.totalorder %s19, 0
      %p40 = por %p38, %p39
      %p41 = scmp.ne.s32.totalorder %s27, %s28
      %p42 = scmp.eq.s32.totalorder %s20, 1
      %p43 = por %p41, %p42
      %p45 = scmp.ne.s32.totalorder %s28, %s44
      %p46 = scmp.eq.s32.totalorder %s20, 0
      %p47 = por %p45, %p46
      %s49 = sadd.s32 %s48, 1
      %p52 = scmp.eq.s32.totalorder %s14, 1
      %p53 = scmp.ne.s32.totalorder %s48, %s50
      %p54 = scmp.eq.s32.totalorder %s14, 0
      %p55 = por %p53, %p54
      %p56 = scmp.ne.s32.totalorder %s48, %s50
      %p57 = scmp.eq.s32.totalorder %s19, 1
      %p58 = por %p56, %p57
      %p59 = scmp.ne.s32.totalorder %s50, %s51
      %p60 = scmp.eq.s32.totalorder %s19, 0
      %p61 = por %p59, %p60
      %p62 = scmp.ne.s32.totalorder %s50, %s51
      %p63 = scmp.eq.s32.totalorder %s20, 1
      %p64 = por %p62, %p63
      %p66 = scmp.ne.s32.totalorder %s51, %s65
      %p67 = scmp.eq.s32.totalorder %s20, 0
      %p68 = por %p66, %p67
      %s70 = sadd.s32 %s69, 1
      %p73 = scmp.eq.s32.totalorder %s14, 1
      %p74 = scmp.ne.s32.totalorder %s69, %s71
      %p75 = scmp.eq.s32.totalorder %s14, 0
      %p76 = por %p74, %p75
      %p77 = scmp.ne.s32.totalorder %s69, %s71
      %p78 = scmp.eq.s32.totalorder %s19, 1
      %p79 = por %p77, %p78
      %p80 = scmp.ne.s32.totalorder %s71, %s72
      %p81 = scmp.eq.s32.totalorder %s19, 0
      %p82 = por %p80, %p81
      %p83 = scmp.ne.s32.totalorder %s71, %s72
      %p84 = scmp.eq.s32.totalorder %s20, 1
      %p85 = por %p83, %p84
      %p87 = scmp.ne.s32.totalorder %s72, %s86
      %p88 = scmp.eq.s32.totalorder %s20, 0
      %p89 = por %p87, %p88
      %s91 = sadd.s32 %s90, 1
      %p94 = scmp.eq.s32.totalorder %s14, 1
      %p95 = scmp.ne.s32.totalorder %s90, %s92
      %p96 = scmp.eq.s32.totalorder %s14, 0
      %p97 = por %p95, %p96
      %p98 = scmp.ne.s32.totalorder %s90, %s92
      %p99 = scmp.eq.s32.totalorder %s19, 1
      %p100 = por %p98, %p99
      %p101 = scmp.ne.s32.totalorder %s92, %s93
      %p102 = scmp.eq.s32.totalorder %s19, 0
      %p103 = por %p101, %p102
      %p104 = scmp.ne.s32.totalorder %s92, %s93
      %p105 = scmp.eq.s32.totalorder %s20, 1
      %p106 = por %p104, %p105
      %p108 = scmp.ne.s32.totalorder %s93, %s107
      %p109 = scmp.eq.s32.totalorder %s20, 0
      %p110 = por %p108, %p109
      %s111 = ssub.s32 %s14, %s21
      %p112 = scmp.eq.s32.totalorder %s111, 0
      %s114 = sadd.s32 %s113, 1
      %s115 = scalar_select %p112, %s113, %s114
      %p118 = pneg %p112
      %p119 = scmp.eq.s32.totalorder %s14, 1
      %p120 = por %p118, %p119
      %p121 = scmp.ne.s32.totalorder %s113, %s116
      %p122 = scmp.eq.s32.totalorder %s14, 0
      %p123 = por %p121, %p122
      %p124 = scmp.ne.s32.totalorder %s113, %s116
      %p125 = scmp.eq.s32.totalorder %s19, 1
      %p126 = por %p124, %p125
      %p127 = scmp.ne.s32.totalorder %s116, %s117
      %p128 = scmp.eq.s32.totalorder %s19, 0
      %p129 = por %p127, %p128
      %p130 = scmp.ne.s32.totalorder %s116, %s117
      %p131 = scmp.eq.s32.totalorder %s20, 1
      %p132 = por %p130, %p131
      %p134 = scmp.ne.s32.totalorder %s117, %s133
      %p135 = scmp.eq.s32.totalorder %s20, 0
      %p136 = por %p134, %p135
      %s137 = ssub.s32 %s14, %s21
      %p138 = scmp.eq.s32.totalorder %s137, 0
      %s140 = sadd.s32 %s139, 1
      %s141 = scalar_select %p138, %s139, %s140
      %p144 = pneg %p138
      %p145 = scmp.eq.s32.totalorder %s14, 1
      %p146 = por %p144, %p145
      %p147 = scmp.ne.s32.totalorder %s139, %s142
      %p148 = scmp.eq.s32.totalorder %s14, 0
      %p149 = por %p147, %p148
      %p150 = scmp.ne.s32.totalorder %s139, %s142
      %p151 = scmp.eq.s32.totalorder %s19, 1
      %p152 = por %p150, %p151
      %p153 = scmp.ne.s32.totalorder %s142, %s143
      %p154 = scmp.eq.s32.totalorder %s19, 0
      %p155 = por %p153, %p154
      %p156 = scmp.ne.s32.totalorder %s142, %s143
      %p157 = scmp.eq.s32.totalorder %s20, 1
      %p158 = por %p156, %p157
      %p160 = scmp.ne.s32.totalorder %s143, %s159
      %p161 = scmp.eq.s32.totalorder %s20, 0
      %p162 = por %p160, %p161
      %p163 = scmp.le.s32.totalorder 1, %s14
      %p164 = scmp.lt.s32.totalorder %s14, 3
      %p165 = pnand %p163, %p164
      %p166 = pneg %p165
      // Predicated region
      $region9: #{attssd_lite_forward.6} parent=5 // pred_check
        _
      $region10: #{attssd_lite_forward.6} parent=5 // pred_check_branch
        %168 = sbr.rel (%p165) target = $region12
      $region11: #{attssd_lite_forward.6} parent=5 // pred_region
        %s169 = ssub.s32 %s14, 1
        // Predicated region
        $region13: #{attssd_lite_forward.6} parent=11 // pred_check
          %p170 = pneg %p61
        $region14: #{attssd_lite_forward.6} parent=11 // pred_check_branch
          %172 = sbr.rel (%p170) target = $region16
        $region15: #{attssd_lite_forward.6} parent=11 // pred_region
          %174 = vsyncadd [#allocation3], 0
          %s175 = sshll.u32 %s1, 4
          %s176 = int_to_ptr.hbm [resolvable:$true] %s175
          %s177 = sshll.u32 [#allocation2], 4
          %s178 = int_to_ptr.vmem [resolvable:$true] %s177
          %183 = dma.hbm_to_vmem [thread:$0]  %s176, 256, %s178, [#allocation3], 64, 64, 4
        $region16: #{attssd_lite_forward.6} parent=11 // pred_fallthru
          _
        // Predicated region
        $region17: #{attssd_lite_forward.6} parent=11 // pred_check
          %p184 = pneg %p82
        $region18: #{attssd_lite_forward.6} parent=11 // pred_check_branch
          %186 = sbr.rel (%p184) target = $region20
        $region19: #{attssd_lite_forward.6} parent=11 // pred_region
          %188 = vsyncadd [#allocation5], 0
          %s190 = sshll.u32 %s2, 4
          %s191 = int_to_ptr.hbm [resolvable:$true] %s190
          %s192 = sshll.u32 [#allocation4], 4
          %s193 = int_to_ptr.vmem [resolvable:$true] %s192
          %195 = dma.hbm_to_vmem [thread:$0]  %s191, 16, %s193, [#allocation5]
        $region20: #{attssd_lite_forward.6} parent=11 // pred_fallthru
          _
        // Predicated region
        $region21: #{attssd_lite_forward.6} parent=11 // pred_check
          %p196 = pneg %p103
        $region22: #{attssd_lite_forward.6} parent=11 // pred_check_branch
          %198 = sbr.rel (%p196) target = $region24
        $region23: #{attssd_lite_forward.6} parent=11 // pred_region
          %200 = vsyncadd [#allocation5], 0
          %s202 = sshll.u32 %s3, 4
          %s203 = int_to_ptr.hbm [resolvable:$true] %s202
          %s204 = sshll.u32 [#allocation6], 4
          %s205 = int_to_ptr.vmem [resolvable:$true] %s204
          %207 = dma.hbm_to_vmem [thread:$0]  %s203, 16, %s205, [#allocation5]
        $region24: #{attssd_lite_forward.6} parent=11 // pred_fallthru
          _
      $region12: #{attssd_lite_forward.6} parent=5 // pred_fallthru
        _
      %p208 = scmp.lt.s32.totalorder %s14, 2
      // Predicated region
      $region25: #{attssd_lite_forward.6} parent=5 // pred_check
        %p209 = pneg %p208
      $region26: #{attssd_lite_forward.6} parent=5 // pred_check_branch
        %211 = sbr.rel (%p209) target = $region28
      $region27: #{attssd_lite_forward.6} parent=5 // pred_region
        // Predicated region
        $region29: #{attssd_lite_forward.6} parent=27 // pred_check
          %p212 = pneg %p34
        $region30: #{attssd_lite_forward.6} parent=27 // pred_check_branch
          %214 = sbr.rel (%p212) target = $region32
        $region31: #{attssd_lite_forward.6} parent=27 // pred_region
          %s215 = smul.u32 32, %s14
          %p216 = scmp.lt.s32.totalorder %s215, 63
          %s217 = scalar_select %p216, %s215, 63
          %s218 = smul.addr %s217, 4
          %s219 = scalar_lea.vmem %s0, %s218
          %s220 = smul.u32 32, %s14
        $region32: #{attssd_lite_forward.6} parent=27 // pred_fallthru
          _
      $region28: #{attssd_lite_forward.6} parent=5 // pred_fallthru
        _
      %p221 = scmp.le.s32.totalorder 1, %s14
      %p222 = scmp.lt.s32.totalorder %s14, 3
      %p223 = pnand %p221, %p222
      %p224 = pneg %p223
      // Predicated region
      $region33: #{attssd_lite_forward.6} parent=5 // pred_check
        _
      $region34: #{attssd_lite_forward.6} parent=5 // pred_check_branch
        %226 = sbr.rel (%p223) target = $region36
      $region35: #{attssd_lite_forward.6} parent=5 // pred_region
        %s227 = ssub.s32 %s14, 1
        // Predicated region
        $region37: #{attssd_lite_forward.6} parent=35 // pred_check
          %p228 = pneg %p61
        $region38: #{attssd_lite_forward.6} parent=35 // pred_check_branch
          %230 = sbr.rel (%p228) target = $region40
        $region39: #{attssd_lite_forward.6} parent=35 // pred_region
          %232 = dma.done [#allocation3], 256
        $region40: #{attssd_lite_forward.6} parent=35 // pred_fallthru
          _
        // Predicated region
        $region41: #{attssd_lite_forward.6} parent=35 // pred_check
          %p233 = pneg %p82
        $region42: #{attssd_lite_forward.6} parent=35 // pred_check_branch
          %235 = sbr.rel (%p233) target = $region44
        $region43: #{attssd_lite_forward.6} parent=35 // pred_region
          %237 = dma.done [#allocation5], 16
        $region44: #{attssd_lite_forward.6} parent=35 // pred_fallthru
          _
        // Predicated region
        $region45: #{attssd_lite_forward.6} parent=35 // pred_check
          %p238 = pneg %p103
        $region46: #{attssd_lite_forward.6} parent=35 // pred_check_branch
          %240 = sbr.rel (%p238) target = $region48
        $region47: #{attssd_lite_forward.6} parent=35 // pred_region
          %242 = dma.done [#allocation5], 16
        $region48: #{attssd_lite_forward.6} parent=35 // pred_fallthru
          _
        %s243 = smul.u32 32, %s19
        %p244 = scmp.lt.s32.totalorder %s243, 63
        %s245 = scalar_select %p244, %s243, 63
        %s246 = smul.addr %s245, 4
        %s247 = scalar_lea.vmem %s0, %s246
        %p248 = pneg %p40
        %p249 = pneg %p37
        %p250 = pneg %p61
        %p251 = pneg %p58
        %p252 = pneg %p82
        %p253 = pneg %p79
        %p254 = pneg %p103
        %p255 = pneg %p100
        %p256 = pneg %p129
        %p257 = pneg %p126
        %s258 = smul.u32 32, %s19
        %p259 = scmp.lt.s32.totalorder %s258, 63
        %s260 = scalar_select %p259, %s258, 63
        %s261 = smul.addr %s260, 8
        %s262 = scalar_lea.vmem %s4, %s261
        %p263 = pneg %p155
        %p264 = pneg %p152
        %s265 = smul.u32 32, %s19
        %p266 = scmp.lt.s32.totalorder %s265, 63
        %s267 = scalar_select %p266, %s265, 63
        %s268 = smul.addr %s267, 8
        %s269 = scalar_lea.vmem %s5, %s268
        %s270 = smul.u32 32, %s19
        %p271 = scmp.lt.s32.totalorder %s270, 63
        %s272 = scalar_select %p271, %s270, 63
        %s273 = smul.addr %s272, 4
        %s274 = scalar_lea.vmem %s0, %s273
        %s275 = smul.u32 32, %s19
        %s276 = smul.u32 32, %s19
        %p277 = scmp.lt.s32.totalorder %s276, 63
        %s278 = scalar_select %p277, %s276, 63
        %s279 = smul.addr %s278, 8
        %s280 = scalar_lea.vmem %s4, %s279
        %s281 = smul.u32 32, %s19
        %s282 = smul.u32 32, %s19
        %p283 = scmp.lt.s32.totalorder %s282, 63
        %s284 = scalar_select %p283, %s282, 63
        %s285 = smul.addr %s284, 8
        %s286 = scalar_lea.vmem %s5, %s285
        %s287 = smul.u32 32, %s19
        %v289 = vld [vmem:[%s274] sm:$0xf]
        %v290 = vld [vmem:[%s274 + $0x4] sm:$0xf]
        %v291 = vld [vmem:[%s274 + $0x8] sm:$0xf]
        %v292 = vld [vmem:[%s274 + $0xc] sm:$0xf]
        %v293 = vld [vmem:[%s274 + $0x10] sm:$0xf]
        %v294 = vld [vmem:[%s274 + $0x14] sm:$0xf]
        %v295 = vld [vmem:[%s274 + $0x18] sm:$0xf]
        %v296 = vld [vmem:[%s274 + $0x1c] sm:$0xf]
        %v297 = vld [vmem:[%s274 + $0x20] sm:$0xf]
        %v298 = vld [vmem:[%s274 + $0x24] sm:$0xf]
        %v299 = vld [vmem:[%s274 + $0x28] sm:$0xf]
        %v300 = vld [vmem:[%s274 + $0x2c] sm:$0xf]
        %v301 = vld [vmem:[%s274 + $0x30] sm:$0xf]
        %v302 = vld [vmem:[%s274 + $0x34] sm:$0xf]
        %v303 = vld [vmem:[%s274 + $0x38] sm:$0xf]
        %v304 = vld [vmem:[%s274 + $0x3c] sm:$0xf]
        %v305 = vld [vmem:[%s274 + $0x40] sm:$0xf]
        %v306 = vld [vmem:[%s274 + $0x44] sm:$0xf]
        %v307 = vld [vmem:[%s274 + $0x48] sm:$0xf]
        %v308 = vld [vmem:[%s274 + $0x4c] sm:$0xf]
        %v309 = vld [vmem:[%s274 + $0x50] sm:$0xf]
        %v310 = vld [vmem:[%s274 + $0x54] sm:$0xf]
        %v311 = vld [vmem:[%s274 + $0x58] sm:$0xf]
        %v312 = vld [vmem:[%s274 + $0x5c] sm:$0xf]
        %v313 = vld [vmem:[%s274 + $0x60] sm:$0xf]
        %v314 = vld [vmem:[%s274 + $0x64] sm:$0xf]
        %v315 = vld [vmem:[%s274 + $0x68] sm:$0xf]
        %v316 = vld [vmem:[%s274 + $0x6c] sm:$0xf]
        %v317 = vld [vmem:[%s274 + $0x70] sm:$0xf]
        %v318 = vld [vmem:[%s274 + $0x74] sm:$0xf]
        %v319 = vld [vmem:[%s274 + $0x78] sm:$0xf]
        %v320 = vld [vmem:[%s274 + $0x7c] sm:$0xf]
        %v321 = vld [vmem:[#allocation2] sm:$0xf]
        %v322 = vld [vmem:[#allocation2 + $0x4] sm:$0xf]
        %v323 = vld [vmem:[#allocation2 + $0x8] sm:$0xf]
        %v324 = vld [vmem:[#allocation2 + $0xc] sm:$0x3]
        %v325 = vld [vmem:[#allocation4] sm:$0x1]
        %v327 = vperm.slane %v325, 0
        %v361 = vunpack.c.l.b16 %v289
        %v362 = vunpack.c.l.b16 %v290
        %v363 = vunpack.c.l.b16 %v291
        %v364 = vunpack.c.l.b16 %v292
        %v365 = vunpack.c.l.b16 %v293
        %v366 = vunpack.c.l.b16 %v294
        %v367 = vunpack.c.l.b16 %v295
        %v368 = vunpack.c.l.b16 %v296
        %v369 = vunpack.c.l.b16 %v297
        %v370 = vunpack.c.l.b16 %v298
        %v371 = vunpack.c.l.b16 %v299
        %v372 = vunpack.c.l.b16 %v300
        %v373 = vunpack.c.l.b16 %v301
        %v374 = vunpack.c.l.b16 %v302
        %v375 = vunpack.c.l.b16 %v303
        %v376 = vunpack.c.l.b16 %v304
        %v377 = vunpack.c.l.b16 %v305
        %v378 = vunpack.c.l.b16 %v306
        %v379 = vunpack.c.l.b16 %v307
        %v380 = vunpack.c.l.b16 %v308
        %v381 = vunpack.c.l.b16 %v309
        %v382 = vunpack.c.l.b16 %v310
        %v383 = vunpack.c.l.b16 %v311
        %v384 = vunpack.c.l.b16 %v312
        %v385 = vunpack.c.l.b16 %v313
        %v386 = vunpack.c.l.b16 %v314
        %v387 = vunpack.c.l.b16 %v315
        %v388 = vunpack.c.l.b16 %v316
        %v389 = vunpack.c.l.b16 %v317
        %v390 = vunpack.c.l.b16 %v318
        %v391 = vunpack.c.l.b16 %v319
        %v392 = vunpack.c.l.b16 %v320
        %v393 = vpack.c.b16 %v362, %v361
        %v394 = vpack.c.b16 %v364, %v363
        %v395 = vpack.c.b16 %v366, %v365
        %v396 = vpack.c.b16 %v368, %v367
        %v397 = vpack.c.b16 %v370, %v369
        %v398 = vpack.c.b16 %v372, %v371
        %v399 = vpack.c.b16 %v374, %v373
        %v400 = vpack.c.b16 %v376, %v375
        %v401 = vpack.c.b16 %v378, %v377
        %v402 = vpack.c.b16 %v380, %v379
        %v403 = vpack.c.b16 %v382, %v381
        %v404 = vpack.c.b16 %v384, %v383
        %v405 = vpack.c.b16 %v386, %v385
        %v406 = vpack.c.b16 %v388, %v387
        %v407 = vpack.c.b16 %v390, %v389
        %v408 = vpack.c.b16 %v392, %v391
        %v413 = vunpack.c.l.b16 %v321
        %v414 = vunpack.c.l.b16 %v322
        %v415 = vunpack.c.l.b16 %v323
        %v416 = vunpack.c.l.b16 %v324
        %v417 = vpack.c.b16 %v414, %v413
        %v418 = vpack.c.b16 %v416, %v415
        %vm420 = vcmask 220160
        %v422 = vsel %vm420, %v393, 0
        %v425 = vsel %vm420, %v394, 0
        %v428 = vsel %vm420, %v395, 0
        %v431 = vsel %vm420, %v396, 0
        %v434 = vsel %vm420, %v397, 0
        %v437 = vsel %vm420, %v398, 0
        %v440 = vsel %vm420, %v399, 0
        %v443 = vsel %vm420, %v400, 0
        %v446 = vsel %vm420, %v401, 0
        %v449 = vsel %vm420, %v402, 0
        %v452 = vsel %vm420, %v403, 0
        %v455 = vsel %vm420, %v404, 0
        %v458 = vsel %vm420, %v405, 0
        %v461 = vsel %vm420, %v406, 0
        %v464 = vsel %vm420, %v407, 0
        %v467 = vsel %vm420, %v408, 0
        %vm469 = vcmask 1044480
        %vm470 = vcmask 1045504
        %v471 = vsel %vm469, 4294967295, 65535
        %v472 = vsel %vm470, %v471, 0
        %v474 = vand.u32 %v418, %v472
        %476 = vmatpush.bf16.msra.mxu0 0
        %477 = vmatpush.bf16.msra.mxu0 0
        %478 = vmatpush.bf16.msra.mxu0 0
        %479 = vmatpush.bf16.msra.mxu0 0
        %480 = vmatpush.bf16.msra.mxu0 0
        %481 = vmatpush.bf16.msra.mxu0 0
        %482 = vmatpush.bf16.msra.mxu0 %v474
        %483 = vmatpush.bf16.msra.mxu0 %v417
        %484 = vmatmul.bf16.gmra.mxu0 %v422
        %v485 = vpop.f32.mrf.mxu0
        %v486 = vadd.f32 %v327, %v485
        %v487 = vpop.f32.mrf.mxu0
        %v488 = vadd.f32 %v327, %v487
        %489 = vmatmul.bf16.gmra.mxu0 %v425
        %v490 = vpop.f32.mrf.mxu0
        %v491 = vadd.f32 %v327, %v490
        %v492 = vpop.f32.mrf.mxu0
        %v493 = vadd.f32 %v327, %v492
        %494 = vmatmul.bf16.gmra.mxu0 %v428
        %v495 = vpop.f32.mrf.mxu0
        %v496 = vadd.f32 %v327, %v495
        %v497 = vpop.f32.mrf.mxu0
        %v498 = vadd.f32 %v327, %v497
        %499 = vmatmul.bf16.gmra.mxu0 %v431
        %v500 = vpop.f32.mrf.mxu0
        %v501 = vadd.f32 %v327, %v500
        %v502 = vpop.f32.mrf.mxu0
        %v503 = vadd.f32 %v327, %v502
        %504 = vmatmul.bf16.gmra.mxu0 %v434
        %v505 = vpop.f32.mrf.mxu0
        %v506 = vadd.f32 %v327, %v505
        %v507 = vpop.f32.mrf.mxu0
        %v508 = vadd.f32 %v327, %v507
        %509 = vmatmul.bf16.gmra.mxu0 %v437
        %v510 = vpop.f32.mrf.mxu0
        %v511 = vadd.f32 %v327, %v510
        %v512 = vpop.f32.mrf.mxu0
        %v513 = vadd.f32 %v327, %v512
        %514 = vmatmul.bf16.gmra.mxu0 %v440
        %v515 = vpop.f32.mrf.mxu0
        %v516 = vadd.f32 %v327, %v515
        %v517 = vpop.f32.mrf.mxu0
        %v518 = vadd.f32 %v327, %v517
        %519 = vmatmul.bf16.gmra.mxu0 %v443
        %v520 = vpop.f32.mrf.mxu0
        %v521 = vadd.f32 %v327, %v520
        %v522 = vpop.f32.mrf.mxu0
        %v523 = vadd.f32 %v327, %v522
        %524 = vmatmul.bf16.gmra.mxu0 %v446
        %v525 = vpop.f32.mrf.mxu0
        %v526 = vadd.f32 %v327, %v525
        %v527 = vpop.f32.mrf.mxu0
        %v528 = vadd.f32 %v327, %v527
        %529 = vmatmul.bf16.gmra.mxu0 %v449
        %v530 = vpop.f32.mrf.mxu0
        %v531 = vadd.f32 %v327, %v530
        %v532 = vpop.f32.mrf.mxu0
        %v533 = vadd.f32 %v327, %v532
        %534 = vmatmul.bf16.gmra.mxu0 %v452
        %v535 = vpop.f32.mrf.mxu0
        %v536 = vadd.f32 %v327, %v535
        %v537 = vpop.f32.mrf.mxu0
        %v538 = vadd.f32 %v327, %v537
        %539 = vmatmul.bf16.gmra.mxu0 %v455
        %v540 = vpop.f32.mrf.mxu0
        %v541 = vadd.f32 %v327, %v540
        %v542 = vpop.f32.mrf.mxu0
        %v543 = vadd.f32 %v327, %v542
        %544 = vmatmul.bf16.gmra.mxu0 %v458
        %v545 = vpop.f32.mrf.mxu0
        %v546 = vadd.f32 %v327, %v545
        %v547 = vpop.f32.mrf.mxu0
        %v548 = vadd.f32 %v327, %v547
        %549 = vmatmul.bf16.gmra.mxu0 %v461
        %v550 = vpop.f32.mrf.mxu0
        %v551 = vadd.f32 %v327, %v550
        %v552 = vpop.f32.mrf.mxu0
        %v553 = vadd.f32 %v327, %v552
        %554 = vmatmul.bf16.gmra.mxu0 %v464
        %v555 = vpop.f32.mrf.mxu0
        %v556 = vadd.f32 %v327, %v555
        %v557 = vpop.f32.mrf.mxu0
        %v558 = vadd.f32 %v327, %v557
        %559 = vmatmul.bf16.gmra.mxu0 %v467
        %v560 = vpop.f32.mrf.mxu0
        %v561 = vadd.f32 %v327, %v560
        %v562 = vpop.f32.mrf.mxu0
        %v563 = vadd.f32 %v327, %v562
        %564 = vdwg.mxu0
        %v565 = vmax.f32 %v486, 0.0
        %v566 = vmax.f32 %v488, 0.0
        %v567 = vmax.f32 %v491, 0.0
        %v568 = vmax.f32 %v493, 0.0
        %v569 = vmax.f32 %v496, 0.0
        %v570 = vmax.f32 %v498, 0.0
        %v571 = vmax.f32 %v501, 0.0
        %v572 = vmax.f32 %v503, 0.0
        %v573 = vmax.f32 %v506, 0.0
        %v574 = vmax.f32 %v508, 0.0
        %v575 = vmax.f32 %v511, 0.0
        %v576 = vmax.f32 %v513, 0.0
        %v577 = vmax.f32 %v516, 0.0
        %v578 = vmax.f32 %v518, 0.0
        %v579 = vmax.f32 %v521, 0.0
        %v580 = vmax.f32 %v523, 0.0
        %v581 = vmax.f32 %v526, 0.0
        %v582 = vmax.f32 %v528, 0.0
        %v583 = vmax.f32 %v531, 0.0
        %v584 = vmax.f32 %v533, 0.0
        %v585 = vmax.f32 %v536, 0.0
        %v586 = vmax.f32 %v538, 0.0
        %v587 = vmax.f32 %v541, 0.0
        %v588 = vmax.f32 %v543, 0.0
        %v589 = vmax.f32 %v546, 0.0
        %v590 = vmax.f32 %v548, 0.0
        %v591 = vmax.f32 %v551, 0.0
        %v592 = vmax.f32 %v553, 0.0
        %v593 = vmax.f32 %v556, 0.0
        %v594 = vmax.f32 %v558, 0.0
        %v595 = vmax.f32 %v561, 0.0
        %v596 = vmax.f32 %v563, 0.0
        %597 = vst [vmem:[%s280] sm:$0xff] %v565
        %598 = vst [vmem:[%s280 + $0x8] sm:$0xff] %v566
        %599 = vst [vmem:[%s280 + $0x10] sm:$0xff] %v567
        %600 = vst [vmem:[%s280 + $0x18] sm:$0xff] %v568
        %601 = vst [vmem:[%s280 + $0x20] sm:$0xff] %v569
        %602 = vst [vmem:[%s280 + $0x28] sm:$0xff] %v570
        %603 = vst [vmem:[%s280 + $0x30] sm:$0xff] %v571
        %604 = vst [vmem:[%s280 + $0x38] sm:$0xff] %v572
        %605 = vst [vmem:[%s280 + $0x40] sm:$0xff] %v573
        %606 = vst [vmem:[%s280 + $0x48] sm:$0xff] %v574
        %607 = vst [vmem:[%s280 + $0x50] sm:$0xff] %v575
        %608 = vst [vmem:[%s280 + $0x58] sm:$0xff] %v576
        %609 = vst [vmem:[%s280 + $0x60] sm:$0xff] %v577
        %610 = vst [vmem:[%s280 + $0x68] sm:$0xff] %v578
        %611 = vst [vmem:[%s280 + $0x70] sm:$0xff] %v579
        %612 = vst [vmem:[%s280 + $0x78] sm:$0xff] %v580
        %613 = vst [vmem:[%s280 + $0x80] sm:$0xff] %v581
        %614 = vst [vmem:[%s280 + $0x88] sm:$0xff] %v582
        %615 = vst [vmem:[%s280 + $0x90] sm:$0xff] %v583
        %616 = vst [vmem:[%s280 + $0x98] sm:$0xff] %v584
        %617 = vst [vmem:[%s280 + $0xa0] sm:$0xff] %v585
        %618 = vst [vmem:[%s280 + $0xa8] sm:$0xff] %v586
        %619 = vst [vmem:[%s280 + $0xb0] sm:$0xff] %v587
        %620 = vst [vmem:[%s280 + $0xb8] sm:$0xff] %v588
        %621 = vst [vmem:[%s280 + $0xc0] sm:$0xff] %v589
        %622 = vst [vmem:[%s280 + $0xc8] sm:$0xff] %v590
        %623 = vst [vmem:[%s280 + $0xd0] sm:$0xff] %v591
        %624 = vst [vmem:[%s280 + $0xd8] sm:$0xff] %v592
        %625 = vst [vmem:[%s280 + $0xe0] sm:$0xff] %v593
        %626 = vst [vmem:[%s280 + $0xe8] sm:$0xff] %v594
        %627 = vst [vmem:[%s280 + $0xf0] sm:$0xff] %v595
        %628 = vst [vmem:[%s280 + $0xf8] sm:$0xff] %v596
        %v629 = vmul.f32 %v565, %v565
        %v630 = vmul.f32 %v566, %v566
        %v631 = vmul.f32 %v567, %v567
        %v632 = vmul.f32 %v568, %v568
        %v633 = vmul.f32 %v569, %v569
        %v634 = vmul.f32 %v570, %v570
        %v635 = vmul.f32 %v571, %v571
        %v636 = vmul.f32 %v572, %v572
        %v637 = vmul.f32 %v573, %v573
        %v638 = vmul.f32 %v574, %v574
        %v639 = vmul.f32 %v575, %v575
        %v640 = vmul.f32 %v576, %v576
        %v641 = vmul.f32 %v577, %v577
        %v642 = vmul.f32 %v578, %v578
        %v643 = vmul.f32 %v579, %v579
        %v644 = vmul.f32 %v580, %v580
        %v645 = vmul.f32 %v581, %v581
        %v646 = vmul.f32 %v582, %v582
        %v647 = vmul.f32 %v583, %v583
        %v648 = vmul.f32 %v584, %v584
        %v649 = vmul.f32 %v585, %v585
        %v650 = vmul.f32 %v586, %v586
        %v651 = vmul.f32 %v587, %v587
        %v652 = vmul.f32 %v588, %v588
        %v653 = vmul.f32 %v589, %v589
        %v654 = vmul.f32 %v590, %v590
        %v655 = vmul.f32 %v591, %v591
        %v656 = vmul.f32 %v592, %v592
        %v657 = vmul.f32 %v593, %v593
        %v658 = vmul.f32 %v594, %v594
        %v659 = vmul.f32 %v595, %v595
        %v660 = vmul.f32 %v596, %v596
        %661 = vadd.xlane.f32.xlu0 %v629
        %v662 = vpop.xlane.xlu0 %661
        %663 = vadd.xlane.f32.xlu0 %v630
        %v664 = vpop.xlane.xlu0 %663
        %665 = vadd.xlane.f32.xlu0 %v631
        %v666 = vpop.xlane.xlu0 %665
        %667 = vadd.xlane.f32.xlu0 %v632
        %v668 = vpop.xlane.xlu0 %667
        %669 = vadd.xlane.f32.xlu0 %v633
        %v670 = vpop.xlane.xlu0 %669
        %671 = vadd.xlane.f32.xlu0 %v634
        %v672 = vpop.xlane.xlu0 %671
        %673 = vadd.xlane.f32.xlu0 %v635
        %v674 = vpop.xlane.xlu0 %673
        %675 = vadd.xlane.f32.xlu0 %v636
        %v676 = vpop.xlane.xlu0 %675
        %677 = vadd.xlane.f32.xlu0 %v637
        %v678 = vpop.xlane.xlu0 %677
        %679 = vadd.xlane.f32.xlu0 %v638
        %v680 = vpop.xlane.xlu0 %679
        %681 = vadd.xlane.f32.xlu0 %v639
        %v682 = vpop.xlane.xlu0 %681
        %683 = vadd.xlane.f32.xlu0 %v640
        %v684 = vpop.xlane.xlu0 %683
        %685 = vadd.xlane.f32.xlu0 %v641
        %v686 = vpop.xlane.xlu0 %685
        %687 = vadd.xlane.f32.xlu0 %v642
        %v688 = vpop.xlane.xlu0 %687
        %689 = vadd.xlane.f32.xlu0 %v643
        %v690 = vpop.xlane.xlu0 %689
        %691 = vadd.xlane.f32.xlu0 %v644
        %v692 = vpop.xlane.xlu0 %691
        %693 = vadd.xlane.f32.xlu0 %v645
        %v694 = vpop.xlane.xlu0 %693
        %695 = vadd.xlane.f32.xlu0 %v646
        %v696 = vpop.xlane.xlu0 %695
        %697 = vadd.xlane.f32.xlu0 %v647
        %v698 = vpop.xlane.xlu0 %697
        %699 = vadd.xlane.f32.xlu0 %v648
        %v700 = vpop.xlane.xlu0 %699
        %701 = vadd.xlane.f32.xlu0 %v649
        %v702 = vpop.xlane.xlu0 %701
        %703 = vadd.xlane.f32.xlu0 %v650
        %v704 = vpop.xlane.xlu0 %703
        %705 = vadd.xlane.f32.xlu0 %v651
        %v706 = vpop.xlane.xlu0 %705
        %707 = vadd.xlane.f32.xlu0 %v652
        %v708 = vpop.xlane.xlu0 %707
        %709 = vadd.xlane.f32.xlu0 %v653
        %v710 = vpop.xlane.xlu0 %709
        %711 = vadd.xlane.f32.xlu0 %v654
        %v712 = vpop.xlane.xlu0 %711
        %713 = vadd.xlane.f32.xlu0 %v655
        %v714 = vpop.xlane.xlu0 %713
        %715 = vadd.xlane.f32.xlu0 %v656
        %v716 = vpop.xlane.xlu0 %715
        %717 = vadd.xlane.f32.xlu0 %v657
        %v718 = vpop.xlane.xlu0 %717
        %719 = vadd.xlane.f32.xlu0 %v658
        %v720 = vpop.xlane.xlu0 %719
        %721 = vadd.xlane.f32.xlu0 %v659
        %v722 = vpop.xlane.xlu0 %721
        %723 = vadd.xlane.f32.xlu0 %v660
        %v724 = vpop.xlane.xlu0 %723
        %v725 = vrsqrt.pop %v662
        %v726 = vmul.f32 %v725, %v662
        %v727 = vmul.f32 %v726, %v725
        %v728 = vmul.f32 0.5, %v727
        %v729 = vsub.f32 1.5, %v728
        %v730 = vmul.f32 %v725, %v729
        %v731 = vmul.f32 %v662, %v730
        %vm732 = vcmp.eq.f32.partialorder %v662, inf
        %v733 = vsel %vm732, %v662, %v731
        %vm734 = vcmp.eq.f32.partialorder %v662, 0.0
        %v735 = vand.u32 %v662, 2147483648
        %v736 = vsel %vm734, %v735, %v733
        %v737 = vrsqrt.pop %v664
        %v738 = vmul.f32 %v737, %v664
        %v739 = vmul.f32 %v738, %v737
        %v740 = vmul.f32 0.5, %v739
        %v741 = vsub.f32 1.5, %v740
        %v742 = vmul.f32 %v737, %v741
        %v743 = vmul.f32 %v664, %v742
        %vm744 = vcmp.eq.f32.partialorder %v664, inf
        %v745 = vsel %vm744, %v664, %v743
        %vm746 = vcmp.eq.f32.partialorder %v664, 0.0
        %v747 = vand.u32 %v664, 2147483648
        %v748 = vsel %vm746, %v747, %v745
        %v749 = vrsqrt.pop %v666
        %v750 = vmul.f32 %v749, %v666
        %v751 = vmul.f32 %v750, %v749
        %v752 = vmul.f32 0.5, %v751
        %v753 = vsub.f32 1.5, %v752
        %v754 = vmul.f32 %v749, %v753
        %v755 = vmul.f32 %v666, %v754
        %vm756 = vcmp.eq.f32.partialorder %v666, inf
        %v757 = vsel %vm756, %v666, %v755
        %vm758 = vcmp.eq.f32.partialorder %v666, 0.0
        %v759 = vand.u32 %v666, 2147483648
        %v760 = vsel %vm758, %v759, %v757
        %v761 = vrsqrt.pop %v668
        %v762 = vmul.f32 %v761, %v668
        %v763 = vmul.f32 %v762, %v761
        %v764 = vmul.f32 0.5, %v763
        %v765 = vsub.f32 1.5, %v764
        %v766 = vmul.f32 %v761, %v765
        %v767 = vmul.f32 %v668, %v766
        %vm768 = vcmp.eq.f32.partialorder %v668, inf
        %v769 = vsel %vm768, %v668, %v767
        %vm770 = vcmp.eq.f32.partialorder %v668, 0.0
        %v771 = vand.u32 %v668, 2147483648
        %v772 = vsel %vm770, %v771, %v769
        %v773 = vrsqrt.pop %v670
        %v774 = vmul.f32 %v773, %v670
        %v775 = vmul.f32 %v774, %v773
        %v776 = vmul.f32 0.5, %v775
        %v777 = vsub.f32 1.5, %v776
        %v778 = vmul.f32 %v773, %v777
        %v779 = vmul.f32 %v670, %v778
        %vm780 = vcmp.eq.f32.partialorder %v670, inf
        %v781 = vsel %vm780, %v670, %v779
        %vm782 = vcmp.eq.f32.partialorder %v670, 0.0
        %v783 = vand.u32 %v670, 2147483648
        %v784 = vsel %vm782, %v783, %v781
        %v785 = vrsqrt.pop %v672
        %v786 = vmul.f32 %v785, %v672
        %v787 = vmul.f32 %v786, %v785
        %v788 = vmul.f32 0.5, %v787
        %v789 = vsub.f32 1.5, %v788
        %v790 = vmul.f32 %v785, %v789
        %v791 = vmul.f32 %v672, %v790
        %vm792 = vcmp.eq.f32.partialorder %v672, inf
        %v793 = vsel %vm792, %v672, %v791
        %vm794 = vcmp.eq.f32.partialorder %v672, 0.0
        %v795 = vand.u32 %v672, 2147483648
        %v796 = vsel %vm794, %v795, %v793
        %v797 = vrsqrt.pop %v674
        %v798 = vmul.f32 %v797, %v674
        %v799 = vmul.f32 %v798, %v797
        %v800 = vmul.f32 0.5, %v799
        %v801 = vsub.f32 1.5, %v800
        %v802 = vmul.f32 %v797, %v801
        %v803 = vmul.f32 %v674, %v802
        %vm804 = vcmp.eq.f32.partialorder %v674, inf
        %v805 = vsel %vm804, %v674, %v803
        %vm806 = vcmp.eq.f32.partialorder %v674, 0.0
        %v807 = vand.u32 %v674, 2147483648
        %v808 = vsel %vm806, %v807, %v805
        %v809 = vrsqrt.pop %v676
        %v810 = vmul.f32 %v809, %v676
        %v811 = vmul.f32 %v810, %v809
        %v812 = vmul.f32 0.5, %v811
        %v813 = vsub.f32 1.5, %v812
        %v814 = vmul.f32 %v809, %v813
        %v815 = vmul.f32 %v676, %v814
        %vm816 = vcmp.eq.f32.partialorder %v676, inf
        %v817 = vsel %vm816, %v676, %v815
        %vm818 = vcmp.eq.f32.partialorder %v676, 0.0
        %v819 = vand.u32 %v676, 2147483648
        %v820 = vsel %vm818, %v819, %v817
        %v821 = vrsqrt.pop %v678
        %v822 = vmul.f32 %v821, %v678
        %v823 = vmul.f32 %v822, %v821
        %v824 = vmul.f32 0.5, %v823
        %v825 = vsub.f32 1.5, %v824
        %v826 = vmul.f32 %v821, %v825
        %v827 = vmul.f32 %v678, %v826
        %vm828 = vcmp.eq.f32.partialorder %v678, inf
        %v829 = vsel %vm828, %v678, %v827
        %vm830 = vcmp.eq.f32.partialorder %v678, 0.0
        %v831 = vand.u32 %v678, 2147483648
        %v832 = vsel %vm830, %v831, %v829
        %v833 = vrsqrt.pop %v680
        %v834 = vmul.f32 %v833, %v680
        %v835 = vmul.f32 %v834, %v833
        %v836 = vmul.f32 0.5, %v835
        %v837 = vsub.f32 1.5, %v836
        %v838 = vmul.f32 %v833, %v837
        %v839 = vmul.f32 %v680, %v838
        %vm840 = vcmp.eq.f32.partialorder %v680, inf
        %v841 = vsel %vm840, %v680, %v839
        %vm842 = vcmp.eq.f32.partialorder %v680, 0.0
        %v843 = vand.u32 %v680, 2147483648
        %v844 = vsel %vm842, %v843, %v841
        %v845 = vrsqrt.pop %v682
        %v846 = vmul.f32 %v845, %v682
        %v847 = vmul.f32 %v846, %v845
        %v848 = vmul.f32 0.5, %v847
        %v849 = vsub.f32 1.5, %v848
        %v850 = vmul.f32 %v845, %v849
        %v851 = vmul.f32 %v682, %v850
        %vm852 = vcmp.eq.f32.partialorder %v682, inf
        %v853 = vsel %vm852, %v682, %v851
        %vm854 = vcmp.eq.f32.partialorder %v682, 0.0
        %v855 = vand.u32 %v682, 2147483648
        %v856 = vsel %vm854, %v855, %v853
        %v857 = vrsqrt.pop %v684
        %v858 = vmul.f32 %v857, %v684
        %v859 = vmul.f32 %v858, %v857
        %v860 = vmul.f32 0.5, %v859
        %v861 = vsub.f32 1.5, %v860
        %v862 = vmul.f32 %v857, %v861
        %v863 = vmul.f32 %v684, %v862
        %vm864 = vcmp.eq.f32.partialorder %v684, inf
        %v865 = vsel %vm864, %v684, %v863
        %vm866 = vcmp.eq.f32.partialorder %v684, 0.0
        %v867 = vand.u32 %v684, 2147483648
        %v868 = vsel %vm866, %v867, %v865
        %v869 = vrsqrt.pop %v686
        %v870 = vmul.f32 %v869, %v686
        %v871 = vmul.f32 %v870, %v869
        %v872 = vmul.f32 0.5, %v871
        %v873 = vsub.f32 1.5, %v872
        %v874 = vmul.f32 %v869, %v873
        %v875 = vmul.f32 %v686, %v874
        %vm876 = vcmp.eq.f32.partialorder %v686, inf
        %v877 = vsel %vm876, %v686, %v875
        %vm878 = vcmp.eq.f32.partialorder %v686, 0.0
        %v879 = vand.u32 %v686, 2147483648
        %v880 = vsel %vm878, %v879, %v877
        %v881 = vrsqrt.pop %v688
        %v882 = vmul.f32 %v881, %v688
        %v883 = vmul.f32 %v882, %v881
        %v884 = vmul.f32 0.5, %v883
        %v885 = vsub.f32 1.5, %v884
        %v886 = vmul.f32 %v881, %v885
        %v887 = vmul.f32 %v688, %v886
        %vm888 = vcmp.eq.f32.partialorder %v688, inf
        %v889 = vsel %vm888, %v688, %v887
        %vm890 = vcmp.eq.f32.partialorder %v688, 0.0
        %v891 = vand.u32 %v688, 2147483648
        %v892 = vsel %vm890, %v891, %v889
        %v893 = vrsqrt.pop %v690
        %v894 = vmul.f32 %v893, %v690
        %v895 = vmul.f32 %v894, %v893
        %v896 = vmul.f32 0.5, %v895
        %v897 = vsub.f32 1.5, %v896
        %v898 = vmul.f32 %v893, %v897
        %v899 = vmul.f32 %v690, %v898
        %vm900 = vcmp.eq.f32.partialorder %v690, inf
        %v901 = vsel %vm900, %v690, %v899
        %vm902 = vcmp.eq.f32.partialorder %v690, 0.0
        %v903 = vand.u32 %v690, 2147483648
        %v904 = vsel %vm902, %v903, %v901
        %v905 = vrsqrt.pop %v692
        %v906 = vmul.f32 %v905, %v692
        %v907 = vmul.f32 %v906, %v905
        %v908 = vmul.f32 0.5, %v907
        %v909 = vsub.f32 1.5, %v908
        %v910 = vmul.f32 %v905, %v909
        %v911 = vmul.f32 %v692, %v910
        %vm912 = vcmp.eq.f32.partialorder %v692, inf
        %v913 = vsel %vm912, %v692, %v911
        %vm914 = vcmp.eq.f32.partialorder %v692, 0.0
        %v915 = vand.u32 %v692, 2147483648
        %v916 = vsel %vm914, %v915, %v913
        %v917 = vrsqrt.pop %v694
        %v918 = vmul.f32 %v917, %v694
        %v919 = vmul.f32 %v918, %v917
        %v920 = vmul.f32 0.5, %v919
        %v921 = vsub.f32 1.5, %v920
        %v922 = vmul.f32 %v917, %v921
        %v923 = vmul.f32 %v694, %v922
        %vm924 = vcmp.eq.f32.partialorder %v694, inf
        %v925 = vsel %vm924, %v694, %v923
        %vm926 = vcmp.eq.f32.partialorder %v694, 0.0
        %v927 = vand.u32 %v694, 2147483648
        %v928 = vsel %vm926, %v927, %v925
        %v929 = vrsqrt.pop %v696
        %v930 = vmul.f32 %v929, %v696
        %v931 = vmul.f32 %v930, %v929
        %v932 = vmul.f32 0.5, %v931
        %v933 = vsub.f32 1.5, %v932
        %v934 = vmul.f32 %v929, %v933
        %v935 = vmul.f32 %v696, %v934
        %vm936 = vcmp.eq.f32.partialorder %v696, inf
        %v937 = vsel %vm936, %v696, %v935
        %vm938 = vcmp.eq.f32.partialorder %v696, 0.0
        %v939 = vand.u32 %v696, 2147483648
        %v940 = vsel %vm938, %v939, %v937
        %v941 = vrsqrt.pop %v698
        %v942 = vmul.f32 %v941, %v698
        %v943 = vmul.f32 %v942, %v941
        %v944 = vmul.f32 0.5, %v943
        %v945 = vsub.f32 1.5, %v944
        %v946 = vmul.f32 %v941, %v945
        %v947 = vmul.f32 %v698, %v946
        %vm948 = vcmp.eq.f32.partialorder %v698, inf
        %v949 = vsel %vm948, %v698, %v947
        %vm950 = vcmp.eq.f32.partialorder %v698, 0.0
        %v951 = vand.u32 %v698, 2147483648
        %v952 = vsel %vm950, %v951, %v949
        %v953 = vrsqrt.pop %v700
        %v954 = vmul.f32 %v953, %v700
        %v955 = vmul.f32 %v954, %v953
        %v956 = vmul.f32 0.5, %v955
        %v957 = vsub.f32 1.5, %v956
        %v958 = vmul.f32 %v953, %v957
        %v959 = vmul.f32 %v700, %v958
        %vm960 = vcmp.eq.f32.partialorder %v700, inf
        %v961 = vsel %vm960, %v700, %v959
        %vm962 = vcmp.eq.f32.partialorder %v700, 0.0
        %v963 = vand.u32 %v700, 2147483648
        %v964 = vsel %vm962, %v963, %v961
        %v965 = vrsqrt.pop %v702
        %v966 = vmul.f32 %v965, %v702
        %v967 = vmul.f32 %v966, %v965
        %v968 = vmul.f32 0.5, %v967
        %v969 = vsub.f32 1.5, %v968
        %v970 = vmul.f32 %v965, %v969
        %v971 = vmul.f32 %v702, %v970
        %vm972 = vcmp.eq.f32.partialorder %v702, inf
        %v973 = vsel %vm972, %v702, %v971
        %vm974 = vcmp.eq.f32.partialorder %v702, 0.0
        %v975 = vand.u32 %v702, 2147483648
        %v976 = vsel %vm974, %v975, %v973
        %v977 = vrsqrt.pop %v704
        %v978 = vmul.f32 %v977, %v704
        %v979 = vmul.f32 %v978, %v977
        %v980 = vmul.f32 0.5, %v979
        %v981 = vsub.f32 1.5, %v980
        %v982 = vmul.f32 %v977, %v981
        %v983 = vmul.f32 %v704, %v982
        %vm984 = vcmp.eq.f32.partialorder %v704, inf
        %v985 = vsel %vm984, %v704, %v983
        %vm986 = vcmp.eq.f32.partialorder %v704, 0.0
        %v987 = vand.u32 %v704, 2147483648
        %v988 = vsel %vm986, %v987, %v985
        %v989 = vrsqrt.pop %v706
        %v990 = vmul.f32 %v989, %v706
        %v991 = vmul.f32 %v990, %v989
        %v992 = vmul.f32 0.5, %v991
        %v993 = vsub.f32 1.5, %v992
        %v994 = vmul.f32 %v989, %v993
        %v995 = vmul.f32 %v706, %v994
        %vm996 = vcmp.eq.f32.partialorder %v706, inf
        %v997 = vsel %vm996, %v706, %v995
        %vm998 = vcmp.eq.f32.partialorder %v706, 0.0
        %v999 = vand.u32 %v706, 2147483648
        %v1000 = vsel %vm998, %v999, %v997
        %v1001 = vrsqrt.pop %v708
        %v1002 = vmul.f32 %v1001, %v708
        %v1003 = vmul.f32 %v1002, %v1001
        %v1004 = vmul.f32 0.5, %v1003
        %v1005 = vsub.f32 1.5, %v1004
        %v1006 = vmul.f32 %v1001, %v1005
        %v1007 = vmul.f32 %v708, %v1006
        %vm1008 = vcmp.eq.f32.partialorder %v708, inf
        %v1009 = vsel %vm1008, %v708, %v1007
        %vm1010 = vcmp.eq.f32.partialorder %v708, 0.0
        %v1011 = vand.u32 %v708, 2147483648
        %v1012 = vsel %vm1010, %v1011, %v1009
        %v1013 = vrsqrt.pop %v710
        %v1014 = vmul.f32 %v1013, %v710
        %v1015 = vmul.f32 %v1014, %v1013
        %v1016 = vmul.f32 0.5, %v1015
        %v1017 = vsub.f32 1.5, %v1016
        %v1018 = vmul.f32 %v1013, %v1017
        %v1019 = vmul.f32 %v710, %v1018
        %vm1020 = vcmp.eq.f32.partialorder %v710, inf
        %v1021 = vsel %vm1020, %v710, %v1019
        %vm1022 = vcmp.eq.f32.partialorder %v710, 0.0
        %v1023 = vand.u32 %v710, 2147483648
        %v1024 = vsel %vm1022, %v1023, %v1021
        %v1025 = vrsqrt.pop %v712
        %v1026 = vmul.f32 %v1025, %v712
        %v1027 = vmul.f32 %v1026, %v1025
        %v1028 = vmul.f32 0.5, %v1027
        %v1029 = vsub.f32 1.5, %v1028
        %v1030 = vmul.f32 %v1025, %v1029
        %v1031 = vmul.f32 %v712, %v1030
        %vm1032 = vcmp.eq.f32.partialorder %v712, inf
        %v1033 = vsel %vm1032, %v712, %v1031
        %vm1034 = vcmp.eq.f32.partialorder %v712, 0.0
        %v1035 = vand.u32 %v712, 2147483648
        %v1036 = vsel %vm1034, %v1035, %v1033
        %v1037 = vrsqrt.pop %v714
        %v1038 = vmul.f32 %v1037, %v714
        %v1039 = vmul.f32 %v1038, %v1037
        %v1040 = vmul.f32 0.5, %v1039
        %v1041 = vsub.f32 1.5, %v1040
        %v1042 = vmul.f32 %v1037, %v1041
        %v1043 = vmul.f32 %v714, %v1042
        %vm1044 = vcmp.eq.f32.partialorder %v714, inf
        %v1045 = vsel %vm1044, %v714, %v1043
        %vm1046 = vcmp.eq.f32.partialorder %v714, 0.0
        %v1047 = vand.u32 %v714, 2147483648
        %v1048 = vsel %vm1046, %v1047, %v1045
        %v1049 = vrsqrt.pop %v716
        %v1050 = vmul.f32 %v1049, %v716
        %v1051 = vmul.f32 %v1050, %v1049
        %v1052 = vmul.f32 0.5, %v1051
        %v1053 = vsub.f32 1.5, %v1052
        %v1054 = vmul.f32 %v1049, %v1053
        %v1055 = vmul.f32 %v716, %v1054
        %vm1056 = vcmp.eq.f32.partialorder %v716, inf
        %v1057 = vsel %vm1056, %v716, %v1055
        %vm1058 = vcmp.eq.f32.partialorder %v716, 0.0
        %v1059 = vand.u32 %v716, 2147483648
        %v1060 = vsel %vm1058, %v1059, %v1057
        %v1061 = vrsqrt.pop %v718
        %v1062 = vmul.f32 %v1061, %v718
        %v1063 = vmul.f32 %v1062, %v1061
        %v1064 = vmul.f32 0.5, %v1063
        %v1065 = vsub.f32 1.5, %v1064
        %v1066 = vmul.f32 %v1061, %v1065
        %v1067 = vmul.f32 %v718, %v1066
        %vm1068 = vcmp.eq.f32.partialorder %v718, inf
        %v1069 = vsel %vm1068, %v718, %v1067
        %vm1070 = vcmp.eq.f32.partialorder %v718, 0.0
        %v1071 = vand.u32 %v718, 2147483648
        %v1072 = vsel %vm1070, %v1071, %v1069
        %v1073 = vrsqrt.pop %v720
        %v1074 = vmul.f32 %v1073, %v720
        %v1075 = vmul.f32 %v1074, %v1073
        %v1076 = vmul.f32 0.5, %v1075
        %v1077 = vsub.f32 1.5, %v1076
        %v1078 = vmul.f32 %v1073, %v1077
        %v1079 = vmul.f32 %v720, %v1078
        %vm1080 = vcmp.eq.f32.partialorder %v720, inf
        %v1081 = vsel %vm1080, %v720, %v1079
        %vm1082 = vcmp.eq.f32.partialorder %v720, 0.0
        %v1083 = vand.u32 %v720, 2147483648
        %v1084 = vsel %vm1082, %v1083, %v1081
        %v1085 = vrsqrt.pop %v722
        %v1086 = vmul.f32 %v1085, %v722
        %v1087 = vmul.f32 %v1086, %v1085
        %v1088 = vmul.f32 0.5, %v1087
        %v1089 = vsub.f32 1.5, %v1088
        %v1090 = vmul.f32 %v1085, %v1089
        %v1091 = vmul.f32 %v722, %v1090
        %vm1092 = vcmp.eq.f32.partialorder %v722, inf
        %v1093 = vsel %vm1092, %v722, %v1091
        %vm1094 = vcmp.eq.f32.partialorder %v722, 0.0
        %v1095 = vand.u32 %v722, 2147483648
        %v1096 = vsel %vm1094, %v1095, %v1093
        %v1097 = vrsqrt.pop %v724
        %v1098 = vmul.f32 %v1097, %v724
        %v1099 = vmul.f32 %v1098, %v1097
        %v1100 = vmul.f32 0.5, %v1099
        %v1101 = vsub.f32 1.5, %v1100
        %v1102 = vmul.f32 %v1097, %v1101
        %v1103 = vmul.f32 %v724, %v1102
        %vm1104 = vcmp.eq.f32.partialorder %v724, inf
        %v1105 = vsel %vm1104, %v724, %v1103
        %vm1106 = vcmp.eq.f32.partialorder %v724, 0.0
        %v1107 = vand.u32 %v724, 2147483648
        %v1108 = vsel %vm1106, %v1107, %v1105
        %v1109 = vadd.f32 %v736, 1e-10
        %v1110 = vadd.f32 %v748, 1e-10
        %v1111 = vadd.f32 %v760, 1e-10
        %v1112 = vadd.f32 %v772, 1e-10
        %v1113 = vadd.f32 %v784, 1e-10
        %v1114 = vadd.f32 %v796, 1e-10
        %v1115 = vadd.f32 %v808, 1e-10
        %v1116 = vadd.f32 %v820, 1e-10
        %v1117 = vadd.f32 %v832, 1e-10
        %v1118 = vadd.f32 %v844, 1e-10
        %v1119 = vadd.f32 %v856, 1e-10
        %v1120 = vadd.f32 %v868, 1e-10
        %v1121 = vadd.f32 %v880, 1e-10
        %v1122 = vadd.f32 %v892, 1e-10
        %v1123 = vadd.f32 %v904, 1e-10
        %v1124 = vadd.f32 %v916, 1e-10
        %v1125 = vadd.f32 %v928, 1e-10
        %v1126 = vadd.f32 %v940, 1e-10
        %v1127 = vadd.f32 %v952, 1e-10
        %v1128 = vadd.f32 %v964, 1e-10
        %v1129 = vadd.f32 %v976, 1e-10
        %v1130 = vadd.f32 %v988, 1e-10
        %v1131 = vadd.f32 %v1000, 1e-10
        %v1132 = vadd.f32 %v1012, 1e-10
        %v1133 = vadd.f32 %v1024, 1e-10
        %v1134 = vadd.f32 %v1036, 1e-10
        %v1135 = vadd.f32 %v1048, 1e-10
        %v1136 = vadd.f32 %v1060, 1e-10
        %v1137 = vadd.f32 %v1072, 1e-10
        %v1138 = vadd.f32 %v1084, 1e-10
        %v1139 = vadd.f32 %v1096, 1e-10
        %v1140 = vadd.f32 %v1108, 1e-10
        %v1141 = vrcp.pop %v1109
        %v1142 = vmul.f32 %v1109, %v1141
        %v1143 = vsub.f32 1.0, %v1142
        %v1144 = vmul.f32 %v1141, %v1143
        %v1145 = vadd.f32 %v1141, %v1144
        %vm1146 = vweird.f32 %v1109
        %vm1147 = vweird.f32 %v1141
        %vm1148 = vmor %vm1146, %vm1147
        %v1149 = vsel %vm1148, %v1141, %v1145
        %v1150 = vand.u32 2147483647, %v1109
        %vm1151 = vcmp.eq.f32.partialorder %v1150, 8.507059e+37
        %v1152 = vand.u32 %v1109, 2147483648
        %v1153 = vor.u32 1.1754944e-38, %v1152
        %v1154 = vsel %vm1151, %v1153, %v1149
        %v1155 = vmul.f32 %v565, %v1154
        %v1156 = vrcp.pop %v1110
        %v1157 = vmul.f32 %v1110, %v1156
        %v1158 = vsub.f32 1.0, %v1157
        %v1159 = vmul.f32 %v1156, %v1158
        %v1160 = vadd.f32 %v1156, %v1159
        %vm1161 = vweird.f32 %v1110
        %vm1162 = vweird.f32 %v1156
        %vm1163 = vmor %vm1161, %vm1162
        %v1164 = vsel %vm1163, %v1156, %v1160
        %v1165 = vand.u32 2147483647, %v1110
        %vm1166 = vcmp.eq.f32.partialorder %v1165, 8.507059e+37
        %v1167 = vand.u32 %v1110, 2147483648
        %v1168 = vor.u32 1.1754944e-38, %v1167
        %v1169 = vsel %vm1166, %v1168, %v1164
        %v1170 = vmul.f32 %v566, %v1169
        %v1171 = vrcp.pop %v1111
        %v1172 = vmul.f32 %v1111, %v1171
        %v1173 = vsub.f32 1.0, %v1172
        %v1174 = vmul.f32 %v1171, %v1173
        %v1175 = vadd.f32 %v1171, %v1174
        %vm1176 = vweird.f32 %v1111
        %vm1177 = vweird.f32 %v1171
        %vm1178 = vmor %vm1176, %vm1177
        %v1179 = vsel %vm1178, %v1171, %v1175
        %v1180 = vand.u32 2147483647, %v1111
        %vm1181 = vcmp.eq.f32.partialorder %v1180, 8.507059e+37
        %v1182 = vand.u32 %v1111, 2147483648
        %v1183 = vor.u32 1.1754944e-38, %v1182
        %v1184 = vsel %vm1181, %v1183, %v1179
        %v1185 = vmul.f32 %v567, %v1184
        %v1186 = vrcp.pop %v1112
        %v1187 = vmul.f32 %v1112, %v1186
        %v1188 = vsub.f32 1.0, %v1187
        %v1189 = vmul.f32 %v1186, %v1188
        %v1190 = vadd.f32 %v1186, %v1189
        %vm1191 = vweird.f32 %v1112
        %vm1192 = vweird.f32 %v1186
        %vm1193 = vmor %vm1191, %vm1192
        %v1194 = vsel %vm1193, %v1186, %v1190
        %v1195 = vand.u32 2147483647, %v1112
        %vm1196 = vcmp.eq.f32.partialorder %v1195, 8.507059e+37
        %v1197 = vand.u32 %v1112, 2147483648
        %v1198 = vor.u32 1.1754944e-38, %v1197
        %v1199 = vsel %vm1196, %v1198, %v1194
        %v1200 = vmul.f32 %v568, %v1199
        %v1201 = vrcp.pop %v1113
        %v1202 = vmul.f32 %v1113, %v1201
        %v1203 = vsub.f32 1.0, %v1202
        %v1204 = vmul.f32 %v1201, %v1203
        %v1205 = vadd.f32 %v1201, %v1204
        %vm1206 = vweird.f32 %v1113
        %vm1207 = vweird.f32 %v1201
        %vm1208 = vmor %vm1206, %vm1207
        %v1209 = vsel %vm1208, %v1201, %v1205
        %v1210 = vand.u32 2147483647, %v1113
        %vm1211 = vcmp.eq.f32.partialorder %v1210, 8.507059e+37
        %v1212 = vand.u32 %v1113, 2147483648
        %v1213 = vor.u32 1.1754944e-38, %v1212
        %v1214 = vsel %vm1211, %v1213, %v1209
        %v1215 = vmul.f32 %v569, %v1214
        %v1216 = vrcp.pop %v1114
        %v1217 = vmul.f32 %v1114, %v1216
        %v1218 = vsub.f32 1.0, %v1217
        %v1219 = vmul.f32 %v1216, %v1218
        %v1220 = vadd.f32 %v1216, %v1219
        %vm1221 = vweird.f32 %v1114
        %vm1222 = vweird.f32 %v1216
        %vm1223 = vmor %vm1221, %vm1222
        %v1224 = vsel %vm1223, %v1216, %v1220
        %v1225 = vand.u32 2147483647, %v1114
        %vm1226 = vcmp.eq.f32.partialorder %v1225, 8.507059e+37
        %v1227 = vand.u32 %v1114, 2147483648
        %v1228 = vor.u32 1.1754944e-38, %v1227
        %v1229 = vsel %vm1226, %v1228, %v1224
        %v1230 = vmul.f32 %v570, %v1229
        %v1231 = vrcp.pop %v1115
        %v1232 = vmul.f32 %v1115, %v1231
        %v1233 = vsub.f32 1.0, %v1232
        %v1234 = vmul.f32 %v1231, %v1233
        %v1235 = vadd.f32 %v1231, %v1234
        %vm1236 = vweird.f32 %v1115
        %vm1237 = vweird.f32 %v1231
        %vm1238 = vmor %vm1236, %vm1237
        %v1239 = vsel %vm1238, %v1231, %v1235
        %v1240 = vand.u32 2147483647, %v1115
        %vm1241 = vcmp.eq.f32.partialorder %v1240, 8.507059e+37
        %v1242 = vand.u32 %v1115, 2147483648
        %v1243 = vor.u32 1.1754944e-38, %v1242
        %v1244 = vsel %vm1241, %v1243, %v1239
        %v1245 = vmul.f32 %v571, %v1244
        %v1246 = vrcp.pop %v1116
        %v1247 = vmul.f32 %v1116, %v1246
        %v1248 = vsub.f32 1.0, %v1247
        %v1249 = vmul.f32 %v1246, %v1248
        %v1250 = vadd.f32 %v1246, %v1249
        %vm1251 = vweird.f32 %v1116
        %vm1252 = vweird.f32 %v1246
        %vm1253 = vmor %vm1251, %vm1252
        %v1254 = vsel %vm1253, %v1246, %v1250
        %v1255 = vand.u32 2147483647, %v1116
        %vm1256 = vcmp.eq.f32.partialorder %v1255, 8.507059e+37
        %v1257 = vand.u32 %v1116, 2147483648
        %v1258 = vor.u32 1.1754944e-38, %v1257
        %v1259 = vsel %vm1256, %v1258, %v1254
        %v1260 = vmul.f32 %v572, %v1259
        %v1261 = vrcp.pop %v1117
        %v1262 = vmul.f32 %v1117, %v1261
        %v1263 = vsub.f32 1.0, %v1262
        %v1264 = vmul.f32 %v1261, %v1263
        %v1265 = vadd.f32 %v1261, %v1264
        %vm1266 = vweird.f32 %v1117
        %vm1267 = vweird.f32 %v1261
        %vm1268 = vmor %vm1266, %vm1267
        %v1269 = vsel %vm1268, %v1261, %v1265
        %v1270 = vand.u32 2147483647, %v1117
        %vm1271 = vcmp.eq.f32.partialorder %v1270, 8.507059e+37
        %v1272 = vand.u32 %v1117, 2147483648
        %v1273 = vor.u32 1.1754944e-38, %v1272
        %v1274 = vsel %vm1271, %v1273, %v1269
        %v1275 = vmul.f32 %v573, %v1274
        %v1276 = vrcp.pop %v1118
        %v1277 = vmul.f32 %v1118, %v1276
        %v1278 = vsub.f32 1.0, %v1277
        %v1279 = vmul.f32 %v1276, %v1278
        %v1280 = vadd.f32 %v1276, %v1279
        %vm1281 = vweird.f32 %v1118
        %vm1282 = vweird.f32 %v1276
        %vm1283 = vmor %vm1281, %vm1282
        %v1284 = vsel %vm1283, %v1276, %v1280
        %v1285 = vand.u32 2147483647, %v1118
        %vm1286 = vcmp.eq.f32.partialorder %v1285, 8.507059e+37
        %v1287 = vand.u32 %v1118, 2147483648
        %v1288 = vor.u32 1.1754944e-38, %v1287
        %v1289 = vsel %vm1286, %v1288, %v1284
        %v1290 = vmul.f32 %v574, %v1289
        %v1291 = vrcp.pop %v1119
        %v1292 = vmul.f32 %v1119, %v1291
        %v1293 = vsub.f32 1.0, %v1292
        %v1294 = vmul.f32 %v1291, %v1293
        %v1295 = vadd.f32 %v1291, %v1294
        %vm1296 = vweird.f32 %v1119
        %vm1297 = vweird.f32 %v1291
        %vm1298 = vmor %vm1296, %vm1297
        %v1299 = vsel %vm1298, %v1291, %v1295
        %v1300 = vand.u32 2147483647, %v1119
        %vm1301 = vcmp.eq.f32.partialorder %v1300, 8.507059e+37
        %v1302 = vand.u32 %v1119, 2147483648
        %v1303 = vor.u32 1.1754944e-38, %v1302
        %v1304 = vsel %vm1301, %v1303, %v1299
        %v1305 = vmul.f32 %v575, %v1304
        %v1306 = vrcp.pop %v1120
        %v1307 = vmul.f32 %v1120, %v1306
        %v1308 = vsub.f32 1.0, %v1307
        %v1309 = vmul.f32 %v1306, %v1308
        %v1310 = vadd.f32 %v1306, %v1309
        %vm1311 = vweird.f32 %v1120
        %vm1312 = vweird.f32 %v1306
        %vm1313 = vmor %vm1311, %vm1312
        %v1314 = vsel %vm1313, %v1306, %v1310
        %v1315 = vand.u32 2147483647, %v1120
        %vm1316 = vcmp.eq.f32.partialorder %v1315, 8.507059e+37
        %v1317 = vand.u32 %v1120, 2147483648
        %v1318 = vor.u32 1.1754944e-38, %v1317
        %v1319 = vsel %vm1316, %v1318, %v1314
        %v1320 = vmul.f32 %v576, %v1319
        %v1321 = vrcp.pop %v1121
        %v1322 = vmul.f32 %v1121, %v1321
        %v1323 = vsub.f32 1.0, %v1322
        %v1324 = vmul.f32 %v1321, %v1323
        %v1325 = vadd.f32 %v1321, %v1324
        %vm1326 = vweird.f32 %v1121
        %vm1327 = vweird.f32 %v1321
        %vm1328 = vmor %vm1326, %vm1327
        %v1329 = vsel %vm1328, %v1321, %v1325
        %v1330 = vand.u32 2147483647, %v1121
        %vm1331 = vcmp.eq.f32.partialorder %v1330, 8.507059e+37
        %v1332 = vand.u32 %v1121, 2147483648
        %v1333 = vor.u32 1.1754944e-38, %v1332
        %v1334 = vsel %vm1331, %v1333, %v1329
        %v1335 = vmul.f32 %v577, %v1334
        %v1336 = vrcp.pop %v1122
        %v1337 = vmul.f32 %v1122, %v1336
        %v1338 = vsub.f32 1.0, %v1337
        %v1339 = vmul.f32 %v1336, %v1338
        %v1340 = vadd.f32 %v1336, %v1339
        %vm1341 = vweird.f32 %v1122
        %vm1342 = vweird.f32 %v1336
        %vm1343 = vmor %vm1341, %vm1342
        %v1344 = vsel %vm1343, %v1336, %v1340
        %v1345 = vand.u32 2147483647, %v1122
        %vm1346 = vcmp.eq.f32.partialorder %v1345, 8.507059e+37
        %v1347 = vand.u32 %v1122, 2147483648
        %v1348 = vor.u32 1.1754944e-38, %v1347
        %v1349 = vsel %vm1346, %v1348, %v1344
        %v1350 = vmul.f32 %v578, %v1349
        %v1351 = vrcp.pop %v1123
        %v1352 = vmul.f32 %v1123, %v1351
        %v1353 = vsub.f32 1.0, %v1352
        %v1354 = vmul.f32 %v1351, %v1353
        %v1355 = vadd.f32 %v1351, %v1354
        %vm1356 = vweird.f32 %v1123
        %vm1357 = vweird.f32 %v1351
        %vm1358 = vmor %vm1356, %vm1357
        %v1359 = vsel %vm1358, %v1351, %v1355
        %v1360 = vand.u32 2147483647, %v1123
        %vm1361 = vcmp.eq.f32.partialorder %v1360, 8.507059e+37
        %v1362 = vand.u32 %v1123, 2147483648
        %v1363 = vor.u32 1.1754944e-38, %v1362
        %v1364 = vsel %vm1361, %v1363, %v1359
        %v1365 = vmul.f32 %v579, %v1364
        %v1366 = vrcp.pop %v1124
        %v1367 = vmul.f32 %v1124, %v1366
        %v1368 = vsub.f32 1.0, %v1367
        %v1369 = vmul.f32 %v1366, %v1368
        %v1370 = vadd.f32 %v1366, %v1369
        %vm1371 = vweird.f32 %v1124
        %vm1372 = vweird.f32 %v1366
        %vm1373 = vmor %vm1371, %vm1372
        %v1374 = vsel %vm1373, %v1366, %v1370
        %v1375 = vand.u32 2147483647, %v1124
        %vm1376 = vcmp.eq.f32.partialorder %v1375, 8.507059e+37
        %v1377 = vand.u32 %v1124, 2147483648
        %v1378 = vor.u32 1.1754944e-38, %v1377
        %v1379 = vsel %vm1376, %v1378, %v1374
        %v1380 = vmul.f32 %v580, %v1379
        %v1381 = vrcp.pop %v1125
        %v1382 = vmul.f32 %v1125, %v1381
        %v1383 = vsub.f32 1.0, %v1382
        %v1384 = vmul.f32 %v1381, %v1383
        %v1385 = vadd.f32 %v1381, %v1384
        %vm1386 = vweird.f32 %v1125
        %vm1387 = vweird.f32 %v1381
        %vm1388 = vmor %vm1386, %vm1387
        %v1389 = vsel %vm1388, %v1381, %v1385
        %v1390 = vand.u32 2147483647, %v1125
        %vm1391 = vcmp.eq.f32.partialorder %v1390, 8.507059e+37
        %v1392 = vand.u32 %v1125, 2147483648
        %v1393 = vor.u32 1.1754944e-38, %v1392
        %v1394 = vsel %vm1391, %v1393, %v1389
        %v1395 = vmul.f32 %v581, %v1394
        %v1396 = vrcp.pop %v1126
        %v1397 = vmul.f32 %v1126, %v1396
        %v1398 = vsub.f32 1.0, %v1397
        %v1399 = vmul.f32 %v1396, %v1398
        %v1400 = vadd.f32 %v1396, %v1399
        %vm1401 = vweird.f32 %v1126
        %vm1402 = vweird.f32 %v1396
        %vm1403 = vmor %vm1401, %vm1402
        %v1404 = vsel %vm1403, %v1396, %v1400
        %v1405 = vand.u32 2147483647, %v1126
        %vm1406 = vcmp.eq.f32.partialorder %v1405, 8.507059e+37
        %v1407 = vand.u32 %v1126, 2147483648
        %v1408 = vor.u32 1.1754944e-38, %v1407
        %v1409 = vsel %vm1406, %v1408, %v1404
        %v1410 = vmul.f32 %v582, %v1409
        %v1411 = vrcp.pop %v1127
        %v1412 = vmul.f32 %v1127, %v1411
        %v1413 = vsub.f32 1.0, %v1412
        %v1414 = vmul.f32 %v1411, %v1413
        %v1415 = vadd.f32 %v1411, %v1414
        %vm1416 = vweird.f32 %v1127
        %vm1417 = vweird.f32 %v1411
        %vm1418 = vmor %vm1416, %vm1417
        %v1419 = vsel %vm1418, %v1411, %v1415
        %v1420 = vand.u32 2147483647, %v1127
        %vm1421 = vcmp.eq.f32.partialorder %v1420, 8.507059e+37
        %v1422 = vand.u32 %v1127, 2147483648
        %v1423 = vor.u32 1.1754944e-38, %v1422
        %v1424 = vsel %vm1421, %v1423, %v1419
        %v1425 = vmul.f32 %v583, %v1424
        %v1426 = vrcp.pop %v1128
        %v1427 = vmul.f32 %v1128, %v1426
        %v1428 = vsub.f32 1.0, %v1427
        %v1429 = vmul.f32 %v1426, %v1428
        %v1430 = vadd.f32 %v1426, %v1429
        %vm1431 = vweird.f32 %v1128
        %vm1432 = vweird.f32 %v1426
        %vm1433 = vmor %vm1431, %vm1432
        %v1434 = vsel %vm1433, %v1426, %v1430
        %v1435 = vand.u32 2147483647, %v1128
        %vm1436 = vcmp.eq.f32.partialorder %v1435, 8.507059e+37
        %v1437 = vand.u32 %v1128, 2147483648
        %v1438 = vor.u32 1.1754944e-38, %v1437
        %v1439 = vsel %vm1436, %v1438, %v1434
        %v1440 = vmul.f32 %v584, %v1439
        %v1441 = vrcp.pop %v1129
        %v1442 = vmul.f32 %v1129, %v1441
        %v1443 = vsub.f32 1.0, %v1442
        %v1444 = vmul.f32 %v1441, %v1443
        %v1445 = vadd.f32 %v1441, %v1444
        %vm1446 = vweird.f32 %v1129
        %vm1447 = vweird.f32 %v1441
        %vm1448 = vmor %vm1446, %vm1447
        %v1449 = vsel %vm1448, %v1441, %v1445
        %v1450 = vand.u32 2147483647, %v1129
        %vm1451 = vcmp.eq.f32.partialorder %v1450, 8.507059e+37
        %v1452 = vand.u32 %v1129, 2147483648
        %v1453 = vor.u32 1.1754944e-38, %v1452
        %v1454 = vsel %vm1451, %v1453, %v1449
        %v1455 = vmul.f32 %v585, %v1454
        %v1456 = vrcp.pop %v1130
        %v1457 = vmul.f32 %v1130, %v1456
        %v1458 = vsub.f32 1.0, %v1457
        %v1459 = vmul.f32 %v1456, %v1458
        %v1460 = vadd.f32 %v1456, %v1459
        %vm1461 = vweird.f32 %v1130
        %vm1462 = vweird.f32 %v1456
        %vm1463 = vmor %vm1461, %vm1462
        %v1464 = vsel %vm1463, %v1456, %v1460
        %v1465 = vand.u32 2147483647, %v1130
        %vm1466 = vcmp.eq.f32.partialorder %v1465, 8.507059e+37
        %v1467 = vand.u32 %v1130, 2147483648
        %v1468 = vor.u32 1.1754944e-38, %v1467
        %v1469 = vsel %vm1466, %v1468, %v1464
        %v1470 = vmul.f32 %v586, %v1469
        %v1471 = vrcp.pop %v1131
        %v1472 = vmul.f32 %v1131, %v1471
        %v1473 = vsub.f32 1.0, %v1472
        %v1474 = vmul.f32 %v1471, %v1473
        %v1475 = vadd.f32 %v1471, %v1474
        %vm1476 = vweird.f32 %v1131
        %vm1477 = vweird.f32 %v1471
        %vm1478 = vmor %vm1476, %vm1477
        %v1479 = vsel %vm1478, %v1471, %v1475
        %v1480 = vand.u32 2147483647, %v1131
        %vm1481 = vcmp.eq.f32.partialorder %v1480, 8.507059e+37
        %v1482 = vand.u32 %v1131, 2147483648
        %v1483 = vor.u32 1.1754944e-38, %v1482
        %v1484 = vsel %vm1481, %v1483, %v1479
        %v1485 = vmul.f32 %v587, %v1484
        %v1486 = vrcp.pop %v1132
        %v1487 = vmul.f32 %v1132, %v1486
        %v1488 = vsub.f32 1.0, %v1487
        %v1489 = vmul.f32 %v1486, %v1488
        %v1490 = vadd.f32 %v1486, %v1489
        %vm1491 = vweird.f32 %v1132
        %vm1492 = vweird.f32 %v1486
        %vm1493 = vmor %vm1491, %vm1492
        %v1494 = vsel %vm1493, %v1486, %v1490
        %v1495 = vand.u32 2147483647, %v1132
        %vm1496 = vcmp.eq.f32.partialorder %v1495, 8.507059e+37
        %v1497 = vand.u32 %v1132, 2147483648
        %v1498 = vor.u32 1.1754944e-38, %v1497
        %v1499 = vsel %vm1496, %v1498, %v1494
        %v1500 = vmul.f32 %v588, %v1499
        %v1501 = vrcp.pop %v1133
        %v1502 = vmul.f32 %v1133, %v1501
        %v1503 = vsub.f32 1.0, %v1502
        %v1504 = vmul.f32 %v1501, %v1503
        %v1505 = vadd.f32 %v1501, %v1504
        %vm1506 = vweird.f32 %v1133
        %vm1507 = vweird.f32 %v1501
        %vm1508 = vmor %vm1506, %vm1507
        %v1509 = vsel %vm1508, %v1501, %v1505
        %v1510 = vand.u32 2147483647, %v1133
        %vm1511 = vcmp.eq.f32.partialorder %v1510, 8.507059e+37
        %v1512 = vand.u32 %v1133, 2147483648
        %v1513 = vor.u32 1.1754944e-38, %v1512
        %v1514 = vsel %vm1511, %v1513, %v1509
        %v1515 = vmul.f32 %v589, %v1514
        %v1516 = vrcp.pop %v1134
        %v1517 = vmul.f32 %v1134, %v1516
        %v1518 = vsub.f32 1.0, %v1517
        %v1519 = vmul.f32 %v1516, %v1518
        %v1520 = vadd.f32 %v1516, %v1519
        %vm1521 = vweird.f32 %v1134
        %vm1522 = vweird.f32 %v1516
        %vm1523 = vmor %vm1521, %vm1522
        %v1524 = vsel %vm1523, %v1516, %v1520
        %v1525 = vand.u32 2147483647, %v1134
        %vm1526 = vcmp.eq.f32.partialorder %v1525, 8.507059e+37
        %v1527 = vand.u32 %v1134, 2147483648
        %v1528 = vor.u32 1.1754944e-38, %v1527
        %v1529 = vsel %vm1526, %v1528, %v1524
        %v1530 = vmul.f32 %v590, %v1529
        %v1531 = vrcp.pop %v1135
        %v1532 = vmul.f32 %v1135, %v1531
        %v1533 = vsub.f32 1.0, %v1532
        %v1534 = vmul.f32 %v1531, %v1533
        %v1535 = vadd.f32 %v1531, %v1534
        %vm1536 = vweird.f32 %v1135
        %vm1537 = vweird.f32 %v1531
        %vm1538 = vmor %vm1536, %vm1537
        %v1539 = vsel %vm1538, %v1531, %v1535
        %v1540 = vand.u32 2147483647, %v1135
        %vm1541 = vcmp.eq.f32.partialorder %v1540, 8.507059e+37
        %v1542 = vand.u32 %v1135, 2147483648
        %v1543 = vor.u32 1.1754944e-38, %v1542
        %v1544 = vsel %vm1541, %v1543, %v1539
        %v1545 = vmul.f32 %v591, %v1544
        %v1546 = vrcp.pop %v1136
        %v1547 = vmul.f32 %v1136, %v1546
        %v1548 = vsub.f32 1.0, %v1547
        %v1549 = vmul.f32 %v1546, %v1548
        %v1550 = vadd.f32 %v1546, %v1549
        %vm1551 = vweird.f32 %v1136
        %vm1552 = vweird.f32 %v1546
        %vm1553 = vmor %vm1551, %vm1552
        %v1554 = vsel %vm1553, %v1546, %v1550
        %v1555 = vand.u32 2147483647, %v1136
        %vm1556 = vcmp.eq.f32.partialorder %v1555, 8.507059e+37
        %v1557 = vand.u32 %v1136, 2147483648
        %v1558 = vor.u32 1.1754944e-38, %v1557
        %v1559 = vsel %vm1556, %v1558, %v1554
        %v1560 = vmul.f32 %v592, %v1559
        %v1561 = vrcp.pop %v1137
        %v1562 = vmul.f32 %v1137, %v1561
        %v1563 = vsub.f32 1.0, %v1562
        %v1564 = vmul.f32 %v1561, %v1563
        %v1565 = vadd.f32 %v1561, %v1564
        %vm1566 = vweird.f32 %v1137
        %vm1567 = vweird.f32 %v1561
        %vm1568 = vmor %vm1566, %vm1567
        %v1569 = vsel %vm1568, %v1561, %v1565
        %v1570 = vand.u32 2147483647, %v1137
        %vm1571 = vcmp.eq.f32.partialorder %v1570, 8.507059e+37
        %v1572 = vand.u32 %v1137, 2147483648
        %v1573 = vor.u32 1.1754944e-38, %v1572
        %v1574 = vsel %vm1571, %v1573, %v1569
        %v1575 = vmul.f32 %v593, %v1574
        %v1576 = vrcp.pop %v1138
        %v1577 = vmul.f32 %v1138, %v1576
        %v1578 = vsub.f32 1.0, %v1577
        %v1579 = vmul.f32 %v1576, %v1578
        %v1580 = vadd.f32 %v1576, %v1579
        %vm1581 = vweird.f32 %v1138
        %vm1582 = vweird.f32 %v1576
        %vm1583 = vmor %vm1581, %vm1582
        %v1584 = vsel %vm1583, %v1576, %v1580
        %v1585 = vand.u32 2147483647, %v1138
        %vm1586 = vcmp.eq.f32.partialorder %v1585, 8.507059e+37
        %v1587 = vand.u32 %v1138, 2147483648
        %v1588 = vor.u32 1.1754944e-38, %v1587
        %v1589 = vsel %vm1586, %v1588, %v1584
        %v1590 = vmul.f32 %v594, %v1589
        %v1591 = vrcp.pop %v1139
        %v1592 = vmul.f32 %v1139, %v1591
        %v1593 = vsub.f32 1.0, %v1592
        %v1594 = vmul.f32 %v1591, %v1593
        %v1595 = vadd.f32 %v1591, %v1594
        %vm1596 = vweird.f32 %v1139
        %vm1597 = vweird.f32 %v1591
        %vm1598 = vmor %vm1596, %vm1597
        %v1599 = vsel %vm1598, %v1591, %v1595
        %v1600 = vand.u32 2147483647, %v1139
        %vm1601 = vcmp.eq.f32.partialorder %v1600, 8.507059e+37
        %v1602 = vand.u32 %v1139, 2147483648
        %v1603 = vor.u32 1.1754944e-38, %v1602
        %v1604 = vsel %vm1601, %v1603, %v1599
        %v1605 = vmul.f32 %v595, %v1604
        %v1606 = vrcp.pop %v1140
        %v1607 = vmul.f32 %v1140, %v1606
        %v1608 = vsub.f32 1.0, %v1607
        %v1609 = vmul.f32 %v1606, %v1608
        %v1610 = vadd.f32 %v1606, %v1609
        %vm1611 = vweird.f32 %v1140
        %vm1612 = vweird.f32 %v1606
        %vm1613 = vmor %vm1611, %vm1612
        %v1614 = vsel %vm1613, %v1606, %v1610
        %v1615 = vand.u32 2147483647, %v1140
        %vm1616 = vcmp.eq.f32.partialorder %v1615, 8.507059e+37
        %v1617 = vand.u32 %v1140, 2147483648
        %v1618 = vor.u32 1.1754944e-38, %v1617
        %v1619 = vsel %vm1616, %v1618, %v1614
        %v1620 = vmul.f32 %v596, %v1619
        %v1621 = vld [vmem:[#allocation6] sm:$0x1]
        %v1623 = vperm.slane %v1621, 0
        %v1625 = vmul.f32 %v1155, %v1623
        %v1626 = vmul.f32 %v1170, %v1623
        %v1627 = vmul.f32 %v1185, %v1623
        %v1628 = vmul.f32 %v1200, %v1623
        %v1629 = vmul.f32 %v1215, %v1623
        %v1630 = vmul.f32 %v1230, %v1623
        %v1631 = vmul.f32 %v1245, %v1623
        %v1632 = vmul.f32 %v1260, %v1623
        %v1633 = vmul.f32 %v1275, %v1623
        %v1634 = vmul.f32 %v1290, %v1623
        %v1635 = vmul.f32 %v1305, %v1623
        %v1636 = vmul.f32 %v1320, %v1623
        %v1637 = vmul.f32 %v1335, %v1623
        %v1638 = vmul.f32 %v1350, %v1623
        %v1639 = vmul.f32 %v1365, %v1623
        %v1640 = vmul.f32 %v1380, %v1623
        %v1641 = vmul.f32 %v1395, %v1623
        %v1642 = vmul.f32 %v1410, %v1623
        %v1643 = vmul.f32 %v1425, %v1623
        %v1644 = vmul.f32 %v1440, %v1623
        %v1645 = vmul.f32 %v1455, %v1623
        %v1646 = vmul.f32 %v1470, %v1623
        %v1647 = vmul.f32 %v1485, %v1623
        %v1648 = vmul.f32 %v1500, %v1623
        %v1649 = vmul.f32 %v1515, %v1623
        %v1650 = vmul.f32 %v1530, %v1623
        %v1651 = vmul.f32 %v1545, %v1623
        %v1652 = vmul.f32 %v1560, %v1623
        %v1653 = vmul.f32 %v1575, %v1623
        %v1654 = vmul.f32 %v1590, %v1623
        %v1655 = vmul.f32 %v1605, %v1623
        %v1656 = vmul.f32 %v1620, %v1623
        %1657 = vst [vmem:[%s286] sm:$0xff] %v1625
        %1658 = vst [vmem:[%s286 + $0x8] sm:$0xff] %v1626
        %1659 = vst [vmem:[%s286 + $0x10] sm:$0xff] %v1627
        %1660 = vst [vmem:[%s286 + $0x18] sm:$0xff] %v1628
        %1661 = vst [vmem:[%s286 + $0x20] sm:$0xff] %v1629
        %1662 = vst [vmem:[%s286 + $0x28] sm:$0xff] %v1630
        %1663 = vst [vmem:[%s286 + $0x30] sm:$0xff] %v1631
        %1664 = vst [vmem:[%s286 + $0x38] sm:$0xff] %v1632
        %1665 = vst [vmem:[%s286 + $0x40] sm:$0xff] %v1633
        %1666 = vst [vmem:[%s286 + $0x48] sm:$0xff] %v1634
        %1667 = vst [vmem:[%s286 + $0x50] sm:$0xff] %v1635
        %1668 = vst [vmem:[%s286 + $0x58] sm:$0xff] %v1636
        %1669 = vst [vmem:[%s286 + $0x60] sm:$0xff] %v1637
        %1670 = vst [vmem:[%s286 + $0x68] sm:$0xff] %v1638
        %1671 = vst [vmem:[%s286 + $0x70] sm:$0xff] %v1639
        %1672 = vst [vmem:[%s286 + $0x78] sm:$0xff] %v1640
        %1673 = vst [vmem:[%s286 + $0x80] sm:$0xff] %v1641
        %1674 = vst [vmem:[%s286 + $0x88] sm:$0xff] %v1642
        %1675 = vst [vmem:[%s286 + $0x90] sm:$0xff] %v1643
        %1676 = vst [vmem:[%s286 + $0x98] sm:$0xff] %v1644
        %1677 = vst [vmem:[%s286 + $0xa0] sm:$0xff] %v1645
        %1678 = vst [vmem:[%s286 + $0xa8] sm:$0xff] %v1646
        %1679 = vst [vmem:[%s286 + $0xb0] sm:$0xff] %v1647
        %1680 = vst [vmem:[%s286 + $0xb8] sm:$0xff] %v1648
        %1681 = vst [vmem:[%s286 + $0xc0] sm:$0xff] %v1649
        %1682 = vst [vmem:[%s286 + $0xc8] sm:$0xff] %v1650
        %1683 = vst [vmem:[%s286 + $0xd0] sm:$0xff] %v1651
        %1684 = vst [vmem:[%s286 + $0xd8] sm:$0xff] %v1652
        %1685 = vst [vmem:[%s286 + $0xe0] sm:$0xff] %v1653
        %1686 = vst [vmem:[%s286 + $0xe8] sm:$0xff] %v1654
        %1687 = vst [vmem:[%s286 + $0xf0] sm:$0xff] %v1655
        %1688 = vst [vmem:[%s286 + $0xf8] sm:$0xff] %v1656
        %s1689 = smul.u32 32, %s19
        %p1690 = scmp.lt.s32.totalorder %s1689, 63
        %s1691 = scalar_select %p1690, %s1689, 63
        %s1692 = smul.addr %s1691, 8
        %s1693 = scalar_lea.vmem %s4, %s1692
        %s1694 = smul.u32 32, %s19
        %p1695 = scmp.lt.s32.totalorder %s1694, 63
        %s1696 = scalar_select %p1695, %s1694, 63
        %s1697 = smul.addr %s1696, 8
        %s1698 = scalar_lea.vmem %s5, %s1697
        // Predicated region
        $region49: #{attssd_lite_forward.6} parent=35 // pred_check
          %p1699 = pneg %p126
        $region50: #{attssd_lite_forward.6} parent=35 // pred_check_branch
          %1701 = sbr.rel (%p1699) target = $region52
        $region51: #{attssd_lite_forward.6} parent=35 // pred_region
          %s1702 = smul.u32 32, %s19
        $region52: #{attssd_lite_forward.6} parent=35 // pred_fallthru
          _
        // Predicated region
        $region53: #{attssd_lite_forward.6} parent=35 // pred_check
          %p1703 = pneg %p152
        $region54: #{attssd_lite_forward.6} parent=35 // pred_check_branch
          %1705 = sbr.rel (%p1703) target = $region56
        $region55: #{attssd_lite_forward.6} parent=35 // pred_region
          %s1706 = smul.u32 32, %s19
        $region56: #{attssd_lite_forward.6} parent=35 // pred_fallthru
          _
      $region36: #{attssd_lite_forward.6} parent=5 // pred_fallthru
        _
      %p1707 = scmp.le.s32.totalorder 2, %s14
      // Predicated region
      $region57: #{attssd_lite_forward.6} parent=5 // pred_check
        %p1708 = pneg %p1707
      $region58: #{attssd_lite_forward.6} parent=5 // pred_check_branch
        %1710 = sbr.rel (%p1708) target = $region60
      $region59: #{attssd_lite_forward.6} parent=5 // pred_region
        %s1711 = ssub.s32 %s14, 2
        // Predicated region
        $region61: #{attssd_lite_forward.6} parent=59 // pred_check
          %p1712 = pneg %p132
        $region62: #{attssd_lite_forward.6} parent=59 // pred_check_branch
          %1714 = sbr.rel (%p1712) target = $region64
        $region63: #{attssd_lite_forward.6} parent=59 // pred_region
          %s1715 = smul.u32 32, %s20
          %p1716 = scmp.lt.s32.totalorder %s1715, 63
          %s1717 = scalar_select %p1716, %s1715, 63
          %s1718 = smul.addr %s1717, 8
          %s1719 = scalar_lea.vmem %s4, %s1718
        $region64: #{attssd_lite_forward.6} parent=59 // pred_fallthru
          _
        // Predicated region
        $region65: #{attssd_lite_forward.6} parent=59 // pred_check
          %p1720 = pneg %p158
        $region66: #{attssd_lite_forward.6} parent=59 // pred_check_branch
          %1722 = sbr.rel (%p1720) target = $region68
        $region67: #{attssd_lite_forward.6} parent=59 // pred_region
          %s1723 = smul.u32 32, %s20
          %p1724 = scmp.lt.s32.totalorder %s1723, 63
          %s1725 = scalar_select %p1724, %s1723, 63
          %s1726 = smul.addr %s1725, 8
          %s1727 = scalar_lea.vmem %s5, %s1726
        $region68: #{attssd_lite_forward.6} parent=59 // pred_fallthru
          _
      $region60: #{attssd_lite_forward.6} parent=5 // pred_fallthru
        _
    $region6: #{attssd_lite_forward.6} parent=1 // loop_footer
      %s18 = sadd.s32 1, %s14
    $region7: #{attssd_lite_forward.6} parent=1 // loop_footer_branch
      %13 = sbr.rel target = $region3
    $region8: #{attssd_lite_forward.6} parent=1 // loop_exit
      _
    %1728 = vsyncpa [#allocation3], 1
    %s1729 = scalar_lea.sflag [#allocation3], 1
    %1730 = vsyncpa %s1729, 1
    %1731 = vsyncpa [#allocation5], 1

// kernel: attssd_lite_forward.7
$region0: #{attssd_lite_forward.7}
  #allocation0 [shape = 'u32[]', space=smem, size = 0x4, offset = 0x4, fixed_abs, tag = 'smem constant byte address 0x4 - core index']
  #allocation1 [shape = 'u32[72,128]{1,0:T(1,128)}', space=vmem, size = 0x9000, scoped, tag = 'internal scratch']
  %s0 = inlined_call_operand.vmem [shape: bf16[128,72], index: 0, kind: input, shape index: {}]
  %s1 = inlined_call_operand.vmem [shape: bf16[72,128], index: 1, kind: input, shape index: {}]
  %s2 = inlined_call_operand.vmem [shape: f32[1,128], index: 2, kind: input, shape index: {}]
  %s3 = inlined_call_operand.vmem [shape: f32[128,128], index: 3, kind: output, shape index: {}]
  %s4 = sld [smem:[#allocation0]]
  $region22: #{attssd_lite_forward.7} parent=0
    _
  %s6 = ssub.s32 1, %s4
  %s7 = scalar_select 0, %s6, %s4
  // Predicated region
  $region2: #{attssd_lite_forward.7} parent=0 // pred_check
    _
  $region3: #{attssd_lite_forward.7} parent=0 // pred_check_branch
    %9 = sbr.rel (0) target = $region5
  $region4: #{attssd_lite_forward.7} parent=0 // pred_region
    _
  $region5: #{attssd_lite_forward.7} parent=0 // pred_fallthru
    _
  // Predicated region
  $region6: #{attssd_lite_forward.7} parent=0 // pred_check
    _
  $region7: #{attssd_lite_forward.7} parent=0 // pred_check_branch
    %11 = sbr.rel (0) target = $region9
  $region8: #{attssd_lite_forward.7} parent=0 // pred_region
    _
  $region9: #{attssd_lite_forward.7} parent=0 // pred_fallthru
    _
  // Predicated region
  $region10: #{attssd_lite_forward.7} parent=0 // pred_check
    _
  $region11: #{attssd_lite_forward.7} parent=0 // pred_check_branch
    %13 = sbr.rel (0) target = $region13
  $region12: #{attssd_lite_forward.7} parent=0 // pred_region
    _
  $region13: #{attssd_lite_forward.7} parent=0 // pred_fallthru
    _
  %v15 = vld [vmem:[%s0] sm:$0xf]
  %v16 = vld [vmem:[%s0 + $0x4] sm:$0xf]
  %v17 = vld [vmem:[%s0 + $0x8] sm:$0xf]
  %v18 = vld [vmem:[%s0 + $0xc] sm:$0xf]
  %v19 = vld [vmem:[%s0 + $0x10] sm:$0xf]
  %v20 = vld [vmem:[%s0 + $0x14] sm:$0xf]
  %v21 = vld [vmem:[%s0 + $0x18] sm:$0xf]
  %v22 = vld [vmem:[%s0 + $0x1c] sm:$0xf]
  %v23 = vld [vmem:[%s0 + $0x20] sm:$0xf]
  %v24 = vld [vmem:[%s0 + $0x24] sm:$0xf]
  %v25 = vld [vmem:[%s0 + $0x28] sm:$0xf]
  %v26 = vld [vmem:[%s0 + $0x2c] sm:$0xf]
  %v27 = vld [vmem:[%s0 + $0x30] sm:$0xf]
  %v28 = vld [vmem:[%s0 + $0x34] sm:$0xf]
  %v29 = vld [vmem:[%s0 + $0x38] sm:$0xf]
  %v30 = vld [vmem:[%s0 + $0x3c] sm:$0xf]
  %v31 = vld [vmem:[%s1] sm:$0xf]
  %v32 = vld [vmem:[%s1 + $0x4] sm:$0xf]
  %v33 = vld [vmem:[%s1 + $0x8] sm:$0xf]
  %v34 = vld [vmem:[%s1 + $0xc] sm:$0xf]
  %v35 = vld [vmem:[%s1 + $0x10] sm:$0xf]
  %v36 = vld [vmem:[%s1 + $0x14] sm:$0xf]
  %v37 = vld [vmem:[%s1 + $0x18] sm:$0xf]
  %v38 = vld [vmem:[%s1 + $0x1c] sm:$0xf]
  %v39 = vld [vmem:[%s1 + $0x20] sm:$0xf]
  %v40 = vld [vmem:[%s2] sm:$0x1]
  %v42 = vperm.slane %v40, 0
  %v60 = vunpack.c.l.b16 %v15
  %v61 = vunpack.c.l.b16 %v16
  %v62 = vunpack.c.l.b16 %v17
  %v63 = vunpack.c.l.b16 %v18
  %v64 = vunpack.c.l.b16 %v19
  %v65 = vunpack.c.l.b16 %v20
  %v66 = vunpack.c.l.b16 %v21
  %v67 = vunpack.c.l.b16 %v22
  %v68 = vunpack.c.l.b16 %v23
  %v69 = vunpack.c.l.b16 %v24
  %v70 = vunpack.c.l.b16 %v25
  %v71 = vunpack.c.l.b16 %v26
  %v72 = vunpack.c.l.b16 %v27
  %v73 = vunpack.c.l.b16 %v28
  %v74 = vunpack.c.l.b16 %v29
  %v75 = vunpack.c.l.b16 %v30
  %v76 = vpack.c.b16 %v61, %v60
  %v77 = vpack.c.b16 %v63, %v62
  %v78 = vpack.c.b16 %v65, %v64
  %v79 = vpack.c.b16 %v67, %v66
  %v80 = vpack.c.b16 %v69, %v68
  %v81 = vpack.c.b16 %v71, %v70
  %v82 = vpack.c.b16 %v73, %v72
  %v83 = vpack.c.b16 %v75, %v74
  %v93 = vunpack.c.l.b16 %v31
  %v94 = vunpack.c.l.b16 %v32
  %v95 = vunpack.c.l.b16 %v33
  %v96 = vunpack.c.l.b16 %v34
  %v97 = vunpack.c.l.b16 %v35
  %v98 = vunpack.c.l.b16 %v36
  %v99 = vunpack.c.l.b16 %v37
  %v100 = vunpack.c.l.b16 %v38
  %v101 = vunpack.c.l.b16 %v39
  %v102 = vpack.c.b16 %v94, %v93
  %v103 = vpack.c.b16 %v96, %v95
  %v104 = vpack.c.b16 %v98, %v97
  %v105 = vpack.c.b16 %v100, %v99
  %v106 = vpack.c.b16 %v101, %v101
  %vm111 = vcmask 588800
  %v113 = vsel %vm111, %v76, 0
  %v116 = vsel %vm111, %v77, 0
  %v119 = vsel %vm111, %v78, 0
  %v122 = vsel %vm111, %v79, 0
  %v125 = vsel %vm111, %v80, 0
  %v128 = vsel %vm111, %v81, 0
  %v131 = vsel %vm111, %v82, 0
  %v134 = vsel %vm111, %v83, 0
  %vm136 = vcmask 1043456
  %v138 = vsel %vm136, %v106, 0
  %140 = vmatpush.bf16.msra.mxu0 0
  %141 = vmatpush.bf16.msra.mxu0 0
  %142 = vmatpush.bf16.msra.mxu0 0
  %143 = vmatpush.bf16.msra.mxu0 %v138
  %144 = vmatpush.bf16.msra.mxu0 %v105
  %145 = vmatpush.bf16.msra.mxu0 %v104
  %146 = vmatpush.bf16.msra.mxu0 %v103
  %147 = vmatpush.bf16.msra.mxu0 %v102
  %148 = vmatmul.bf16.gmra.mxu0 %v113
  %v149 = vpop.f32.mrf.mxu0
  %v150 = vadd.f32 %v42, %v149
  %v151 = vpop.f32.mrf.mxu0
  %v152 = vadd.f32 %v42, %v151
  %153 = vmatmul.bf16.gmra.mxu0 %v116
  %v154 = vpop.f32.mrf.mxu0
  %v155 = vadd.f32 %v42, %v154
  %v156 = vpop.f32.mrf.mxu0
  %v157 = vadd.f32 %v42, %v156
  %158 = vmatmul.bf16.gmra.mxu0 %v119
  %v159 = vpop.f32.mrf.mxu0
  %v160 = vadd.f32 %v42, %v159
  %v161 = vpop.f32.mrf.mxu0
  %v162 = vadd.f32 %v42, %v161
  %163 = vmatmul.bf16.gmra.mxu0 %v122
  %v164 = vpop.f32.mrf.mxu0
  %v165 = vadd.f32 %v42, %v164
  %v166 = vpop.f32.mrf.mxu0
  %v167 = vadd.f32 %v42, %v166
  %168 = vmatmul.bf16.gmra.mxu0 %v125
  %v169 = vpop.f32.mrf.mxu0
  %v170 = vadd.f32 %v42, %v169
  %v171 = vpop.f32.mrf.mxu0
  %v172 = vadd.f32 %v42, %v171
  %173 = vmatmul.bf16.gmra.mxu0 %v128
  %v174 = vpop.f32.mrf.mxu0
  %v175 = vadd.f32 %v42, %v174
  %v176 = vpop.f32.mrf.mxu0
  %v177 = vadd.f32 %v42, %v176
  %178 = vmatmul.bf16.gmra.mxu0 %v131
  %v179 = vpop.f32.mrf.mxu0
  %v180 = vadd.f32 %v42, %v179
  %v181 = vpop.f32.mrf.mxu0
  %v182 = vadd.f32 %v42, %v181
  %183 = vmatmul.bf16.gmra.mxu0 %v134
  %v184 = vpop.f32.mrf.mxu0
  %v185 = vadd.f32 %v42, %v184
  %v186 = vpop.f32.mrf.mxu0
  %v187 = vadd.f32 %v42, %v186
  %188 = vdwg.mxu0
  %v189 = vmax.f32 %v150, 0.0
  %v190 = vmax.f32 %v152, 0.0
  %v191 = vmax.f32 %v155, 0.0
  %v192 = vmax.f32 %v157, 0.0
  %v193 = vmax.f32 %v160, 0.0
  %v194 = vmax.f32 %v162, 0.0
  %v195 = vmax.f32 %v165, 0.0
  %v196 = vmax.f32 %v167, 0.0
  %v197 = vmax.f32 %v170, 0.0
  %v198 = vmax.f32 %v172, 0.0
  %v199 = vmax.f32 %v175, 0.0
  %v200 = vmax.f32 %v177, 0.0
  %v201 = vmax.f32 %v180, 0.0
  %v202 = vmax.f32 %v182, 0.0
  %v203 = vmax.f32 %v185, 0.0
  %v204 = vmax.f32 %v187, 0.0
  %205 = vst [vmem:[%s3] sm:$0xff] %v189
  %206 = vst [vmem:[%s3 + $0x8] sm:$0xff] %v190
  %207 = vst [vmem:[%s3 + $0x10] sm:$0xff] %v191
  %208 = vst [vmem:[%s3 + $0x18] sm:$0xff] %v192
  %209 = vst [vmem:[%s3 + $0x20] sm:$0xff] %v193
  %210 = vst [vmem:[%s3 + $0x28] sm:$0xff] %v194
  %211 = vst [vmem:[%s3 + $0x30] sm:$0xff] %v195
  %212 = vst [vmem:[%s3 + $0x38] sm:$0xff] %v196
  %213 = vst [vmem:[%s3 + $0x40] sm:$0xff] %v197
  %214 = vst [vmem:[%s3 + $0x48] sm:$0xff] %v198
  %215 = vst [vmem:[%s3 + $0x50] sm:$0xff] %v199
  %216 = vst [vmem:[%s3 + $0x58] sm:$0xff] %v200
  %217 = vst [vmem:[%s3 + $0x60] sm:$0xff] %v201
  %218 = vst [vmem:[%s3 + $0x68] sm:$0xff] %v202
  %219 = vst [vmem:[%s3 + $0x70] sm:$0xff] %v203
  %220 = vst [vmem:[%s3 + $0x78] sm:$0xff] %v204
  // Predicated region
  $region14: #{attssd_lite_forward.7} parent=0 // pred_check
    _
  $region15: #{attssd_lite_forward.7} parent=0 // pred_check_branch
    %222 = sbr.rel (0) target = $region17
  $region16: #{attssd_lite_forward.7} parent=0 // pred_region
    _
  $region17: #{attssd_lite_forward.7} parent=0 // pred_fallthru
    _
  // Predicated region
  $region18: #{attssd_lite_forward.7} parent=0 // pred_check
    _
  $region19: #{attssd_lite_forward.7} parent=0 // pred_check_branch
    %224 = sbr.rel (0) target = $region21
  $region20: #{attssd_lite_forward.7} parent=0 // pred_region
    _
  $region21: #{attssd_lite_forward.7} parent=0 // pred_fallthru
    _

// kernel: attssd_lite_forward.8
$region0: #{attssd_lite_forward.8}
  #allocation0 [shape = 'u32[]', space=smem, size = 0x4, offset = 0x4, fixed_abs, tag = 'smem constant byte address 0x4 - core index']
  #allocation1 [shape = 'u32[72,128]{1,0:T(1,128)}', space=vmem, size = 0x9000, scoped, tag = 'internal scratch']
  %s0 = inlined_call_operand.vmem [shape: bf16[32,144], index: 0, kind: input, shape index: {}]
  %s1 = inlined_call_operand.vmem [shape: bf16[144,128], index: 1, kind: input, shape index: {}]
  %s2 = inlined_call_operand.vmem [shape: f32[1,128], index: 2, kind: input, shape index: {}]
  %s3 = inlined_call_operand.vmem [shape: f32[32,128], index: 3, kind: output, shape index: {}]
  %s4 = sld [smem:[#allocation0]]
  $region22: #{attssd_lite_forward.8} parent=0
    _
  %s6 = ssub.s32 1, %s4
  %s7 = scalar_select 0, %s6, %s4
  // Predicated region
  $region2: #{attssd_lite_forward.8} parent=0 // pred_check
    _
  $region3: #{attssd_lite_forward.8} parent=0 // pred_check_branch
    %9 = sbr.rel (0) target = $region5
  $region4: #{attssd_lite_forward.8} parent=0 // pred_region
    _
  $region5: #{attssd_lite_forward.8} parent=0 // pred_fallthru
    _
  // Predicated region
  $region6: #{attssd_lite_forward.8} parent=0 // pred_check
    _
  $region7: #{attssd_lite_forward.8} parent=0 // pred_check_branch
    %11 = sbr.rel (0) target = $region9
  $region8: #{attssd_lite_forward.8} parent=0 // pred_region
    _
  $region9: #{attssd_lite_forward.8} parent=0 // pred_fallthru
    _
  // Predicated region
  $region10: #{attssd_lite_forward.8} parent=0 // pred_check
    _
  $region11: #{attssd_lite_forward.8} parent=0 // pred_check_branch
    %13 = sbr.rel (0) target = $region13
  $region12: #{attssd_lite_forward.8} parent=0 // pred_region
    _
  $region13: #{attssd_lite_forward.8} parent=0 // pred_fallthru
    _
  %v15 = vld [vmem:[%s0] sm:$0xff]
  %v16 = vld [vmem:[%s0 + $0x8] sm:$0xff]
  %v17 = vld [vmem:[%s0 + $0x10] sm:$0xff]
  %v18 = vld [vmem:[%s0 + $0x18] sm:$0xff]
  %v19 = vld [vmem:[%s1] sm:$0xf]
  %v20 = vld [vmem:[%s1 + $0x4] sm:$0xf]
  %v21 = vld [vmem:[%s1 + $0x8] sm:$0xf]
  %v22 = vld [vmem:[%s1 + $0xc] sm:$0xf]
  %v23 = vld [vmem:[%s1 + $0x10] sm:$0xf]
  %v24 = vld [vmem:[%s1 + $0x14] sm:$0xf]
  %v25 = vld [vmem:[%s1 + $0x18] sm:$0xf]
  %v26 = vld [vmem:[%s1 + $0x1c] sm:$0xf]
  %v27 = vld [vmem:[%s1 + $0x20] sm:$0xf]
  %v28 = vld [vmem:[%s1 + $0x24] sm:$0xf]
  %v29 = vld [vmem:[%s1 + $0x28] sm:$0xf]
  %v30 = vld [vmem:[%s1 + $0x2c] sm:$0xf]
  %v31 = vld [vmem:[%s1 + $0x30] sm:$0xf]
  %v32 = vld [vmem:[%s1 + $0x34] sm:$0xf]
  %v33 = vld [vmem:[%s1 + $0x38] sm:$0xf]
  %v34 = vld [vmem:[%s1 + $0x3c] sm:$0xf]
  %v35 = vld [vmem:[%s1 + $0x40] sm:$0xf]
  %v36 = vld [vmem:[%s1 + $0x44] sm:$0xf]
  %v37 = vld [vmem:[%s2] sm:$0x1]
  %v39 = vperm.slane %v37, 0
  %v45 = vunpack.c.l.b16 %v15
  %v46 = vunpack.c.h.b16 %v15
  %v47 = vunpack.c.l.b16 %v16
  %v48 = vunpack.c.h.b16 %v16
  %v49 = vunpack.c.l.b16 %v17
  %v50 = vunpack.c.h.b16 %v17
  %v51 = vunpack.c.l.b16 %v18
  %v52 = vunpack.c.h.b16 %v18
  %v53 = vpack.c.b16 %v47, %v45
  %v54 = vpack.c.b16 %v48, %v46
  %v55 = vpack.c.b16 %v51, %v49
  %v56 = vpack.c.b16 %v52, %v50
  %v77 = vunpack.c.l.b16 %v19
  %v78 = vunpack.c.l.b16 %v20
  %v79 = vunpack.c.l.b16 %v21
  %v80 = vunpack.c.l.b16 %v22
  %v81 = vunpack.c.l.b16 %v23
  %v82 = vunpack.c.l.b16 %v24
  %v83 = vunpack.c.l.b16 %v25
  %v84 = vunpack.c.l.b16 %v26
  %v85 = vunpack.c.l.b16 %v27
  %v86 = vunpack.c.l.b16 %v28
  %v87 = vunpack.c.l.b16 %v29
  %v88 = vunpack.c.l.b16 %v30
  %v89 = vunpack.c.l.b16 %v31
  %v90 = vunpack.c.l.b16 %v32
  %v91 = vunpack.c.l.b16 %v33
  %v92 = vunpack.c.l.b16 %v34
  %v93 = vunpack.c.l.b16 %v35
  %v94 = vunpack.c.l.b16 %v36
  %v95 = vpack.c.b16 %v78, %v77
  %v96 = vpack.c.b16 %v80, %v79
  %v97 = vpack.c.b16 %v82, %v81
  %v98 = vpack.c.b16 %v84, %v83
  %v99 = vpack.c.b16 %v86, %v85
  %v100 = vpack.c.b16 %v88, %v87
  %v101 = vpack.c.b16 %v90, %v89
  %v102 = vpack.c.b16 %v92, %v91
  %v103 = vpack.c.b16 %v94, %v93
  %vm113 = vcmask 130048
  %v115 = vsel %vm113, %v54, 0
  %v118 = vsel %vm113, %v56, 0
  %120 = vmatpush.bf16.msra.mxu0 %v102
  %121 = vmatpush.bf16.msra.mxu0 %v101
  %122 = vmatpush.bf16.msra.mxu0 %v100
  %123 = vmatpush.bf16.msra.mxu0 %v99
  %124 = vmatpush.bf16.msra.mxu0 %v98
  %125 = vmatpush.bf16.msra.mxu0 %v97
  %126 = vmatpush.bf16.msra.mxu0 %v96
  %127 = vmatpush.bf16.msra.mxu0 %v95
  %128 = vmatmul.bf16.gmra.mxu0 %v53
  %v129 = vpop.f32.mrf.mxu0
  %v130 = vadd.f32 %v39, %v129
  %v131 = vpop.f32.mrf.mxu0
  %v132 = vadd.f32 %v39, %v131
  %133 = vmatmul.bf16.gmra.mxu0 %v55
  %v134 = vpop.f32.mrf.mxu0
  %v135 = vadd.f32 %v39, %v134
  %v136 = vpop.f32.mrf.mxu0
  %v137 = vadd.f32 %v39, %v136
  %138 = vdwg.mxu0
  %139 = vmatpush.bf16.msra.mxu0 0
  %140 = vmatpush.bf16.msra.mxu0 0
  %141 = vmatpush.bf16.msra.mxu0 0
  %142 = vmatpush.bf16.msra.mxu0 0
  %143 = vmatpush.bf16.msra.mxu0 0
  %144 = vmatpush.bf16.msra.mxu0 0
  %145 = vmatpush.bf16.msra.mxu0 0
  %146 = vmatpush.bf16.msra.mxu0 %v103
  %147 = vmatmul.bf16.gmra.mxu0 %v115
  %v148 = vpop.f32.mrf.mxu0
  %v149 = vadd.f32 %v130, %v148
  %v150 = vpop.f32.mrf.mxu0
  %v151 = vadd.f32 %v132, %v150
  %152 = vmatmul.bf16.gmra.mxu0 %v118
  %v153 = vpop.f32.mrf.mxu0
  %v154 = vadd.f32 %v135, %v153
  %v155 = vpop.f32.mrf.mxu0
  %v156 = vadd.f32 %v137, %v155
  %157 = vdwg.mxu0
  %v158 = vmax.f32 %v149, 0.0
  %v159 = vmax.f32 %v151, 0.0
  %v160 = vmax.f32 %v154, 0.0
  %v161 = vmax.f32 %v156, 0.0
  %162 = vst [vmem:[%s3] sm:$0xff] %v158
  %163 = vst [vmem:[%s3 + $0x8] sm:$0xff] %v159
  %164 = vst [vmem:[%s3 + $0x10] sm:$0xff] %v160
  %165 = vst [vmem:[%s3 + $0x18] sm:$0xff] %v161
  // Predicated region
  $region14: #{attssd_lite_forward.8} parent=0 // pred_check
    _
  $region15: #{attssd_lite_forward.8} parent=0 // pred_check_branch
    %167 = sbr.rel (0) target = $region17
  $region16: #{attssd_lite_forward.8} parent=0 // pred_region
    _
  $region17: #{attssd_lite_forward.8} parent=0 // pred_fallthru
    _
  // Predicated region
  $region18: #{attssd_lite_forward.8} parent=0 // pred_check
    _
  $region19: #{attssd_lite_forward.8} parent=0 // pred_check_branch
    %169 = sbr.rel (0) target = $region21
  $region20: #{attssd_lite_forward.8} parent=0 // pred_region
    _
  $region21: #{attssd_lite_forward.8} parent=0 // pred_fallthru
    _

// kernel: attssd_lite_forward.11
$region0: #{attssd_lite_forward.11}
  #allocation0 [shape = 'u32[]', space=smem, size = 0x4, offset = 0x4, fixed_abs, tag = 'smem constant byte address 0x4 - core index']
  #allocation1 [shape = 'u32[72,128]{1,0:T(1,128)}', space=vmem, size = 0x9000, scoped, tag = 'internal scratch']
  %s0 = inlined_call_operand.vmem [shape: bf16[32,288], index: 0, kind: input, shape index: {}]
  %s1 = inlined_call_operand.vmem [shape: bf16[288,128], index: 1, kind: input, shape index: {}]
  %s2 = inlined_call_operand.vmem [shape: f32[1,128], index: 2, kind: input, shape index: {}]
  %s3 = inlined_call_operand.vmem [shape: f32[32,128], index: 3, kind: output, shape index: {}]
  %s4 = sld [smem:[#allocation0]]
  $region22: #{attssd_lite_forward.11} parent=0
    _
  %s6 = ssub.s32 1, %s4
  %s7 = scalar_select 0, %s6, %s4
  // Predicated region
  $region2: #{attssd_lite_forward.11} parent=0 // pred_check
    _
  $region3: #{attssd_lite_forward.11} parent=0 // pred_check_branch
    %9 = sbr.rel (0) target = $region5
  $region4: #{attssd_lite_forward.11} parent=0 // pred_region
    _
  $region5: #{attssd_lite_forward.11} parent=0 // pred_fallthru
    _
  // Predicated region
  $region6: #{attssd_lite_forward.11} parent=0 // pred_check
    _
  $region7: #{attssd_lite_forward.11} parent=0 // pred_check_branch
    %11 = sbr.rel (0) target = $region9
  $region8: #{attssd_lite_forward.11} parent=0 // pred_region
    _
  $region9: #{attssd_lite_forward.11} parent=0 // pred_fallthru
    _
  // Predicated region
  $region10: #{attssd_lite_forward.11} parent=0 // pred_check
    _
  $region11: #{attssd_lite_forward.11} parent=0 // pred_check_branch
    %13 = sbr.rel (0) target = $region13
  $region12: #{attssd_lite_forward.11} parent=0 // pred_region
    _
  $region13: #{attssd_lite_forward.11} parent=0 // pred_fallthru
    _
  %v15 = vld [vmem:[%s0] sm:$0xff]
  %v16 = vld [vmem:[%s0 + $0x8] sm:$0xf]
  %v17 = vld [vmem:[%s0 + $0xc] sm:$0xff]
  %v18 = vld [vmem:[%s0 + $0x14] sm:$0xf]
  %v19 = vld [vmem:[%s0 + $0x18] sm:$0xff]
  %v20 = vld [vmem:[%s0 + $0x20] sm:$0xf]
  %v21 = vld [vmem:[%s0 + $0x24] sm:$0xff]
  %v22 = vld [vmem:[%s0 + $0x2c] sm:$0xf]
  %v23 = vld [vmem:[%s1] sm:$0xf]
  %v24 = vld [vmem:[%s1 + $0x4] sm:$0xf]
  %v25 = vld [vmem:[%s1 + $0x8] sm:$0xf]
  %v26 = vld [vmem:[%s1 + $0xc] sm:$0xf]
  %v27 = vld [vmem:[%s1 + $0x10] sm:$0xf]
  %v28 = vld [vmem:[%s1 + $0x14] sm:$0xf]
  %v29 = vld [vmem:[%s1 + $0x18] sm:$0xf]
  %v30 = vld [vmem:[%s1 + $0x1c] sm:$0xf]
  %v31 = vld [vmem:[%s1 + $0x20] sm:$0xf]
  %v32 = vld [vmem:[%s1 + $0x24] sm:$0xf]
  %v33 = vld [vmem:[%s1 + $0x28] sm:$0xf]
  %v34 = vld [vmem:[%s1 + $0x2c] sm:$0xf]
  %v35 = vld [vmem:[%s1 + $0x30] sm:$0xf]
  %v36 = vld [vmem:[%s1 + $0x34] sm:$0xf]
  %v37 = vld [vmem:[%s1 + $0x38] sm:$0xf]
  %v38 = vld [vmem:[%s1 + $0x3c] sm:$0xf]
  %v39 = vld [vmem:[%s1 + $0x40] sm:$0xf]
  %v40 = vld [vmem:[%s1 + $0x44] sm:$0xf]
  %v41 = vld [vmem:[%s1 + $0x48] sm:$0xf]
  %v42 = vld [vmem:[%s1 + $0x4c] sm:$0xf]
  %v43 = vld [vmem:[%s1 + $0x50] sm:$0xf]
  %v44 = vld [vmem:[%s1 + $0x54] sm:$0xf]
  %v45 = vld [vmem:[%s1 + $0x58] sm:$0xf]
  %v46 = vld [vmem:[%s1 + $0x5c] sm:$0xf]
  %v47 = vld [vmem:[%s1 + $0x60] sm:$0xf]
  %v48 = vld [vmem:[%s1 + $0x64] sm:$0xf]
  %v49 = vld [vmem:[%s1 + $0x68] sm:$0xf]
  %v50 = vld [vmem:[%s1 + $0x6c] sm:$0xf]
  %v51 = vld [vmem:[%s1 + $0x70] sm:$0xf]
  %v52 = vld [vmem:[%s1 + $0x74] sm:$0xf]
  %v53 = vld [vmem:[%s1 + $0x78] sm:$0xf]
  %v54 = vld [vmem:[%s1 + $0x7c] sm:$0xf]
  %v55 = vld [vmem:[%s1 + $0x80] sm:$0xf]
  %v56 = vld [vmem:[%s1 + $0x84] sm:$0xf]
  %v57 = vld [vmem:[%s1 + $0x88] sm:$0xf]
  %v58 = vld [vmem:[%s1 + $0x8c] sm:$0xf]
  %v59 = vld [vmem:[%s2] sm:$0x1]
  %v61 = vperm.slane %v59, 0
  %v71 = vunpack.c.l.b16 %v15
  %v72 = vunpack.c.h.b16 %v15
  %v73 = vunpack.c.l.b16 %v16
  %v74 = vunpack.c.l.b16 %v17
  %v75 = vunpack.c.h.b16 %v17
  %v76 = vunpack.c.l.b16 %v18
  %v77 = vunpack.c.l.b16 %v19
  %v78 = vunpack.c.h.b16 %v19
  %v79 = vunpack.c.l.b16 %v20
  %v80 = vunpack.c.l.b16 %v21
  %v81 = vunpack.c.h.b16 %v21
  %v82 = vunpack.c.l.b16 %v22
  %v83 = vpack.c.b16 %v74, %v71
  %v84 = vpack.c.b16 %v75, %v72
  %v85 = vpack.c.b16 %v76, %v73
  %v86 = vpack.c.b16 %v80, %v77
  %v87 = vpack.c.b16 %v81, %v78
  %v88 = vpack.c.b16 %v82, %v79
  %v129 = vunpack.c.l.b16 %v23
  %v130 = vunpack.c.l.b16 %v24
  %v131 = vunpack.c.l.b16 %v25
  %v132 = vunpack.c.l.b16 %v26
  %v133 = vunpack.c.l.b16 %v27
  %v134 = vunpack.c.l.b16 %v28
  %v135 = vunpack.c.l.b16 %v29
  %v136 = vunpack.c.l.b16 %v30
  %v137 = vunpack.c.l.b16 %v31
  %v138 = vunpack.c.l.b16 %v32
  %v139 = vunpack.c.l.b16 %v33
  %v140 = vunpack.c.l.b16 %v34
  %v141 = vunpack.c.l.b16 %v35
  %v142 = vunpack.c.l.b16 %v36
  %v143 = vunpack.c.l.b16 %v37
  %v144 = vunpack.c.l.b16 %v38
  %v145 = vunpack.c.l.b16 %v39
  %v146 = vunpack.c.l.b16 %v40
  %v147 = vunpack.c.l.b16 %v41
  %v148 = vunpack.c.l.b16 %v42
  %v149 = vunpack.c.l.b16 %v43
  %v150 = vunpack.c.l.b16 %v44
  %v151 = vunpack.c.l.b16 %v45
  %v152 = vunpack.c.l.b16 %v46
  %v153 = vunpack.c.l.b16 %v47
  %v154 = vunpack.c.l.b16 %v48
  %v155 = vunpack.c.l.b16 %v49
  %v156 = vunpack.c.l.b16 %v50
  %v157 = vunpack.c.l.b16 %v51
  %v158 = vunpack.c.l.b16 %v52
  %v159 = vunpack.c.l.b16 %v53
  %v160 = vunpack.c.l.b16 %v54
  %v161 = vunpack.c.l.b16 %v55
  %v162 = vunpack.c.l.b16 %v56
  %v163 = vunpack.c.l.b16 %v57
  %v164 = vunpack.c.l.b16 %v58
  %v165 = vpack.c.b16 %v130, %v129
  %v166 = vpack.c.b16 %v132, %v131
  %v167 = vpack.c.b16 %v134, %v133
  %v168 = vpack.c.b16 %v136, %v135
  %v169 = vpack.c.b16 %v138, %v137
  %v170 = vpack.c.b16 %v140, %v139
  %v171 = vpack.c.b16 %v142, %v141
  %v172 = vpack.c.b16 %v144, %v143
  %v173 = vpack.c.b16 %v146, %v145
  %v174 = vpack.c.b16 %v148, %v147
  %v175 = vpack.c.b16 %v150, %v149
  %v176 = vpack.c.b16 %v152, %v151
  %v177 = vpack.c.b16 %v154, %v153
  %v178 = vpack.c.b16 %v156, %v155
  %v179 = vpack.c.b16 %v158, %v157
  %v180 = vpack.c.b16 %v160, %v159
  %v181 = vpack.c.b16 %v162, %v161
  %v182 = vpack.c.b16 %v164, %v163
  %vm201 = vcmask 261120
  %v203 = vsel %vm201, %v85, 0
  %v206 = vsel %vm201, %v88, 0
  %208 = vmatpush.bf16.msra.mxu0 %v172
  %209 = vmatpush.bf16.msra.mxu0 %v171
  %210 = vmatpush.bf16.msra.mxu0 %v170
  %211 = vmatpush.bf16.msra.mxu0 %v169
  %212 = vmatpush.bf16.msra.mxu0 %v168
  %213 = vmatpush.bf16.msra.mxu0 %v167
  %214 = vmatpush.bf16.msra.mxu0 %v166
  %215 = vmatpush.bf16.msra.mxu0 %v165
  %216 = vmatmul.bf16.gmra.mxu0 %v83
  %v217 = vpop.f32.mrf.mxu0
  %v218 = vadd.f32 %v61, %v217
  %v219 = vpop.f32.mrf.mxu0
  %v220 = vadd.f32 %v61, %v219
  %221 = vmatmul.bf16.gmra.mxu0 %v86
  %v222 = vpop.f32.mrf.mxu0
  %v223 = vadd.f32 %v61, %v222
  %v224 = vpop.f32.mrf.mxu0
  %v225 = vadd.f32 %v61, %v224
  %226 = vdwg.mxu0
  %227 = vmatpush.bf16.msra.mxu0 %v180
  %228 = vmatpush.bf16.msra.mxu0 %v179
  %229 = vmatpush.bf16.msra.mxu0 %v178
  %230 = vmatpush.bf16.msra.mxu0 %v177
  %231 = vmatpush.bf16.msra.mxu0 %v176
  %232 = vmatpush.bf16.msra.mxu0 %v175
  %233 = vmatpush.bf16.msra.mxu0 %v174
  %234 = vmatpush.bf16.msra.mxu0 %v173
  %235 = vmatmul.bf16.gmra.mxu0 %v84
  %v236 = vpop.f32.mrf.mxu0
  %v237 = vadd.f32 %v218, %v236
  %v238 = vpop.f32.mrf.mxu0
  %v239 = vadd.f32 %v220, %v238
  %240 = vmatmul.bf16.gmra.mxu0 %v87
  %v241 = vpop.f32.mrf.mxu0
  %v242 = vadd.f32 %v223, %v241
  %v243 = vpop.f32.mrf.mxu0
  %v244 = vadd.f32 %v225, %v243
  %245 = vdwg.mxu0
  %246 = vmatpush.bf16.msra.mxu0 0
  %247 = vmatpush.bf16.msra.mxu0 0
  %248 = vmatpush.bf16.msra.mxu0 0
  %249 = vmatpush.bf16.msra.mxu0 0
  %250 = vmatpush.bf16.msra.mxu0 0
  %251 = vmatpush.bf16.msra.mxu0 0
  %252 = vmatpush.bf16.msra.mxu0 %v182
  %253 = vmatpush.bf16.msra.mxu0 %v181
  %254 = vmatmul.bf16.gmra.mxu0 %v203
  %v255 = vpop.f32.mrf.mxu0
  %v256 = vadd.f32 %v237, %v255
  %v257 = vpop.f32.mrf.mxu0
  %v258 = vadd.f32 %v239, %v257
  %259 = vmatmul.bf16.gmra.mxu0 %v206
  %v260 = vpop.f32.mrf.mxu0
  %v261 = vadd.f32 %v242, %v260
  %v262 = vpop.f32.mrf.mxu0
  %v263 = vadd.f32 %v244, %v262
  %264 = vdwg.mxu0
  %v265 = vlaneseq
  %v266 = vand.u32 %v265, 127
  %vm267 = vcmp.ge.s32.totalorder %v266, 16
  %vm268 = vcmp.lt.s32.totalorder %v266, 28
  %vm269 = vmand %vm267, %vm268
  %vm270 = vcmask 154752
  %v271 = vsel %vm270, %v256, -inf
  %272 = vmax.xlane.f32.xlu0 %v271
  %v273 = vpop.xlane.xlu0 %272
  %v274 = vsel %vm270, %v258, -inf
  %275 = vmax.xlane.f32.xlu0 %v274
  %v276 = vpop.xlane.xlu0 %275
  %v277 = vsel %vm270, %v261, -inf
  %278 = vmax.xlane.f32.xlu0 %v277
  %v279 = vpop.xlane.xlu0 %278
  %v280 = vsel %vm270, %v263, -inf
  %281 = vmax.xlane.f32.xlu0 %v280
  %v282 = vpop.xlane.xlu0 %281
  %v283 = vsub.f32 %v256, %v273
  %v284 = vsub.f32 %v258, %v276
  %v285 = vsub.f32 %v261, %v279
  %v286 = vsub.f32 %v263, %v282
  %v287 = vmul.f32 %v283, 1.442695
  %v288 = vpow.pop %v287
  %v289 = vmul.f32 %v284, 1.442695
  %v290 = vpow.pop %v289
  %v291 = vmul.f32 %v285, 1.442695
  %v292 = vpow.pop %v291
  %v293 = vmul.f32 %v286, 1.442695
  %v294 = vpow.pop %v293
  %299 = vrot.lane.b32.xlu0 %v288, 112
  %v300 = vpop.permute.xlu0 %299
  %301 = vrot.lane.b32.xlu0 %v290, 112
  %v302 = vpop.permute.xlu0 %301
  %303 = vrot.lane.b32.xlu0 %v292, 112
  %v304 = vpop.permute.xlu0 %303
  %305 = vrot.lane.b32.xlu0 %v294, 112
  %v306 = vpop.permute.xlu0 %305
  %vm311 = vcmask 23552
  %v312 = vsel %vm311, %v300, 0.0
  %313 = vadd.xlane.f32.xlu0 %v312
  %v314 = vpop.xlane.xlu0 %313
  %v315 = vsel %vm311, %v302, 0.0
  %316 = vadd.xlane.f32.xlu0 %v315
  %v317 = vpop.xlane.xlu0 %316
  %v318 = vsel %vm311, %v304, 0.0
  %319 = vadd.xlane.f32.xlu0 %v318
  %v320 = vpop.xlane.xlu0 %319
  %v321 = vsel %vm311, %v306, 0.0
  %322 = vadd.xlane.f32.xlu0 %v321
  %v323 = vpop.xlane.xlu0 %322
  %vm324 = vcmp.lt.s32.totalorder %v266, 19
  %vm325 = vmand %vm267, %vm324
  %v326 = vsel %vm325, 1, 0
  %vm327 = vcmp.eq.s32.totalorder %v326, 1
  %v328 = vsel %vm327, %v273, 0.0
  %v329 = vsel %vm327, %v276, 0.0
  %v330 = vsel %vm327, %v279, 0.0
  %v331 = vsel %vm327, %v282, 0.0
  %v332 = vsel %vm327, %v314, 1.0
  %v333 = vsel %vm327, %v317, 1.0
  %v334 = vsel %vm327, %v320, 1.0
  %v335 = vsel %vm327, %v323, 1.0
  %vm336 = vcmask 179352
  %v337 = vsel %vm336, %v256, -inf
  %338 = vmax.xlane.f32.xlu0 %v337
  %v339 = vpop.xlane.xlu0 %338
  %v340 = vsel %vm336, %v258, -inf
  %341 = vmax.xlane.f32.xlu0 %v340
  %v342 = vpop.xlane.xlu0 %341
  %v343 = vsel %vm336, %v261, -inf
  %344 = vmax.xlane.f32.xlu0 %v343
  %v345 = vpop.xlane.xlu0 %344
  %v346 = vsel %vm336, %v263, -inf
  %347 = vmax.xlane.f32.xlu0 %v346
  %v348 = vpop.xlane.xlu0 %347
  %v349 = vsub.f32 %v256, %v339
  %v350 = vsub.f32 %v258, %v342
  %v351 = vsub.f32 %v261, %v345
  %v352 = vsub.f32 %v263, %v348
  %v353 = vmul.f32 %v349, 1.442695
  %v354 = vpow.pop %v353
  %v355 = vmul.f32 %v350, 1.442695
  %v356 = vpow.pop %v355
  %v357 = vmul.f32 %v351, 1.442695
  %v358 = vpow.pop %v357
  %v359 = vmul.f32 %v352, 1.442695
  %v360 = vpow.pop %v359
  %365 = vrot.lane.b32.xlu0 %v354, 109
  %v366 = vpop.permute.xlu0 %365
  %367 = vrot.lane.b32.xlu0 %v356, 109
  %v368 = vpop.permute.xlu0 %367
  %369 = vrot.lane.b32.xlu0 %v358, 109
  %v370 = vpop.permute.xlu0 %369
  %371 = vrot.lane.b32.xlu0 %v360, 109
  %v372 = vpop.permute.xlu0 %371
  %v377 = vsel %vm311, %v366, 0.0
  %378 = vadd.xlane.f32.xlu0 %v377
  %v379 = vpop.xlane.xlu0 %378
  %v380 = vsel %vm311, %v368, 0.0
  %381 = vadd.xlane.f32.xlu0 %v380
  %v382 = vpop.xlane.xlu0 %381
  %v383 = vsel %vm311, %v370, 0.0
  %384 = vadd.xlane.f32.xlu0 %v383
  %v385 = vpop.xlane.xlu0 %384
  %v386 = vsel %vm311, %v372, 0.0
  %387 = vadd.xlane.f32.xlu0 %v386
  %v388 = vpop.xlane.xlu0 %387
  %vm389 = vcmp.ge.s32.totalorder %v266, 19
  %vm390 = vcmp.lt.s32.totalorder %v266, 22
  %vm391 = vmand %vm389, %vm390
  %v392 = vsel %vm391, 1, 0
  %vm393 = vcmp.eq.s32.totalorder %v392, 1
  %v394 = vsel %vm393, %v339, %v328
  %v395 = vsel %vm393, %v342, %v329
  %v396 = vsel %vm393, %v345, %v330
  %v397 = vsel %vm393, %v348, %v331
  %v398 = vsel %vm393, %v379, %v332
  %v399 = vsel %vm393, %v382, %v333
  %v400 = vsel %vm393, %v385, %v334
  %v401 = vsel %vm393, %v388, %v335
  %vm402 = vcmask 203952
  %v403 = vsel %vm402, %v256, -inf
  %404 = vmax.xlane.f32.xlu0 %v403
  %v405 = vpop.xlane.xlu0 %404
  %v406 = vsel %vm402, %v258, -inf
  %407 = vmax.xlane.f32.xlu0 %v406
  %v408 = vpop.xlane.xlu0 %407
  %v409 = vsel %vm402, %v261, -inf
  %410 = vmax.xlane.f32.xlu0 %v409
  %v411 = vpop.xlane.xlu0 %410
  %v412 = vsel %vm402, %v263, -inf
  %413 = vmax.xlane.f32.xlu0 %v412
  %v414 = vpop.xlane.xlu0 %413
  %v415 = vsub.f32 %v256, %v405
  %v416 = vsub.f32 %v258, %v408
  %v417 = vsub.f32 %v261, %v411
  %v418 = vsub.f32 %v263, %v414
  %v419 = vmul.f32 %v415, 1.442695
  %v420 = vpow.pop %v419
  %v421 = vmul.f32 %v416, 1.442695
  %v422 = vpow.pop %v421
  %v423 = vmul.f32 %v417, 1.442695
  %v424 = vpow.pop %v423
  %v425 = vmul.f32 %v418, 1.442695
  %v426 = vpow.pop %v425
  %431 = vrot.lane.b32.xlu0 %v420, 106
  %v432 = vpop.permute.xlu0 %431
  %433 = vrot.lane.b32.xlu0 %v422, 106
  %v434 = vpop.permute.xlu0 %433
  %435 = vrot.lane.b32.xlu0 %v424, 106
  %v436 = vpop.permute.xlu0 %435
  %437 = vrot.lane.b32.xlu0 %v426, 106
  %v438 = vpop.permute.xlu0 %437
  %v443 = vsel %vm311, %v432, 0.0
  %444 = vadd.xlane.f32.xlu0 %v443
  %v445 = vpop.xlane.xlu0 %444
  %v446 = vsel %vm311, %v434, 0.0
  %447 = vadd.xlane.f32.xlu0 %v446
  %v448 = vpop.xlane.xlu0 %447
  %v449 = vsel %vm311, %v436, 0.0
  %450 = vadd.xlane.f32.xlu0 %v449
  %v451 = vpop.xlane.xlu0 %450
  %v452 = vsel %vm311, %v438, 0.0
  %453 = vadd.xlane.f32.xlu0 %v452
  %v454 = vpop.xlane.xlu0 %453
  %vm455 = vcmp.ge.s32.totalorder %v266, 22
  %vm456 = vcmp.lt.s32.totalorder %v266, 25
  %vm457 = vmand %vm455, %vm456
  %v458 = vsel %vm457, 1, 0
  %vm459 = vcmp.eq.s32.totalorder %v458, 1
  %v460 = vsel %vm459, %v405, %v394
  %v461 = vsel %vm459, %v408, %v395
  %v462 = vsel %vm459, %v411, %v396
  %v463 = vsel %vm459, %v414, %v397
  %v464 = vsel %vm459, %v445, %v398
  %v465 = vsel %vm459, %v448, %v399
  %v466 = vsel %vm459, %v451, %v400
  %v467 = vsel %vm459, %v454, %v401
  %vm468 = vcmask 228552
  %v469 = vsel %vm468, %v256, -inf
  %470 = vmax.xlane.f32.xlu0 %v469
  %v471 = vpop.xlane.xlu0 %470
  %v472 = vsel %vm468, %v258, -inf
  %473 = vmax.xlane.f32.xlu0 %v472
  %v474 = vpop.xlane.xlu0 %473
  %v475 = vsel %vm468, %v261, -inf
  %476 = vmax.xlane.f32.xlu0 %v475
  %v477 = vpop.xlane.xlu0 %476
  %v478 = vsel %vm468, %v263, -inf
  %479 = vmax.xlane.f32.xlu0 %v478
  %v480 = vpop.xlane.xlu0 %479
  %v481 = vsub.f32 %v256, %v471
  %v482 = vsub.f32 %v258, %v474
  %v483 = vsub.f32 %v261, %v477
  %v484 = vsub.f32 %v263, %v480
  %v485 = vmul.f32 %v481, 1.442695
  %v486 = vpow.pop %v485
  %v487 = vmul.f32 %v482, 1.442695
  %v488 = vpow.pop %v487
  %v489 = vmul.f32 %v483, 1.442695
  %v490 = vpow.pop %v489
  %v491 = vmul.f32 %v484, 1.442695
  %v492 = vpow.pop %v491
  %497 = vrot.lane.b32.xlu0 %v486, 103
  %v498 = vpop.permute.xlu0 %497
  %499 = vrot.lane.b32.xlu0 %v488, 103
  %v500 = vpop.permute.xlu0 %499
  %501 = vrot.lane.b32.xlu0 %v490, 103
  %v502 = vpop.permute.xlu0 %501
  %503 = vrot.lane.b32.xlu0 %v492, 103
  %v504 = vpop.permute.xlu0 %503
  %v509 = vsel %vm311, %v498, 0.0
  %510 = vadd.xlane.f32.xlu0 %v509
  %v511 = vpop.xlane.xlu0 %510
  %v512 = vsel %vm311, %v500, 0.0
  %513 = vadd.xlane.f32.xlu0 %v512
  %v514 = vpop.xlane.xlu0 %513
  %v515 = vsel %vm311, %v502, 0.0
  %516 = vadd.xlane.f32.xlu0 %v515
  %v517 = vpop.xlane.xlu0 %516
  %v518 = vsel %vm311, %v504, 0.0
  %519 = vadd.xlane.f32.xlu0 %v518
  %v520 = vpop.xlane.xlu0 %519
  %vm521 = vcmp.ge.s32.totalorder %v266, 25
  %vm522 = vmand %vm521, %vm268
  %v523 = vsel %vm522, 1, 0
  %vm524 = vcmp.eq.s32.totalorder %v523, 1
  %v525 = vsel %vm524, %v471, %v460
  %v526 = vsel %vm524, %v474, %v461
  %v527 = vsel %vm524, %v477, %v462
  %v528 = vsel %vm524, %v480, %v463
  %v529 = vsel %vm524, %v511, %v464
  %v530 = vsel %vm524, %v514, %v465
  %v531 = vsel %vm524, %v517, %v466
  %v532 = vsel %vm524, %v520, %v467
  %v533 = vsub.f32 %v256, %v525
  %v534 = vsub.f32 %v258, %v526
  %v535 = vsub.f32 %v261, %v527
  %v536 = vsub.f32 %v263, %v528
  %v537 = vmul.f32 %v533, 1.442695
  %v538 = vpow.pop %v537
  %v539 = vmul.f32 %v534, 1.442695
  %v540 = vpow.pop %v539
  %v541 = vmul.f32 %v535, 1.442695
  %v542 = vpow.pop %v541
  %v543 = vmul.f32 %v536, 1.442695
  %v544 = vpow.pop %v543
  %v545 = vrcp.pop %v529
  %v546 = vrcp.pop %v530
  %v547 = vrcp.pop %v531
  %v548 = vrcp.pop %v532
  %v549 = vmul.f32 %v538, %v545
  %v550 = vmul.f32 %v540, %v546
  %v551 = vmul.f32 %v542, %v547
  %v552 = vmul.f32 %v544, %v548
  %v553 = vsel %vm269, 1, 0
  %vm554 = vcmp.eq.s32.totalorder %v553, 1
  %v555 = vsel %vm554, %v549, %v256
  %v556 = vsel %vm554, %v550, %v258
  %v557 = vsel %vm554, %v551, %v261
  %v558 = vsel %vm554, %v552, %v263
  %559 = vst [vmem:[%s3] sm:$0xff] %v555
  %560 = vst [vmem:[%s3 + $0x8] sm:$0xff] %v556
  %561 = vst [vmem:[%s3 + $0x10] sm:$0xff] %v557
  %562 = vst [vmem:[%s3 + $0x18] sm:$0xff] %v558
  // Predicated region
  $region14: #{attssd_lite_forward.11} parent=0 // pred_check
    _
  $region15: #{attssd_lite_forward.11} parent=0 // pred_check_branch
    %564 = sbr.rel (0) target = $region17
  $region16: #{attssd_lite_forward.11} parent=0 // pred_region
    _
  $region17: #{attssd_lite_forward.11} parent=0 // pred_fallthru
    _
  // Predicated region
  $region18: #{attssd_lite_forward.11} parent=0 // pred_check
    _
  $region19: #{attssd_lite_forward.11} parent=0 // pred_check_branch
    %566 = sbr.rel (0) target = $region21
  $region20: #{attssd_lite_forward.11} parent=0 // pred_region
    _
  $region21: #{attssd_lite_forward.11} parent=0 // pred_fallthru
    _

// kernel: attssd_lite_forward.10
$region0: #{attssd_lite_forward.10}
  #allocation0 [shape = 'u32[]', space=smem, size = 0x4, offset = 0x4, fixed_abs, tag = 'smem constant byte address 0x4 - core index']
  #allocation1 [shape = 'u32[72,128]{1,0:T(1,128)}', space=vmem, size = 0x9000, scoped, tag = 'internal scratch']
  %s0 = inlined_call_operand.vmem [shape: bf16[128,144], index: 0, kind: input, shape index: {}]
  %s1 = inlined_call_operand.vmem [shape: bf16[144,128], index: 1, kind: input, shape index: {}]
  %s2 = inlined_call_operand.vmem [shape: f32[1,128], index: 2, kind: input, shape index: {}]
  %s3 = inlined_call_operand.vmem [shape: f32[128,128], index: 3, kind: output, shape index: {}]
  %s4 = sld [smem:[#allocation0]]
  $region22: #{attssd_lite_forward.10} parent=0
    _
  %s6 = ssub.s32 1, %s4
  %s7 = scalar_select 0, %s6, %s4
  // Predicated region
  $region2: #{attssd_lite_forward.10} parent=0 // pred_check
    _
  $region3: #{attssd_lite_forward.10} parent=0 // pred_check_branch
    %9 = sbr.rel (0) target = $region5
  $region4: #{attssd_lite_forward.10} parent=0 // pred_region
    _
  $region5: #{attssd_lite_forward.10} parent=0 // pred_fallthru
    _
  // Predicated region
  $region6: #{attssd_lite_forward.10} parent=0 // pred_check
    _
  $region7: #{attssd_lite_forward.10} parent=0 // pred_check_branch
    %11 = sbr.rel (0) target = $region9
  $region8: #{attssd_lite_forward.10} parent=0 // pred_region
    _
  $region9: #{attssd_lite_forward.10} parent=0 // pred_fallthru
    _
  // Predicated region
  $region10: #{attssd_lite_forward.10} parent=0 // pred_check
    _
  $region11: #{attssd_lite_forward.10} parent=0 // pred_check_branch
    %13 = sbr.rel (0) target = $region13
  $region12: #{attssd_lite_forward.10} parent=0 // pred_region
    _
  $region13: #{attssd_lite_forward.10} parent=0 // pred_fallthru
    _
  %v15 = vld [vmem:[%s0] sm:$0xff]
  %v16 = vld [vmem:[%s0 + $0x8] sm:$0xff]
  %v17 = vld [vmem:[%s0 + $0x10] sm:$0xff]
  %v18 = vld [vmem:[%s0 + $0x18] sm:$0xff]
  %v19 = vld [vmem:[%s0 + $0x20] sm:$0xff]
  %v20 = vld [vmem:[%s0 + $0x28] sm:$0xff]
  %v21 = vld [vmem:[%s0 + $0x30] sm:$0xff]
  %v22 = vld [vmem:[%s0 + $0x38] sm:$0xff]
  %v23 = vld [vmem:[%s0 + $0x40] sm:$0xff]
  %v24 = vld [vmem:[%s0 + $0x48] sm:$0xff]
  %v25 = vld [vmem:[%s0 + $0x50] sm:$0xff]
  %v26 = vld [vmem:[%s0 + $0x58] sm:$0xff]
  %v27 = vld [vmem:[%s0 + $0x60] sm:$0xff]
  %v28 = vld [vmem:[%s0 + $0x68] sm:$0xff]
  %v29 = vld [vmem:[%s0 + $0x70] sm:$0xff]
  %v30 = vld [vmem:[%s0 + $0x78] sm:$0xff]
  %v31 = vld [vmem:[%s1] sm:$0xf]
  %v32 = vld [vmem:[%s1 + $0x4] sm:$0xf]
  %v33 = vld [vmem:[%s1 + $0x8] sm:$0xf]
  %v34 = vld [vmem:[%s1 + $0xc] sm:$0xf]
  %v35 = vld [vmem:[%s1 + $0x10] sm:$0xf]
  %v36 = vld [vmem:[%s1 + $0x14] sm:$0xf]
  %v37 = vld [vmem:[%s1 + $0x18] sm:$0xf]
  %v38 = vld [vmem:[%s1 + $0x1c] sm:$0xf]
  %v39 = vld [vmem:[%s1 + $0x20] sm:$0xf]
  %v40 = vld [vmem:[%s1 + $0x24] sm:$0xf]
  %v41 = vld [vmem:[%s1 + $0x28] sm:$0xf]
  %v42 = vld [vmem:[%s1 + $0x2c] sm:$0xf]
  %v43 = vld [vmem:[%s1 + $0x30] sm:$0xf]
  %v44 = vld [vmem:[%s1 + $0x34] sm:$0xf]
  %v45 = vld [vmem:[%s1 + $0x38] sm:$0xf]
  %v46 = vld [vmem:[%s1 + $0x3c] sm:$0xf]
  %v47 = vld [vmem:[%s1 + $0x40] sm:$0xf]
  %v48 = vld [vmem:[%s1 + $0x44] sm:$0xf]
  %v49 = vld [vmem:[%s2] sm:$0x1]
  %v51 = vperm.slane %v49, 0
  %v69 = vunpack.c.l.b16 %v15
  %v70 = vunpack.c.h.b16 %v15
  %v71 = vunpack.c.l.b16 %v16
  %v72 = vunpack.c.h.b16 %v16
  %v73 = vunpack.c.l.b16 %v17
  %v74 = vunpack.c.h.b16 %v17
  %v75 = vunpack.c.l.b16 %v18
  %v76 = vunpack.c.h.b16 %v18
  %v77 = vunpack.c.l.b16 %v19
  %v78 = vunpack.c.h.b16 %v19
  %v79 = vunpack.c.l.b16 %v20
  %v80 = vunpack.c.h.b16 %v20
  %v81 = vunpack.c.l.b16 %v21
  %v82 = vunpack.c.h.b16 %v21
  %v83 = vunpack.c.l.b16 %v22
  %v84 = vunpack.c.h.b16 %v22
  %v85 = vunpack.c.l.b16 %v23
  %v86 = vunpack.c.h.b16 %v23
  %v87 = vunpack.c.l.b16 %v24
  %v88 = vunpack.c.h.b16 %v24
  %v89 = vunpack.c.l.b16 %v25
  %v90 = vunpack.c.h.b16 %v25
  %v91 = vunpack.c.l.b16 %v26
  %v92 = vunpack.c.h.b16 %v26
  %v93 = vunpack.c.l.b16 %v27
  %v94 = vunpack.c.h.b16 %v27
  %v95 = vunpack.c.l.b16 %v28
  %v96 = vunpack.c.h.b16 %v28
  %v97 = vunpack.c.l.b16 %v29
  %v98 = vunpack.c.h.b16 %v29
  %v99 = vunpack.c.l.b16 %v30
  %v100 = vunpack.c.h.b16 %v30
  %v101 = vpack.c.b16 %v71, %v69
  %v102 = vpack.c.b16 %v72, %v70
  %v103 = vpack.c.b16 %v75, %v73
  %v104 = vpack.c.b16 %v76, %v74
  %v105 = vpack.c.b16 %v79, %v77
  %v106 = vpack.c.b16 %v80, %v78
  %v107 = vpack.c.b16 %v83, %v81
  %v108 = vpack.c.b16 %v84, %v82
  %v109 = vpack.c.b16 %v87, %v85
  %v110 = vpack.c.b16 %v88, %v86
  %v111 = vpack.c.b16 %v91, %v89
  %v112 = vpack.c.b16 %v92, %v90
  %v113 = vpack.c.b16 %v95, %v93
  %v114 = vpack.c.b16 %v96, %v94
  %v115 = vpack.c.b16 %v99, %v97
  %v116 = vpack.c.b16 %v100, %v98
  %v143 = vunpack.c.l.b16 %v31
  %v144 = vunpack.c.l.b16 %v32
  %v145 = vunpack.c.l.b16 %v33
  %v146 = vunpack.c.l.b16 %v34
  %v147 = vunpack.c.l.b16 %v35
  %v148 = vunpack.c.l.b16 %v36
  %v149 = vunpack.c.l.b16 %v37
  %v150 = vunpack.c.l.b16 %v38
  %v151 = vunpack.c.l.b16 %v39
  %v152 = vunpack.c.l.b16 %v40
  %v153 = vunpack.c.l.b16 %v41
  %v154 = vunpack.c.l.b16 %v42
  %v155 = vunpack.c.l.b16 %v43
  %v156 = vunpack.c.l.b16 %v44
  %v157 = vunpack.c.l.b16 %v45
  %v158 = vunpack.c.l.b16 %v46
  %v159 = vunpack.c.l.b16 %v47
  %v160 = vunpack.c.l.b16 %v48
  %v161 = vpack.c.b16 %v144, %v143
  %v162 = vpack.c.b16 %v146, %v145
  %v163 = vpack.c.b16 %v148, %v147
  %v164 = vpack.c.b16 %v150, %v149
  %v165 = vpack.c.b16 %v152, %v151
  %v166 = vpack.c.b16 %v154, %v153
  %v167 = vpack.c.b16 %v156, %v155
  %v168 = vpack.c.b16 %v158, %v157
  %v169 = vpack.c.b16 %v160, %v159
  %vm179 = vcmask 130048
  %v181 = vsel %vm179, %v102, 0
  %v184 = vsel %vm179, %v104, 0
  %v187 = vsel %vm179, %v106, 0
  %v190 = vsel %vm179, %v108, 0
  %v193 = vsel %vm179, %v110, 0
  %v196 = vsel %vm179, %v112, 0
  %v199 = vsel %vm179, %v114, 0
  %v202 = vsel %vm179, %v116, 0
  %204 = vmatpush.bf16.msra.mxu0 %v168
  %205 = vmatpush.bf16.msra.mxu0 %v167
  %206 = vmatpush.bf16.msra.mxu0 %v166
  %207 = vmatpush.bf16.msra.mxu0 %v165
  %208 = vmatpush.bf16.msra.mxu0 %v164
  %209 = vmatpush.bf16.msra.mxu0 %v163
  %210 = vmatpush.bf16.msra.mxu0 %v162
  %211 = vmatpush.bf16.msra.mxu0 %v161
  %212 = vmatmul.bf16.gmra.mxu0 %v101
  %v213 = vpop.f32.mrf.mxu0
  %v214 = vadd.f32 %v51, %v213
  %v215 = vpop.f32.mrf.mxu0
  %v216 = vadd.f32 %v51, %v215
  %217 = vmatmul.bf16.gmra.mxu0 %v103
  %v218 = vpop.f32.mrf.mxu0
  %v219 = vadd.f32 %v51, %v218
  %v220 = vpop.f32.mrf.mxu0
  %v221 = vadd.f32 %v51, %v220
  %222 = vmatmul.bf16.gmra.mxu0 %v105
  %v223 = vpop.f32.mrf.mxu0
  %v224 = vadd.f32 %v51, %v223
  %v225 = vpop.f32.mrf.mxu0
  %v226 = vadd.f32 %v51, %v225
  %227 = vmatmul.bf16.gmra.mxu0 %v107
  %v228 = vpop.f32.mrf.mxu0
  %v229 = vadd.f32 %v51, %v228
  %v230 = vpop.f32.mrf.mxu0
  %v231 = vadd.f32 %v51, %v230
  %232 = vmatmul.bf16.gmra.mxu0 %v109
  %v233 = vpop.f32.mrf.mxu0
  %v234 = vadd.f32 %v51, %v233
  %v235 = vpop.f32.mrf.mxu0
  %v236 = vadd.f32 %v51, %v235
  %237 = vmatmul.bf16.gmra.mxu0 %v111
  %v238 = vpop.f32.mrf.mxu0
  %v239 = vadd.f32 %v51, %v238
  %v240 = vpop.f32.mrf.mxu0
  %v241 = vadd.f32 %v51, %v240
  %242 = vmatmul.bf16.gmra.mxu0 %v113
  %v243 = vpop.f32.mrf.mxu0
  %v244 = vadd.f32 %v51, %v243
  %v245 = vpop.f32.mrf.mxu0
  %v246 = vadd.f32 %v51, %v245
  %247 = vmatmul.bf16.gmra.mxu0 %v115
  %v248 = vpop.f32.mrf.mxu0
  %v249 = vadd.f32 %v51, %v248
  %v250 = vpop.f32.mrf.mxu0
  %v251 = vadd.f32 %v51, %v250
  %252 = vdwg.mxu0
  %253 = vmatpush.bf16.msra.mxu0 0
  %254 = vmatpush.bf16.msra.mxu0 0
  %255 = vmatpush.bf16.msra.mxu0 0
  %256 = vmatpush.bf16.msra.mxu0 0
  %257 = vmatpush.bf16.msra.mxu0 0
  %258 = vmatpush.bf16.msra.mxu0 0
  %259 = vmatpush.bf16.msra.mxu0 0
  %260 = vmatpush.bf16.msra.mxu0 %v169
  %261 = vmatmul.bf16.gmra.mxu0 %v181
  %v262 = vpop.f32.mrf.mxu0
  %v263 = vadd.f32 %v214, %v262
  %v264 = vpop.f32.mrf.mxu0
  %v265 = vadd.f32 %v216, %v264
  %266 = vmatmul.bf16.gmra.mxu0 %v184
  %v267 = vpop.f32.mrf.mxu0
  %v268 = vadd.f32 %v219, %v267
  %v269 = vpop.f32.mrf.mxu0
  %v270 = vadd.f32 %v221, %v269
  %271 = vmatmul.bf16.gmra.mxu0 %v187
  %v272 = vpop.f32.mrf.mxu0
  %v273 = vadd.f32 %v224, %v272
  %v274 = vpop.f32.mrf.mxu0
  %v275 = vadd.f32 %v226, %v274
  %276 = vmatmul.bf16.gmra.mxu0 %v190
  %v277 = vpop.f32.mrf.mxu0
  %v278 = vadd.f32 %v229, %v277
  %v279 = vpop.f32.mrf.mxu0
  %v280 = vadd.f32 %v231, %v279
  %281 = vmatmul.bf16.gmra.mxu0 %v193
  %v282 = vpop.f32.mrf.mxu0
  %v283 = vadd.f32 %v234, %v282
  %v284 = vpop.f32.mrf.mxu0
  %v285 = vadd.f32 %v236, %v284
  %286 = vmatmul.bf16.gmra.mxu0 %v196
  %v287 = vpop.f32.mrf.mxu0
  %v288 = vadd.f32 %v239, %v287
  %v289 = vpop.f32.mrf.mxu0
  %v290 = vadd.f32 %v241, %v289
  %291 = vmatmul.bf16.gmra.mxu0 %v199
  %v292 = vpop.f32.mrf.mxu0
  %v293 = vadd.f32 %v244, %v292
  %v294 = vpop.f32.mrf.mxu0
  %v295 = vadd.f32 %v246, %v294
  %296 = vmatmul.bf16.gmra.mxu0 %v202
  %v297 = vpop.f32.mrf.mxu0
  %v298 = vadd.f32 %v249, %v297
  %v299 = vpop.f32.mrf.mxu0
  %v300 = vadd.f32 %v251, %v299
  %301 = vdwg.mxu0
  %v302 = vlaneseq
  %v303 = vand.u32 %v302, 127
  %vm304 = vcmp.ge.s32.totalorder %v303, 16
  %vm305 = vcmp.lt.s32.totalorder %v303, 28
  %vm306 = vmand %vm304, %vm305
  %vm307 = vcmask 154752
  %v308 = vsel %vm307, %v263, -inf
  %309 = vmax.xlane.f32.xlu0 %v308
  %v310 = vpop.xlane.xlu0 %309
  %v311 = vsel %vm307, %v265, -inf
  %312 = vmax.xlane.f32.xlu0 %v311
  %v313 = vpop.xlane.xlu0 %312
  %v314 = vsel %vm307, %v268, -inf
  %315 = vmax.xlane.f32.xlu0 %v314
  %v316 = vpop.xlane.xlu0 %315
  %v317 = vsel %vm307, %v270, -inf
  %318 = vmax.xlane.f32.xlu0 %v317
  %v319 = vpop.xlane.xlu0 %318
  %v320 = vsel %vm307, %v273, -inf
  %321 = vmax.xlane.f32.xlu0 %v320
  %v322 = vpop.xlane.xlu0 %321
  %v323 = vsel %vm307, %v275, -inf
  %324 = vmax.xlane.f32.xlu0 %v323
  %v325 = vpop.xlane.xlu0 %324
  %v326 = vsel %vm307, %v278, -inf
  %327 = vmax.xlane.f32.xlu0 %v326
  %v328 = vpop.xlane.xlu0 %327
  %v329 = vsel %vm307, %v280, -inf
  %330 = vmax.xlane.f32.xlu0 %v329
  %v331 = vpop.xlane.xlu0 %330
  %v332 = vsel %vm307, %v283, -inf
  %333 = vmax.xlane.f32.xlu0 %v332
  %v334 = vpop.xlane.xlu0 %333
  %v335 = vsel %vm307, %v285, -inf
  %336 = vmax.xlane.f32.xlu0 %v335
  %v337 = vpop.xlane.xlu0 %336
  %v338 = vsel %vm307, %v288, -inf
  %339 = vmax.xlane.f32.xlu0 %v338
  %v340 = vpop.xlane.xlu0 %339
  %v341 = vsel %vm307, %v290, -inf
  %342 = vmax.xlane.f32.xlu0 %v341
  %v343 = vpop.xlane.xlu0 %342
  %v344 = vsel %vm307, %v293, -inf
  %345 = vmax.xlane.f32.xlu0 %v344
  %v346 = vpop.xlane.xlu0 %345
  %v347 = vsel %vm307, %v295, -inf
  %348 = vmax.xlane.f32.xlu0 %v347
  %v349 = vpop.xlane.xlu0 %348
  %v350 = vsel %vm307, %v298, -inf
  %351 = vmax.xlane.f32.xlu0 %v350
  %v352 = vpop.xlane.xlu0 %351
  %v353 = vsel %vm307, %v300, -inf
  %354 = vmax.xlane.f32.xlu0 %v353
  %v355 = vpop.xlane.xlu0 %354
  %v356 = vsub.f32 %v263, %v310
  %v357 = vsub.f32 %v265, %v313
  %v358 = vsub.f32 %v268, %v316
  %v359 = vsub.f32 %v270, %v319
  %v360 = vsub.f32 %v273, %v322
  %v361 = vsub.f32 %v275, %v325
  %v362 = vsub.f32 %v278, %v328
  %v363 = vsub.f32 %v280, %v331
  %v364 = vsub.f32 %v283, %v334
  %v365 = vsub.f32 %v285, %v337
  %v366 = vsub.f32 %v288, %v340
  %v367 = vsub.f32 %v290, %v343
  %v368 = vsub.f32 %v293, %v346
  %v369 = vsub.f32 %v295, %v349
  %v370 = vsub.f32 %v298, %v352
  %v371 = vsub.f32 %v300, %v355
  %v372 = vmul.f32 %v356, 1.442695
  %v373 = vpow.pop %v372
  %v374 = vmul.f32 %v357, 1.442695
  %v375 = vpow.pop %v374
  %v376 = vmul.f32 %v358, 1.442695
  %v377 = vpow.pop %v376
  %v378 = vmul.f32 %v359, 1.442695
  %v379 = vpow.pop %v378
  %v380 = vmul.f32 %v360, 1.442695
  %v381 = vpow.pop %v380
  %v382 = vmul.f32 %v361, 1.442695
  %v383 = vpow.pop %v382
  %v384 = vmul.f32 %v362, 1.442695
  %v385 = vpow.pop %v384
  %v386 = vmul.f32 %v363, 1.442695
  %v387 = vpow.pop %v386
  %v388 = vmul.f32 %v364, 1.442695
  %v389 = vpow.pop %v388
  %v390 = vmul.f32 %v365, 1.442695
  %v391 = vpow.pop %v390
  %v392 = vmul.f32 %v366, 1.442695
  %v393 = vpow.pop %v392
  %v394 = vmul.f32 %v367, 1.442695
  %v395 = vpow.pop %v394
  %v396 = vmul.f32 %v368, 1.442695
  %v397 = vpow.pop %v396
  %v398 = vmul.f32 %v369, 1.442695
  %v399 = vpow.pop %v398
  %v400 = vmul.f32 %v370, 1.442695
  %v401 = vpow.pop %v400
  %v402 = vmul.f32 %v371, 1.442695
  %v403 = vpow.pop %v402
  %420 = vrot.lane.b32.xlu0 %v373, 112
  %v421 = vpop.permute.xlu0 %420
  %422 = vrot.lane.b32.xlu0 %v375, 112
  %v423 = vpop.permute.xlu0 %422
  %424 = vrot.lane.b32.xlu0 %v377, 112
  %v425 = vpop.permute.xlu0 %424
  %426 = vrot.lane.b32.xlu0 %v379, 112
  %v427 = vpop.permute.xlu0 %426
  %428 = vrot.lane.b32.xlu0 %v381, 112
  %v429 = vpop.permute.xlu0 %428
  %430 = vrot.lane.b32.xlu0 %v383, 112
  %v431 = vpop.permute.xlu0 %430
  %432 = vrot.lane.b32.xlu0 %v385, 112
  %v433 = vpop.permute.xlu0 %432
  %434 = vrot.lane.b32.xlu0 %v387, 112
  %v435 = vpop.permute.xlu0 %434
  %436 = vrot.lane.b32.xlu0 %v389, 112
  %v437 = vpop.permute.xlu0 %436
  %438 = vrot.lane.b32.xlu0 %v391, 112
  %v439 = vpop.permute.xlu0 %438
  %440 = vrot.lane.b32.xlu0 %v393, 112
  %v441 = vpop.permute.xlu0 %440
  %442 = vrot.lane.b32.xlu0 %v395, 112
  %v443 = vpop.permute.xlu0 %442
  %444 = vrot.lane.b32.xlu0 %v397, 112
  %v445 = vpop.permute.xlu0 %444
  %446 = vrot.lane.b32.xlu0 %v399, 112
  %v447 = vpop.permute.xlu0 %446
  %448 = vrot.lane.b32.xlu0 %v401, 112
  %v449 = vpop.permute.xlu0 %448
  %450 = vrot.lane.b32.xlu0 %v403, 112
  %v451 = vpop.permute.xlu0 %450
  %vm468 = vcmask 23552
  %v469 = vsel %vm468, %v421, 0.0
  %470 = vadd.xlane.f32.xlu0 %v469
  %v471 = vpop.xlane.xlu0 %470
  %v472 = vsel %vm468, %v423, 0.0
  %473 = vadd.xlane.f32.xlu0 %v472
  %v474 = vpop.xlane.xlu0 %473
  %v475 = vsel %vm468, %v425, 0.0
  %476 = vadd.xlane.f32.xlu0 %v475
  %v477 = vpop.xlane.xlu0 %476
  %v478 = vsel %vm468, %v427, 0.0
  %479 = vadd.xlane.f32.xlu0 %v478
  %v480 = vpop.xlane.xlu0 %479
  %v481 = vsel %vm468, %v429, 0.0
  %482 = vadd.xlane.f32.xlu0 %v481
  %v483 = vpop.xlane.xlu0 %482
  %v484 = vsel %vm468, %v431, 0.0
  %485 = vadd.xlane.f32.xlu0 %v484
  %v486 = vpop.xlane.xlu0 %485
  %v487 = vsel %vm468, %v433, 0.0
  %488 = vadd.xlane.f32.xlu0 %v487
  %v489 = vpop.xlane.xlu0 %488
  %v490 = vsel %vm468, %v435, 0.0
  %491 = vadd.xlane.f32.xlu0 %v490
  %v492 = vpop.xlane.xlu0 %491
  %v493 = vsel %vm468, %v437, 0.0
  %494 = vadd.xlane.f32.xlu0 %v493
  %v495 = vpop.xlane.xlu0 %494
  %v496 = vsel %vm468, %v439, 0.0
  %497 = vadd.xlane.f32.xlu0 %v496
  %v498 = vpop.xlane.xlu0 %497
  %v499 = vsel %vm468, %v441, 0.0
  %500 = vadd.xlane.f32.xlu0 %v499
  %v501 = vpop.xlane.xlu0 %500
  %v502 = vsel %vm468, %v443, 0.0
  %503 = vadd.xlane.f32.xlu0 %v502
  %v504 = vpop.xlane.xlu0 %503
  %v505 = vsel %vm468, %v445, 0.0
  %506 = vadd.xlane.f32.xlu0 %v505
  %v507 = vpop.xlane.xlu0 %506
  %v508 = vsel %vm468, %v447, 0.0
  %509 = vadd.xlane.f32.xlu0 %v508
  %v510 = vpop.xlane.xlu0 %509
  %v511 = vsel %vm468, %v449, 0.0
  %512 = vadd.xlane.f32.xlu0 %v511
  %v513 = vpop.xlane.xlu0 %512
  %v514 = vsel %vm468, %v451, 0.0
  %515 = vadd.xlane.f32.xlu0 %v514
  %v516 = vpop.xlane.xlu0 %515
  %vm517 = vcmp.lt.s32.totalorder %v303, 19
  %vm518 = vmand %vm304, %vm517
  %v519 = vsel %vm518, 1, 0
  %vm520 = vcmp.eq.s32.totalorder %v519, 1
  %v521 = vsel %vm520, %v310, 0.0
  %v522 = vsel %vm520, %v313, 0.0
  %v523 = vsel %vm520, %v316, 0.0
  %v524 = vsel %vm520, %v319, 0.0
  %v525 = vsel %vm520, %v322, 0.0
  %v526 = vsel %vm520, %v325, 0.0
  %v527 = vsel %vm520, %v328, 0.0
  %v528 = vsel %vm520, %v331, 0.0
  %v529 = vsel %vm520, %v334, 0.0
  %v530 = vsel %vm520, %v337, 0.0
  %v531 = vsel %vm520, %v340, 0.0
  %v532 = vsel %vm520, %v343, 0.0
  %v533 = vsel %vm520, %v346, 0.0
  %v534 = vsel %vm520, %v349, 0.0
  %v535 = vsel %vm520, %v352, 0.0
  %v536 = vsel %vm520, %v355, 0.0
  %v537 = vsel %vm520, %v471, 1.0
  %v538 = vsel %vm520, %v474, 1.0
  %v539 = vsel %vm520, %v477, 1.0
  %v540 = vsel %vm520, %v480, 1.0
  %v541 = vsel %vm520, %v483, 1.0
  %v542 = vsel %vm520, %v486, 1.0
  %v543 = vsel %vm520, %v489, 1.0
  %v544 = vsel %vm520, %v492, 1.0
  %v545 = vsel %vm520, %v495, 1.0
  %v546 = vsel %vm520, %v498, 1.0
  %v547 = vsel %vm520, %v501, 1.0
  %v548 = vsel %vm520, %v504, 1.0
  %v549 = vsel %vm520, %v507, 1.0
  %v550 = vsel %vm520, %v510, 1.0
  %v551 = vsel %vm520, %v513, 1.0
  %v552 = vsel %vm520, %v516, 1.0
  %vm553 = vcmask 179352
  %v554 = vsel %vm553, %v263, -inf
  %555 = vmax.xlane.f32.xlu0 %v554
  %v556 = vpop.xlane.xlu0 %555
  %v557 = vsel %vm553, %v265, -inf
  %558 = vmax.xlane.f32.xlu0 %v557
  %v559 = vpop.xlane.xlu0 %558
  %v560 = vsel %vm553, %v268, -inf
  %561 = vmax.xlane.f32.xlu0 %v560
  %v562 = vpop.xlane.xlu0 %561
  %v563 = vsel %vm553, %v270, -inf
  %564 = vmax.xlane.f32.xlu0 %v563
  %v565 = vpop.xlane.xlu0 %564
  %v566 = vsel %vm553, %v273, -inf
  %567 = vmax.xlane.f32.xlu0 %v566
  %v568 = vpop.xlane.xlu0 %567
  %v569 = vsel %vm553, %v275, -inf
  %570 = vmax.xlane.f32.xlu0 %v569
  %v571 = vpop.xlane.xlu0 %570
  %v572 = vsel %vm553, %v278, -inf
  %573 = vmax.xlane.f32.xlu0 %v572
  %v574 = vpop.xlane.xlu0 %573
  %v575 = vsel %vm553, %v280, -inf
  %576 = vmax.xlane.f32.xlu0 %v575
  %v577 = vpop.xlane.xlu0 %576
  %v578 = vsel %vm553, %v283, -inf
  %579 = vmax.xlane.f32.xlu0 %v578
  %v580 = vpop.xlane.xlu0 %579
  %v581 = vsel %vm553, %v285, -inf
  %582 = vmax.xlane.f32.xlu0 %v581
  %v583 = vpop.xlane.xlu0 %582
  %v584 = vsel %vm553, %v288, -inf
  %585 = vmax.xlane.f32.xlu0 %v584
  %v586 = vpop.xlane.xlu0 %585
  %v587 = vsel %vm553, %v290, -inf
  %588 = vmax.xlane.f32.xlu0 %v587
  %v589 = vpop.xlane.xlu0 %588
  %v590 = vsel %vm553, %v293, -inf
  %591 = vmax.xlane.f32.xlu0 %v590
  %v592 = vpop.xlane.xlu0 %591
  %v593 = vsel %vm553, %v295, -inf
  %594 = vmax.xlane.f32.xlu0 %v593
  %v595 = vpop.xlane.xlu0 %594
  %v596 = vsel %vm553, %v298, -inf
  %597 = vmax.xlane.f32.xlu0 %v596
  %v598 = vpop.xlane.xlu0 %597
  %v599 = vsel %vm553, %v300, -inf
  %600 = vmax.xlane.f32.xlu0 %v599
  %v601 = vpop.xlane.xlu0 %600
  %v602 = vsub.f32 %v263, %v556
  %v603 = vsub.f32 %v265, %v559
  %v604 = vsub.f32 %v268, %v562
  %v605 = vsub.f32 %v270, %v565
  %v606 = vsub.f32 %v273, %v568
  %v607 = vsub.f32 %v275, %v571
  %v608 = vsub.f32 %v278, %v574
  %v609 = vsub.f32 %v280, %v577
  %v610 = vsub.f32 %v283, %v580
  %v611 = vsub.f32 %v285, %v583
  %v612 = vsub.f32 %v288, %v586
  %v613 = vsub.f32 %v290, %v589
  %v614 = vsub.f32 %v293, %v592
  %v615 = vsub.f32 %v295, %v595
  %v616 = vsub.f32 %v298, %v598
  %v617 = vsub.f32 %v300, %v601
  %v618 = vmul.f32 %v602, 1.442695
  %v619 = vpow.pop %v618
  %v620 = vmul.f32 %v603, 1.442695
  %v621 = vpow.pop %v620
  %v622 = vmul.f32 %v604, 1.442695
  %v623 = vpow.pop %v622
  %v624 = vmul.f32 %v605, 1.442695
  %v625 = vpow.pop %v624
  %v626 = vmul.f32 %v606, 1.442695
  %v627 = vpow.pop %v626
  %v628 = vmul.f32 %v607, 1.442695
  %v629 = vpow.pop %v628
  %v630 = vmul.f32 %v608, 1.442695
  %v631 = vpow.pop %v630
  %v632 = vmul.f32 %v609, 1.442695
  %v633 = vpow.pop %v632
  %v634 = vmul.f32 %v610, 1.442695
  %v635 = vpow.pop %v634
  %v636 = vmul.f32 %v611, 1.442695
  %v637 = vpow.pop %v636
  %v638 = vmul.f32 %v612, 1.442695
  %v639 = vpow.pop %v638
  %v640 = vmul.f32 %v613, 1.442695
  %v641 = vpow.pop %v640
  %v642 = vmul.f32 %v614, 1.442695
  %v643 = vpow.pop %v642
  %v644 = vmul.f32 %v615, 1.442695
  %v645 = vpow.pop %v644
  %v646 = vmul.f32 %v616, 1.442695
  %v647 = vpow.pop %v646
  %v648 = vmul.f32 %v617, 1.442695
  %v649 = vpow.pop %v648
  %666 = vrot.lane.b32.xlu0 %v619, 109
  %v667 = vpop.permute.xlu0 %666
  %668 = vrot.lane.b32.xlu0 %v621, 109
  %v669 = vpop.permute.xlu0 %668
  %670 = vrot.lane.b32.xlu0 %v623, 109
  %v671 = vpop.permute.xlu0 %670
  %672 = vrot.lane.b32.xlu0 %v625, 109
  %v673 = vpop.permute.xlu0 %672
  %674 = vrot.lane.b32.xlu0 %v627, 109
  %v675 = vpop.permute.xlu0 %674
  %676 = vrot.lane.b32.xlu0 %v629, 109
  %v677 = vpop.permute.xlu0 %676
  %678 = vrot.lane.b32.xlu0 %v631, 109
  %v679 = vpop.permute.xlu0 %678
  %680 = vrot.lane.b32.xlu0 %v633, 109
  %v681 = vpop.permute.xlu0 %680
  %682 = vrot.lane.b32.xlu0 %v635, 109
  %v683 = vpop.permute.xlu0 %682
  %684 = vrot.lane.b32.xlu0 %v637, 109
  %v685 = vpop.permute.xlu0 %684
  %686 = vrot.lane.b32.xlu0 %v639, 109
  %v687 = vpop.permute.xlu0 %686
  %688 = vrot.lane.b32.xlu0 %v641, 109
  %v689 = vpop.permute.xlu0 %688
  %690 = vrot.lane.b32.xlu0 %v643, 109
  %v691 = vpop.permute.xlu0 %690
  %692 = vrot.lane.b32.xlu0 %v645, 109
  %v693 = vpop.permute.xlu0 %692
  %694 = vrot.lane.b32.xlu0 %v647, 109
  %v695 = vpop.permute.xlu0 %694
  %696 = vrot.lane.b32.xlu0 %v649, 109
  %v697 = vpop.permute.xlu0 %696
  %v714 = vsel %vm468, %v667, 0.0
  %715 = vadd.xlane.f32.xlu0 %v714
  %v716 = vpop.xlane.xlu0 %715
  %v717 = vsel %vm468, %v669, 0.0
  %718 = vadd.xlane.f32.xlu0 %v717
  %v719 = vpop.xlane.xlu0 %718
  %v720 = vsel %vm468, %v671, 0.0
  %721 = vadd.xlane.f32.xlu0 %v720
  %v722 = vpop.xlane.xlu0 %721
  %v723 = vsel %vm468, %v673, 0.0
  %724 = vadd.xlane.f32.xlu0 %v723
  %v725 = vpop.xlane.xlu0 %724
  %v726 = vsel %vm468, %v675, 0.0
  %727 = vadd.xlane.f32.xlu0 %v726
  %v728 = vpop.xlane.xlu0 %727
  %v729 = vsel %vm468, %v677, 0.0
  %730 = vadd.xlane.f32.xlu0 %v729
  %v731 = vpop.xlane.xlu0 %730
  %v732 = vsel %vm468, %v679, 0.0
  %733 = vadd.xlane.f32.xlu0 %v732
  %v734 = vpop.xlane.xlu0 %733
  %v735 = vsel %vm468, %v681, 0.0
  %736 = vadd.xlane.f32.xlu0 %v735
  %v737 = vpop.xlane.xlu0 %736
  %v738 = vsel %vm468, %v683, 0.0
  %739 = vadd.xlane.f32.xlu0 %v738
  %v740 = vpop.xlane.xlu0 %739
  %v741 = vsel %vm468, %v685, 0.0
  %742 = vadd.xlane.f32.xlu0 %v741
  %v743 = vpop.xlane.xlu0 %742
  %v744 = vsel %vm468, %v687, 0.0
  %745 = vadd.xlane.f32.xlu0 %v744
  %v746 = vpop.xlane.xlu0 %745
  %v747 = vsel %vm468, %v689, 0.0
  %748 = vadd.xlane.f32.xlu0 %v747
  %v749 = vpop.xlane.xlu0 %748
  %v750 = vsel %vm468, %v691, 0.0
  %751 = vadd.xlane.f32.xlu0 %v750
  %v752 = vpop.xlane.xlu0 %751
  %v753 = vsel %vm468, %v693, 0.0
  %754 = vadd.xlane.f32.xlu0 %v753
  %v755 = vpop.xlane.xlu0 %754
  %v756 = vsel %vm468, %v695, 0.0
  %757 = vadd.xlane.f32.xlu0 %v756
  %v758 = vpop.xlane.xlu0 %757
  %v759 = vsel %vm468, %v697, 0.0
  %760 = vadd.xlane.f32.xlu0 %v759
  %v761 = vpop.xlane.xlu0 %760
  %vm762 = vcmp.ge.s32.totalorder %v303, 19
  %vm763 = vcmp.lt.s32.totalorder %v303, 22
  %vm764 = vmand %vm762, %vm763
  %v765 = vsel %vm764, 1, 0
  %vm766 = vcmp.eq.s32.totalorder %v765, 1
  %v767 = vsel %vm766, %v556, %v521
  %v768 = vsel %vm766, %v559, %v522
  %v769 = vsel %vm766, %v562, %v523
  %v770 = vsel %vm766, %v565, %v524
  %v771 = vsel %vm766, %v568, %v525
  %v772 = vsel %vm766, %v571, %v526
  %v773 = vsel %vm766, %v574, %v527
  %v774 = vsel %vm766, %v577, %v528
  %v775 = vsel %vm766, %v580, %v529
  %v776 = vsel %vm766, %v583, %v530
  %v777 = vsel %vm766, %v586, %v531
  %v778 = vsel %vm766, %v589, %v532
  %v779 = vsel %vm766, %v592, %v533
  %v780 = vsel %vm766, %v595, %v534
  %v781 = vsel %vm766, %v598, %v535
  %v782 = vsel %vm766, %v601, %v536
  %v783 = vsel %vm766, %v716, %v537
  %v784 = vsel %vm766, %v719, %v538
  %v785 = vsel %vm766, %v722, %v539
  %v786 = vsel %vm766, %v725, %v540
  %v787 = vsel %vm766, %v728, %v541
  %v788 = vsel %vm766, %v731, %v542
  %v789 = vsel %vm766, %v734, %v543
  %v790 = vsel %vm766, %v737, %v544
  %v791 = vsel %vm766, %v740, %v545
  %v792 = vsel %vm766, %v743, %v546
  %v793 = vsel %vm766, %v746, %v547
  %v794 = vsel %vm766, %v749, %v548
  %v795 = vsel %vm766, %v752, %v549
  %v796 = vsel %vm766, %v755, %v550
  %v797 = vsel %vm766, %v758, %v551
  %v798 = vsel %vm766, %v761, %v552
  %vm799 = vcmask 203952
  %v800 = vsel %vm799, %v263, -inf
  %801 = vmax.xlane.f32.xlu0 %v800
  %v802 = vpop.xlane.xlu0 %801
  %v803 = vsel %vm799, %v265, -inf
  %804 = vmax.xlane.f32.xlu0 %v803
  %v805 = vpop.xlane.xlu0 %804
  %v806 = vsel %vm799, %v268, -inf
  %807 = vmax.xlane.f32.xlu0 %v806
  %v808 = vpop.xlane.xlu0 %807
  %v809 = vsel %vm799, %v270, -inf
  %810 = vmax.xlane.f32.xlu0 %v809
  %v811 = vpop.xlane.xlu0 %810
  %v812 = vsel %vm799, %v273, -inf
  %813 = vmax.xlane.f32.xlu0 %v812
  %v814 = vpop.xlane.xlu0 %813
  %v815 = vsel %vm799, %v275, -inf
  %816 = vmax.xlane.f32.xlu0 %v815
  %v817 = vpop.xlane.xlu0 %816
  %v818 = vsel %vm799, %v278, -inf
  %819 = vmax.xlane.f32.xlu0 %v818
  %v820 = vpop.xlane.xlu0 %819
  %v821 = vsel %vm799, %v280, -inf
  %822 = vmax.xlane.f32.xlu0 %v821
  %v823 = vpop.xlane.xlu0 %822
  %v824 = vsel %vm799, %v283, -inf
  %825 = vmax.xlane.f32.xlu0 %v824
  %v826 = vpop.xlane.xlu0 %825
  %v827 = vsel %vm799, %v285, -inf
  %828 = vmax.xlane.f32.xlu0 %v827
  %v829 = vpop.xlane.xlu0 %828
  %v830 = vsel %vm799, %v288, -inf
  %831 = vmax.xlane.f32.xlu0 %v830
  %v832 = vpop.xlane.xlu0 %831
  %v833 = vsel %vm799, %v290, -inf
  %834 = vmax.xlane.f32.xlu0 %v833
  %v835 = vpop.xlane.xlu0 %834
  %v836 = vsel %vm799, %v293, -inf
  %837 = vmax.xlane.f32.xlu0 %v836
  %v838 = vpop.xlane.xlu0 %837
  %v839 = vsel %vm799, %v295, -inf
  %840 = vmax.xlane.f32.xlu0 %v839
  %v841 = vpop.xlane.xlu0 %840
  %v842 = vsel %vm799, %v298, -inf
  %843 = vmax.xlane.f32.xlu0 %v842
  %v844 = vpop.xlane.xlu0 %843
  %v845 = vsel %vm799, %v300, -inf
  %846 = vmax.xlane.f32.xlu0 %v845
  %v847 = vpop.xlane.xlu0 %846
  %v848 = vsub.f32 %v263, %v802
  %v849 = vsub.f32 %v265, %v805
  %v850 = vsub.f32 %v268, %v808
  %v851 = vsub.f32 %v270, %v811
  %v852 = vsub.f32 %v273, %v814
  %v853 = vsub.f32 %v275, %v817
  %v854 = vsub.f32 %v278, %v820
  %v855 = vsub.f32 %v280, %v823
  %v856 = vsub.f32 %v283, %v826
  %v857 = vsub.f32 %v285, %v829
  %v858 = vsub.f32 %v288, %v832
  %v859 = vsub.f32 %v290, %v835
  %v860 = vsub.f32 %v293, %v838
  %v861 = vsub.f32 %v295, %v841
  %v862 = vsub.f32 %v298, %v844
  %v863 = vsub.f32 %v300, %v847
  %v864 = vmul.f32 %v848, 1.442695
  %v865 = vpow.pop %v864
  %v866 = vmul.f32 %v849, 1.442695
  %v867 = vpow.pop %v866
  %v868 = vmul.f32 %v850, 1.442695
  %v869 = vpow.pop %v868
  %v870 = vmul.f32 %v851, 1.442695
  %v871 = vpow.pop %v870
  %v872 = vmul.f32 %v852, 1.442695
  %v873 = vpow.pop %v872
  %v874 = vmul.f32 %v853, 1.442695
  %v875 = vpow.pop %v874
  %v876 = vmul.f32 %v854, 1.442695
  %v877 = vpow.pop %v876
  %v878 = vmul.f32 %v855, 1.442695
  %v879 = vpow.pop %v878
  %v880 = vmul.f32 %v856, 1.442695
  %v881 = vpow.pop %v880
  %v882 = vmul.f32 %v857, 1.442695
  %v883 = vpow.pop %v882
  %v884 = vmul.f32 %v858, 1.442695
  %v885 = vpow.pop %v884
  %v886 = vmul.f32 %v859, 1.442695
  %v887 = vpow.pop %v886
  %v888 = vmul.f32 %v860, 1.442695
  %v889 = vpow.pop %v888
  %v890 = vmul.f32 %v861, 1.442695
  %v891 = vpow.pop %v890
  %v892 = vmul.f32 %v862, 1.442695
  %v893 = vpow.pop %v892
  %v894 = vmul.f32 %v863, 1.442695
  %v895 = vpow.pop %v894
  %912 = vrot.lane.b32.xlu0 %v865, 106
  %v913 = vpop.permute.xlu0 %912
  %914 = vrot.lane.b32.xlu0 %v867, 106
  %v915 = vpop.permute.xlu0 %914
  %916 = vrot.lane.b32.xlu0 %v869, 106
  %v917 = vpop.permute.xlu0 %916
  %918 = vrot.lane.b32.xlu0 %v871, 106
  %v919 = vpop.permute.xlu0 %918
  %920 = vrot.lane.b32.xlu0 %v873, 106
  %v921 = vpop.permute.xlu0 %920
  %922 = vrot.lane.b32.xlu0 %v875, 106
  %v923 = vpop.permute.xlu0 %922
  %924 = vrot.lane.b32.xlu0 %v877, 106
  %v925 = vpop.permute.xlu0 %924
  %926 = vrot.lane.b32.xlu0 %v879, 106
  %v927 = vpop.permute.xlu0 %926
  %928 = vrot.lane.b32.xlu0 %v881, 106
  %v929 = vpop.permute.xlu0 %928
  %930 = vrot.lane.b32.xlu0 %v883, 106
  %v931 = vpop.permute.xlu0 %930
  %932 = vrot.lane.b32.xlu0 %v885, 106
  %v933 = vpop.permute.xlu0 %932
  %934 = vrot.lane.b32.xlu0 %v887, 106
  %v935 = vpop.permute.xlu0 %934
  %936 = vrot.lane.b32.xlu0 %v889, 106
  %v937 = vpop.permute.xlu0 %936
  %938 = vrot.lane.b32.xlu0 %v891, 106
  %v939 = vpop.permute.xlu0 %938
  %940 = vrot.lane.b32.xlu0 %v893, 106
  %v941 = vpop.permute.xlu0 %940
  %942 = vrot.lane.b32.xlu0 %v895, 106
  %v943 = vpop.permute.xlu0 %942
  %v960 = vsel %vm468, %v913, 0.0
  %961 = vadd.xlane.f32.xlu0 %v960
  %v962 = vpop.xlane.xlu0 %961
  %v963 = vsel %vm468, %v915, 0.0
  %964 = vadd.xlane.f32.xlu0 %v963
  %v965 = vpop.xlane.xlu0 %964
  %v966 = vsel %vm468, %v917, 0.0
  %967 = vadd.xlane.f32.xlu0 %v966
  %v968 = vpop.xlane.xlu0 %967
  %v969 = vsel %vm468, %v919, 0.0
  %970 = vadd.xlane.f32.xlu0 %v969
  %v971 = vpop.xlane.xlu0 %970
  %v972 = vsel %vm468, %v921, 0.0
  %973 = vadd.xlane.f32.xlu0 %v972
  %v974 = vpop.xlane.xlu0 %973
  %v975 = vsel %vm468, %v923, 0.0
  %976 = vadd.xlane.f32.xlu0 %v975
  %v977 = vpop.xlane.xlu0 %976
  %v978 = vsel %vm468, %v925, 0.0
  %979 = vadd.xlane.f32.xlu0 %v978
  %v980 = vpop.xlane.xlu0 %979
  %v981 = vsel %vm468, %v927, 0.0
  %982 = vadd.xlane.f32.xlu0 %v981
  %v983 = vpop.xlane.xlu0 %982
  %v984 = vsel %vm468, %v929, 0.0
  %985 = vadd.xlane.f32.xlu0 %v984
  %v986 = vpop.xlane.xlu0 %985
  %v987 = vsel %vm468, %v931, 0.0
  %988 = vadd.xlane.f32.xlu0 %v987
  %v989 = vpop.xlane.xlu0 %988
  %v990 = vsel %vm468, %v933, 0.0
  %991 = vadd.xlane.f32.xlu0 %v990
  %v992 = vpop.xlane.xlu0 %991
  %v993 = vsel %vm468, %v935, 0.0
  %994 = vadd.xlane.f32.xlu0 %v993
  %v995 = vpop.xlane.xlu0 %994
  %v996 = vsel %vm468, %v937, 0.0
  %997 = vadd.xlane.f32.xlu0 %v996
  %v998 = vpop.xlane.xlu0 %997
  %v999 = vsel %vm468, %v939, 0.0
  %1000 = vadd.xlane.f32.xlu0 %v999
  %v1001 = vpop.xlane.xlu0 %1000
  %v1002 = vsel %vm468, %v941, 0.0
  %1003 = vadd.xlane.f32.xlu0 %v1002
  %v1004 = vpop.xlane.xlu0 %1003
  %v1005 = vsel %vm468, %v943, 0.0
  %1006 = vadd.xlane.f32.xlu0 %v1005
  %v1007 = vpop.xlane.xlu0 %1006
  %vm1008 = vcmp.ge.s32.totalorder %v303, 22
  %vm1009 = vcmp.lt.s32.totalorder %v303, 25
  %vm1010 = vmand %vm1008, %vm1009
  %v1011 = vsel %vm1010, 1, 0
  %vm1012 = vcmp.eq.s32.totalorder %v1011, 1
  %v1013 = vsel %vm1012, %v802, %v767
  %v1014 = vsel %vm1012, %v805, %v768
  %v1015 = vsel %vm1012, %v808, %v769
  %v1016 = vsel %vm1012, %v811, %v770
  %v1017 = vsel %vm1012, %v814, %v771
  %v1018 = vsel %vm1012, %v817, %v772
  %v1019 = vsel %vm1012, %v820, %v773
  %v1020 = vsel %vm1012, %v823, %v774
  %v1021 = vsel %vm1012, %v826, %v775
  %v1022 = vsel %vm1012, %v829, %v776
  %v1023 = vsel %vm1012, %v832, %v777
  %v1024 = vsel %vm1012, %v835, %v778
  %v1025 = vsel %vm1012, %v838, %v779
  %v1026 = vsel %vm1012, %v841, %v780
  %v1027 = vsel %vm1012, %v844, %v781
  %v1028 = vsel %vm1012, %v847, %v782
  %v1029 = vsel %vm1012, %v962, %v783
  %v1030 = vsel %vm1012, %v965, %v784
  %v1031 = vsel %vm1012, %v968, %v785
  %v1032 = vsel %vm1012, %v971, %v786
  %v1033 = vsel %vm1012, %v974, %v787
  %v1034 = vsel %vm1012, %v977, %v788
  %v1035 = vsel %vm1012, %v980, %v789
  %v1036 = vsel %vm1012, %v983, %v790
  %v1037 = vsel %vm1012, %v986, %v791
  %v1038 = vsel %vm1012, %v989, %v792
  %v1039 = vsel %vm1012, %v992, %v793
  %v1040 = vsel %vm1012, %v995, %v794
  %v1041 = vsel %vm1012, %v998, %v795
  %v1042 = vsel %vm1012, %v1001, %v796
  %v1043 = vsel %vm1012, %v1004, %v797
  %v1044 = vsel %vm1012, %v1007, %v798
  %vm1045 = vcmask 228552
  %v1046 = vsel %vm1045, %v263, -inf
  %1047 = vmax.xlane.f32.xlu0 %v1046
  %v1048 = vpop.xlane.xlu0 %1047
  %v1049 = vsel %vm1045, %v265, -inf
  %1050 = vmax.xlane.f32.xlu0 %v1049
  %v1051 = vpop.xlane.xlu0 %1050
  %v1052 = vsel %vm1045, %v268, -inf
  %1053 = vmax.xlane.f32.xlu0 %v1052
  %v1054 = vpop.xlane.xlu0 %1053
  %v1055 = vsel %vm1045, %v270, -inf
  %1056 = vmax.xlane.f32.xlu0 %v1055
  %v1057 = vpop.xlane.xlu0 %1056
  %v1058 = vsel %vm1045, %v273, -inf
  %1059 = vmax.xlane.f32.xlu0 %v1058
  %v1060 = vpop.xlane.xlu0 %1059
  %v1061 = vsel %vm1045, %v275, -inf
  %1062 = vmax.xlane.f32.xlu0 %v1061
  %v1063 = vpop.xlane.xlu0 %1062
  %v1064 = vsel %vm1045, %v278, -inf
  %1065 = vmax.xlane.f32.xlu0 %v1064
  %v1066 = vpop.xlane.xlu0 %1065
  %v1067 = vsel %vm1045, %v280, -inf
  %1068 = vmax.xlane.f32.xlu0 %v1067
  %v1069 = vpop.xlane.xlu0 %1068
  %v1070 = vsel %vm1045, %v283, -inf
  %1071 = vmax.xlane.f32.xlu0 %v1070
  %v1072 = vpop.xlane.xlu0 %1071
  %v1073 = vsel %vm1045, %v285, -inf
  %1074 = vmax.xlane.f32.xlu0 %v1073
  %v1075 = vpop.xlane.xlu0 %1074
  %v1076 = vsel %vm1045, %v288, -inf
  %1077 = vmax.xlane.f32.xlu0 %v1076
  %v1078 = vpop.xlane.xlu0 %1077
  %v1079 = vsel %vm1045, %v290, -inf
  %1080 = vmax.xlane.f32.xlu0 %v1079
  %v1081 = vpop.xlane.xlu0 %1080
  %v1082 = vsel %vm1045, %v293, -inf
  %1083 = vmax.xlane.f32.xlu0 %v1082
  %v1084 = vpop.xlane.xlu0 %1083
  %v1085 = vsel %vm1045, %v295, -inf
  %1086 = vmax.xlane.f32.xlu0 %v1085
  %v1087 = vpop.xlane.xlu0 %1086
  %v1088 = vsel %vm1045, %v298, -inf
  %1089 = vmax.xlane.f32.xlu0 %v1088
  %v1090 = vpop.xlane.xlu0 %1089
  %v1091 = vsel %vm1045, %v300, -inf
  %1092 = vmax.xlane.f32.xlu0 %v1091
  %v1093 = vpop.xlane.xlu0 %1092
  %v1094 = vsub.f32 %v263, %v1048
  %v1095 = vsub.f32 %v265, %v1051
  %v1096 = vsub.f32 %v268, %v1054
  %v1097 = vsub.f32 %v270, %v1057
  %v1098 = vsub.f32 %v273, %v1060
  %v1099 = vsub.f32 %v275, %v1063
  %v1100 = vsub.f32 %v278, %v1066
  %v1101 = vsub.f32 %v280, %v1069
  %v1102 = vsub.f32 %v283, %v1072
  %v1103 = vsub.f32 %v285, %v1075
  %v1104 = vsub.f32 %v288, %v1078
  %v1105 = vsub.f32 %v290, %v1081
  %v1106 = vsub.f32 %v293, %v1084
  %v1107 = vsub.f32 %v295, %v1087
  %v1108 = vsub.f32 %v298, %v1090
  %v1109 = vsub.f32 %v300, %v1093
  %v1110 = vmul.f32 %v1094, 1.442695
  %v1111 = vpow.pop %v1110
  %v1112 = vmul.f32 %v1095, 1.442695
  %v1113 = vpow.pop %v1112
  %v1114 = vmul.f32 %v1096, 1.442695
  %v1115 = vpow.pop %v1114
  %v1116 = vmul.f32 %v1097, 1.442695
  %v1117 = vpow.pop %v1116
  %v1118 = vmul.f32 %v1098, 1.442695
  %v1119 = vpow.pop %v1118
  %v1120 = vmul.f32 %v1099, 1.442695
  %v1121 = vpow.pop %v1120
  %v1122 = vmul.f32 %v1100, 1.442695
  %v1123 = vpow.pop %v1122
  %v1124 = vmul.f32 %v1101, 1.442695
  %v1125 = vpow.pop %v1124
  %v1126 = vmul.f32 %v1102, 1.442695
  %v1127 = vpow.pop %v1126
  %v1128 = vmul.f32 %v1103, 1.442695
  %v1129 = vpow.pop %v1128
  %v1130 = vmul.f32 %v1104, 1.442695
  %v1131 = vpow.pop %v1130
  %v1132 = vmul.f32 %v1105, 1.442695
  %v1133 = vpow.pop %v1132
  %v1134 = vmul.f32 %v1106, 1.442695
  %v1135 = vpow.pop %v1134
  %v1136 = vmul.f32 %v1107, 1.442695
  %v1137 = vpow.pop %v1136
  %v1138 = vmul.f32 %v1108, 1.442695
  %v1139 = vpow.pop %v1138
  %v1140 = vmul.f32 %v1109, 1.442695
  %v1141 = vpow.pop %v1140
  %1158 = vrot.lane.b32.xlu0 %v1111, 103
  %v1159 = vpop.permute.xlu0 %1158
  %1160 = vrot.lane.b32.xlu0 %v1113, 103
  %v1161 = vpop.permute.xlu0 %1160
  %1162 = vrot.lane.b32.xlu0 %v1115, 103
  %v1163 = vpop.permute.xlu0 %1162
  %1164 = vrot.lane.b32.xlu0 %v1117, 103
  %v1165 = vpop.permute.xlu0 %1164
  %1166 = vrot.lane.b32.xlu0 %v1119, 103
  %v1167 = vpop.permute.xlu0 %1166
  %1168 = vrot.lane.b32.xlu0 %v1121, 103
  %v1169 = vpop.permute.xlu0 %1168
  %1170 = vrot.lane.b32.xlu0 %v1123, 103
  %v1171 = vpop.permute.xlu0 %1170
  %1172 = vrot.lane.b32.xlu0 %v1125, 103
  %v1173 = vpop.permute.xlu0 %1172
  %1174 = vrot.lane.b32.xlu0 %v1127, 103
  %v1175 = vpop.permute.xlu0 %1174
  %1176 = vrot.lane.b32.xlu0 %v1129, 103
  %v1177 = vpop.permute.xlu0 %1176
  %1178 = vrot.lane.b32.xlu0 %v1131, 103
  %v1179 = vpop.permute.xlu0 %1178
  %1180 = vrot.lane.b32.xlu0 %v1133, 103
  %v1181 = vpop.permute.xlu0 %1180
  %1182 = vrot.lane.b32.xlu0 %v1135, 103
  %v1183 = vpop.permute.xlu0 %1182
  %1184 = vrot.lane.b32.xlu0 %v1137, 103
  %v1185 = vpop.permute.xlu0 %1184
  %1186 = vrot.lane.b32.xlu0 %v1139, 103
  %v1187 = vpop.permute.xlu0 %1186
  %1188 = vrot.lane.b32.xlu0 %v1141, 103
  %v1189 = vpop.permute.xlu0 %1188
  %v1206 = vsel %vm468, %v1159, 0.0
  %1207 = vadd.xlane.f32.xlu0 %v1206
  %v1208 = vpop.xlane.xlu0 %1207
  %v1209 = vsel %vm468, %v1161, 0.0
  %1210 = vadd.xlane.f32.xlu0 %v1209
  %v1211 = vpop.xlane.xlu0 %1210
  %v1212 = vsel %vm468, %v1163, 0.0
  %1213 = vadd.xlane.f32.xlu0 %v1212
  %v1214 = vpop.xlane.xlu0 %1213
  %v1215 = vsel %vm468, %v1165, 0.0
  %1216 = vadd.xlane.f32.xlu0 %v1215
  %v1217 = vpop.xlane.xlu0 %1216
  %v1218 = vsel %vm468, %v1167, 0.0
  %1219 = vadd.xlane.f32.xlu0 %v1218
  %v1220 = vpop.xlane.xlu0 %1219
  %v1221 = vsel %vm468, %v1169, 0.0
  %1222 = vadd.xlane.f32.xlu0 %v1221
  %v1223 = vpop.xlane.xlu0 %1222
  %v1224 = vsel %vm468, %v1171, 0.0
  %1225 = vadd.xlane.f32.xlu0 %v1224
  %v1226 = vpop.xlane.xlu0 %1225
  %v1227 = vsel %vm468, %v1173, 0.0
  %1228 = vadd.xlane.f32.xlu0 %v1227
  %v1229 = vpop.xlane.xlu0 %1228
  %v1230 = vsel %vm468, %v1175, 0.0
  %1231 = vadd.xlane.f32.xlu0 %v1230
  %v1232 = vpop.xlane.xlu0 %1231
  %v1233 = vsel %vm468, %v1177, 0.0
  %1234 = vadd.xlane.f32.xlu0 %v1233
  %v1235 = vpop.xlane.xlu0 %1234
  %v1236 = vsel %vm468, %v1179, 0.0
  %1237 = vadd.xlane.f32.xlu0 %v1236
  %v1238 = vpop.xlane.xlu0 %1237
  %v1239 = vsel %vm468, %v1181, 0.0
  %1240 = vadd.xlane.f32.xlu0 %v1239
  %v1241 = vpop.xlane.xlu0 %1240
  %v1242 = vsel %vm468, %v1183, 0.0
  %1243 = vadd.xlane.f32.xlu0 %v1242
  %v1244 = vpop.xlane.xlu0 %1243
  %v1245 = vsel %vm468, %v1185, 0.0
  %1246 = vadd.xlane.f32.xlu0 %v1245
  %v1247 = vpop.xlane.xlu0 %1246
  %v1248 = vsel %vm468, %v1187, 0.0
  %1249 = vadd.xlane.f32.xlu0 %v1248
  %v1250 = vpop.xlane.xlu0 %1249
  %v1251 = vsel %vm468, %v1189, 0.0
  %1252 = vadd.xlane.f32.xlu0 %v1251
  %v1253 = vpop.xlane.xlu0 %1252
  %vm1254 = vcmp.ge.s32.totalorder %v303, 25
  %vm1255 = vmand %vm1254, %vm305
  %v1256 = vsel %vm1255, 1, 0
  %vm1257 = vcmp.eq.s32.totalorder %v1256, 1
  %v1258 = vsel %vm1257, %v1048, %v1013
  %v1259 = vsel %vm1257, %v1051, %v1014
  %v1260 = vsel %vm1257, %v1054, %v1015
  %v1261 = vsel %vm1257, %v1057, %v1016
  %v1262 = vsel %vm1257, %v1060, %v1017
  %v1263 = vsel %vm1257, %v1063, %v1018
  %v1264 = vsel %vm1257, %v1066, %v1019
  %v1265 = vsel %vm1257, %v1069, %v1020
  %v1266 = vsel %vm1257, %v1072, %v1021
  %v1267 = vsel %vm1257, %v1075, %v1022
  %v1268 = vsel %vm1257, %v1078, %v1023
  %v1269 = vsel %vm1257, %v1081, %v1024
  %v1270 = vsel %vm1257, %v1084, %v1025
  %v1271 = vsel %vm1257, %v1087, %v1026
  %v1272 = vsel %vm1257, %v1090, %v1027
  %v1273 = vsel %vm1257, %v1093, %v1028
  %v1274 = vsel %vm1257, %v1208, %v1029
  %v1275 = vsel %vm1257, %v1211, %v1030
  %v1276 = vsel %vm1257, %v1214, %v1031
  %v1277 = vsel %vm1257, %v1217, %v1032
  %v1278 = vsel %vm1257, %v1220, %v1033
  %v1279 = vsel %vm1257, %v1223, %v1034
  %v1280 = vsel %vm1257, %v1226, %v1035
  %v1281 = vsel %vm1257, %v1229, %v1036
  %v1282 = vsel %vm1257, %v1232, %v1037
  %v1283 = vsel %vm1257, %v1235, %v1038
  %v1284 = vsel %vm1257, %v1238, %v1039
  %v1285 = vsel %vm1257, %v1241, %v1040
  %v1286 = vsel %vm1257, %v1244, %v1041
  %v1287 = vsel %vm1257, %v1247, %v1042
  %v1288 = vsel %vm1257, %v1250, %v1043
  %v1289 = vsel %vm1257, %v1253, %v1044
  %v1290 = vsub.f32 %v263, %v1258
  %v1291 = vsub.f32 %v265, %v1259
  %v1292 = vsub.f32 %v268, %v1260
  %v1293 = vsub.f32 %v270, %v1261
  %v1294 = vsub.f32 %v273, %v1262
  %v1295 = vsub.f32 %v275, %v1263
  %v1296 = vsub.f32 %v278, %v1264
  %v1297 = vsub.f32 %v280, %v1265
  %v1298 = vsub.f32 %v283, %v1266
  %v1299 = vsub.f32 %v285, %v1267
  %v1300 = vsub.f32 %v288, %v1268
  %v1301 = vsub.f32 %v290, %v1269
  %v1302 = vsub.f32 %v293, %v1270
  %v1303 = vsub.f32 %v295, %v1271
  %v1304 = vsub.f32 %v298, %v1272
  %v1305 = vsub.f32 %v300, %v1273
  %v1306 = vmul.f32 %v1290, 1.442695
  %v1307 = vpow.pop %v1306
  %v1308 = vmul.f32 %v1291, 1.442695
  %v1309 = vpow.pop %v1308
  %v1310 = vmul.f32 %v1292, 1.442695
  %v1311 = vpow.pop %v1310
  %v1312 = vmul.f32 %v1293, 1.442695
  %v1313 = vpow.pop %v1312
  %v1314 = vmul.f32 %v1294, 1.442695
  %v1315 = vpow.pop %v1314
  %v1316 = vmul.f32 %v1295, 1.442695
  %v1317 = vpow.pop %v1316
  %v1318 = vmul.f32 %v1296, 1.442695
  %v1319 = vpow.pop %v1318
  %v1320 = vmul.f32 %v1297, 1.442695
  %v1321 = vpow.pop %v1320
  %v1322 = vmul.f32 %v1298, 1.442695
  %v1323 = vpow.pop %v1322
  %v1324 = vmul.f32 %v1299, 1.442695
  %v1325 = vpow.pop %v1324
  %v1326 = vmul.f32 %v1300, 1.442695
  %v1327 = vpow.pop %v1326
  %v1328 = vmul.f32 %v1301, 1.442695
  %v1329 = vpow.pop %v1328
  %v1330 = vmul.f32 %v1302, 1.442695
  %v1331 = vpow.pop %v1330
  %v1332 = vmul.f32 %v1303, 1.442695
  %v1333 = vpow.pop %v1332
  %v1334 = vmul.f32 %v1304, 1.442695
  %v1335 = vpow.pop %v1334
  %v1336 = vmul.f32 %v1305, 1.442695
  %v1337 = vpow.pop %v1336
  %v1338 = vrcp.pop %v1274
  %v1339 = vrcp.pop %v1275
  %v1340 = vrcp.pop %v1276
  %v1341 = vrcp.pop %v1277
  %v1342 = vrcp.pop %v1278
  %v1343 = vrcp.pop %v1279
  %v1344 = vrcp.pop %v1280
  %v1345 = vrcp.pop %v1281
  %v1346 = vrcp.pop %v1282
  %v1347 = vrcp.pop %v1283
  %v1348 = vrcp.pop %v1284
  %v1349 = vrcp.pop %v1285
  %v1350 = vrcp.pop %v1286
  %v1351 = vrcp.pop %v1287
  %v1352 = vrcp.pop %v1288
  %v1353 = vrcp.pop %v1289
  %v1354 = vmul.f32 %v1307, %v1338
  %v1355 = vmul.f32 %v1309, %v1339
  %v1356 = vmul.f32 %v1311, %v1340
  %v1357 = vmul.f32 %v1313, %v1341
  %v1358 = vmul.f32 %v1315, %v1342
  %v1359 = vmul.f32 %v1317, %v1343
  %v1360 = vmul.f32 %v1319, %v1344
  %v1361 = vmul.f32 %v1321, %v1345
  %v1362 = vmul.f32 %v1323, %v1346
  %v1363 = vmul.f32 %v1325, %v1347
  %v1364 = vmul.f32 %v1327, %v1348
  %v1365 = vmul.f32 %v1329, %v1349
  %v1366 = vmul.f32 %v1331, %v1350
  %v1367 = vmul.f32 %v1333, %v1351
  %v1368 = vmul.f32 %v1335, %v1352
  %v1369 = vmul.f32 %v1337, %v1353
  %v1370 = vsel %vm306, 1, 0
  %vm1371 = vcmp.eq.s32.totalorder %v1370, 1
  %v1372 = vsel %vm1371, %v1354, %v263
  %v1373 = vsel %vm1371, %v1355, %v265
  %v1374 = vsel %vm1371, %v1356, %v268
  %v1375 = vsel %vm1371, %v1357, %v270
  %v1376 = vsel %vm1371, %v1358, %v273
  %v1377 = vsel %vm1371, %v1359, %v275
  %v1378 = vsel %vm1371, %v1360, %v278
  %v1379 = vsel %vm1371, %v1361, %v280
  %v1380 = vsel %vm1371, %v1362, %v283
  %v1381 = vsel %vm1371, %v1363, %v285
  %v1382 = vsel %vm1371, %v1364, %v288
  %v1383 = vsel %vm1371, %v1365, %v290
  %v1384 = vsel %vm1371, %v1366, %v293
  %v1385 = vsel %vm1371, %v1367, %v295
  %v1386 = vsel %vm1371, %v1368, %v298
  %v1387 = vsel %vm1371, %v1369, %v300
  %1388 = vst [vmem:[%s3] sm:$0xff] %v1372
  %1389 = vst [vmem:[%s3 + $0x8] sm:$0xff] %v1373
  %1390 = vst [vmem:[%s3 + $0x10] sm:$0xff] %v1374
  %1391 = vst [vmem:[%s3 + $0x18] sm:$0xff] %v1375
  %1392 = vst [vmem:[%s3 + $0x20] sm:$0xff] %v1376
  %1393 = vst [vmem:[%s3 + $0x28] sm:$0xff] %v1377
  %1394 = vst [vmem:[%s3 + $0x30] sm:$0xff] %v1378
  %1395 = vst [vmem:[%s3 + $0x38] sm:$0xff] %v1379
  %1396 = vst [vmem:[%s3 + $0x40] sm:$0xff] %v1380
  %1397 = vst [vmem:[%s3 + $0x48] sm:$0xff] %v1381
  %1398 = vst [vmem:[%s3 + $0x50] sm:$0xff] %v1382
  %1399 = vst [vmem:[%s3 + $0x58] sm:$0xff] %v1383
  %1400 = vst [vmem:[%s3 + $0x60] sm:$0xff] %v1384
  %1401 = vst [vmem:[%s3 + $0x68] sm:$0xff] %v1385
  %1402 = vst [vmem:[%s3 + $0x70] sm:$0xff] %v1386
  %1403 = vst [vmem:[%s3 + $0x78] sm:$0xff] %v1387
  // Predicated region
  $region14: #{attssd_lite_forward.10} parent=0 // pred_check
    _
  $region15: #{attssd_lite_forward.10} parent=0 // pred_check_branch
    %1405 = sbr.rel (0) target = $region17
  $region16: #{attssd_lite_forward.10} parent=0 // pred_region
    _
  $region17: #{attssd_lite_forward.10} parent=0 // pred_fallthru
    _
  // Predicated region
  $region18: #{attssd_lite_forward.10} parent=0 // pred_check
    _
  $region19: #{attssd_lite_forward.10} parent=0 // pred_check_branch
    %1407 = sbr.rel (0) target = $region21
  $region20: #{attssd_lite_forward.10} parent=0 // pred_region
    _
  $region21: #{attssd_lite_forward.10} parent=0 // pred_fallthru
    _

// kernel: attssd_lite_forward.9
$region0: #{attssd_lite_forward.9}
  #allocation0 [shape = 'u32[]', space=smem, size = 0x4, offset = 0x4, fixed_abs, tag = 'smem constant byte address 0x4 - core index']
  #allocation1 [shape = 'u32[72,128]{1,0:T(1,128)}', space=vmem, size = 0x9000, scoped, tag = 'internal scratch']
  %s0 = inlined_call_operand.vmem [shape: bf16[512,72], index: 0, kind: input, shape index: {}]
  %s1 = inlined_call_operand.vmem [shape: bf16[72,128], index: 1, kind: input, shape index: {}]
  %s2 = inlined_call_operand.vmem [shape: f32[1,128], index: 2, kind: input, shape index: {}]
  %s3 = inlined_call_operand.vmem [shape: f32[512,128], index: 3, kind: output, shape index: {}]
  %s4 = sld [smem:[#allocation0]]
  $region45: #{attssd_lite_forward.9} parent=0
    _
  %s6 = ssub.s32 1, %s4
  %s7 = scalar_select 0, %s6, %s4
  loop: start=0, step=1, limit=4
  $region2: #{attssd_lite_forward.9} parent=0 // loop_pre_header
    _
  $region3: #{attssd_lite_forward.9} parent=0 // loop_header
    %s9 = sphi 0, %s13
    %p10 = scmp.ge.s32.totalorder %s9, 4
    %s19 = sphi 0, %s21
    %s22 = sphi 0, %s19
    %s23 = sphi 0, %s22
    %s39 = sphi 0, %s23
    %s43 = sphi 0, %s43
    %s45 = sphi 0, %s43
    %s46 = sphi 0, %s45
    %s60 = sphi 0, %s46
    %s64 = sphi 0, %s64
    %s66 = sphi 0, %s64
    %s67 = sphi 0, %s66
    %s81 = sphi 0, %s67
    %s87 = sphi 0, %s89
    %s90 = sphi 0, %s87
    %s91 = sphi 0, %s90
    %s107 = sphi 0, %s91
  $region4: #{attssd_lite_forward.9} parent=0 // loop_header_branch
    %12 = sbr.rel (%p10) target = $region8
  $region5: #{attssd_lite_forward.9} parent=0 // loop_body
    %s14 = ssub.s32 %s9, 1
    %s15 = ssub.s32 %s9, 2
    %s16 = sadd.s32 %s9, 1
    %s17 = ssub.s32 %s9, %s16
    %p18 = scmp.eq.s32.totalorder %s17, 0
    %s20 = sadd.s32 %s19, 1
    %s21 = scalar_select %p18, %s19, %s20
    %p24 = pneg %p18
    %p25 = scmp.eq.s32.totalorder %s9, 1
    %p26 = por %p24, %p25
    %p27 = scmp.ne.s32.totalorder %s19, %s22
    %p28 = scmp.eq.s32.totalorder %s9, 0
    %p29 = por %p27, %p28
    %p30 = scmp.ne.s32.totalorder %s19, %s22
    %p31 = scmp.eq.s32.totalorder %s14, 1
    %p32 = por %p30, %p31
    %p33 = scmp.ne.s32.totalorder %s22, %s23
    %p34 = scmp.eq.s32.totalorder %s14, 0
    %p35 = por %p33, %p34
    %p36 = scmp.ne.s32.totalorder %s22, %s23
    %p37 = scmp.eq.s32.totalorder %s15, 1
    %p38 = por %p36, %p37
    %p40 = scmp.ne.s32.totalorder %s23, %s39
    %p41 = scmp.eq.s32.totalorder %s15, 0
    %p42 = por %p40, %p41
    %s44 = sadd.s32 %s43, 1
    %p47 = scmp.eq.s32.totalorder %s9, 1
    %p48 = scmp.ne.s32.totalorder %s43, %s45
    %p49 = scmp.eq.s32.totalorder %s9, 0
    %p50 = por %p48, %p49
    %p51 = scmp.ne.s32.totalorder %s43, %s45
    %p52 = scmp.eq.s32.totalorder %s14, 1
    %p53 = por %p51, %p52
    %p54 = scmp.ne.s32.totalorder %s45, %s46
    %p55 = scmp.eq.s32.totalorder %s14, 0
    %p56 = por %p54, %p55
    %p57 = scmp.ne.s32.totalorder %s45, %s46
    %p58 = scmp.eq.s32.totalorder %s15, 1
    %p59 = por %p57, %p58
    %p61 = scmp.ne.s32.totalorder %s46, %s60
    %p62 = scmp.eq.s32.totalorder %s15, 0
    %p63 = por %p61, %p62
    %s65 = sadd.s32 %s64, 1
    %p68 = scmp.eq.s32.totalorder %s9, 1
    %p69 = scmp.ne.s32.totalorder %s64, %s66
    %p70 = scmp.eq.s32.totalorder %s9, 0
    %p71 = por %p69, %p70
    %p72 = scmp.ne.s32.totalorder %s64, %s66
    %p73 = scmp.eq.s32.totalorder %s14, 1
    %p74 = por %p72, %p73
    %p75 = scmp.ne.s32.totalorder %s66, %s67
    %p76 = scmp.eq.s32.totalorder %s14, 0
    %p77 = por %p75, %p76
    %p78 = scmp.ne.s32.totalorder %s66, %s67
    %p79 = scmp.eq.s32.totalorder %s15, 1
    %p80 = por %p78, %p79
    %p82 = scmp.ne.s32.totalorder %s67, %s81
    %p83 = scmp.eq.s32.totalorder %s15, 0
    %p84 = por %p82, %p83
    %s85 = ssub.s32 %s9, %s16
    %p86 = scmp.eq.s32.totalorder %s85, 0
    %s88 = sadd.s32 %s87, 1
    %s89 = scalar_select %p86, %s87, %s88
    %p92 = pneg %p86
    %p93 = scmp.eq.s32.totalorder %s9, 1
    %p94 = por %p92, %p93
    %p95 = scmp.ne.s32.totalorder %s87, %s90
    %p96 = scmp.eq.s32.totalorder %s9, 0
    %p97 = por %p95, %p96
    %p98 = scmp.ne.s32.totalorder %s87, %s90
    %p99 = scmp.eq.s32.totalorder %s14, 1
    %p100 = por %p98, %p99
    %p101 = scmp.ne.s32.totalorder %s90, %s91
    %p102 = scmp.eq.s32.totalorder %s14, 0
    %p103 = por %p101, %p102
    %p104 = scmp.ne.s32.totalorder %s90, %s91
    %p105 = scmp.eq.s32.totalorder %s15, 1
    %p106 = por %p104, %p105
    %p108 = scmp.ne.s32.totalorder %s91, %s107
    %p109 = scmp.eq.s32.totalorder %s15, 0
    %p110 = por %p108, %p109
    %p111 = scmp.le.s32.totalorder 1, %s9
    %p112 = scmp.lt.s32.totalorder %s9, 3
    %p113 = pnand %p111, %p112
    %p114 = pneg %p113
    // Predicated region
    $region9: #{attssd_lite_forward.9} parent=5 // pred_check
      _
    $region10: #{attssd_lite_forward.9} parent=5 // pred_check_branch
      %116 = sbr.rel (%p113) target = $region12
    $region11: #{attssd_lite_forward.9} parent=5 // pred_region
      %s117 = ssub.s32 %s9, 1
      // Predicated region
      $region13: #{attssd_lite_forward.9} parent=11 // pred_check
        %p118 = pneg %p56
      $region14: #{attssd_lite_forward.9} parent=11 // pred_check_branch
        %120 = sbr.rel (%p118) target = $region16
      $region15: #{attssd_lite_forward.9} parent=11 // pred_region
        _
      $region16: #{attssd_lite_forward.9} parent=11 // pred_fallthru
        _
      // Predicated region
      $region17: #{attssd_lite_forward.9} parent=11 // pred_check
        %p121 = pneg %p77
      $region18: #{attssd_lite_forward.9} parent=11 // pred_check_branch
        %123 = sbr.rel (%p121) target = $region20
      $region19: #{attssd_lite_forward.9} parent=11 // pred_region
        _
      $region20: #{attssd_lite_forward.9} parent=11 // pred_fallthru
        _
    $region12: #{attssd_lite_forward.9} parent=5 // pred_fallthru
      _
    %p124 = scmp.lt.s32.totalorder %s9, 2
    // Predicated region
    $region21: #{attssd_lite_forward.9} parent=5 // pred_check
      %p125 = pneg %p124
    $region22: #{attssd_lite_forward.9} parent=5 // pred_check_branch
      %127 = sbr.rel (%p125) target = $region24
    $region23: #{attssd_lite_forward.9} parent=5 // pred_region
      // Predicated region
      $region25: #{attssd_lite_forward.9} parent=23 // pred_check
        %p128 = pneg %p29
      $region26: #{attssd_lite_forward.9} parent=23 // pred_check_branch
        %130 = sbr.rel (%p128) target = $region28
      $region27: #{attssd_lite_forward.9} parent=23 // pred_region
        %s131 = smul.u32 32, %s9
        %p132 = scmp.lt.s32.totalorder %s131, 63
        %s133 = scalar_select %p132, %s131, 63
        %s134 = smul.addr %s133, 4
        %s135 = scalar_lea.vmem %s0, %s134
        %s136 = smul.u32 32, %s9
      $region28: #{attssd_lite_forward.9} parent=23 // pred_fallthru
        _
    $region24: #{attssd_lite_forward.9} parent=5 // pred_fallthru
      _
    %p137 = scmp.le.s32.totalorder 1, %s9
    %p138 = scmp.lt.s32.totalorder %s9, 3
    %p139 = pnand %p137, %p138
    %p140 = pneg %p139
    // Predicated region
    $region29: #{attssd_lite_forward.9} parent=5 // pred_check
      _
    $region30: #{attssd_lite_forward.9} parent=5 // pred_check_branch
      %142 = sbr.rel (%p139) target = $region32
    $region31: #{attssd_lite_forward.9} parent=5 // pred_region
      %s143 = ssub.s32 %s9, 1
      %s144 = smul.u32 32, %s14
      %p145 = scmp.lt.s32.totalorder %s144, 63
      %s146 = scalar_select %p145, %s144, 63
      %s147 = smul.addr %s146, 4
      %s148 = scalar_lea.vmem %s0, %s147
      %p149 = pneg %p35
      %p150 = pneg %p32
      %p151 = pneg %p56
      %p152 = pneg %p53
      %p153 = pneg %p77
      %p154 = pneg %p74
      %p155 = pneg %p103
      %p156 = pneg %p100
      %s157 = smul.u32 32, %s14
      %p158 = scmp.lt.s32.totalorder %s157, 63
      %s159 = scalar_select %p158, %s157, 63
      %s160 = smul.addr %s159, 8
      %s161 = scalar_lea.vmem %s3, %s160
      %s162 = smul.u32 32, %s14
      %p163 = scmp.lt.s32.totalorder %s162, 63
      %s164 = scalar_select %p163, %s162, 63
      %s165 = smul.addr %s164, 4
      %s166 = scalar_lea.vmem %s0, %s165
      %s167 = smul.u32 32, %s14
      %s168 = smul.u32 32, %s14
      %p169 = scmp.lt.s32.totalorder %s168, 63
      %s170 = scalar_select %p169, %s168, 63
      %s171 = smul.addr %s170, 8
      %s172 = scalar_lea.vmem %s3, %s171
      %s173 = smul.u32 32, %s14
      %v175 = vld [vmem:[%s166] sm:$0xf]
      %v176 = vld [vmem:[%s166 + $0x4] sm:$0xf]
      %v177 = vld [vmem:[%s166 + $0x8] sm:$0xf]
      %v178 = vld [vmem:[%s166 + $0xc] sm:$0xf]
      %v179 = vld [vmem:[%s166 + $0x10] sm:$0xf]
      %v180 = vld [vmem:[%s166 + $0x14] sm:$0xf]
      %v181 = vld [vmem:[%s166 + $0x18] sm:$0xf]
      %v182 = vld [vmem:[%s166 + $0x1c] sm:$0xf]
      %v183 = vld [vmem:[%s166 + $0x20] sm:$0xf]
      %v184 = vld [vmem:[%s166 + $0x24] sm:$0xf]
      %v185 = vld [vmem:[%s166 + $0x28] sm:$0xf]
      %v186 = vld [vmem:[%s166 + $0x2c] sm:$0xf]
      %v187 = vld [vmem:[%s166 + $0x30] sm:$0xf]
      %v188 = vld [vmem:[%s166 + $0x34] sm:$0xf]
      %v189 = vld [vmem:[%s166 + $0x38] sm:$0xf]
      %v190 = vld [vmem:[%s166 + $0x3c] sm:$0xf]
      %v191 = vld [vmem:[%s166 + $0x40] sm:$0xf]
      %v192 = vld [vmem:[%s166 + $0x44] sm:$0xf]
      %v193 = vld [vmem:[%s166 + $0x48] sm:$0xf]
      %v194 = vld [vmem:[%s166 + $0x4c] sm:$0xf]
      %v195 = vld [vmem:[%s166 + $0x50] sm:$0xf]
      %v196 = vld [vmem:[%s166 + $0x54] sm:$0xf]
      %v197 = vld [vmem:[%s166 + $0x58] sm:$0xf]
      %v198 = vld [vmem:[%s166 + $0x5c] sm:$0xf]
      %v199 = vld [vmem:[%s166 + $0x60] sm:$0xf]
      %v200 = vld [vmem:[%s166 + $0x64] sm:$0xf]
      %v201 = vld [vmem:[%s166 + $0x68] sm:$0xf]
      %v202 = vld [vmem:[%s166 + $0x6c] sm:$0xf]
      %v203 = vld [vmem:[%s166 + $0x70] sm:$0xf]
      %v204 = vld [vmem:[%s166 + $0x74] sm:$0xf]
      %v205 = vld [vmem:[%s166 + $0x78] sm:$0xf]
      %v206 = vld [vmem:[%s166 + $0x7c] sm:$0xf]
      %v207 = vld [vmem:[%s1] sm:$0xf]
      %v208 = vld [vmem:[%s1 + $0x4] sm:$0xf]
      %v209 = vld [vmem:[%s1 + $0x8] sm:$0xf]
      %v210 = vld [vmem:[%s1 + $0xc] sm:$0xf]
      %v211 = vld [vmem:[%s1 + $0x10] sm:$0xf]
      %v212 = vld [vmem:[%s1 + $0x14] sm:$0xf]
      %v213 = vld [vmem:[%s1 + $0x18] sm:$0xf]
      %v214 = vld [vmem:[%s1 + $0x1c] sm:$0xf]
      %v215 = vld [vmem:[%s1 + $0x20] sm:$0xf]
      %v216 = vld [vmem:[%s2] sm:$0x1]
      %v218 = vperm.slane %v216, 0
      %v252 = vunpack.c.l.b16 %v175
      %v253 = vunpack.c.l.b16 %v176
      %v254 = vunpack.c.l.b16 %v177
      %v255 = vunpack.c.l.b16 %v178
      %v256 = vunpack.c.l.b16 %v179
      %v257 = vunpack.c.l.b16 %v180
      %v258 = vunpack.c.l.b16 %v181
      %v259 = vunpack.c.l.b16 %v182
      %v260 = vunpack.c.l.b16 %v183
      %v261 = vunpack.c.l.b16 %v184
      %v262 = vunpack.c.l.b16 %v185
      %v263 = vunpack.c.l.b16 %v186
      %v264 = vunpack.c.l.b16 %v187
      %v265 = vunpack.c.l.b16 %v188
      %v266 = vunpack.c.l.b16 %v189
      %v267 = vunpack.c.l.b16 %v190
      %v268 = vunpack.c.l.b16 %v191
      %v269 = vunpack.c.l.b16 %v192
      %v270 = vunpack.c.l.b16 %v193
      %v271 = vunpack.c.l.b16 %v194
      %v272 = vunpack.c.l.b16 %v195
      %v273 = vunpack.c.l.b16 %v196
      %v274 = vunpack.c.l.b16 %v197
      %v275 = vunpack.c.l.b16 %v198
      %v276 = vunpack.c.l.b16 %v199
      %v277 = vunpack.c.l.b16 %v200
      %v278 = vunpack.c.l.b16 %v201
      %v279 = vunpack.c.l.b16 %v202
      %v280 = vunpack.c.l.b16 %v203
      %v281 = vunpack.c.l.b16 %v204
      %v282 = vunpack.c.l.b16 %v205
      %v283 = vunpack.c.l.b16 %v206
      %v284 = vpack.c.b16 %v253, %v252
      %v285 = vpack.c.b16 %v255, %v254
      %v286 = vpack.c.b16 %v257, %v256
      %v287 = vpack.c.b16 %v259, %v258
      %v288 = vpack.c.b16 %v261, %v260
      %v289 = vpack.c.b16 %v263, %v262
      %v290 = vpack.c.b16 %v265, %v264
      %v291 = vpack.c.b16 %v267, %v266
      %v292 = vpack.c.b16 %v269, %v268
      %v293 = vpack.c.b16 %v271, %v270
      %v294 = vpack.c.b16 %v273, %v272
      %v295 = vpack.c.b16 %v275, %v274
      %v296 = vpack.c.b16 %v277, %v276
      %v297 = vpack.c.b16 %v279, %v278
      %v298 = vpack.c.b16 %v281, %v280
      %v299 = vpack.c.b16 %v283, %v282
      %v309 = vunpack.c.l.b16 %v207
      %v310 = vunpack.c.l.b16 %v208
      %v311 = vunpack.c.l.b16 %v209
      %v312 = vunpack.c.l.b16 %v210
      %v313 = vunpack.c.l.b16 %v211
      %v314 = vunpack.c.l.b16 %v212
      %v315 = vunpack.c.l.b16 %v213
      %v316 = vunpack.c.l.b16 %v214
      %v317 = vunpack.c.l.b16 %v215
      %v318 = vpack.c.b16 %v310, %v309
      %v319 = vpack.c.b16 %v312, %v311
      %v320 = vpack.c.b16 %v314, %v313
      %v321 = vpack.c.b16 %v316, %v315
      %v322 = vpack.c.b16 %v317, %v317
      %vm327 = vcmask 588800
      %v329 = vsel %vm327, %v284, 0
      %v332 = vsel %vm327, %v285, 0
      %v335 = vsel %vm327, %v286, 0
      %v338 = vsel %vm327, %v287, 0
      %v341 = vsel %vm327, %v288, 0
      %v344 = vsel %vm327, %v289, 0
      %v347 = vsel %vm327, %v290, 0
      %v350 = vsel %vm327, %v291, 0
      %v353 = vsel %vm327, %v292, 0
      %v356 = vsel %vm327, %v293, 0
      %v359 = vsel %vm327, %v294, 0
      %v362 = vsel %vm327, %v295, 0
      %v365 = vsel %vm327, %v296, 0
      %v368 = vsel %vm327, %v297, 0
      %v371 = vsel %vm327, %v298, 0
      %v374 = vsel %vm327, %v299, 0
      %vm376 = vcmask 1043456
      %v378 = vsel %vm376, %v322, 0
      %380 = vmatpush.bf16.msra.mxu0 0
      %381 = vmatpush.bf16.msra.mxu0 0
      %382 = vmatpush.bf16.msra.mxu0 0
      %383 = vmatpush.bf16.msra.mxu0 %v378
      %384 = vmatpush.bf16.msra.mxu0 %v321
      %385 = vmatpush.bf16.msra.mxu0 %v320
      %386 = vmatpush.bf16.msra.mxu0 %v319
      %387 = vmatpush.bf16.msra.mxu0 %v318
      %388 = vmatmul.bf16.gmra.mxu0 %v329
      %v389 = vpop.f32.mrf.mxu0
      %v390 = vadd.f32 %v218, %v389
      %v391 = vpop.f32.mrf.mxu0
      %v392 = vadd.f32 %v218, %v391
      %393 = vmatmul.bf16.gmra.mxu0 %v332
      %v394 = vpop.f32.mrf.mxu0
      %v395 = vadd.f32 %v218, %v394
      %v396 = vpop.f32.mrf.mxu0
      %v397 = vadd.f32 %v218, %v396
      %398 = vmatmul.bf16.gmra.mxu0 %v335
      %v399 = vpop.f32.mrf.mxu0
      %v400 = vadd.f32 %v218, %v399
      %v401 = vpop.f32.mrf.mxu0
      %v402 = vadd.f32 %v218, %v401
      %403 = vmatmul.bf16.gmra.mxu0 %v338
      %v404 = vpop.f32.mrf.mxu0
      %v405 = vadd.f32 %v218, %v404
      %v406 = vpop.f32.mrf.mxu0
      %v407 = vadd.f32 %v218, %v406
      %408 = vmatmul.bf16.gmra.mxu0 %v341
      %v409 = vpop.f32.mrf.mxu0
      %v410 = vadd.f32 %v218, %v409
      %v411 = vpop.f32.mrf.mxu0
      %v412 = vadd.f32 %v218, %v411
      %413 = vmatmul.bf16.gmra.mxu0 %v344
      %v414 = vpop.f32.mrf.mxu0
      %v415 = vadd.f32 %v218, %v414
      %v416 = vpop.f32.mrf.mxu0
      %v417 = vadd.f32 %v218, %v416
      %418 = vmatmul.bf16.gmra.mxu0 %v347
      %v419 = vpop.f32.mrf.mxu0
      %v420 = vadd.f32 %v218, %v419
      %v421 = vpop.f32.mrf.mxu0
      %v422 = vadd.f32 %v218, %v421
      %423 = vmatmul.bf16.gmra.mxu0 %v350
      %v424 = vpop.f32.mrf.mxu0
      %v425 = vadd.f32 %v218, %v424
      %v426 = vpop.f32.mrf.mxu0
      %v427 = vadd.f32 %v218, %v426
      %428 = vmatmul.bf16.gmra.mxu0 %v353
      %v429 = vpop.f32.mrf.mxu0
      %v430 = vadd.f32 %v218, %v429
      %v431 = vpop.f32.mrf.mxu0
      %v432 = vadd.f32 %v218, %v431
      %433 = vmatmul.bf16.gmra.mxu0 %v356
      %v434 = vpop.f32.mrf.mxu0
      %v435 = vadd.f32 %v218, %v434
      %v436 = vpop.f32.mrf.mxu0
      %v437 = vadd.f32 %v218, %v436
      %438 = vmatmul.bf16.gmra.mxu0 %v359
      %v439 = vpop.f32.mrf.mxu0
      %v440 = vadd.f32 %v218, %v439
      %v441 = vpop.f32.mrf.mxu0
      %v442 = vadd.f32 %v218, %v441
      %443 = vmatmul.bf16.gmra.mxu0 %v362
      %v444 = vpop.f32.mrf.mxu0
      %v445 = vadd.f32 %v218, %v444
      %v446 = vpop.f32.mrf.mxu0
      %v447 = vadd.f32 %v218, %v446
      %448 = vmatmul.bf16.gmra.mxu0 %v365
      %v449 = vpop.f32.mrf.mxu0
      %v450 = vadd.f32 %v218, %v449
      %v451 = vpop.f32.mrf.mxu0
      %v452 = vadd.f32 %v218, %v451
      %453 = vmatmul.bf16.gmra.mxu0 %v368
      %v454 = vpop.f32.mrf.mxu0
      %v455 = vadd.f32 %v218, %v454
      %v456 = vpop.f32.mrf.mxu0
      %v457 = vadd.f32 %v218, %v456
      %458 = vmatmul.bf16.gmra.mxu0 %v371
      %v459 = vpop.f32.mrf.mxu0
      %v460 = vadd.f32 %v218, %v459
      %v461 = vpop.f32.mrf.mxu0
      %v462 = vadd.f32 %v218, %v461
      %463 = vmatmul.bf16.gmra.mxu0 %v374
      %v464 = vpop.f32.mrf.mxu0
      %v465 = vadd.f32 %v218, %v464
      %v466 = vpop.f32.mrf.mxu0
      %v467 = vadd.f32 %v218, %v466
      %468 = vdwg.mxu0
      %v469 = vlaneseq
      %v470 = vand.u32 %v469, 127
      %vm471 = vcmp.ge.s32.totalorder %v470, 16
      %vm472 = vcmp.lt.s32.totalorder %v470, 28
      %vm473 = vmand %vm471, %vm472
      %vm474 = vcmask 154752
      %v475 = vsel %vm474, %v390, -inf
      %476 = vmax.xlane.f32.xlu0 %v475
      %v477 = vpop.xlane.xlu0 %476
      %v478 = vsel %vm474, %v392, -inf
      %479 = vmax.xlane.f32.xlu0 %v478
      %v480 = vpop.xlane.xlu0 %479
      %v481 = vsel %vm474, %v395, -inf
      %482 = vmax.xlane.f32.xlu0 %v481
      %v483 = vpop.xlane.xlu0 %482
      %v484 = vsel %vm474, %v397, -inf
      %485 = vmax.xlane.f32.xlu0 %v484
      %v486 = vpop.xlane.xlu0 %485
      %v487 = vsel %vm474, %v400, -inf
      %488 = vmax.xlane.f32.xlu0 %v487
      %v489 = vpop.xlane.xlu0 %488
      %v490 = vsel %vm474, %v402, -inf
      %491 = vmax.xlane.f32.xlu0 %v490
      %v492 = vpop.xlane.xlu0 %491
      %v493 = vsel %vm474, %v405, -inf
      %494 = vmax.xlane.f32.xlu0 %v493
      %v495 = vpop.xlane.xlu0 %494
      %v496 = vsel %vm474, %v407, -inf
      %497 = vmax.xlane.f32.xlu0 %v496
      %v498 = vpop.xlane.xlu0 %497
      %v499 = vsel %vm474, %v410, -inf
      %500 = vmax.xlane.f32.xlu0 %v499
      %v501 = vpop.xlane.xlu0 %500
      %v502 = vsel %vm474, %v412, -inf
      %503 = vmax.xlane.f32.xlu0 %v502
      %v504 = vpop.xlane.xlu0 %503
      %v505 = vsel %vm474, %v415, -inf
      %506 = vmax.xlane.f32.xlu0 %v505
      %v507 = vpop.xlane.xlu0 %506
      %v508 = vsel %vm474, %v417, -inf
      %509 = vmax.xlane.f32.xlu0 %v508
      %v510 = vpop.xlane.xlu0 %509
      %v511 = vsel %vm474, %v420, -inf
      %512 = vmax.xlane.f32.xlu0 %v511
      %v513 = vpop.xlane.xlu0 %512
      %v514 = vsel %vm474, %v422, -inf
      %515 = vmax.xlane.f32.xlu0 %v514
      %v516 = vpop.xlane.xlu0 %515
      %v517 = vsel %vm474, %v425, -inf
      %518 = vmax.xlane.f32.xlu0 %v517
      %v519 = vpop.xlane.xlu0 %518
      %v520 = vsel %vm474, %v427, -inf
      %521 = vmax.xlane.f32.xlu0 %v520
      %v522 = vpop.xlane.xlu0 %521
      %v523 = vsel %vm474, %v430, -inf
      %524 = vmax.xlane.f32.xlu0 %v523
      %v525 = vpop.xlane.xlu0 %524
      %v526 = vsel %vm474, %v432, -inf
      %527 = vmax.xlane.f32.xlu0 %v526
      %v528 = vpop.xlane.xlu0 %527
      %v529 = vsel %vm474, %v435, -inf
      %530 = vmax.xlane.f32.xlu0 %v529
      %v531 = vpop.xlane.xlu0 %530
      %v532 = vsel %vm474, %v437, -inf
      %533 = vmax.xlane.f32.xlu0 %v532
      %v534 = vpop.xlane.xlu0 %533
      %v535 = vsel %vm474, %v440, -inf
      %536 = vmax.xlane.f32.xlu0 %v535
      %v537 = vpop.xlane.xlu0 %536
      %v538 = vsel %vm474, %v442, -inf
      %539 = vmax.xlane.f32.xlu0 %v538
      %v540 = vpop.xlane.xlu0 %539
      %v541 = vsel %vm474, %v445, -inf
      %542 = vmax.xlane.f32.xlu0 %v541
      %v543 = vpop.xlane.xlu0 %542
      %v544 = vsel %vm474, %v447, -inf
      %545 = vmax.xlane.f32.xlu0 %v544
      %v546 = vpop.xlane.xlu0 %545
      %v547 = vsel %vm474, %v450, -inf
      %548 = vmax.xlane.f32.xlu0 %v547
      %v549 = vpop.xlane.xlu0 %548
      %v550 = vsel %vm474, %v452, -inf
      %551 = vmax.xlane.f32.xlu0 %v550
      %v552 = vpop.xlane.xlu0 %551
      %v553 = vsel %vm474, %v455, -inf
      %554 = vmax.xlane.f32.xlu0 %v553
      %v555 = vpop.xlane.xlu0 %554
      %v556 = vsel %vm474, %v457, -inf
      %557 = vmax.xlane.f32.xlu0 %v556
      %v558 = vpop.xlane.xlu0 %557
      %v559 = vsel %vm474, %v460, -inf
      %560 = vmax.xlane.f32.xlu0 %v559
      %v561 = vpop.xlane.xlu0 %560
      %v562 = vsel %vm474, %v462, -inf
      %563 = vmax.xlane.f32.xlu0 %v562
      %v564 = vpop.xlane.xlu0 %563
      %v565 = vsel %vm474, %v465, -inf
      %566 = vmax.xlane.f32.xlu0 %v565
      %v567 = vpop.xlane.xlu0 %566
      %v568 = vsel %vm474, %v467, -inf
      %569 = vmax.xlane.f32.xlu0 %v568
      %v570 = vpop.xlane.xlu0 %569
      %v571 = vsub.f32 %v390, %v477
      %v572 = vsub.f32 %v392, %v480
      %v573 = vsub.f32 %v395, %v483
      %v574 = vsub.f32 %v397, %v486
      %v575 = vsub.f32 %v400, %v489
      %v576 = vsub.f32 %v402, %v492
      %v577 = vsub.f32 %v405, %v495
      %v578 = vsub.f32 %v407, %v498
      %v579 = vsub.f32 %v410, %v501
      %v580 = vsub.f32 %v412, %v504
      %v581 = vsub.f32 %v415, %v507
      %v582 = vsub.f32 %v417, %v510
      %v583 = vsub.f32 %v420, %v513
      %v584 = vsub.f32 %v422, %v516
      %v585 = vsub.f32 %v425, %v519
      %v586 = vsub.f32 %v427, %v522
      %v587 = vsub.f32 %v430, %v525
      %v588 = vsub.f32 %v432, %v528
      %v589 = vsub.f32 %v435, %v531
      %v590 = vsub.f32 %v437, %v534
      %v591 = vsub.f32 %v440, %v537
      %v592 = vsub.f32 %v442, %v540
      %v593 = vsub.f32 %v445, %v543
      %v594 = vsub.f32 %v447, %v546
      %v595 = vsub.f32 %v450, %v549
      %v596 = vsub.f32 %v452, %v552
      %v597 = vsub.f32 %v455, %v555
      %v598 = vsub.f32 %v457, %v558
      %v599 = vsub.f32 %v460, %v561
      %v600 = vsub.f32 %v462, %v564
      %v601 = vsub.f32 %v465, %v567
      %v602 = vsub.f32 %v467, %v570
      %v603 = vmul.f32 %v571, 1.442695
      %v604 = vpow.pop %v603
      %v605 = vmul.f32 %v572, 1.442695
      %v606 = vpow.pop %v605
      %v607 = vmul.f32 %v573, 1.442695
      %v608 = vpow.pop %v607
      %v609 = vmul.f32 %v574, 1.442695
      %v610 = vpow.pop %v609
      %v611 = vmul.f32 %v575, 1.442695
      %v612 = vpow.pop %v611
      %v613 = vmul.f32 %v576, 1.442695
      %v614 = vpow.pop %v613
      %v615 = vmul.f32 %v577, 1.442695
      %v616 = vpow.pop %v615
      %v617 = vmul.f32 %v578, 1.442695
      %v618 = vpow.pop %v617
      %v619 = vmul.f32 %v579, 1.442695
      %v620 = vpow.pop %v619
      %v621 = vmul.f32 %v580, 1.442695
      %v622 = vpow.pop %v621
      %v623 = vmul.f32 %v581, 1.442695
      %v624 = vpow.pop %v623
      %v625 = vmul.f32 %v582, 1.442695
      %v626 = vpow.pop %v625
      %v627 = vmul.f32 %v583, 1.442695
      %v628 = vpow.pop %v627
      %v629 = vmul.f32 %v584, 1.442695
      %v630 = vpow.pop %v629
      %v631 = vmul.f32 %v585, 1.442695
      %v632 = vpow.pop %v631
      %v633 = vmul.f32 %v586, 1.442695
      %v634 = vpow.pop %v633
      %v635 = vmul.f32 %v587, 1.442695
      %v636 = vpow.pop %v635
      %v637 = vmul.f32 %v588, 1.442695
      %v638 = vpow.pop %v637
      %v639 = vmul.f32 %v589, 1.442695
      %v640 = vpow.pop %v639
      %v641 = vmul.f32 %v590, 1.442695
      %v642 = vpow.pop %v641
      %v643 = vmul.f32 %v591, 1.442695
      %v644 = vpow.pop %v643
      %v645 = vmul.f32 %v592, 1.442695
      %v646 = vpow.pop %v645
      %v647 = vmul.f32 %v593, 1.442695
      %v648 = vpow.pop %v647
      %v649 = vmul.f32 %v594, 1.442695
      %v650 = vpow.pop %v649
      %v651 = vmul.f32 %v595, 1.442695
      %v652 = vpow.pop %v651
      %v653 = vmul.f32 %v596, 1.442695
      %v654 = vpow.pop %v653
      %v655 = vmul.f32 %v597, 1.442695
      %v656 = vpow.pop %v655
      %v657 = vmul.f32 %v598, 1.442695
      %v658 = vpow.pop %v657
      %v659 = vmul.f32 %v599, 1.442695
      %v660 = vpow.pop %v659
      %v661 = vmul.f32 %v600, 1.442695
      %v662 = vpow.pop %v661
      %v663 = vmul.f32 %v601, 1.442695
      %v664 = vpow.pop %v663
      %v665 = vmul.f32 %v602, 1.442695
      %v666 = vpow.pop %v665
      %699 = vrot.lane.b32.xlu0 %v604, 112
      %v700 = vpop.permute.xlu0 %699
      %701 = vrot.lane.b32.xlu0 %v606, 112
      %v702 = vpop.permute.xlu0 %701
      %703 = vrot.lane.b32.xlu0 %v608, 112
      %v704 = vpop.permute.xlu0 %703
      %705 = vrot.lane.b32.xlu0 %v610, 112
      %v706 = vpop.permute.xlu0 %705
      %707 = vrot.lane.b32.xlu0 %v612, 112
      %v708 = vpop.permute.xlu0 %707
      %709 = vrot.lane.b32.xlu0 %v614, 112
      %v710 = vpop.permute.xlu0 %709
      %711 = vrot.lane.b32.xlu0 %v616, 112
      %v712 = vpop.permute.xlu0 %711
      %713 = vrot.lane.b32.xlu0 %v618, 112
      %v714 = vpop.permute.xlu0 %713
      %715 = vrot.lane.b32.xlu0 %v620, 112
      %v716 = vpop.permute.xlu0 %715
      %717 = vrot.lane.b32.xlu0 %v622, 112
      %v718 = vpop.permute.xlu0 %717
      %719 = vrot.lane.b32.xlu0 %v624, 112
      %v720 = vpop.permute.xlu0 %719
      %721 = vrot.lane.b32.xlu0 %v626, 112
      %v722 = vpop.permute.xlu0 %721
      %723 = vrot.lane.b32.xlu0 %v628, 112
      %v724 = vpop.permute.xlu0 %723
      %725 = vrot.lane.b32.xlu0 %v630, 112
      %v726 = vpop.permute.xlu0 %725
      %727 = vrot.lane.b32.xlu0 %v632, 112
      %v728 = vpop.permute.xlu0 %727
      %729 = vrot.lane.b32.xlu0 %v634, 112
      %v730 = vpop.permute.xlu0 %729
      %731 = vrot.lane.b32.xlu0 %v636, 112
      %v732 = vpop.permute.xlu0 %731
      %733 = vrot.lane.b32.xlu0 %v638, 112
      %v734 = vpop.permute.xlu0 %733
      %735 = vrot.lane.b32.xlu0 %v640, 112
      %v736 = vpop.permute.xlu0 %735
      %737 = vrot.lane.b32.xlu0 %v642, 112
      %v738 = vpop.permute.xlu0 %737
      %739 = vrot.lane.b32.xlu0 %v644, 112
      %v740 = vpop.permute.xlu0 %739
      %741 = vrot.lane.b32.xlu0 %v646, 112
      %v742 = vpop.permute.xlu0 %741
      %743 = vrot.lane.b32.xlu0 %v648, 112
      %v744 = vpop.permute.xlu0 %743
      %745 = vrot.lane.b32.xlu0 %v650, 112
      %v746 = vpop.permute.xlu0 %745
      %747 = vrot.lane.b32.xlu0 %v652, 112
      %v748 = vpop.permute.xlu0 %747
      %749 = vrot.lane.b32.xlu0 %v654, 112
      %v750 = vpop.permute.xlu0 %749
      %751 = vrot.lane.b32.xlu0 %v656, 112
      %v752 = vpop.permute.xlu0 %751
      %753 = vrot.lane.b32.xlu0 %v658, 112
      %v754 = vpop.permute.xlu0 %753
      %755 = vrot.lane.b32.xlu0 %v660, 112
      %v756 = vpop.permute.xlu0 %755
      %757 = vrot.lane.b32.xlu0 %v662, 112
      %v758 = vpop.permute.xlu0 %757
      %759 = vrot.lane.b32.xlu0 %v664, 112
      %v760 = vpop.permute.xlu0 %759
      %761 = vrot.lane.b32.xlu0 %v666, 112
      %v762 = vpop.permute.xlu0 %761
      %vm795 = vcmask 23552
      %v796 = vsel %vm795, %v700, 0.0
      %797 = vadd.xlane.f32.xlu0 %v796
      %v798 = vpop.xlane.xlu0 %797
      %v799 = vsel %vm795, %v702, 0.0
      %800 = vadd.xlane.f32.xlu0 %v799
      %v801 = vpop.xlane.xlu0 %800
      %v802 = vsel %vm795, %v704, 0.0
      %803 = vadd.xlane.f32.xlu0 %v802
      %v804 = vpop.xlane.xlu0 %803
      %v805 = vsel %vm795, %v706, 0.0
      %806 = vadd.xlane.f32.xlu0 %v805
      %v807 = vpop.xlane.xlu0 %806
      %v808 = vsel %vm795, %v708, 0.0
      %809 = vadd.xlane.f32.xlu0 %v808
      %v810 = vpop.xlane.xlu0 %809
      %v811 = vsel %vm795, %v710, 0.0
      %812 = vadd.xlane.f32.xlu0 %v811
      %v813 = vpop.xlane.xlu0 %812
      %v814 = vsel %vm795, %v712, 0.0
      %815 = vadd.xlane.f32.xlu0 %v814
      %v816 = vpop.xlane.xlu0 %815
      %v817 = vsel %vm795, %v714, 0.0
      %818 = vadd.xlane.f32.xlu0 %v817
      %v819 = vpop.xlane.xlu0 %818
      %v820 = vsel %vm795, %v716, 0.0
      %821 = vadd.xlane.f32.xlu0 %v820
      %v822 = vpop.xlane.xlu0 %821
      %v823 = vsel %vm795, %v718, 0.0
      %824 = vadd.xlane.f32.xlu0 %v823
      %v825 = vpop.xlane.xlu0 %824
      %v826 = vsel %vm795, %v720, 0.0
      %827 = vadd.xlane.f32.xlu0 %v826
      %v828 = vpop.xlane.xlu0 %827
      %v829 = vsel %vm795, %v722, 0.0
      %830 = vadd.xlane.f32.xlu0 %v829
      %v831 = vpop.xlane.xlu0 %830
      %v832 = vsel %vm795, %v724, 0.0
      %833 = vadd.xlane.f32.xlu0 %v832
      %v834 = vpop.xlane.xlu0 %833
      %v835 = vsel %vm795, %v726, 0.0
      %836 = vadd.xlane.f32.xlu0 %v835
      %v837 = vpop.xlane.xlu0 %836
      %v838 = vsel %vm795, %v728, 0.0
      %839 = vadd.xlane.f32.xlu0 %v838
      %v840 = vpop.xlane.xlu0 %839
      %v841 = vsel %vm795, %v730, 0.0
      %842 = vadd.xlane.f32.xlu0 %v841
      %v843 = vpop.xlane.xlu0 %842
      %v844 = vsel %vm795, %v732, 0.0
      %845 = vadd.xlane.f32.xlu0 %v844
      %v846 = vpop.xlane.xlu0 %845
      %v847 = vsel %vm795, %v734, 0.0
      %848 = vadd.xlane.f32.xlu0 %v847
      %v849 = vpop.xlane.xlu0 %848
      %v850 = vsel %vm795, %v736, 0.0
      %851 = vadd.xlane.f32.xlu0 %v850
      %v852 = vpop.xlane.xlu0 %851
      %v853 = vsel %vm795, %v738, 0.0
      %854 = vadd.xlane.f32.xlu0 %v853
      %v855 = vpop.xlane.xlu0 %854
      %v856 = vsel %vm795, %v740, 0.0
      %857 = vadd.xlane.f32.xlu0 %v856
      %v858 = vpop.xlane.xlu0 %857
      %v859 = vsel %vm795, %v742, 0.0
      %860 = vadd.xlane.f32.xlu0 %v859
      %v861 = vpop.xlane.xlu0 %860
      %v862 = vsel %vm795, %v744, 0.0
      %863 = vadd.xlane.f32.xlu0 %v862
      %v864 = vpop.xlane.xlu0 %863
      %v865 = vsel %vm795, %v746, 0.0
      %866 = vadd.xlane.f32.xlu0 %v865
      %v867 = vpop.xlane.xlu0 %866
      %v868 = vsel %vm795, %v748, 0.0
      %869 = vadd.xlane.f32.xlu0 %v868
      %v870 = vpop.xlane.xlu0 %869
      %v871 = vsel %vm795, %v750, 0.0
      %872 = vadd.xlane.f32.xlu0 %v871
      %v873 = vpop.xlane.xlu0 %872
      %v874 = vsel %vm795, %v752, 0.0
      %875 = vadd.xlane.f32.xlu0 %v874
      %v876 = vpop.xlane.xlu0 %875
      %v877 = vsel %vm795, %v754, 0.0
      %878 = vadd.xlane.f32.xlu0 %v877
      %v879 = vpop.xlane.xlu0 %878
      %v880 = vsel %vm795, %v756, 0.0
      %881 = vadd.xlane.f32.xlu0 %v880
      %v882 = vpop.xlane.xlu0 %881
      %v883 = vsel %vm795, %v758, 0.0
      %884 = vadd.xlane.f32.xlu0 %v883
      %v885 = vpop.xlane.xlu0 %884
      %v886 = vsel %vm795, %v760, 0.0
      %887 = vadd.xlane.f32.xlu0 %v886
      %v888 = vpop.xlane.xlu0 %887
      %v889 = vsel %vm795, %v762, 0.0
      %890 = vadd.xlane.f32.xlu0 %v889
      %v891 = vpop.xlane.xlu0 %890
      %vm892 = vcmp.lt.s32.totalorder %v470, 19
      %vm893 = vmand %vm471, %vm892
      %v894 = vsel %vm893, 1, 0
      %vm895 = vcmp.eq.s32.totalorder %v894, 1
      %v896 = vsel %vm895, %v477, 0.0
      %v897 = vsel %vm895, %v480, 0.0
      %v898 = vsel %vm895, %v483, 0.0
      %v899 = vsel %vm895, %v486, 0.0
      %v900 = vsel %vm895, %v489, 0.0
      %v901 = vsel %vm895, %v492, 0.0
      %v902 = vsel %vm895, %v495, 0.0
      %v903 = vsel %vm895, %v498, 0.0
      %v904 = vsel %vm895, %v501, 0.0
      %v905 = vsel %vm895, %v504, 0.0
      %v906 = vsel %vm895, %v507, 0.0
      %v907 = vsel %vm895, %v510, 0.0
      %v908 = vsel %vm895, %v513, 0.0
      %v909 = vsel %vm895, %v516, 0.0
      %v910 = vsel %vm895, %v519, 0.0
      %v911 = vsel %vm895, %v522, 0.0
      %v912 = vsel %vm895, %v525, 0.0
      %v913 = vsel %vm895, %v528, 0.0
      %v914 = vsel %vm895, %v531, 0.0
      %v915 = vsel %vm895, %v534, 0.0
      %v916 = vsel %vm895, %v537, 0.0
      %v917 = vsel %vm895, %v540, 0.0
      %v918 = vsel %vm895, %v543, 0.0
      %v919 = vsel %vm895, %v546, 0.0
      %v920 = vsel %vm895, %v549, 0.0
      %v921 = vsel %vm895, %v552, 0.0
      %v922 = vsel %vm895, %v555, 0.0
      %v923 = vsel %vm895, %v558, 0.0
      %v924 = vsel %vm895, %v561, 0.0
      %v925 = vsel %vm895, %v564, 0.0
      %v926 = vsel %vm895, %v567, 0.0
      %v927 = vsel %vm895, %v570, 0.0
      %v928 = vsel %vm895, %v798, 1.0
      %v929 = vsel %vm895, %v801, 1.0
      %v930 = vsel %vm895, %v804, 1.0
      %v931 = vsel %vm895, %v807, 1.0
      %v932 = vsel %vm895, %v810, 1.0
      %v933 = vsel %vm895, %v813, 1.0
      %v934 = vsel %vm895, %v816, 1.0
      %v935 = vsel %vm895, %v819, 1.0
      %v936 = vsel %vm895, %v822, 1.0
      %v937 = vsel %vm895, %v825, 1.0
      %v938 = vsel %vm895, %v828, 1.0
      %v939 = vsel %vm895, %v831, 1.0
      %v940 = vsel %vm895, %v834, 1.0
      %v941 = vsel %vm895, %v837, 1.0
      %v942 = vsel %vm895, %v840, 1.0
      %v943 = vsel %vm895, %v843, 1.0
      %v944 = vsel %vm895, %v846, 1.0
      %v945 = vsel %vm895, %v849, 1.0
      %v946 = vsel %vm895, %v852, 1.0
      %v947 = vsel %vm895, %v855, 1.0
      %v948 = vsel %vm895, %v858, 1.0
      %v949 = vsel %vm895, %v861, 1.0
      %v950 = vsel %vm895, %v864, 1.0
      %v951 = vsel %vm895, %v867, 1.0
      %v952 = vsel %vm895, %v870, 1.0
      %v953 = vsel %vm895, %v873, 1.0
      %v954 = vsel %vm895, %v876, 1.0
      %v955 = vsel %vm895, %v879, 1.0
      %v956 = vsel %vm895, %v882, 1.0
      %v957 = vsel %vm895, %v885, 1.0
      %v958 = vsel %vm895, %v888, 1.0
      %v959 = vsel %vm895, %v891, 1.0
      %vm960 = vcmask 179352
      %v961 = vsel %vm960, %v390, -inf
      %962 = vmax.xlane.f32.xlu0 %v961
      %v963 = vpop.xlane.xlu0 %962
      %v964 = vsel %vm960, %v392, -inf
      %965 = vmax.xlane.f32.xlu0 %v964
      %v966 = vpop.xlane.xlu0 %965
      %v967 = vsel %vm960, %v395, -inf
      %968 = vmax.xlane.f32.xlu0 %v967
      %v969 = vpop.xlane.xlu0 %968
      %v970 = vsel %vm960, %v397, -inf
      %971 = vmax.xlane.f32.xlu0 %v970
      %v972 = vpop.xlane.xlu0 %971
      %v973 = vsel %vm960, %v400, -inf
      %974 = vmax.xlane.f32.xlu0 %v973
      %v975 = vpop.xlane.xlu0 %974
      %v976 = vsel %vm960, %v402, -inf
      %977 = vmax.xlane.f32.xlu0 %v976
      %v978 = vpop.xlane.xlu0 %977
      %v979 = vsel %vm960, %v405, -inf
      %980 = vmax.xlane.f32.xlu0 %v979
      %v981 = vpop.xlane.xlu0 %980
      %v982 = vsel %vm960, %v407, -inf
      %983 = vmax.xlane.f32.xlu0 %v982
      %v984 = vpop.xlane.xlu0 %983
      %v985 = vsel %vm960, %v410, -inf
      %986 = vmax.xlane.f32.xlu0 %v985
      %v987 = vpop.xlane.xlu0 %986
      %v988 = vsel %vm960, %v412, -inf
      %989 = vmax.xlane.f32.xlu0 %v988
      %v990 = vpop.xlane.xlu0 %989
      %v991 = vsel %vm960, %v415, -inf
      %992 = vmax.xlane.f32.xlu0 %v991
      %v993 = vpop.xlane.xlu0 %992
      %v994 = vsel %vm960, %v417, -inf
      %995 = vmax.xlane.f32.xlu0 %v994
      %v996 = vpop.xlane.xlu0 %995
      %v997 = vsel %vm960, %v420, -inf
      %998 = vmax.xlane.f32.xlu0 %v997
      %v999 = vpop.xlane.xlu0 %998
      %v1000 = vsel %vm960, %v422, -inf
      %1001 = vmax.xlane.f32.xlu0 %v1000
      %v1002 = vpop.xlane.xlu0 %1001
      %v1003 = vsel %vm960, %v425, -inf
      %1004 = vmax.xlane.f32.xlu0 %v1003
      %v1005 = vpop.xlane.xlu0 %1004
      %v1006 = vsel %vm960, %v427, -inf
      %1007 = vmax.xlane.f32.xlu0 %v1006
      %v1008 = vpop.xlane.xlu0 %1007
      %v1009 = vsel %vm960, %v430, -inf
      %1010 = vmax.xlane.f32.xlu0 %v1009
      %v1011 = vpop.xlane.xlu0 %1010
      %v1012 = vsel %vm960, %v432, -inf
      %1013 = vmax.xlane.f32.xlu0 %v1012
      %v1014 = vpop.xlane.xlu0 %1013
      %v1015 = vsel %vm960, %v435, -inf
      %1016 = vmax.xlane.f32.xlu0 %v1015
      %v1017 = vpop.xlane.xlu0 %1016
      %v1018 = vsel %vm960, %v437, -inf
      %1019 = vmax.xlane.f32.xlu0 %v1018
      %v1020 = vpop.xlane.xlu0 %1019
      %v1021 = vsel %vm960, %v440, -inf
      %1022 = vmax.xlane.f32.xlu0 %v1021
      %v1023 = vpop.xlane.xlu0 %1022
      %v1024 = vsel %vm960, %v442, -inf
      %1025 = vmax.xlane.f32.xlu0 %v1024
      %v1026 = vpop.xlane.xlu0 %1025
      %v1027 = vsel %vm960, %v445, -inf
      %1028 = vmax.xlane.f32.xlu0 %v1027
      %v1029 = vpop.xlane.xlu0 %1028
      %v1030 = vsel %vm960, %v447, -inf
      %1031 = vmax.xlane.f32.xlu0 %v1030
      %v1032 = vpop.xlane.xlu0 %1031
      %v1033 = vsel %vm960, %v450, -inf
      %1034 = vmax.xlane.f32.xlu0 %v1033
      %v1035 = vpop.xlane.xlu0 %1034
      %v1036 = vsel %vm960, %v452, -inf
      %1037 = vmax.xlane.f32.xlu0 %v1036
      %v1038 = vpop.xlane.xlu0 %1037
      %v1039 = vsel %vm960, %v455, -inf
      %1040 = vmax.xlane.f32.xlu0 %v1039
      %v1041 = vpop.xlane.xlu0 %1040
      %v1042 = vsel %vm960, %v457, -inf
      %1043 = vmax.xlane.f32.xlu0 %v1042
      %v1044 = vpop.xlane.xlu0 %1043
      %v1045 = vsel %vm960, %v460, -inf
      %1046 = vmax.xlane.f32.xlu0 %v1045
      %v1047 = vpop.xlane.xlu0 %1046
      %v1048 = vsel %vm960, %v462, -inf
      %1049 = vmax.xlane.f32.xlu0 %v1048
      %v1050 = vpop.xlane.xlu0 %1049
      %v1051 = vsel %vm960, %v465, -inf
      %1052 = vmax.xlane.f32.xlu0 %v1051
      %v1053 = vpop.xlane.xlu0 %1052
      %v1054 = vsel %vm960, %v467, -inf
      %1055 = vmax.xlane.f32.xlu0 %v1054
      %v1056 = vpop.xlane.xlu0 %1055
      %v1057 = vsub.f32 %v390, %v963
      %v1058 = vsub.f32 %v392, %v966
      %v1059 = vsub.f32 %v395, %v969
      %v1060 = vsub.f32 %v397, %v972
      %v1061 = vsub.f32 %v400, %v975
      %v1062 = vsub.f32 %v402, %v978
      %v1063 = vsub.f32 %v405, %v981
      %v1064 = vsub.f32 %v407, %v984
      %v1065 = vsub.f32 %v410, %v987
      %v1066 = vsub.f32 %v412, %v990
      %v1067 = vsub.f32 %v415, %v993
      %v1068 = vsub.f32 %v417, %v996
      %v1069 = vsub.f32 %v420, %v999
      %v1070 = vsub.f32 %v422, %v1002
      %v1071 = vsub.f32 %v425, %v1005
      %v1072 = vsub.f32 %v427, %v1008
      %v1073 = vsub.f32 %v430, %v1011
      %v1074 = vsub.f32 %v432, %v1014
      %v1075 = vsub.f32 %v435, %v1017
      %v1076 = vsub.f32 %v437, %v1020
      %v1077 = vsub.f32 %v440, %v1023
      %v1078 = vsub.f32 %v442, %v1026
      %v1079 = vsub.f32 %v445, %v1029
      %v1080 = vsub.f32 %v447, %v1032
      %v1081 = vsub.f32 %v450, %v1035
      %v1082 = vsub.f32 %v452, %v1038
      %v1083 = vsub.f32 %v455, %v1041
      %v1084 = vsub.f32 %v457, %v1044
      %v1085 = vsub.f32 %v460, %v1047
      %v1086 = vsub.f32 %v462, %v1050
      %v1087 = vsub.f32 %v465, %v1053
      %v1088 = vsub.f32 %v467, %v1056
      %v1089 = vmul.f32 %v1057, 1.442695
      %v1090 = vpow.pop %v1089
      %v1091 = vmul.f32 %v1058, 1.442695
      %v1092 = vpow.pop %v1091
      %v1093 = vmul.f32 %v1059, 1.442695
      %v1094 = vpow.pop %v1093
      %v1095 = vmul.f32 %v1060, 1.442695
      %v1096 = vpow.pop %v1095
      %v1097 = vmul.f32 %v1061, 1.442695
      %v1098 = vpow.pop %v1097
      %v1099 = vmul.f32 %v1062, 1.442695
      %v1100 = vpow.pop %v1099
      %v1101 = vmul.f32 %v1063, 1.442695
      %v1102 = vpow.pop %v1101
      %v1103 = vmul.f32 %v1064, 1.442695
      %v1104 = vpow.pop %v1103
      %v1105 = vmul.f32 %v1065, 1.442695
      %v1106 = vpow.pop %v1105
      %v1107 = vmul.f32 %v1066, 1.442695
      %v1108 = vpow.pop %v1107
      %v1109 = vmul.f32 %v1067, 1.442695
      %v1110 = vpow.pop %v1109
      %v1111 = vmul.f32 %v1068, 1.442695
      %v1112 = vpow.pop %v1111
      %v1113 = vmul.f32 %v1069, 1.442695
      %v1114 = vpow.pop %v1113
      %v1115 = vmul.f32 %v1070, 1.442695
      %v1116 = vpow.pop %v1115
      %v1117 = vmul.f32 %v1071, 1.442695
      %v1118 = vpow.pop %v1117
      %v1119 = vmul.f32 %v1072, 1.442695
      %v1120 = vpow.pop %v1119
      %v1121 = vmul.f32 %v1073, 1.442695
      %v1122 = vpow.pop %v1121
      %v1123 = vmul.f32 %v1074, 1.442695
      %v1124 = vpow.pop %v1123
      %v1125 = vmul.f32 %v1075, 1.442695
      %v1126 = vpow.pop %v1125
      %v1127 = vmul.f32 %v1076, 1.442695
      %v1128 = vpow.pop %v1127
      %v1129 = vmul.f32 %v1077, 1.442695
      %v1130 = vpow.pop %v1129
      %v1131 = vmul.f32 %v1078, 1.442695
      %v1132 = vpow.pop %v1131
      %v1133 = vmul.f32 %v1079, 1.442695
      %v1134 = vpow.pop %v1133
      %v1135 = vmul.f32 %v1080, 1.442695
      %v1136 = vpow.pop %v1135
      %v1137 = vmul.f32 %v1081, 1.442695
      %v1138 = vpow.pop %v1137
      %v1139 = vmul.f32 %v1082, 1.442695
      %v1140 = vpow.pop %v1139
      %v1141 = vmul.f32 %v1083, 1.442695
      %v1142 = vpow.pop %v1141
      %v1143 = vmul.f32 %v1084, 1.442695
      %v1144 = vpow.pop %v1143
      %v1145 = vmul.f32 %v1085, 1.442695
      %v1146 = vpow.pop %v1145
      %v1147 = vmul.f32 %v1086, 1.442695
      %v1148 = vpow.pop %v1147
      %v1149 = vmul.f32 %v1087, 1.442695
      %v1150 = vpow.pop %v1149
      %v1151 = vmul.f32 %v1088, 1.442695
      %v1152 = vpow.pop %v1151
      %1185 = vrot.lane.b32.xlu0 %v1090, 109
      %v1186 = vpop.permute.xlu0 %1185
      %1187 = vrot.lane.b32.xlu0 %v1092, 109
      %v1188 = vpop.permute.xlu0 %1187
      %1189 = vrot.lane.b32.xlu0 %v1094, 109
      %v1190 = vpop.permute.xlu0 %1189
      %1191 = vrot.lane.b32.xlu0 %v1096, 109
      %v1192 = vpop.permute.xlu0 %1191
      %1193 = vrot.lane.b32.xlu0 %v1098, 109
      %v1194 = vpop.permute.xlu0 %1193
      %1195 = vrot.lane.b32.xlu0 %v1100, 109
      %v1196 = vpop.permute.xlu0 %1195
      %1197 = vrot.lane.b32.xlu0 %v1102, 109
      %v1198 = vpop.permute.xlu0 %1197
      %1199 = vrot.lane.b32.xlu0 %v1104, 109
      %v1200 = vpop.permute.xlu0 %1199
      %1201 = vrot.lane.b32.xlu0 %v1106, 109
      %v1202 = vpop.permute.xlu0 %1201
      %1203 = vrot.lane.b32.xlu0 %v1108, 109
      %v1204 = vpop.permute.xlu0 %1203
      %1205 = vrot.lane.b32.xlu0 %v1110, 109
      %v1206 = vpop.permute.xlu0 %1205
      %1207 = vrot.lane.b32.xlu0 %v1112, 109
      %v1208 = vpop.permute.xlu0 %1207
      %1209 = vrot.lane.b32.xlu0 %v1114, 109
      %v1210 = vpop.permute.xlu0 %1209
      %1211 = vrot.lane.b32.xlu0 %v1116, 109
      %v1212 = vpop.permute.xlu0 %1211
      %1213 = vrot.lane.b32.xlu0 %v1118, 109
      %v1214 = vpop.permute.xlu0 %1213
      %1215 = vrot.lane.b32.xlu0 %v1120, 109
      %v1216 = vpop.permute.xlu0 %1215
      %1217 = vrot.lane.b32.xlu0 %v1122, 109
      %v1218 = vpop.permute.xlu0 %1217
      %1219 = vrot.lane.b32.xlu0 %v1124, 109
      %v1220 = vpop.permute.xlu0 %1219
      %1221 = vrot.lane.b32.xlu0 %v1126, 109
      %v1222 = vpop.permute.xlu0 %1221
      %1223 = vrot.lane.b32.xlu0 %v1128, 109
      %v1224 = vpop.permute.xlu0 %1223
      %1225 = vrot.lane.b32.xlu0 %v1130, 109
      %v1226 = vpop.permute.xlu0 %1225
      %1227 = vrot.lane.b32.xlu0 %v1132, 109
      %v1228 = vpop.permute.xlu0 %1227
      %1229 = vrot.lane.b32.xlu0 %v1134, 109
      %v1230 = vpop.permute.xlu0 %1229
      %1231 = vrot.lane.b32.xlu0 %v1136, 109
      %v1232 = vpop.permute.xlu0 %1231
      %1233 = vrot.lane.b32.xlu0 %v1138, 109
      %v1234 = vpop.permute.xlu0 %1233
      %1235 = vrot.lane.b32.xlu0 %v1140, 109
      %v1236 = vpop.permute.xlu0 %1235
      %1237 = vrot.lane.b32.xlu0 %v1142, 109
      %v1238 = vpop.permute.xlu0 %1237
      %1239 = vrot.lane.b32.xlu0 %v1144, 109
      %v1240 = vpop.permute.xlu0 %1239
      %1241 = vrot.lane.b32.xlu0 %v1146, 109
      %v1242 = vpop.permute.xlu0 %1241
      %1243 = vrot.lane.b32.xlu0 %v1148, 109
      %v1244 = vpop.permute.xlu0 %1243
      %1245 = vrot.lane.b32.xlu0 %v1150, 109
      %v1246 = vpop.permute.xlu0 %1245
      %1247 = vrot.lane.b32.xlu0 %v1152, 109
      %v1248 = vpop.permute.xlu0 %1247
      %v1281 = vsel %vm795, %v1186, 0.0
      %1282 = vadd.xlane.f32.xlu0 %v1281
      %v1283 = vpop.xlane.xlu0 %1282
      %v1284 = vsel %vm795, %v1188, 0.0
      %1285 = vadd.xlane.f32.xlu0 %v1284
      %v1286 = vpop.xlane.xlu0 %1285
      %v1287 = vsel %vm795, %v1190, 0.0
      %1288 = vadd.xlane.f32.xlu0 %v1287
      %v1289 = vpop.xlane.xlu0 %1288
      %v1290 = vsel %vm795, %v1192, 0.0
      %1291 = vadd.xlane.f32.xlu0 %v1290
      %v1292 = vpop.xlane.xlu0 %1291
      %v1293 = vsel %vm795, %v1194, 0.0
      %1294 = vadd.xlane.f32.xlu0 %v1293
      %v1295 = vpop.xlane.xlu0 %1294
      %v1296 = vsel %vm795, %v1196, 0.0
      %1297 = vadd.xlane.f32.xlu0 %v1296
      %v1298 = vpop.xlane.xlu0 %1297
      %v1299 = vsel %vm795, %v1198, 0.0
      %1300 = vadd.xlane.f32.xlu0 %v1299
      %v1301 = vpop.xlane.xlu0 %1300
      %v1302 = vsel %vm795, %v1200, 0.0
      %1303 = vadd.xlane.f32.xlu0 %v1302
      %v1304 = vpop.xlane.xlu0 %1303
      %v1305 = vsel %vm795, %v1202, 0.0
      %1306 = vadd.xlane.f32.xlu0 %v1305
      %v1307 = vpop.xlane.xlu0 %1306
      %v1308 = vsel %vm795, %v1204, 0.0
      %1309 = vadd.xlane.f32.xlu0 %v1308
      %v1310 = vpop.xlane.xlu0 %1309
      %v1311 = vsel %vm795, %v1206, 0.0
      %1312 = vadd.xlane.f32.xlu0 %v1311
      %v1313 = vpop.xlane.xlu0 %1312
      %v1314 = vsel %vm795, %v1208, 0.0
      %1315 = vadd.xlane.f32.xlu0 %v1314
      %v1316 = vpop.xlane.xlu0 %1315
      %v1317 = vsel %vm795, %v1210, 0.0
      %1318 = vadd.xlane.f32.xlu0 %v1317
      %v1319 = vpop.xlane.xlu0 %1318
      %v1320 = vsel %vm795, %v1212, 0.0
      %1321 = vadd.xlane.f32.xlu0 %v1320
      %v1322 = vpop.xlane.xlu0 %1321
      %v1323 = vsel %vm795, %v1214, 0.0
      %1324 = vadd.xlane.f32.xlu0 %v1323
      %v1325 = vpop.xlane.xlu0 %1324
      %v1326 = vsel %vm795, %v1216, 0.0
      %1327 = vadd.xlane.f32.xlu0 %v1326
      %v1328 = vpop.xlane.xlu0 %1327
      %v1329 = vsel %vm795, %v1218, 0.0
      %1330 = vadd.xlane.f32.xlu0 %v1329
      %v1331 = vpop.xlane.xlu0 %1330
      %v1332 = vsel %vm795, %v1220, 0.0
      %1333 = vadd.xlane.f32.xlu0 %v1332
      %v1334 = vpop.xlane.xlu0 %1333
      %v1335 = vsel %vm795, %v1222, 0.0
      %1336 = vadd.xlane.f32.xlu0 %v1335
      %v1337 = vpop.xlane.xlu0 %1336
      %v1338 = vsel %vm795, %v1224, 0.0
      %1339 = vadd.xlane.f32.xlu0 %v1338
      %v1340 = vpop.xlane.xlu0 %1339
      %v1341 = vsel %vm795, %v1226, 0.0
      %1342 = vadd.xlane.f32.xlu0 %v1341
      %v1343 = vpop.xlane.xlu0 %1342
      %v1344 = vsel %vm795, %v1228, 0.0
      %1345 = vadd.xlane.f32.xlu0 %v1344
      %v1346 = vpop.xlane.xlu0 %1345
      %v1347 = vsel %vm795, %v1230, 0.0
      %1348 = vadd.xlane.f32.xlu0 %v1347
      %v1349 = vpop.xlane.xlu0 %1348
      %v1350 = vsel %vm795, %v1232, 0.0
      %1351 = vadd.xlane.f32.xlu0 %v1350
      %v1352 = vpop.xlane.xlu0 %1351
      %v1353 = vsel %vm795, %v1234, 0.0
      %1354 = vadd.xlane.f32.xlu0 %v1353
      %v1355 = vpop.xlane.xlu0 %1354
      %v1356 = vsel %vm795, %v1236, 0.0
      %1357 = vadd.xlane.f32.xlu0 %v1356
      %v1358 = vpop.xlane.xlu0 %1357
      %v1359 = vsel %vm795, %v1238, 0.0
      %1360 = vadd.xlane.f32.xlu0 %v1359
      %v1361 = vpop.xlane.xlu0 %1360
      %v1362 = vsel %vm795, %v1240, 0.0
      %1363 = vadd.xlane.f32.xlu0 %v1362
      %v1364 = vpop.xlane.xlu0 %1363
      %v1365 = vsel %vm795, %v1242, 0.0
      %1366 = vadd.xlane.f32.xlu0 %v1365
      %v1367 = vpop.xlane.xlu0 %1366
      %v1368 = vsel %vm795, %v1244, 0.0
      %1369 = vadd.xlane.f32.xlu0 %v1368
      %v1370 = vpop.xlane.xlu0 %1369
      %v1371 = vsel %vm795, %v1246, 0.0
      %1372 = vadd.xlane.f32.xlu0 %v1371
      %v1373 = vpop.xlane.xlu0 %1372
      %v1374 = vsel %vm795, %v1248, 0.0
      %1375 = vadd.xlane.f32.xlu0 %v1374
      %v1376 = vpop.xlane.xlu0 %1375
      %vm1377 = vcmp.ge.s32.totalorder %v470, 19
      %vm1378 = vcmp.lt.s32.totalorder %v470, 22
      %vm1379 = vmand %vm1377, %vm1378
      %v1380 = vsel %vm1379, 1, 0
      %vm1381 = vcmp.eq.s32.totalorder %v1380, 1
      %v1382 = vsel %vm1381, %v963, %v896
      %v1383 = vsel %vm1381, %v966, %v897
      %v1384 = vsel %vm1381, %v969, %v898
      %v1385 = vsel %vm1381, %v972, %v899
      %v1386 = vsel %vm1381, %v975, %v900
      %v1387 = vsel %vm1381, %v978, %v901
      %v1388 = vsel %vm1381, %v981, %v902
      %v1389 = vsel %vm1381, %v984, %v903
      %v1390 = vsel %vm1381, %v987, %v904
      %v1391 = vsel %vm1381, %v990, %v905
      %v1392 = vsel %vm1381, %v993, %v906
      %v1393 = vsel %vm1381, %v996, %v907
      %v1394 = vsel %vm1381, %v999, %v908
      %v1395 = vsel %vm1381, %v1002, %v909
      %v1396 = vsel %vm1381, %v1005, %v910
      %v1397 = vsel %vm1381, %v1008, %v911
      %v1398 = vsel %vm1381, %v1011, %v912
      %v1399 = vsel %vm1381, %v1014, %v913
      %v1400 = vsel %vm1381, %v1017, %v914
      %v1401 = vsel %vm1381, %v1020, %v915
      %v1402 = vsel %vm1381, %v1023, %v916
      %v1403 = vsel %vm1381, %v1026, %v917
      %v1404 = vsel %vm1381, %v1029, %v918
      %v1405 = vsel %vm1381, %v1032, %v919
      %v1406 = vsel %vm1381, %v1035, %v920
      %v1407 = vsel %vm1381, %v1038, %v921
      %v1408 = vsel %vm1381, %v1041, %v922
      %v1409 = vsel %vm1381, %v1044, %v923
      %v1410 = vsel %vm1381, %v1047, %v924
      %v1411 = vsel %vm1381, %v1050, %v925
      %v1412 = vsel %vm1381, %v1053, %v926
      %v1413 = vsel %vm1381, %v1056, %v927
      %v1414 = vsel %vm1381, %v1283, %v928
      %v1415 = vsel %vm1381, %v1286, %v929
      %v1416 = vsel %vm1381, %v1289, %v930
      %v1417 = vsel %vm1381, %v1292, %v931
      %v1418 = vsel %vm1381, %v1295, %v932
      %v1419 = vsel %vm1381, %v1298, %v933
      %v1420 = vsel %vm1381, %v1301, %v934
      %v1421 = vsel %vm1381, %v1304, %v935
      %v1422 = vsel %vm1381, %v1307, %v936
      %v1423 = vsel %vm1381, %v1310, %v937
      %v1424 = vsel %vm1381, %v1313, %v938
      %v1425 = vsel %vm1381, %v1316, %v939
      %v1426 = vsel %vm1381, %v1319, %v940
      %v1427 = vsel %vm1381, %v1322, %v941
      %v1428 = vsel %vm1381, %v1325, %v942
      %v1429 = vsel %vm1381, %v1328, %v943
      %v1430 = vsel %vm1381, %v1331, %v944
      %v1431 = vsel %vm1381, %v1334, %v945
      %v1432 = vsel %vm1381, %v1337, %v946
      %v1433 = vsel %vm1381, %v1340, %v947
      %v1434 = vsel %vm1381, %v1343, %v948
      %v1435 = vsel %vm1381, %v1346, %v949
      %v1436 = vsel %vm1381, %v1349, %v950
      %v1437 = vsel %vm1381, %v1352, %v951
      %v1438 = vsel %vm1381, %v1355, %v952
      %v1439 = vsel %vm1381, %v1358, %v953
      %v1440 = vsel %vm1381, %v1361, %v954
      %v1441 = vsel %vm1381, %v1364, %v955
      %v1442 = vsel %vm1381, %v1367, %v956
      %v1443 = vsel %vm1381, %v1370, %v957
      %v1444 = vsel %vm1381, %v1373, %v958
      %v1445 = vsel %vm1381, %v1376, %v959
      %vm1446 = vcmask 203952
      %v1447 = vsel %vm1446, %v390, -inf
      %1448 = vmax.xlane.f32.xlu0 %v1447
      %v1449 = vpop.xlane.xlu0 %1448
      %v1450 = vsel %vm1446, %v392, -inf
      %1451 = vmax.xlane.f32.xlu0 %v1450
      %v1452 = vpop.xlane.xlu0 %1451
      %v1453 = vsel %vm1446, %v395, -inf
      %1454 = vmax.xlane.f32.xlu0 %v1453
      %v1455 = vpop.xlane.xlu0 %1454
      %v1456 = vsel %vm1446, %v397, -inf
      %1457 = vmax.xlane.f32.xlu0 %v1456
      %v1458 = vpop.xlane.xlu0 %1457
      %v1459 = vsel %vm1446, %v400, -inf
      %1460 = vmax.xlane.f32.xlu0 %v1459
      %v1461 = vpop.xlane.xlu0 %1460
      %v1462 = vsel %vm1446, %v402, -inf
      %1463 = vmax.xlane.f32.xlu0 %v1462
      %v1464 = vpop.xlane.xlu0 %1463
      %v1465 = vsel %vm1446, %v405, -inf
      %1466 = vmax.xlane.f32.xlu0 %v1465
      %v1467 = vpop.xlane.xlu0 %1466
      %v1468 = vsel %vm1446, %v407, -inf
      %1469 = vmax.xlane.f32.xlu0 %v1468
      %v1470 = vpop.xlane.xlu0 %1469
      %v1471 = vsel %vm1446, %v410, -inf
      %1472 = vmax.xlane.f32.xlu0 %v1471
      %v1473 = vpop.xlane.xlu0 %1472
      %v1474 = vsel %vm1446, %v412, -inf
      %1475 = vmax.xlane.f32.xlu0 %v1474
      %v1476 = vpop.xlane.xlu0 %1475
      %v1477 = vsel %vm1446, %v415, -inf
      %1478 = vmax.xlane.f32.xlu0 %v1477
      %v1479 = vpop.xlane.xlu0 %1478
      %v1480 = vsel %vm1446, %v417, -inf
      %1481 = vmax.xlane.f32.xlu0 %v1480
      %v1482 = vpop.xlane.xlu0 %1481
      %v1483 = vsel %vm1446, %v420, -inf
      %1484 = vmax.xlane.f32.xlu0 %v1483
      %v1485 = vpop.xlane.xlu0 %1484
      %v1486 = vsel %vm1446, %v422, -inf
      %1487 = vmax.xlane.f32.xlu0 %v1486
      %v1488 = vpop.xlane.xlu0 %1487
      %v1489 = vsel %vm1446, %v425, -inf
      %1490 = vmax.xlane.f32.xlu0 %v1489
      %v1491 = vpop.xlane.xlu0 %1490
      %v1492 = vsel %vm1446, %v427, -inf
      %1493 = vmax.xlane.f32.xlu0 %v1492
      %v1494 = vpop.xlane.xlu0 %1493
      %v1495 = vsel %vm1446, %v430, -inf
      %1496 = vmax.xlane.f32.xlu0 %v1495
      %v1497 = vpop.xlane.xlu0 %1496
      %v1498 = vsel %vm1446, %v432, -inf
      %1499 = vmax.xlane.f32.xlu0 %v1498
      %v1500 = vpop.xlane.xlu0 %1499
      %v1501 = vsel %vm1446, %v435, -inf
      %1502 = vmax.xlane.f32.xlu0 %v1501
      %v1503 = vpop.xlane.xlu0 %1502
      %v1504 = vsel %vm1446, %v437, -inf
      %1505 = vmax.xlane.f32.xlu0 %v1504
      %v1506 = vpop.xlane.xlu0 %1505
      %v1507 = vsel %vm1446, %v440, -inf
      %1508 = vmax.xlane.f32.xlu0 %v1507
      %v1509 = vpop.xlane.xlu0 %1508
      %v1510 = vsel %vm1446, %v442, -inf
      %1511 = vmax.xlane.f32.xlu0 %v1510
      %v1512 = vpop.xlane.xlu0 %1511
      %v1513 = vsel %vm1446, %v445, -inf
      %1514 = vmax.xlane.f32.xlu0 %v1513
      %v1515 = vpop.xlane.xlu0 %1514
      %v1516 = vsel %vm1446, %v447, -inf
      %1517 = vmax.xlane.f32.xlu0 %v1516
      %v1518 = vpop.xlane.xlu0 %1517
      %v1519 = vsel %vm1446, %v450, -inf
      %1520 = vmax.xlane.f32.xlu0 %v1519
      %v1521 = vpop.xlane.xlu0 %1520
      %v1522 = vsel %vm1446, %v452, -inf
      %1523 = vmax.xlane.f32.xlu0 %v1522
      %v1524 = vpop.xlane.xlu0 %1523
      %v1525 = vsel %vm1446, %v455, -inf
      %1526 = vmax.xlane.f32.xlu0 %v1525
      %v1527 = vpop.xlane.xlu0 %1526
      %v1528 = vsel %vm1446, %v457, -inf
      %1529 = vmax.xlane.f32.xlu0 %v1528
      %v1530 = vpop.xlane.xlu0 %1529
      %v1531 = vsel %vm1446, %v460, -inf
      %1532 = vmax.xlane.f32.xlu0 %v1531
      %v1533 = vpop.xlane.xlu0 %1532
      %v1534 = vsel %vm1446, %v462, -inf
      %1535 = vmax.xlane.f32.xlu0 %v1534
      %v1536 = vpop.xlane.xlu0 %1535
      %v1537 = vsel %vm1446, %v465, -inf
      %1538 = vmax.xlane.f32.xlu0 %v1537
      %v1539 = vpop.xlane.xlu0 %1538
      %v1540 = vsel %vm1446, %v467, -inf
      %1541 = vmax.xlane.f32.xlu0 %v1540
      %v1542 = vpop.xlane.xlu0 %1541
      %v1543 = vsub.f32 %v390, %v1449
      %v1544 = vsub.f32 %v392, %v1452
      %v1545 = vsub.f32 %v395, %v1455
      %v1546 = vsub.f32 %v397, %v1458
      %v1547 = vsub.f32 %v400, %v1461
      %v1548 = vsub.f32 %v402, %v1464
      %v1549 = vsub.f32 %v405, %v1467
      %v1550 = vsub.f32 %v407, %v1470
      %v1551 = vsub.f32 %v410, %v1473
      %v1552 = vsub.f32 %v412, %v1476
      %v1553 = vsub.f32 %v415, %v1479
      %v1554 = vsub.f32 %v417, %v1482
      %v1555 = vsub.f32 %v420, %v1485
      %v1556 = vsub.f32 %v422, %v1488
      %v1557 = vsub.f32 %v425, %v1491
      %v1558 = vsub.f32 %v427, %v1494
      %v1559 = vsub.f32 %v430, %v1497
      %v1560 = vsub.f32 %v432, %v1500
      %v1561 = vsub.f32 %v435, %v1503
      %v1562 = vsub.f32 %v437, %v1506
      %v1563 = vsub.f32 %v440, %v1509
      %v1564 = vsub.f32 %v442, %v1512
      %v1565 = vsub.f32 %v445, %v1515
      %v1566 = vsub.f32 %v447, %v1518
      %v1567 = vsub.f32 %v450, %v1521
      %v1568 = vsub.f32 %v452, %v1524
      %v1569 = vsub.f32 %v455, %v1527
      %v1570 = vsub.f32 %v457, %v1530
      %v1571 = vsub.f32 %v460, %v1533
      %v1572 = vsub.f32 %v462, %v1536
      %v1573 = vsub.f32 %v465, %v1539
      %v1574 = vsub.f32 %v467, %v1542
      %v1575 = vmul.f32 %v1543, 1.442695
      %v1576 = vpow.pop %v1575
      %v1577 = vmul.f32 %v1544, 1.442695
      %v1578 = vpow.pop %v1577
      %v1579 = vmul.f32 %v1545, 1.442695
      %v1580 = vpow.pop %v1579
      %v1581 = vmul.f32 %v1546, 1.442695
      %v1582 = vpow.pop %v1581
      %v1583 = vmul.f32 %v1547, 1.442695
      %v1584 = vpow.pop %v1583
      %v1585 = vmul.f32 %v1548, 1.442695
      %v1586 = vpow.pop %v1585
      %v1587 = vmul.f32 %v1549, 1.442695
      %v1588 = vpow.pop %v1587
      %v1589 = vmul.f32 %v1550, 1.442695
      %v1590 = vpow.pop %v1589
      %v1591 = vmul.f32 %v1551, 1.442695
      %v1592 = vpow.pop %v1591
      %v1593 = vmul.f32 %v1552, 1.442695
      %v1594 = vpow.pop %v1593
      %v1595 = vmul.f32 %v1553, 1.442695
      %v1596 = vpow.pop %v1595
      %v1597 = vmul.f32 %v1554, 1.442695
      %v1598 = vpow.pop %v1597
      %v1599 = vmul.f32 %v1555, 1.442695
      %v1600 = vpow.pop %v1599
      %v1601 = vmul.f32 %v1556, 1.442695
      %v1602 = vpow.pop %v1601
      %v1603 = vmul.f32 %v1557, 1.442695
      %v1604 = vpow.pop %v1603
      %v1605 = vmul.f32 %v1558, 1.442695
      %v1606 = vpow.pop %v1605
      %v1607 = vmul.f32 %v1559, 1.442695
      %v1608 = vpow.pop %v1607
      %v1609 = vmul.f32 %v1560, 1.442695
      %v1610 = vpow.pop %v1609
      %v1611 = vmul.f32 %v1561, 1.442695
      %v1612 = vpow.pop %v1611
      %v1613 = vmul.f32 %v1562, 1.442695
      %v1614 = vpow.pop %v1613
      %v1615 = vmul.f32 %v1563, 1.442695
      %v1616 = vpow.pop %v1615
      %v1617 = vmul.f32 %v1564, 1.442695
      %v1618 = vpow.pop %v1617
      %v1619 = vmul.f32 %v1565, 1.442695
      %v1620 = vpow.pop %v1619
      %v1621 = vmul.f32 %v1566, 1.442695
      %v1622 = vpow.pop %v1621
      %v1623 = vmul.f32 %v1567, 1.442695
      %v1624 = vpow.pop %v1623
      %v1625 = vmul.f32 %v1568, 1.442695
      %v1626 = vpow.pop %v1625
      %v1627 = vmul.f32 %v1569, 1.442695
      %v1628 = vpow.pop %v1627
      %v1629 = vmul.f32 %v1570, 1.442695
      %v1630 = vpow.pop %v1629
      %v1631 = vmul.f32 %v1571, 1.442695
      %v1632 = vpow.pop %v1631
      %v1633 = vmul.f32 %v1572, 1.442695
      %v1634 = vpow.pop %v1633
      %v1635 = vmul.f32 %v1573, 1.442695
      %v1636 = vpow.pop %v1635
      %v1637 = vmul.f32 %v1574, 1.442695
      %v1638 = vpow.pop %v1637
      %1671 = vrot.lane.b32.xlu0 %v1576, 106
      %v1672 = vpop.permute.xlu0 %1671
      %1673 = vrot.lane.b32.xlu0 %v1578, 106
      %v1674 = vpop.permute.xlu0 %1673
      %1675 = vrot.lane.b32.xlu0 %v1580, 106
      %v1676 = vpop.permute.xlu0 %1675
      %1677 = vrot.lane.b32.xlu0 %v1582, 106
      %v1678 = vpop.permute.xlu0 %1677
      %1679 = vrot.lane.b32.xlu0 %v1584, 106
      %v1680 = vpop.permute.xlu0 %1679
      %1681 = vrot.lane.b32.xlu0 %v1586, 106
      %v1682 = vpop.permute.xlu0 %1681
      %1683 = vrot.lane.b32.xlu0 %v1588, 106
      %v1684 = vpop.permute.xlu0 %1683
      %1685 = vrot.lane.b32.xlu0 %v1590, 106
      %v1686 = vpop.permute.xlu0 %1685
      %1687 = vrot.lane.b32.xlu0 %v1592, 106
      %v1688 = vpop.permute.xlu0 %1687
      %1689 = vrot.lane.b32.xlu0 %v1594, 106
      %v1690 = vpop.permute.xlu0 %1689
      %1691 = vrot.lane.b32.xlu0 %v1596, 106
      %v1692 = vpop.permute.xlu0 %1691
      %1693 = vrot.lane.b32.xlu0 %v1598, 106
      %v1694 = vpop.permute.xlu0 %1693
      %1695 = vrot.lane.b32.xlu0 %v1600, 106
      %v1696 = vpop.permute.xlu0 %1695
      %1697 = vrot.lane.b32.xlu0 %v1602, 106
      %v1698 = vpop.permute.xlu0 %1697
      %1699 = vrot.lane.b32.xlu0 %v1604, 106
      %v1700 = vpop.permute.xlu0 %1699
      %1701 = vrot.lane.b32.xlu0 %v1606, 106
      %v1702 = vpop.permute.xlu0 %1701
      %1703 = vrot.lane.b32.xlu0 %v1608, 106
      %v1704 = vpop.permute.xlu0 %1703
      %1705 = vrot.lane.b32.xlu0 %v1610, 106
      %v1706 = vpop.permute.xlu0 %1705
      %1707 = vrot.lane.b32.xlu0 %v1612, 106
      %v1708 = vpop.permute.xlu0 %1707
      %1709 = vrot.lane.b32.xlu0 %v1614, 106
      %v1710 = vpop.permute.xlu0 %1709
      %1711 = vrot.lane.b32.xlu0 %v1616, 106
      %v1712 = vpop.permute.xlu0 %1711
      %1713 = vrot.lane.b32.xlu0 %v1618, 106
      %v1714 = vpop.permute.xlu0 %1713
      %1715 = vrot.lane.b32.xlu0 %v1620, 106
      %v1716 = vpop.permute.xlu0 %1715
      %1717 = vrot.lane.b32.xlu0 %v1622, 106
      %v1718 = vpop.permute.xlu0 %1717
      %1719 = vrot.lane.b32.xlu0 %v1624, 106
      %v1720 = vpop.permute.xlu0 %1719
      %1721 = vrot.lane.b32.xlu0 %v1626, 106
      %v1722 = vpop.permute.xlu0 %1721
      %1723 = vrot.lane.b32.xlu0 %v1628, 106
      %v1724 = vpop.permute.xlu0 %1723
      %1725 = vrot.lane.b32.xlu0 %v1630, 106
      %v1726 = vpop.permute.xlu0 %1725
      %1727 = vrot.lane.b32.xlu0 %v1632, 106
      %v1728 = vpop.permute.xlu0 %1727
      %1729 = vrot.lane.b32.xlu0 %v1634, 106
      %v1730 = vpop.permute.xlu0 %1729
      %1731 = vrot.lane.b32.xlu0 %v1636, 106
      %v1732 = vpop.permute.xlu0 %1731
      %1733 = vrot.lane.b32.xlu0 %v1638, 106
      %v1734 = vpop.permute.xlu0 %1733
      %v1767 = vsel %vm795, %v1672, 0.0
      %1768 = vadd.xlane.f32.xlu0 %v1767
      %v1769 = vpop.xlane.xlu0 %1768
      %v1770 = vsel %vm795, %v1674, 0.0
      %1771 = vadd.xlane.f32.xlu0 %v1770
      %v1772 = vpop.xlane.xlu0 %1771
      %v1773 = vsel %vm795, %v1676, 0.0
      %1774 = vadd.xlane.f32.xlu0 %v1773
      %v1775 = vpop.xlane.xlu0 %1774
      %v1776 = vsel %vm795, %v1678, 0.0
      %1777 = vadd.xlane.f32.xlu0 %v1776
      %v1778 = vpop.xlane.xlu0 %1777
      %v1779 = vsel %vm795, %v1680, 0.0
      %1780 = vadd.xlane.f32.xlu0 %v1779
      %v1781 = vpop.xlane.xlu0 %1780
      %v1782 = vsel %vm795, %v1682, 0.0
      %1783 = vadd.xlane.f32.xlu0 %v1782
      %v1784 = vpop.xlane.xlu0 %1783
      %v1785 = vsel %vm795, %v1684, 0.0
      %1786 = vadd.xlane.f32.xlu0 %v1785
      %v1787 = vpop.xlane.xlu0 %1786
      %v1788 = vsel %vm795, %v1686, 0.0
      %1789 = vadd.xlane.f32.xlu0 %v1788
      %v1790 = vpop.xlane.xlu0 %1789
      %v1791 = vsel %vm795, %v1688, 0.0
      %1792 = vadd.xlane.f32.xlu0 %v1791
      %v1793 = vpop.xlane.xlu0 %1792
      %v1794 = vsel %vm795, %v1690, 0.0
      %1795 = vadd.xlane.f32.xlu0 %v1794
      %v1796 = vpop.xlane.xlu0 %1795
      %v1797 = vsel %vm795, %v1692, 0.0
      %1798 = vadd.xlane.f32.xlu0 %v1797
      %v1799 = vpop.xlane.xlu0 %1798
      %v1800 = vsel %vm795, %v1694, 0.0
      %1801 = vadd.xlane.f32.xlu0 %v1800
      %v1802 = vpop.xlane.xlu0 %1801
      %v1803 = vsel %vm795, %v1696, 0.0
      %1804 = vadd.xlane.f32.xlu0 %v1803
      %v1805 = vpop.xlane.xlu0 %1804
      %v1806 = vsel %vm795, %v1698, 0.0
      %1807 = vadd.xlane.f32.xlu0 %v1806
      %v1808 = vpop.xlane.xlu0 %1807
      %v1809 = vsel %vm795, %v1700, 0.0
      %1810 = vadd.xlane.f32.xlu0 %v1809
      %v1811 = vpop.xlane.xlu0 %1810
      %v1812 = vsel %vm795, %v1702, 0.0
      %1813 = vadd.xlane.f32.xlu0 %v1812
      %v1814 = vpop.xlane.xlu0 %1813
      %v1815 = vsel %vm795, %v1704, 0.0
      %1816 = vadd.xlane.f32.xlu0 %v1815
      %v1817 = vpop.xlane.xlu0 %1816
      %v1818 = vsel %vm795, %v1706, 0.0
      %1819 = vadd.xlane.f32.xlu0 %v1818
      %v1820 = vpop.xlane.xlu0 %1819
      %v1821 = vsel %vm795, %v1708, 0.0
      %1822 = vadd.xlane.f32.xlu0 %v1821
      %v1823 = vpop.xlane.xlu0 %1822
      %v1824 = vsel %vm795, %v1710, 0.0
      %1825 = vadd.xlane.f32.xlu0 %v1824
      %v1826 = vpop.xlane.xlu0 %1825
      %v1827 = vsel %vm795, %v1712, 0.0
      %1828 = vadd.xlane.f32.xlu0 %v1827
      %v1829 = vpop.xlane.xlu0 %1828
      %v1830 = vsel %vm795, %v1714, 0.0
      %1831 = vadd.xlane.f32.xlu0 %v1830
      %v1832 = vpop.xlane.xlu0 %1831
      %v1833 = vsel %vm795, %v1716, 0.0
      %1834 = vadd.xlane.f32.xlu0 %v1833
      %v1835 = vpop.xlane.xlu0 %1834
      %v1836 = vsel %vm795, %v1718, 0.0
      %1837 = vadd.xlane.f32.xlu0 %v1836
      %v1838 = vpop.xlane.xlu0 %1837
      %v1839 = vsel %vm795, %v1720, 0.0
      %1840 = vadd.xlane.f32.xlu0 %v1839
      %v1841 = vpop.xlane.xlu0 %1840
      %v1842 = vsel %vm795, %v1722, 0.0
      %1843 = vadd.xlane.f32.xlu0 %v1842
      %v1844 = vpop.xlane.xlu0 %1843
      %v1845 = vsel %vm795, %v1724, 0.0
      %1846 = vadd.xlane.f32.xlu0 %v1845
      %v1847 = vpop.xlane.xlu0 %1846
      %v1848 = vsel %vm795, %v1726, 0.0
      %1849 = vadd.xlane.f32.xlu0 %v1848
      %v1850 = vpop.xlane.xlu0 %1849
      %v1851 = vsel %vm795, %v1728, 0.0
      %1852 = vadd.xlane.f32.xlu0 %v1851
      %v1853 = vpop.xlane.xlu0 %1852
      %v1854 = vsel %vm795, %v1730, 0.0
      %1855 = vadd.xlane.f32.xlu0 %v1854
      %v1856 = vpop.xlane.xlu0 %1855
      %v1857 = vsel %vm795, %v1732, 0.0
      %1858 = vadd.xlane.f32.xlu0 %v1857
      %v1859 = vpop.xlane.xlu0 %1858
      %v1860 = vsel %vm795, %v1734, 0.0
      %1861 = vadd.xlane.f32.xlu0 %v1860
      %v1862 = vpop.xlane.xlu0 %1861
      %vm1863 = vcmp.ge.s32.totalorder %v470, 22
      %vm1864 = vcmp.lt.s32.totalorder %v470, 25
      %vm1865 = vmand %vm1863, %vm1864
      %v1866 = vsel %vm1865, 1, 0
      %vm1867 = vcmp.eq.s32.totalorder %v1866, 1
      %v1868 = vsel %vm1867, %v1449, %v1382
      %v1869 = vsel %vm1867, %v1452, %v1383
      %v1870 = vsel %vm1867, %v1455, %v1384
      %v1871 = vsel %vm1867, %v1458, %v1385
      %v1872 = vsel %vm1867, %v1461, %v1386
      %v1873 = vsel %vm1867, %v1464, %v1387
      %v1874 = vsel %vm1867, %v1467, %v1388
      %v1875 = vsel %vm1867, %v1470, %v1389
      %v1876 = vsel %vm1867, %v1473, %v1390
      %v1877 = vsel %vm1867, %v1476, %v1391
      %v1878 = vsel %vm1867, %v1479, %v1392
      %v1879 = vsel %vm1867, %v1482, %v1393
      %v1880 = vsel %vm1867, %v1485, %v1394
      %v1881 = vsel %vm1867, %v1488, %v1395
      %v1882 = vsel %vm1867, %v1491, %v1396
      %v1883 = vsel %vm1867, %v1494, %v1397
      %v1884 = vsel %vm1867, %v1497, %v1398
      %v1885 = vsel %vm1867, %v1500, %v1399
      %v1886 = vsel %vm1867, %v1503, %v1400
      %v1887 = vsel %vm1867, %v1506, %v1401
      %v1888 = vsel %vm1867, %v1509, %v1402
      %v1889 = vsel %vm1867, %v1512, %v1403
      %v1890 = vsel %vm1867, %v1515, %v1404
      %v1891 = vsel %vm1867, %v1518, %v1405
      %v1892 = vsel %vm1867, %v1521, %v1406
      %v1893 = vsel %vm1867, %v1524, %v1407
      %v1894 = vsel %vm1867, %v1527, %v1408
      %v1895 = vsel %vm1867, %v1530, %v1409
      %v1896 = vsel %vm1867, %v1533, %v1410
      %v1897 = vsel %vm1867, %v1536, %v1411
      %v1898 = vsel %vm1867, %v1539, %v1412
      %v1899 = vsel %vm1867, %v1542, %v1413
      %v1900 = vsel %vm1867, %v1769, %v1414
      %v1901 = vsel %vm1867, %v1772, %v1415
      %v1902 = vsel %vm1867, %v1775, %v1416
      %v1903 = vsel %vm1867, %v1778, %v1417
      %v1904 = vsel %vm1867, %v1781, %v1418
      %v1905 = vsel %vm1867, %v1784, %v1419
      %v1906 = vsel %vm1867, %v1787, %v1420
      %v1907 = vsel %vm1867, %v1790, %v1421
      %v1908 = vsel %vm1867, %v1793, %v1422
      %v1909 = vsel %vm1867, %v1796, %v1423
      %v1910 = vsel %vm1867, %v1799, %v1424
      %v1911 = vsel %vm1867, %v1802, %v1425
      %v1912 = vsel %vm1867, %v1805, %v1426
      %v1913 = vsel %vm1867, %v1808, %v1427
      %v1914 = vsel %vm1867, %v1811, %v1428
      %v1915 = vsel %vm1867, %v1814, %v1429
      %v1916 = vsel %vm1867, %v1817, %v1430
      %v1917 = vsel %vm1867, %v1820, %v1431
      %v1918 = vsel %vm1867, %v1823, %v1432
      %v1919 = vsel %vm1867, %v1826, %v1433
      %v1920 = vsel %vm1867, %v1829, %v1434
      %v1921 = vsel %vm1867, %v1832, %v1435
      %v1922 = vsel %vm1867, %v1835, %v1436
      %v1923 = vsel %vm1867, %v1838, %v1437
      %v1924 = vsel %vm1867, %v1841, %v1438
      %v1925 = vsel %vm1867, %v1844, %v1439
      %v1926 = vsel %vm1867, %v1847, %v1440
      %v1927 = vsel %vm1867, %v1850, %v1441
      %v1928 = vsel %vm1867, %v1853, %v1442
      %v1929 = vsel %vm1867, %v1856, %v1443
      %v1930 = vsel %vm1867, %v1859, %v1444
      %v1931 = vsel %vm1867, %v1862, %v1445
      %vm1932 = vcmask 228552
      %v1933 = vsel %vm1932, %v390, -inf
      %1934 = vmax.xlane.f32.xlu0 %v1933
      %v1935 = vpop.xlane.xlu0 %1934
      %v1936 = vsel %vm1932, %v392, -inf
      %1937 = vmax.xlane.f32.xlu0 %v1936
      %v1938 = vpop.xlane.xlu0 %1937
      %v1939 = vsel %vm1932, %v395, -inf
      %1940 = vmax.xlane.f32.xlu0 %v1939
      %v1941 = vpop.xlane.xlu0 %1940
      %v1942 = vsel %vm1932, %v397, -inf
      %1943 = vmax.xlane.f32.xlu0 %v1942
      %v1944 = vpop.xlane.xlu0 %1943
      %v1945 = vsel %vm1932, %v400, -inf
      %1946 = vmax.xlane.f32.xlu0 %v1945
      %v1947 = vpop.xlane.xlu0 %1946
      %v1948 = vsel %vm1932, %v402, -inf
      %1949 = vmax.xlane.f32.xlu0 %v1948
      %v1950 = vpop.xlane.xlu0 %1949
      %v1951 = vsel %vm1932, %v405, -inf
      %1952 = vmax.xlane.f32.xlu0 %v1951
      %v1953 = vpop.xlane.xlu0 %1952
      %v1954 = vsel %vm1932, %v407, -inf
      %1955 = vmax.xlane.f32.xlu0 %v1954
      %v1956 = vpop.xlane.xlu0 %1955
      %v1957 = vsel %vm1932, %v410, -inf
      %1958 = vmax.xlane.f32.xlu0 %v1957
      %v1959 = vpop.xlane.xlu0 %1958
      %v1960 = vsel %vm1932, %v412, -inf
      %1961 = vmax.xlane.f32.xlu0 %v1960
      %v1962 = vpop.xlane.xlu0 %1961
      %v1963 = vsel %vm1932, %v415, -inf
      %1964 = vmax.xlane.f32.xlu0 %v1963
      %v1965 = vpop.xlane.xlu0 %1964
      %v1966 = vsel %vm1932, %v417, -inf
      %1967 = vmax.xlane.f32.xlu0 %v1966
      %v1968 = vpop.xlane.xlu0 %1967
      %v1969 = vsel %vm1932, %v420, -inf
      %1970 = vmax.xlane.f32.xlu0 %v1969
      %v1971 = vpop.xlane.xlu0 %1970
      %v1972 = vsel %vm1932, %v422, -inf
      %1973 = vmax.xlane.f32.xlu0 %v1972
      %v1974 = vpop.xlane.xlu0 %1973
      %v1975 = vsel %vm1932, %v425, -inf
      %1976 = vmax.xlane.f32.xlu0 %v1975
      %v1977 = vpop.xlane.xlu0 %1976
      %v1978 = vsel %vm1932, %v427, -inf
      %1979 = vmax.xlane.f32.xlu0 %v1978
      %v1980 = vpop.xlane.xlu0 %1979
      %v1981 = vsel %vm1932, %v430, -inf
      %1982 = vmax.xlane.f32.xlu0 %v1981
      %v1983 = vpop.xlane.xlu0 %1982
      %v1984 = vsel %vm1932, %v432, -inf
      %1985 = vmax.xlane.f32.xlu0 %v1984
      %v1986 = vpop.xlane.xlu0 %1985
      %v1987 = vsel %vm1932, %v435, -inf
      %1988 = vmax.xlane.f32.xlu0 %v1987
      %v1989 = vpop.xlane.xlu0 %1988
      %v1990 = vsel %vm1932, %v437, -inf
      %1991 = vmax.xlane.f32.xlu0 %v1990
      %v1992 = vpop.xlane.xlu0 %1991
      %v1993 = vsel %vm1932, %v440, -inf
      %1994 = vmax.xlane.f32.xlu0 %v1993
      %v1995 = vpop.xlane.xlu0 %1994
      %v1996 = vsel %vm1932, %v442, -inf
      %1997 = vmax.xlane.f32.xlu0 %v1996
      %v1998 = vpop.xlane.xlu0 %1997
      %v1999 = vsel %vm1932, %v445, -inf
      %2000 = vmax.xlane.f32.xlu0 %v1999
      %v2001 = vpop.xlane.xlu0 %2000
      %v2002 = vsel %vm1932, %v447, -inf
      %2003 = vmax.xlane.f32.xlu0 %v2002
      %v2004 = vpop.xlane.xlu0 %2003
      %v2005 = vsel %vm1932, %v450, -inf
      %2006 = vmax.xlane.f32.xlu0 %v2005
      %v2007 = vpop.xlane.xlu0 %2006
      %v2008 = vsel %vm1932, %v452, -inf
      %2009 = vmax.xlane.f32.xlu0 %v2008
      %v2010 = vpop.xlane.xlu0 %2009
      %v2011 = vsel %vm1932, %v455, -inf
      %2012 = vmax.xlane.f32.xlu0 %v2011
      %v2013 = vpop.xlane.xlu0 %2012
      %v2014 = vsel %vm1932, %v457, -inf
      %2015 = vmax.xlane.f32.xlu0 %v2014
      %v2016 = vpop.xlane.xlu0 %2015
      %v2017 = vsel %vm1932, %v460, -inf
      %2018 = vmax.xlane.f32.xlu0 %v2017
      %v2019 = vpop.xlane.xlu0 %2018
      %v2020 = vsel %vm1932, %v462, -inf
      %2021 = vmax.xlane.f32.xlu0 %v2020
      %v2022 = vpop.xlane.xlu0 %2021
      %v2023 = vsel %vm1932, %v465, -inf
      %2024 = vmax.xlane.f32.xlu0 %v2023
      %v2025 = vpop.xlane.xlu0 %2024
      %v2026 = vsel %vm1932, %v467, -inf
      %2027 = vmax.xlane.f32.xlu0 %v2026
      %v2028 = vpop.xlane.xlu0 %2027
      %v2029 = vsub.f32 %v390, %v1935
      %v2030 = vsub.f32 %v392, %v1938
      %v2031 = vsub.f32 %v395, %v1941
      %v2032 = vsub.f32 %v397, %v1944
      %v2033 = vsub.f32 %v400, %v1947
      %v2034 = vsub.f32 %v402, %v1950
      %v2035 = vsub.f32 %v405, %v1953
      %v2036 = vsub.f32 %v407, %v1956
      %v2037 = vsub.f32 %v410, %v1959
      %v2038 = vsub.f32 %v412, %v1962
      %v2039 = vsub.f32 %v415, %v1965
      %v2040 = vsub.f32 %v417, %v1968
      %v2041 = vsub.f32 %v420, %v1971
      %v2042 = vsub.f32 %v422, %v1974
      %v2043 = vsub.f32 %v425, %v1977
      %v2044 = vsub.f32 %v427, %v1980
      %v2045 = vsub.f32 %v430, %v1983
      %v2046 = vsub.f32 %v432, %v1986
      %v2047 = vsub.f32 %v435, %v1989
      %v2048 = vsub.f32 %v437, %v1992
      %v2049 = vsub.f32 %v440, %v1995
      %v2050 = vsub.f32 %v442, %v1998
      %v2051 = vsub.f32 %v445, %v2001
      %v2052 = vsub.f32 %v447, %v2004
      %v2053 = vsub.f32 %v450, %v2007
      %v2054 = vsub.f32 %v452, %v2010
      %v2055 = vsub.f32 %v455, %v2013
      %v2056 = vsub.f32 %v457, %v2016
      %v2057 = vsub.f32 %v460, %v2019
      %v2058 = vsub.f32 %v462, %v2022
      %v2059 = vsub.f32 %v465, %v2025
      %v2060 = vsub.f32 %v467, %v2028
      %v2061 = vmul.f32 %v2029, 1.442695
      %v2062 = vpow.pop %v2061
      %v2063 = vmul.f32 %v2030, 1.442695
      %v2064 = vpow.pop %v2063
      %v2065 = vmul.f32 %v2031, 1.442695
      %v2066 = vpow.pop %v2065
      %v2067 = vmul.f32 %v2032, 1.442695
      %v2068 = vpow.pop %v2067
      %v2069 = vmul.f32 %v2033, 1.442695
      %v2070 = vpow.pop %v2069
      %v2071 = vmul.f32 %v2034, 1.442695
      %v2072 = vpow.pop %v2071
      %v2073 = vmul.f32 %v2035, 1.442695
      %v2074 = vpow.pop %v2073
      %v2075 = vmul.f32 %v2036, 1.442695
      %v2076 = vpow.pop %v2075
      %v2077 = vmul.f32 %v2037, 1.442695
      %v2078 = vpow.pop %v2077
      %v2079 = vmul.f32 %v2038, 1.442695
      %v2080 = vpow.pop %v2079
      %v2081 = vmul.f32 %v2039, 1.442695
      %v2082 = vpow.pop %v2081
      %v2083 = vmul.f32 %v2040, 1.442695
      %v2084 = vpow.pop %v2083
      %v2085 = vmul.f32 %v2041, 1.442695
      %v2086 = vpow.pop %v2085
      %v2087 = vmul.f32 %v2042, 1.442695
      %v2088 = vpow.pop %v2087
      %v2089 = vmul.f32 %v2043, 1.442695
      %v2090 = vpow.pop %v2089
      %v2091 = vmul.f32 %v2044, 1.442695
      %v2092 = vpow.pop %v2091
      %v2093 = vmul.f32 %v2045, 1.442695
      %v2094 = vpow.pop %v2093
      %v2095 = vmul.f32 %v2046, 1.442695
      %v2096 = vpow.pop %v2095
      %v2097 = vmul.f32 %v2047, 1.442695
      %v2098 = vpow.pop %v2097
      %v2099 = vmul.f32 %v2048, 1.442695
      %v2100 = vpow.pop %v2099
      %v2101 = vmul.f32 %v2049, 1.442695
      %v2102 = vpow.pop %v2101
      %v2103 = vmul.f32 %v2050, 1.442695
      %v2104 = vpow.pop %v2103
      %v2105 = vmul.f32 %v2051, 1.442695
      %v2106 = vpow.pop %v2105
      %v2107 = vmul.f32 %v2052, 1.442695
      %v2108 = vpow.pop %v2107
      %v2109 = vmul.f32 %v2053, 1.442695
      %v2110 = vpow.pop %v2109
      %v2111 = vmul.f32 %v2054, 1.442695
      %v2112 = vpow.pop %v2111
      %v2113 = vmul.f32 %v2055, 1.442695
      %v2114 = vpow.pop %v2113
      %v2115 = vmul.f32 %v2056, 1.442695
      %v2116 = vpow.pop %v2115
      %v2117 = vmul.f32 %v2057, 1.442695
      %v2118 = vpow.pop %v2117
      %v2119 = vmul.f32 %v2058, 1.442695
      %v2120 = vpow.pop %v2119
      %v2121 = vmul.f32 %v2059, 1.442695
      %v2122 = vpow.pop %v2121
      %v2123 = vmul.f32 %v2060, 1.442695
      %v2124 = vpow.pop %v2123
      %2157 = vrot.lane.b32.xlu0 %v2062, 103
      %v2158 = vpop.permute.xlu0 %2157
      %2159 = vrot.lane.b32.xlu0 %v2064, 103
      %v2160 = vpop.permute.xlu0 %2159
      %2161 = vrot.lane.b32.xlu0 %v2066, 103
      %v2162 = vpop.permute.xlu0 %2161
      %2163 = vrot.lane.b32.xlu0 %v2068, 103
      %v2164 = vpop.permute.xlu0 %2163
      %2165 = vrot.lane.b32.xlu0 %v2070, 103
      %v2166 = vpop.permute.xlu0 %2165
      %2167 = vrot.lane.b32.xlu0 %v2072, 103
      %v2168 = vpop.permute.xlu0 %2167
      %2169 = vrot.lane.b32.xlu0 %v2074, 103
      %v2170 = vpop.permute.xlu0 %2169
      %2171 = vrot.lane.b32.xlu0 %v2076, 103
      %v2172 = vpop.permute.xlu0 %2171
      %2173 = vrot.lane.b32.xlu0 %v2078, 103
      %v2174 = vpop.permute.xlu0 %2173
      %2175 = vrot.lane.b32.xlu0 %v2080, 103
      %v2176 = vpop.permute.xlu0 %2175
      %2177 = vrot.lane.b32.xlu0 %v2082, 103
      %v2178 = vpop.permute.xlu0 %2177
      %2179 = vrot.lane.b32.xlu0 %v2084, 103
      %v2180 = vpop.permute.xlu0 %2179
      %2181 = vrot.lane.b32.xlu0 %v2086, 103
      %v2182 = vpop.permute.xlu0 %2181
      %2183 = vrot.lane.b32.xlu0 %v2088, 103
      %v2184 = vpop.permute.xlu0 %2183
      %2185 = vrot.lane.b32.xlu0 %v2090, 103
      %v2186 = vpop.permute.xlu0 %2185
      %2187 = vrot.lane.b32.xlu0 %v2092, 103
      %v2188 = vpop.permute.xlu0 %2187
      %2189 = vrot.lane.b32.xlu0 %v2094, 103
      %v2190 = vpop.permute.xlu0 %2189
      %2191 = vrot.lane.b32.xlu0 %v2096, 103
      %v2192 = vpop.permute.xlu0 %2191
      %2193 = vrot.lane.b32.xlu0 %v2098, 103
      %v2194 = vpop.permute.xlu0 %2193
      %2195 = vrot.lane.b32.xlu0 %v2100, 103
      %v2196 = vpop.permute.xlu0 %2195
      %2197 = vrot.lane.b32.xlu0 %v2102, 103
      %v2198 = vpop.permute.xlu0 %2197
      %2199 = vrot.lane.b32.xlu0 %v2104, 103
      %v2200 = vpop.permute.xlu0 %2199
      %2201 = vrot.lane.b32.xlu0 %v2106, 103
      %v2202 = vpop.permute.xlu0 %2201
      %2203 = vrot.lane.b32.xlu0 %v2108, 103
      %v2204 = vpop.permute.xlu0 %2203
      %2205 = vrot.lane.b32.xlu0 %v2110, 103
      %v2206 = vpop.permute.xlu0 %2205
      %2207 = vrot.lane.b32.xlu0 %v2112, 103
      %v2208 = vpop.permute.xlu0 %2207
      %2209 = vrot.lane.b32.xlu0 %v2114, 103
      %v2210 = vpop.permute.xlu0 %2209
      %2211 = vrot.lane.b32.xlu0 %v2116, 103
      %v2212 = vpop.permute.xlu0 %2211
      %2213 = vrot.lane.b32.xlu0 %v2118, 103
      %v2214 = vpop.permute.xlu0 %2213
      %2215 = vrot.lane.b32.xlu0 %v2120, 103
      %v2216 = vpop.permute.xlu0 %2215
      %2217 = vrot.lane.b32.xlu0 %v2122, 103
      %v2218 = vpop.permute.xlu0 %2217
      %2219 = vrot.lane.b32.xlu0 %v2124, 103
      %v2220 = vpop.permute.xlu0 %2219
      %v2253 = vsel %vm795, %v2158, 0.0
      %2254 = vadd.xlane.f32.xlu0 %v2253
      %v2255 = vpop.xlane.xlu0 %2254
      %v2256 = vsel %vm795, %v2160, 0.0
      %2257 = vadd.xlane.f32.xlu0 %v2256
      %v2258 = vpop.xlane.xlu0 %2257
      %v2259 = vsel %vm795, %v2162, 0.0
      %2260 = vadd.xlane.f32.xlu0 %v2259
      %v2261 = vpop.xlane.xlu0 %2260
      %v2262 = vsel %vm795, %v2164, 0.0
      %2263 = vadd.xlane.f32.xlu0 %v2262
      %v2264 = vpop.xlane.xlu0 %2263
      %v2265 = vsel %vm795, %v2166, 0.0
      %2266 = vadd.xlane.f32.xlu0 %v2265
      %v2267 = vpop.xlane.xlu0 %2266
      %v2268 = vsel %vm795, %v2168, 0.0
      %2269 = vadd.xlane.f32.xlu0 %v2268
      %v2270 = vpop.xlane.xlu0 %2269
      %v2271 = vsel %vm795, %v2170, 0.0
      %2272 = vadd.xlane.f32.xlu0 %v2271
      %v2273 = vpop.xlane.xlu0 %2272
      %v2274 = vsel %vm795, %v2172, 0.0
      %2275 = vadd.xlane.f32.xlu0 %v2274
      %v2276 = vpop.xlane.xlu0 %2275
      %v2277 = vsel %vm795, %v2174, 0.0
      %2278 = vadd.xlane.f32.xlu0 %v2277
      %v2279 = vpop.xlane.xlu0 %2278
      %v2280 = vsel %vm795, %v2176, 0.0
      %2281 = vadd.xlane.f32.xlu0 %v2280
      %v2282 = vpop.xlane.xlu0 %2281
      %v2283 = vsel %vm795, %v2178, 0.0
      %2284 = vadd.xlane.f32.xlu0 %v2283
      %v2285 = vpop.xlane.xlu0 %2284
      %v2286 = vsel %vm795, %v2180, 0.0
      %2287 = vadd.xlane.f32.xlu0 %v2286
      %v2288 = vpop.xlane.xlu0 %2287
      %v2289 = vsel %vm795, %v2182, 0.0
      %2290 = vadd.xlane.f32.xlu0 %v2289
      %v2291 = vpop.xlane.xlu0 %2290
      %v2292 = vsel %vm795, %v2184, 0.0
      %2293 = vadd.xlane.f32.xlu0 %v2292
      %v2294 = vpop.xlane.xlu0 %2293
      %v2295 = vsel %vm795, %v2186, 0.0
      %2296 = vadd.xlane.f32.xlu0 %v2295
      %v2297 = vpop.xlane.xlu0 %2296
      %v2298 = vsel %vm795, %v2188, 0.0
      %2299 = vadd.xlane.f32.xlu0 %v2298
      %v2300 = vpop.xlane.xlu0 %2299
      %v2301 = vsel %vm795, %v2190, 0.0
      %2302 = vadd.xlane.f32.xlu0 %v2301
      %v2303 = vpop.xlane.xlu0 %2302
      %v2304 = vsel %vm795, %v2192, 0.0
      %2305 = vadd.xlane.f32.xlu0 %v2304
      %v2306 = vpop.xlane.xlu0 %2305
      %v2307 = vsel %vm795, %v2194, 0.0
      %2308 = vadd.xlane.f32.xlu0 %v2307
      %v2309 = vpop.xlane.xlu0 %2308
      %v2310 = vsel %vm795, %v2196, 0.0
      %2311 = vadd.xlane.f32.xlu0 %v2310
      %v2312 = vpop.xlane.xlu0 %2311
      %v2313 = vsel %vm795, %v2198, 0.0
      %2314 = vadd.xlane.f32.xlu0 %v2313
      %v2315 = vpop.xlane.xlu0 %2314
      %v2316 = vsel %vm795, %v2200, 0.0
      %2317 = vadd.xlane.f32.xlu0 %v2316
      %v2318 = vpop.xlane.xlu0 %2317
      %v2319 = vsel %vm795, %v2202, 0.0
      %2320 = vadd.xlane.f32.xlu0 %v2319
      %v2321 = vpop.xlane.xlu0 %2320
      %v2322 = vsel %vm795, %v2204, 0.0
      %2323 = vadd.xlane.f32.xlu0 %v2322
      %v2324 = vpop.xlane.xlu0 %2323
      %v2325 = vsel %vm795, %v2206, 0.0
      %2326 = vadd.xlane.f32.xlu0 %v2325
      %v2327 = vpop.xlane.xlu0 %2326
      %v2328 = vsel %vm795, %v2208, 0.0
      %2329 = vadd.xlane.f32.xlu0 %v2328
      %v2330 = vpop.xlane.xlu0 %2329
      %v2331 = vsel %vm795, %v2210, 0.0
      %2332 = vadd.xlane.f32.xlu0 %v2331
      %v2333 = vpop.xlane.xlu0 %2332
      %v2334 = vsel %vm795, %v2212, 0.0
      %2335 = vadd.xlane.f32.xlu0 %v2334
      %v2336 = vpop.xlane.xlu0 %2335
      %v2337 = vsel %vm795, %v2214, 0.0
      %2338 = vadd.xlane.f32.xlu0 %v2337
      %v2339 = vpop.xlane.xlu0 %2338
      %v2340 = vsel %vm795, %v2216, 0.0
      %2341 = vadd.xlane.f32.xlu0 %v2340
      %v2342 = vpop.xlane.xlu0 %2341
      %v2343 = vsel %vm795, %v2218, 0.0
      %2344 = vadd.xlane.f32.xlu0 %v2343
      %v2345 = vpop.xlane.xlu0 %2344
      %v2346 = vsel %vm795, %v2220, 0.0
      %2347 = vadd.xlane.f32.xlu0 %v2346
      %v2348 = vpop.xlane.xlu0 %2347
      %vm2349 = vcmp.ge.s32.totalorder %v470, 25
      %vm2350 = vmand %vm2349, %vm472
      %v2351 = vsel %vm2350, 1, 0
      %vm2352 = vcmp.eq.s32.totalorder %v2351, 1
      %v2353 = vsel %vm2352, %v1935, %v1868
      %v2354 = vsel %vm2352, %v1938, %v1869
      %v2355 = vsel %vm2352, %v1941, %v1870
      %v2356 = vsel %vm2352, %v1944, %v1871
      %v2357 = vsel %vm2352, %v1947, %v1872
      %v2358 = vsel %vm2352, %v1950, %v1873
      %v2359 = vsel %vm2352, %v1953, %v1874
      %v2360 = vsel %vm2352, %v1956, %v1875
      %v2361 = vsel %vm2352, %v1959, %v1876
      %v2362 = vsel %vm2352, %v1962, %v1877
      %v2363 = vsel %vm2352, %v1965, %v1878
      %v2364 = vsel %vm2352, %v1968, %v1879
      %v2365 = vsel %vm2352, %v1971, %v1880
      %v2366 = vsel %vm2352, %v1974, %v1881
      %v2367 = vsel %vm2352, %v1977, %v1882
      %v2368 = vsel %vm2352, %v1980, %v1883
      %v2369 = vsel %vm2352, %v1983, %v1884
      %v2370 = vsel %vm2352, %v1986, %v1885
      %v2371 = vsel %vm2352, %v1989, %v1886
      %v2372 = vsel %vm2352, %v1992, %v1887
      %v2373 = vsel %vm2352, %v1995, %v1888
      %v2374 = vsel %vm2352, %v1998, %v1889
      %v2375 = vsel %vm2352, %v2001, %v1890
      %v2376 = vsel %vm2352, %v2004, %v1891
      %v2377 = vsel %vm2352, %v2007, %v1892
      %v2378 = vsel %vm2352, %v2010, %v1893
      %v2379 = vsel %vm2352, %v2013, %v1894
      %v2380 = vsel %vm2352, %v2016, %v1895
      %v2381 = vsel %vm2352, %v2019, %v1896
      %v2382 = vsel %vm2352, %v2022, %v1897
      %v2383 = vsel %vm2352, %v2025, %v1898
      %v2384 = vsel %vm2352, %v2028, %v1899
      %v2385 = vsel %vm2352, %v2255, %v1900
      %v2386 = vsel %vm2352, %v2258, %v1901
      %v2387 = vsel %vm2352, %v2261, %v1902
      %v2388 = vsel %vm2352, %v2264, %v1903
      %v2389 = vsel %vm2352, %v2267, %v1904
      %v2390 = vsel %vm2352, %v2270, %v1905
      %v2391 = vsel %vm2352, %v2273, %v1906
      %v2392 = vsel %vm2352, %v2276, %v1907
      %v2393 = vsel %vm2352, %v2279, %v1908
      %v2394 = vsel %vm2352, %v2282, %v1909
      %v2395 = vsel %vm2352, %v2285, %v1910
      %v2396 = vsel %vm2352, %v2288, %v1911
      %v2397 = vsel %vm2352, %v2291, %v1912
      %v2398 = vsel %vm2352, %v2294, %v1913
      %v2399 = vsel %vm2352, %v2297, %v1914
      %v2400 = vsel %vm2352, %v2300, %v1915
      %v2401 = vsel %vm2352, %v2303, %v1916
      %v2402 = vsel %vm2352, %v2306, %v1917
      %v2403 = vsel %vm2352, %v2309, %v1918
      %v2404 = vsel %vm2352, %v2312, %v1919
      %v2405 = vsel %vm2352, %v2315, %v1920
      %v2406 = vsel %vm2352, %v2318, %v1921
      %v2407 = vsel %vm2352, %v2321, %v1922
      %v2408 = vsel %vm2352, %v2324, %v1923
      %v2409 = vsel %vm2352, %v2327, %v1924
      %v2410 = vsel %vm2352, %v2330, %v1925
      %v2411 = vsel %vm2352, %v2333, %v1926
      %v2412 = vsel %vm2352, %v2336, %v1927
      %v2413 = vsel %vm2352, %v2339, %v1928
      %v2414 = vsel %vm2352, %v2342, %v1929
      %v2415 = vsel %vm2352, %v2345, %v1930
      %v2416 = vsel %vm2352, %v2348, %v1931
      %v2417 = vsub.f32 %v390, %v2353
      %v2418 = vsub.f32 %v392, %v2354
      %v2419 = vsub.f32 %v395, %v2355
      %v2420 = vsub.f32 %v397, %v2356
      %v2421 = vsub.f32 %v400, %v2357
      %v2422 = vsub.f32 %v402, %v2358
      %v2423 = vsub.f32 %v405, %v2359
      %v2424 = vsub.f32 %v407, %v2360
      %v2425 = vsub.f32 %v410, %v2361
      %v2426 = vsub.f32 %v412, %v2362
      %v2427 = vsub.f32 %v415, %v2363
      %v2428 = vsub.f32 %v417, %v2364
      %v2429 = vsub.f32 %v420, %v2365
      %v2430 = vsub.f32 %v422, %v2366
      %v2431 = vsub.f32 %v425, %v2367
      %v2432 = vsub.f32 %v427, %v2368
      %v2433 = vsub.f32 %v430, %v2369
      %v2434 = vsub.f32 %v432, %v2370
      %v2435 = vsub.f32 %v435, %v2371
      %v2436 = vsub.f32 %v437, %v2372
      %v2437 = vsub.f32 %v440, %v2373
      %v2438 = vsub.f32 %v442, %v2374
      %v2439 = vsub.f32 %v445, %v2375
      %v2440 = vsub.f32 %v447, %v2376
      %v2441 = vsub.f32 %v450, %v2377
      %v2442 = vsub.f32 %v452, %v2378
      %v2443 = vsub.f32 %v455, %v2379
      %v2444 = vsub.f32 %v457, %v2380
      %v2445 = vsub.f32 %v460, %v2381
      %v2446 = vsub.f32 %v462, %v2382
      %v2447 = vsub.f32 %v465, %v2383
      %v2448 = vsub.f32 %v467, %v2384
      %v2449 = vmul.f32 %v2417, 1.442695
      %v2450 = vpow.pop %v2449
      %v2451 = vmul.f32 %v2418, 1.442695
      %v2452 = vpow.pop %v2451
      %v2453 = vmul.f32 %v2419, 1.442695
      %v2454 = vpow.pop %v2453
      %v2455 = vmul.f32 %v2420, 1.442695
      %v2456 = vpow.pop %v2455
      %v2457 = vmul.f32 %v2421, 1.442695
      %v2458 = vpow.pop %v2457
      %v2459 = vmul.f32 %v2422, 1.442695
      %v2460 = vpow.pop %v2459
      %v2461 = vmul.f32 %v2423, 1.442695
      %v2462 = vpow.pop %v2461
      %v2463 = vmul.f32 %v2424, 1.442695
      %v2464 = vpow.pop %v2463
      %v2465 = vmul.f32 %v2425, 1.442695
      %v2466 = vpow.pop %v2465
      %v2467 = vmul.f32 %v2426, 1.442695
      %v2468 = vpow.pop %v2467
      %v2469 = vmul.f32 %v2427, 1.442695
      %v2470 = vpow.pop %v2469
      %v2471 = vmul.f32 %v2428, 1.442695
      %v2472 = vpow.pop %v2471
      %v2473 = vmul.f32 %v2429, 1.442695
      %v2474 = vpow.pop %v2473
      %v2475 = vmul.f32 %v2430, 1.442695
      %v2476 = vpow.pop %v2475
      %v2477 = vmul.f32 %v2431, 1.442695
      %v2478 = vpow.pop %v2477
      %v2479 = vmul.f32 %v2432, 1.442695
      %v2480 = vpow.pop %v2479
      %v2481 = vmul.f32 %v2433, 1.442695
      %v2482 = vpow.pop %v2481
      %v2483 = vmul.f32 %v2434, 1.442695
      %v2484 = vpow.pop %v2483
      %v2485 = vmul.f32 %v2435, 1.442695
      %v2486 = vpow.pop %v2485
      %v2487 = vmul.f32 %v2436, 1.442695
      %v2488 = vpow.pop %v2487
      %v2489 = vmul.f32 %v2437, 1.442695
      %v2490 = vpow.pop %v2489
      %v2491 = vmul.f32 %v2438, 1.442695
      %v2492 = vpow.pop %v2491
      %v2493 = vmul.f32 %v2439, 1.442695
      %v2494 = vpow.pop %v2493
      %v2495 = vmul.f32 %v2440, 1.442695
      %v2496 = vpow.pop %v2495
      %v2497 = vmul.f32 %v2441, 1.442695
      %v2498 = vpow.pop %v2497
      %v2499 = vmul.f32 %v2442, 1.442695
      %v2500 = vpow.pop %v2499
      %v2501 = vmul.f32 %v2443, 1.442695
      %v2502 = vpow.pop %v2501
      %v2503 = vmul.f32 %v2444, 1.442695
      %v2504 = vpow.pop %v2503
      %v2505 = vmul.f32 %v2445, 1.442695
      %v2506 = vpow.pop %v2505
      %v2507 = vmul.f32 %v2446, 1.442695
      %v2508 = vpow.pop %v2507
      %v2509 = vmul.f32 %v2447, 1.442695
      %v2510 = vpow.pop %v2509
      %v2511 = vmul.f32 %v2448, 1.442695
      %v2512 = vpow.pop %v2511
      %v2513 = vrcp.pop %v2385
      %v2514 = vrcp.pop %v2386
      %v2515 = vrcp.pop %v2387
      %v2516 = vrcp.pop %v2388
      %v2517 = vrcp.pop %v2389
      %v2518 = vrcp.pop %v2390
      %v2519 = vrcp.pop %v2391
      %v2520 = vrcp.pop %v2392
      %v2521 = vrcp.pop %v2393
      %v2522 = vrcp.pop %v2394
      %v2523 = vrcp.pop %v2395
      %v2524 = vrcp.pop %v2396
      %v2525 = vrcp.pop %v2397
      %v2526 = vrcp.pop %v2398
      %v2527 = vrcp.pop %v2399
      %v2528 = vrcp.pop %v2400
      %v2529 = vrcp.pop %v2401
      %v2530 = vrcp.pop %v2402
      %v2531 = vrcp.pop %v2403
      %v2532 = vrcp.pop %v2404
      %v2533 = vrcp.pop %v2405
      %v2534 = vrcp.pop %v2406
      %v2535 = vrcp.pop %v2407
      %v2536 = vrcp.pop %v2408
      %v2537 = vrcp.pop %v2409
      %v2538 = vrcp.pop %v2410
      %v2539 = vrcp.pop %v2411
      %v2540 = vrcp.pop %v2412
      %v2541 = vrcp.pop %v2413
      %v2542 = vrcp.pop %v2414
      %v2543 = vrcp.pop %v2415
      %v2544 = vrcp.pop %v2416
      %v2545 = vmul.f32 %v2450, %v2513
      %v2546 = vmul.f32 %v2452, %v2514
      %v2547 = vmul.f32 %v2454, %v2515
      %v2548 = vmul.f32 %v2456, %v2516
      %v2549 = vmul.f32 %v2458, %v2517
      %v2550 = vmul.f32 %v2460, %v2518
      %v2551 = vmul.f32 %v2462, %v2519
      %v2552 = vmul.f32 %v2464, %v2520
      %v2553 = vmul.f32 %v2466, %v2521
      %v2554 = vmul.f32 %v2468, %v2522
      %v2555 = vmul.f32 %v2470, %v2523
      %v2556 = vmul.f32 %v2472, %v2524
      %v2557 = vmul.f32 %v2474, %v2525
      %v2558 = vmul.f32 %v2476, %v2526
      %v2559 = vmul.f32 %v2478, %v2527
      %v2560 = vmul.f32 %v2480, %v2528
      %v2561 = vmul.f32 %v2482, %v2529
      %v2562 = vmul.f32 %v2484, %v2530
      %v2563 = vmul.f32 %v2486, %v2531
      %v2564 = vmul.f32 %v2488, %v2532
      %v2565 = vmul.f32 %v2490, %v2533
      %v2566 = vmul.f32 %v2492, %v2534
      %v2567 = vmul.f32 %v2494, %v2535
      %v2568 = vmul.f32 %v2496, %v2536
      %v2569 = vmul.f32 %v2498, %v2537
      %v2570 = vmul.f32 %v2500, %v2538
      %v2571 = vmul.f32 %v2502, %v2539
      %v2572 = vmul.f32 %v2504, %v2540
      %v2573 = vmul.f32 %v2506, %v2541
      %v2574 = vmul.f32 %v2508, %v2542
      %v2575 = vmul.f32 %v2510, %v2543
      %v2576 = vmul.f32 %v2512, %v2544
      %v2577 = vsel %vm473, 1, 0
      %vm2578 = vcmp.eq.s32.totalorder %v2577, 1
      %v2579 = vsel %vm2578, %v2545, %v390
      %v2580 = vsel %vm2578, %v2546, %v392
      %v2581 = vsel %vm2578, %v2547, %v395
      %v2582 = vsel %vm2578, %v2548, %v397
      %v2583 = vsel %vm2578, %v2549, %v400
      %v2584 = vsel %vm2578, %v2550, %v402
      %v2585 = vsel %vm2578, %v2551, %v405
      %v2586 = vsel %vm2578, %v2552, %v407
      %v2587 = vsel %vm2578, %v2553, %v410
      %v2588 = vsel %vm2578, %v2554, %v412
      %v2589 = vsel %vm2578, %v2555, %v415
      %v2590 = vsel %vm2578, %v2556, %v417
      %v2591 = vsel %vm2578, %v2557, %v420
      %v2592 = vsel %vm2578, %v2558, %v422
      %v2593 = vsel %vm2578, %v2559, %v425
      %v2594 = vsel %vm2578, %v2560, %v427
      %v2595 = vsel %vm2578, %v2561, %v430
      %v2596 = vsel %vm2578, %v2562, %v432
      %v2597 = vsel %vm2578, %v2563, %v435
      %v2598 = vsel %vm2578, %v2564, %v437
      %v2599 = vsel %vm2578, %v2565, %v440
      %v2600 = vsel %vm2578, %v2566, %v442
      %v2601 = vsel %vm2578, %v2567, %v445
      %v2602 = vsel %vm2578, %v2568, %v447
      %v2603 = vsel %vm2578, %v2569, %v450
      %v2604 = vsel %vm2578, %v2570, %v452
      %v2605 = vsel %vm2578, %v2571, %v455
      %v2606 = vsel %vm2578, %v2572, %v457
      %v2607 = vsel %vm2578, %v2573, %v460
      %v2608 = vsel %vm2578, %v2574, %v462
      %v2609 = vsel %vm2578, %v2575, %v465
      %v2610 = vsel %vm2578, %v2576, %v467
      %2611 = vst [vmem:[%s172] sm:$0xff] %v2579
      %2612 = vst [vmem:[%s172 + $0x8] sm:$0xff] %v2580
      %2613 = vst [vmem:[%s172 + $0x10] sm:$0xff] %v2581
      %2614 = vst [vmem:[%s172 + $0x18] sm:$0xff] %v2582
      %2615 = vst [vmem:[%s172 + $0x20] sm:$0xff] %v2583
      %2616 = vst [vmem:[%s172 + $0x28] sm:$0xff] %v2584
      %2617 = vst [vmem:[%s172 + $0x30] sm:$0xff] %v2585
      %2618 = vst [vmem:[%s172 + $0x38] sm:$0xff] %v2586
      %2619 = vst [vmem:[%s172 + $0x40] sm:$0xff] %v2587
      %2620 = vst [vmem:[%s172 + $0x48] sm:$0xff] %v2588
      %2621 = vst [vmem:[%s172 + $0x50] sm:$0xff] %v2589
      %2622 = vst [vmem:[%s172 + $0x58] sm:$0xff] %v2590
      %2623 = vst [vmem:[%s172 + $0x60] sm:$0xff] %v2591
      %2624 = vst [vmem:[%s172 + $0x68] sm:$0xff] %v2592
      %2625 = vst [vmem:[%s172 + $0x70] sm:$0xff] %v2593
      %2626 = vst [vmem:[%s172 + $0x78] sm:$0xff] %v2594
      %2627 = vst [vmem:[%s172 + $0x80] sm:$0xff] %v2595
      %2628 = vst [vmem:[%s172 + $0x88] sm:$0xff] %v2596
      %2629 = vst [vmem:[%s172 + $0x90] sm:$0xff] %v2597
      %2630 = vst [vmem:[%s172 + $0x98] sm:$0xff] %v2598
      %2631 = vst [vmem:[%s172 + $0xa0] sm:$0xff] %v2599
      %2632 = vst [vmem:[%s172 + $0xa8] sm:$0xff] %v2600
      %2633 = vst [vmem:[%s172 + $0xb0] sm:$0xff] %v2601
      %2634 = vst [vmem:[%s172 + $0xb8] sm:$0xff] %v2602
      %2635 = vst [vmem:[%s172 + $0xc0] sm:$0xff] %v2603
      %2636 = vst [vmem:[%s172 + $0xc8] sm:$0xff] %v2604
      %2637 = vst [vmem:[%s172 + $0xd0] sm:$0xff] %v2605
      %2638 = vst [vmem:[%s172 + $0xd8] sm:$0xff] %v2606
      %2639 = vst [vmem:[%s172 + $0xe0] sm:$0xff] %v2607
      %2640 = vst [vmem:[%s172 + $0xe8] sm:$0xff] %v2608
      %2641 = vst [vmem:[%s172 + $0xf0] sm:$0xff] %v2609
      %2642 = vst [vmem:[%s172 + $0xf8] sm:$0xff] %v2610
      %s2643 = smul.u32 32, %s14
      %p2644 = scmp.lt.s32.totalorder %s2643, 63
      %s2645 = scalar_select %p2644, %s2643, 63
      %s2646 = smul.addr %s2645, 8
      %s2647 = scalar_lea.vmem %s3, %s2646
      // Predicated region
      $region33: #{attssd_lite_forward.9} parent=31 // pred_check
        %p2648 = pneg %p100
      $region34: #{attssd_lite_forward.9} parent=31 // pred_check_branch
        %2650 = sbr.rel (%p2648) target = $region36
      $region35: #{attssd_lite_forward.9} parent=31 // pred_region
        %s2651 = smul.u32 32, %s14
      $region36: #{attssd_lite_forward.9} parent=31 // pred_fallthru
        _
    $region32: #{attssd_lite_forward.9} parent=5 // pred_fallthru
      _
    %p2652 = scmp.le.s32.totalorder 2, %s9
    // Predicated region
    $region37: #{attssd_lite_forward.9} parent=5 // pred_check
      %p2653 = pneg %p2652
    $region38: #{attssd_lite_forward.9} parent=5 // pred_check_branch
      %2655 = sbr.rel (%p2653) target = $region40
    $region39: #{attssd_lite_forward.9} parent=5 // pred_region
      %s2656 = ssub.s32 %s9, 2
      // Predicated region
      $region41: #{attssd_lite_forward.9} parent=39 // pred_check
        %p2657 = pneg %p106
      $region42: #{attssd_lite_forward.9} parent=39 // pred_check_branch
        %2659 = sbr.rel (%p2657) target = $region44
      $region43: #{attssd_lite_forward.9} parent=39 // pred_region
        %s2660 = smul.u32 32, %s15
        %p2661 = scmp.lt.s32.totalorder %s2660, 63
        %s2662 = scalar_select %p2661, %s2660, 63
        %s2663 = smul.addr %s2662, 8
        %s2664 = scalar_lea.vmem %s3, %s2663
      $region44: #{attssd_lite_forward.9} parent=39 // pred_fallthru
        _
    $region40: #{attssd_lite_forward.9} parent=5 // pred_fallthru
      _
  $region6: #{attssd_lite_forward.9} parent=0 // loop_footer
    %s13 = sadd.s32 1, %s9
  $region7: #{attssd_lite_forward.9} parent=0 // loop_footer_branch
    %8 = sbr.rel target = $region3
  $region8: #{attssd_lite_forward.9} parent=0 // loop_exit
    _

</llo_original>
